<compile_context>
chip_gen: v5e
topology: v5e:2x2
jax: 0.10.0
libtpu: 0.0.40
codegen_flags: <defaults>
</compile_context>

<pallas_src>
import jax
import jax.numpy as jnp
import numpy as np
from jax import lax
from jax.experimental import pallas as pl
from jax.experimental.pallas import tpu as pltpu

# ---- static problem sizes (small, consistent with the module) ----------------
N, D, H, W = 2, 8, 8, 8
C_IN = 16                 # in_chs
C_OUT = 16                # out_chs (== in_chs so the identity residual is valid)
REDUCTION = 4
C_RED = C_OUT // REDUCTION
DHW = D * H * W           # 512 (multiple of 128 -> lane-aligned rolls / stores)
C2 = 2 * C_OUT            # stacked rows: sample0 channels then sample1 channels
EPS = 1e-5

assert C_IN == C_OUT, "identity residual requires in_chs == out_chs"
assert DHW % 128 == 0, "per-sample spatial size must be lane aligned"
assert N == 2, "stacked (2C, DHW) layout below is written for batch == 2"

# ---- packed-parameter column layout (one (32, 128) VMEM operand) -------------
COL_W1 = 0      # [:, 0:32]    conv1 weight, block-diag over samples
COL_W3 = 32     # [:, 32:64]   conv3 weight, block-diag
COL_SW2 = 64    # [:, 64:72]   SE fc2 weight, block-diag (32, 8)
COL_SW1 = 72    # [0:8, 72:104] SE fc1 weight, block-diag (8, 32)
COL_G1, COL_B1 = 104, 105
COL_G2, COL_B2 = 106, 107
COL_G3, COL_B3 = 108, 109
COL_SB2 = 110
COL_SB1 = 111   # rows 0:8
PACK_COLS = 128


def _make_tap_tables():
    """Static per-tap lane shifts and (27, DHW) spatial-validity masks."""
    idx = np.arange(DHW)
    d_i = idx // (H * W)
    h_i = (idx // W) % H
    w_i = idx % W
    deltas, masks = [], []
    for kd in range(3):
        for kh in range(3):
            for kw in range(3):
                a, b, c = kd - 1, kh - 1, kw - 1
                deltas.append(a * H * W + b * W + c)
                valid = ((d_i + a >= 0) & (d_i + a < D) &
                         (h_i + b >= 0) & (h_i + b < H) &
                         (w_i + c >= 0) & (w_i + c < W))
                masks.append(valid)
    return tuple(deltas), np.stack(masks).astype(np.float32)   # (27, 512)


DELTAS, MASK27 = _make_tap_tables()
CENTER = DELTAS.index(0)          # tap (1,1,1): mask is all-ones, no roll needed

_INV_NTOT = 1.0 / float(N * DHW)  # BatchNorm population size per channel


def _bn(y, gamma_s, beta_s, *, relu):
    """BatchNorm3d (training stats, biased var, eps=1e-5) on the stacked
    (2C, DHW) layout; per-channel stats pool both sample halves + all lanes."""
    def pool_halves(v):                       # (2C,1) -> per-channel total, dup'd
        t = v[:C_OUT] + v[C_OUT:]
        return jnp.concatenate([t, t], axis=0)

    mu = pool_halves(jnp.sum(y, axis=1, keepdims=True)) * _INV_NTOT
    yc = y - mu
    var = pool_halves(jnp.sum(yc * yc, axis=1, keepdims=True)) * _INV_NTOT
    out = yc * (gamma_s * lax.rsqrt(var + EPS)) + beta_s      # fused scale+shift
    return jnp.maximum(out, 0.0) if relu else out


def se_block_kernel(x_ref, mask_ref, w2_ref, pack_ref, o_ref):
    # ---- conv1 (1x1x1, no bias) + BN + ReLU -----------------------------------
    y = jnp.dot(pack_ref[:, COL_W1:COL_W1 + C2], x_ref[...],
                preferred_element_type=jnp.float32)
    y = _bn(y, pack_ref[:, COL_G1:COL_G1 + 1], pack_ref[:, COL_B1:COL_B1 + 1],
            relu=True)

    # ---- conv2 (3x3x3, pad=1): 27-tap roll/mask/matmul accumulation -----------
    # No im2col scratch: each tap's contribution is accumulated straight into a
    # (2C, DHW) f32 value.  Cross-boundary (wrap-around) lanes are zeroed by the
    # precomputed validity mask; the center tap needs neither roll nor mask.
    acc = jnp.dot(w2_ref[:, CENTER * C2:(CENTER + 1) * C2], y,
                  preferred_element_type=jnp.float32)
    for k, delta in enumerate(DELTAS):
        if k == CENTER:
            continue
        tap = pltpu.roll(y, (-delta) % DHW, axis=1) * mask_ref[k:k + 1, :]
        acc = acc + jnp.dot(w2_ref[:, k * C2:(k + 1) * C2], tap,
                            preferred_element_type=jnp.float32)
    y = _bn(acc, pack_ref[:, COL_G2:COL_G2 + 1], pack_ref[:, COL_B2:COL_B2 + 1],
            relu=True)

    # ---- conv3 (1x1x1, no bias) + BN -------------------------------------------
    y = jnp.dot(pack_ref[:, COL_W3:COL_W3 + C2], y,
                preferred_element_type=jnp.float32)
    y = _bn(y, pack_ref[:, COL_G3:COL_G3 + 1], pack_ref[:, COL_B3:COL_B3 + 1],
            relu=False)

    # ---- SE: per-sample global avg pool -> FC -> ReLU -> FC -> sigmoid --------
    pooled = jnp.sum(y, axis=1, keepdims=True) * (1.0 / DHW)          # (2C, 1)
    hdn = jnp.maximum(
        jnp.dot(pack_ref[0:2 * C_RED, COL_SW1:COL_SW1 + C2], pooled,
                preferred_element_type=jnp.float32)
        + pack_ref[0:2 * C_RED, COL_SB1:COL_SB1 + 1], 0.0)            # (2*Cred, 1)
    gate = jax.nn.sigmoid(
        jnp.dot(pack_ref[:, COL_SW2:COL_SW2 + 2 * C_RED], hdn,
                preferred_element_type=jnp.float32)
        + pack_ref[:, COL_SB2:COL_SB2 + 1])                           # (2C, 1)

    # ---- channel gate * y + identity residual + final ReLU --------------------
    o_ref[...] = jnp.maximum(y * gate + x_ref[...], 0.0)


def _bdiag(w):
    """(a, b) -> (2a, 2b) block-diagonal: same weight applied to each sample half."""
    z = jnp.zeros_like(w)
    return jnp.concatenate(
        [jnp.concatenate([w, z], axis=1), jnp.concatenate([z, w], axis=1)], axis=0)


@jax.jit
def se_block_pallas(x_ncdhw, p):
    # Free reshape: NCDHW (2,16,8,8,8) -> stacked (N*C, DHW) = (32, 512).
    x_stk = x_ncdhw.reshape(N * C_IN, DHW)

    # conv2 weights: per tap k, columns [k*32:(k+1)*32] hold blockdiag(w2_k).
    w2t = jnp.transpose(p["conv2_w"], (2, 3, 4, 0, 1)).reshape(27, C_OUT, C_IN)
    z27 = jnp.zeros_like(w2t)
    w2bd = jnp.concatenate(
        [jnp.concatenate([w2t, z27], axis=2), jnp.concatenate([z27, w2t], axis=2)],
        axis=1)                                            # (27, 32, 32)
    w2bd = jnp.transpose(w2bd, (1, 0, 2)).reshape(C2, 27 * C2)   # (32, 864)

    # One (32, 128) pack for every other parameter (weights block-diag'd, BN/SE
    # per-channel vectors duplicated across the two sample halves).
    vecs = jnp.stack([p["bn1_g"], p["bn1_b"], p["bn2_g"], p["bn2_b"],
                      p["bn3_g"], p["bn3_b"], p["se_fc2_b"]], axis=1)   # (16, 7)
    pack = jnp.zeros((C2, PACK_COLS), jnp.float32)
    pack = pack.at[:, COL_W1:COL_W1 + C2].set(_bdiag(p["conv1_w"][:, :, 0, 0, 0]))
    pack = pack.at[:, COL_W3:COL_W3 + C2].set(_bdiag(p["conv3_w"][:, :, 0, 0, 0]))
    pack = pack.at[:, COL_SW2:COL_SW2 + 2 * C_RED].set(
        _bdiag(p["se_fc2_w"][:, :, 0, 0, 0]))
    pack = pack.at[0:2 * C_RED, COL_SW1:COL_SW1 + C2].set(
        _bdiag(p["se_fc1_w"][:, :, 0, 0, 0]))
    pack = pack.at[:, COL_G1:COL_G1 + 7].set(jnp.concatenate([vecs, vecs], axis=0))
    pack = pack.at[0:2 * C_RED, COL_SB1].set(
        jnp.concatenate([p["se_fc1_b"], p["se_fc1_b"]], axis=0))

    out_stk = pl.pallas_call(
        se_block_kernel,
        out_shape=jax.ShapeDtypeStruct((C2, DHW), jnp.float32),
        in_specs=[pl.BlockSpec(memory_space=pltpu.MemorySpace.VMEM)] * 4,
        out_specs=pl.BlockSpec(memory_space=pltpu.MemorySpace.VMEM),
    )(x_stk, jnp.asarray(MASK27), w2bd, pack)

    # Free reshape back: (N*C, DHW) -> NCDHW.
    return out_stk.reshape(N, C_OUT, D, H, W)


# ---- pure-JAX reference (straight translation of the PyTorch forward) --------
def se_block_reference(x, p):
    dn = ('NCDHW', 'OIDHW', 'NCDHW')

    def conv(inp, w, pad):
        return lax.conv_general_dilated(inp, w, (1, 1, 1), [(pad, pad)] * 3,
                                        dimension_numbers=dn,
                                        precision=lax.Precision.HIGHEST)

    def bn(inp, g, b):
        mu = jnp.mean(inp, axis=(0, 2, 3, 4), keepdims=True)
        var = jnp.mean((inp - mu) ** 2, axis=(0, 2, 3, 4), keepdims=True)
        return ((inp - mu) * lax.rsqrt(var + EPS) * g.reshape(1, -1, 1, 1, 1)
                + b.reshape(1, -1, 1, 1, 1))

    relu = lambda t: jnp.maximum(t, 0.0)

    out = relu(bn(conv(x, p["conv1_w"], 0), p["bn1_g"], p["bn1_b"]))
    out = relu(bn(conv(out, p["conv2_w"], 1), p["bn2_g"], p["bn2_b"]))
    out = bn(conv(out, p["conv3_w"], 0), p["bn3_g"], p["bn3_b"])

    pooled = jnp.mean(out, axis=(2, 3, 4))                                # (N, Cout)
    hdn = relu(pooled @ p["se_fc1_w"][:, :, 0, 0, 0].T + p["se_fc1_b"])
    gate = 1.0 / (1.0 + jnp.exp(-(hdn @ p["se_fc2_w"][:, :, 0, 0, 0].T
                                  + p["se_fc2_b"])))
    out = out * gate[:, :, None, None, None] + x
    return relu(out)


def init_params(key):
    ks = jax.random.split(key, 14)

    def w(k, shape, fan_in):
        return (jax.random.normal(k, shape, jnp.float32) / np.sqrt(fan_in))

    return {
        "conv1_w": w(ks[0], (C_IN, C_IN, 1, 1, 1), C_IN),
        "conv2_w": w(ks[1], (C_IN, C_IN, 3, 3, 3), C_IN * 27),
        "conv3_w": w(ks[2], (C_OUT, C_IN, 1, 1, 1), C_IN),
        "bn1_g": 1.0 + 0.1 * jax.random.normal(ks[3], (C_IN,), jnp.float32),
        "bn1_b": 0.1 * jax.random.normal(ks[4], (C_IN,), jnp.float32),
        "bn2_g": 1.0 + 0.1 * jax.random.normal(ks[5], (C_IN,), jnp.float32),
        "bn2_b": 0.1 * jax.random.normal(ks[6], (C_IN,), jnp.float32),
        "bn3_g": 1.0 + 0.1 * jax.random.normal(ks[7], (C_OUT,), jnp.float32),
        "bn3_b": 0.1 * jax.random.normal(ks[8], (C_OUT,), jnp.float32),
        "se_fc1_w": w(ks[9], (C_RED, C_OUT, 1, 1, 1), C_OUT),
        "se_fc1_b": 0.1 * jax.random.normal(ks[10], (C_RED,), jnp.float32),
        "se_fc2_w": w(ks[11], (C_OUT, C_RED, 1, 1, 1), C_RED),
        "se_fc2_b": 0.1 * jax.random.normal(ks[12], (C_OUT,), jnp.float32),
    }


if __name__ == "__main__":
    key = jax.random.PRNGKey(0)
    k_params, k_x = jax.random.split(key)
    params = init_params(k_params)
    x = jax.random.normal(k_x, (N, C_IN, D, H, W), jnp.float32)   # NCDHW like PyTorch

    out_kernel = se_block_pallas(x, params)
    jax.block_until_ready(out_kernel)

    out_ref = se_block_reference(x, params)
    np.testing.assert_allclose(np.asarray(out_kernel), np.asarray(out_ref),
                               rtol=1e-3, atol=1e-3)
    print("KERNEL_OK")
</pallas_src>

<mosaic_0001>
module attributes {stable_mosaic.version = 11 : i64} {
  func.func @se_block_kernel(%arg0: memref<32x512xf32, #tpu.memory_space<vmem>>, %arg1: memref<27x512xf32, #tpu.memory_space<vmem>>, %arg2: memref<32x864xf32, #tpu.memory_space<vmem>>, %arg3: memref<32x128xf32, #tpu.memory_space<vmem>>, %arg4: memref<32x512xf32, #tpu.memory_space<vmem>>) attributes {dimension_semantics = [], scalar_prefetch = 0 : i64, scratch_operands = 0 : i64, tpu.core_type = #tpu.core_type<tc>} {
    %c0 = arith.constant 0 : index
    %c0_0 = arith.constant 0 : index
    %0 = vector.load %arg3[%c0, %c0_0] : memref<32x128xf32, #tpu.memory_space<vmem>>, vector<32x32xf32>
    %c0_1 = arith.constant 0 : index
    %c0_2 = arith.constant 0 : index
    %1 = vector.load %arg0[%c0_1, %c0_2] : memref<32x512xf32, #tpu.memory_space<vmem>>, vector<32x512xf32>
    %cst = arith.constant dense<0.000000e+00> : vector<32x512xf32>
    %2 = tpu.matmul %0, %1, %cst {dimension_numbers = #tpu.dot_dimension_numbers<[1], [0], [0], [1], [0, 0, 1, 1], [], []>} : vector<32x32xf32>, vector<32x512xf32>, vector<32x512xf32> -> vector<32x512xf32>
    %c0_3 = arith.constant 0 : index
    %c104 = arith.constant 104 : index
    %3 = vector.load %arg3[%c0_3, %c104] : memref<32x128xf32, #tpu.memory_space<vmem>>, vector<32x1xf32>
    %c0_4 = arith.constant 0 : index
    %c105 = arith.constant 105 : index
    %4 = vector.load %arg3[%c0_4, %c105] : memref<32x128xf32, #tpu.memory_space<vmem>>, vector<32x1xf32>
    %cst_5 = arith.constant dense<0.000000e+00> : vector<32xf32>
    %5 = vector.multi_reduction <add>, %2, %cst_5 [1] : vector<32x512xf32> to vector<32xf32>
    %6 = vector.shape_cast %5 : vector<32xf32> to vector<32x1xf32>
    %7 = vector.extract_strided_slice %6 {offsets = [0, 0], sizes = [16, 1], strides = [1, 1]} : vector<32x1xf32> to vector<16x1xf32>
    %8 = vector.extract_strided_slice %6 {offsets = [16, 0], sizes = [16, 1], strides = [1, 1]} : vector<32x1xf32> to vector<16x1xf32>
    %9 = arith.addf %7, %8 : vector<16x1xf32>
    %10 = tpu.concatenate %9, %9 in 0 : vector<16x1xf32>, vector<16x1xf32> -> vector<32x1xf32>
    %cst_6 = arith.constant 9.765625E-4 : f32
    %11 = vector.broadcast %cst_6 : f32 to vector<32x1xf32>
    %12 = arith.mulf %10, %11 : vector<32x1xf32>
    %13 = vector.broadcast %12 : vector<32x1xf32> to vector<32x512xf32>
    %14 = arith.subf %2, %13 : vector<32x512xf32>
    %15 = arith.mulf %14, %14 : vector<32x512xf32>
    %cst_7 = arith.constant dense<0.000000e+00> : vector<32xf32>
    %16 = vector.multi_reduction <add>, %15, %cst_7 [1] : vector<32x512xf32> to vector<32xf32>
    %17 = vector.shape_cast %16 : vector<32xf32> to vector<32x1xf32>
    %18 = vector.extract_strided_slice %17 {offsets = [0, 0], sizes = [16, 1], strides = [1, 1]} : vector<32x1xf32> to vector<16x1xf32>
    %19 = vector.extract_strided_slice %17 {offsets = [16, 0], sizes = [16, 1], strides = [1, 1]} : vector<32x1xf32> to vector<16x1xf32>
    %20 = arith.addf %18, %19 : vector<16x1xf32>
    %21 = tpu.concatenate %20, %20 in 0 : vector<16x1xf32>, vector<16x1xf32> -> vector<32x1xf32>
    %cst_8 = arith.constant 9.765625E-4 : f32
    %22 = vector.broadcast %cst_8 : f32 to vector<32x1xf32>
    %23 = arith.mulf %21, %22 : vector<32x1xf32>
    %cst_9 = arith.constant 9.99999974E-6 : f32
    %24 = vector.broadcast %cst_9 : f32 to vector<32x1xf32>
    %25 = arith.addf %23, %24 : vector<32x1xf32>
    %26 = math.rsqrt %25 : vector<32x1xf32>
    %27 = arith.mulf %3, %26 : vector<32x1xf32>
    %28 = vector.broadcast %27 : vector<32x1xf32> to vector<32x512xf32>
    %29 = arith.mulf %14, %28 : vector<32x512xf32>
    %30 = vector.broadcast %4 : vector<32x1xf32> to vector<32x512xf32>
    %31 = arith.addf %29, %30 : vector<32x512xf32>
    %cst_10 = arith.constant 0.000000e+00 : f32
    %32 = vector.broadcast %cst_10 : f32 to vector<32x512xf32>
    %33 = arith.maximumf %31, %32 : vector<32x512xf32>
    %c0_11 = arith.constant 0 : index
    %c416 = arith.constant 416 : index
    %34 = vector.load %arg2[%c0_11, %c416] : memref<32x864xf32, #tpu.memory_space<vmem>>, vector<32x32xf32>
    %cst_12 = arith.constant dense<0.000000e+00> : vector<32x512xf32>
    %35 = tpu.matmul %34, %33, %cst_12 {dimension_numbers = #tpu.dot_dimension_numbers<[1], [0], [0], [1], [0, 0, 1, 1], [], []>} : vector<32x32xf32>, vector<32x512xf32>, vector<32x512xf32> -> vector<32x512xf32>
    %c73_i32 = arith.constant 73 : i32
    %36 = tpu.dynamic_rotate %33 by %c73_i32 dim 1 : vector<32x512xf32>, i32 -> vector<32x512xf32>
    %c0_13 = arith.constant 0 : index
    %c0_14 = arith.constant 0 : index
    %37 = vector.load %arg1[%c0_13, %c0_14] : memref<27x512xf32, #tpu.memory_space<vmem>>, vector<1x512xf32>
    %38 = vector.broadcast %37 : vector<1x512xf32> to vector<32x512xf32>
    %39 = arith.mulf %36, %38 : vector<32x512xf32>
    %c0_15 = arith.constant 0 : index
    %c0_16 = arith.constant 0 : index
    %40 = vector.load %arg2[%c0_15, %c0_16] : memref<32x864xf32, #tpu.memory_space<vmem>>, vector<32x32xf32>
    %cst_17 = arith.constant dense<0.000000e+00> : vector<32x512xf32>
    %41 = tpu.matmul %40, %39, %cst_17 {dimension_numbers = #tpu.dot_dimension_numbers<[1], [0], [0], [1], [0, 0, 1, 1], [], []>} : vector<32x32xf32>, vector<32x512xf32>, vector<32x512xf32> -> vector<32x512xf32>
    %42 = arith.addf %35, %41 : vector<32x512xf32>
    %c72_i32 = arith.constant 72 : i32
    %43 = tpu.dynamic_rotate %33 by %c72_i32 dim 1 : vector<32x512xf32>, i32 -> vector<32x512xf32>
    %c1 = arith.constant 1 : index
    %c0_18 = arith.constant 0 : index
    %44 = vector.load %arg1[%c1, %c0_18] : memref<27x512xf32, #tpu.memory_space<vmem>>, vector<1x512xf32>
    %45 = vector.broadcast %44 : vector<1x512xf32> to vector<32x512xf32>
    %46 = arith.mulf %43, %45 : vector<32x512xf32>
    %c0_19 = arith.constant 0 : index
    %c32 = arith.constant 32 : index
    %47 = vector.load %arg2[%c0_19, %c32] : memref<32x864xf32, #tpu.memory_space<vmem>>, vector<32x32xf32>
    %cst_20 = arith.constant dense<0.000000e+00> : vector<32x512xf32>
    %48 = tpu.matmul %47, %46, %cst_20 {dimension_numbers = #tpu.dot_dimension_numbers<[1], [0], [0], [1], [0, 0, 1, 1], [], []>} : vector<32x32xf32>, vector<32x512xf32>, vector<32x512xf32> -> vector<32x512xf32>
    %49 = arith.addf %42, %48 : vector<32x512xf32>
    %c71_i32 = arith.constant 71 : i32
    %50 = tpu.dynamic_rotate %33 by %c71_i32 dim 1 : vector<32x512xf32>, i32 -> vector<32x512xf32>
    %c2 = arith.constant 2 : index
    %c0_21 = arith.constant 0 : index
    %51 = vector.load %arg1[%c2, %c0_21] : memref<27x512xf32, #tpu.memory_space<vmem>>, vector<1x512xf32>
    %52 = vector.broadcast %51 : vector<1x512xf32> to vector<32x512xf32>
    %53 = arith.mulf %50, %52 : vector<32x512xf32>
    %c0_22 = arith.constant 0 : index
    %c64 = arith.constant 64 : index
    %54 = vector.load %arg2[%c0_22, %c64] : memref<32x864xf32, #tpu.memory_space<vmem>>, vector<32x32xf32>
    %cst_23 = arith.constant dense<0.000000e+00> : vector<32x512xf32>
    %55 = tpu.matmul %54, %53, %cst_23 {dimension_numbers = #tpu.dot_dimension_numbers<[1], [0], [0], [1], [0, 0, 1, 1], [], []>} : vector<32x32xf32>, vector<32x512xf32>, vector<32x512xf32> -> vector<32x512xf32>
    %56 = arith.addf %49, %55 : vector<32x512xf32>
    %c65_i32 = arith.constant 65 : i32
    %57 = tpu.dynamic_rotate %33 by %c65_i32 dim 1 : vector<32x512xf32>, i32 -> vector<32x512xf32>
    %c3 = arith.constant 3 : index
    %c0_24 = arith.constant 0 : index
    %58 = vector.load %arg1[%c3, %c0_24] : memref<27x512xf32, #tpu.memory_space<vmem>>, vector<1x512xf32>
    %59 = vector.broadcast %58 : vector<1x512xf32> to vector<32x512xf32>
    %60 = arith.mulf %57, %59 : vector<32x512xf32>
    %c0_25 = arith.constant 0 : index
    %c96 = arith.constant 96 : index
    %61 = vector.load %arg2[%c0_25, %c96] : memref<32x864xf32, #tpu.memory_space<vmem>>, vector<32x32xf32>
    %cst_26 = arith.constant dense<0.000000e+00> : vector<32x512xf32>
    %62 = tpu.matmul %61, %60, %cst_26 {dimension_numbers = #tpu.dot_dimension_numbers<[1], [0], [0], [1], [0, 0, 1, 1], [], []>} : vector<32x32xf32>, vector<32x512xf32>, vector<32x512xf32> -> vector<32x512xf32>
    %63 = arith.addf %56, %62 : vector<32x512xf32>
    %c64_i32 = arith.constant 64 : i32
    %64 = tpu.dynamic_rotate %33 by %c64_i32 dim 1 : vector<32x512xf32>, i32 -> vector<32x512xf32>
    %c4 = arith.constant 4 : index
    %c0_27 = arith.constant 0 : index
    %65 = vector.load %arg1[%c4, %c0_27] : memref<27x512xf32, #tpu.memory_space<vmem>>, vector<1x512xf32>
    %66 = vector.broadcast %65 : vector<1x512xf32> to vector<32x512xf32>
    %67 = arith.mulf %64, %66 : vector<32x512xf32>
    %c0_28 = arith.constant 0 : index
    %c128 = arith.constant 128 : index
    %68 = vector.load %arg2[%c0_28, %c128] : memref<32x864xf32, #tpu.memory_space<vmem>>, vector<32x32xf32>
    %cst_29 = arith.constant dense<0.000000e+00> : vector<32x512xf32>
    %69 = tpu.matmul %68, %67, %cst_29 {dimension_numbers = #tpu.dot_dimension_numbers<[1], [0], [0], [1], [0, 0, 1, 1], [], []>} : vector<32x32xf32>, vector<32x512xf32>, vector<32x512xf32> -> vector<32x512xf32>
    %70 = arith.addf %63, %69 : vector<32x512xf32>
    %c63_i32 = arith.constant 63 : i32
    %71 = tpu.dynamic_rotate %33 by %c63_i32 dim 1 : vector<32x512xf32>, i32 -> vector<32x512xf32>
    %c5 = arith.constant 5 : index
    %c0_30 = arith.constant 0 : index
    %72 = vector.load %arg1[%c5, %c0_30] : memref<27x512xf32, #tpu.memory_space<vmem>>, vector<1x512xf32>
    %73 = vector.broadcast %72 : vector<1x512xf32> to vector<32x512xf32>
    %74 = arith.mulf %71, %73 : vector<32x512xf32>
    %c0_31 = arith.constant 0 : index
    %c160 = arith.constant 160 : index
    %75 = vector.load %arg2[%c0_31, %c160] : memref<32x864xf32, #tpu.memory_space<vmem>>, vector<32x32xf32>
    %cst_32 = arith.constant dense<0.000000e+00> : vector<32x512xf32>
    %76 = tpu.matmul %75, %74, %cst_32 {dimension_numbers = #tpu.dot_dimension_numbers<[1], [0], [0], [1], [0, 0, 1, 1], [], []>} : vector<32x32xf32>, vector<32x512xf32>, vector<32x512xf32> -> vector<32x512xf32>
    %77 = arith.addf %70, %76 : vector<32x512xf32>
    %c57_i32 = arith.constant 57 : i32
    %78 = tpu.dynamic_rotate %33 by %c57_i32 dim 1 : vector<32x512xf32>, i32 -> vector<32x512xf32>
    %c6 = arith.constant 6 : index
    %c0_33 = arith.constant 0 : index
    %79 = vector.load %arg1[%c6, %c0_33] : memref<27x512xf32, #tpu.memory_space<vmem>>, vector<1x512xf32>
    %80 = vector.broadcast %79 : vector<1x512xf32> to vector<32x512xf32>
    %81 = arith.mulf %78, %80 : vector<32x512xf32>
    %c0_34 = arith.constant 0 : index
    %c192 = arith.constant 192 : index
    %82 = vector.load %arg2[%c0_34, %c192] : memref<32x864xf32, #tpu.memory_space<vmem>>, vector<32x32xf32>
    %cst_35 = arith.constant dense<0.000000e+00> : vector<32x512xf32>
    %83 = tpu.matmul %82, %81, %cst_35 {dimension_numbers = #tpu.dot_dimension_numbers<[1], [0], [0], [1], [0, 0, 1, 1], [], []>} : vector<32x32xf32>, vector<32x512xf32>, vector<32x512xf32> -> vector<32x512xf32>
    %84 = arith.addf %77, %83 : vector<32x512xf32>
    %c56_i32 = arith.constant 56 : i32
    %85 = tpu.dynamic_rotate %33 by %c56_i32 dim 1 : vector<32x512xf32>, i32 -> vector<32x512xf32>
    %c7 = arith.constant 7 : index
    %c0_36 = arith.constant 0 : index
    %86 = vector.load %arg1[%c7, %c0_36] : memref<27x512xf32, #tpu.memory_space<vmem>>, vector<1x512xf32>
    %87 = vector.broadcast %86 : vector<1x512xf32> to vector<32x512xf32>
    %88 = arith.mulf %85, %87 : vector<32x512xf32>
    %c0_37 = arith.constant 0 : index
    %c224 = arith.constant 224 : index
    %89 = vector.load %arg2[%c0_37, %c224] : memref<32x864xf32, #tpu.memory_space<vmem>>, vector<32x32xf32>
    %cst_38 = arith.constant dense<0.000000e+00> : vector<32x512xf32>
    %90 = tpu.matmul %89, %88, %cst_38 {dimension_numbers = #tpu.dot_dimension_numbers<[1], [0], [0], [1], [0, 0, 1, 1], [], []>} : vector<32x32xf32>, vector<32x512xf32>, vector<32x512xf32> -> vector<32x512xf32>
    %91 = arith.addf %84, %90 : vector<32x512xf32>
    %c55_i32 = arith.constant 55 : i32
    %92 = tpu.dynamic_rotate %33 by %c55_i32 dim 1 : vector<32x512xf32>, i32 -> vector<32x512xf32>
    %c8 = arith.constant 8 : index
    %c0_39 = arith.constant 0 : index
    %93 = vector.load %arg1[%c8, %c0_39] : memref<27x512xf32, #tpu.memory_space<vmem>>, vector<1x512xf32>
    %94 = vector.broadcast %93 : vector<1x512xf32> to vector<32x512xf32>
    %95 = arith.mulf %92, %94 : vector<32x512xf32>
    %c0_40 = arith.constant 0 : index
    %c256 = arith.constant 256 : index
    %96 = vector.load %arg2[%c0_40, %c256] : memref<32x864xf32, #tpu.memory_space<vmem>>, vector<32x32xf32>
    %cst_41 = arith.constant dense<0.000000e+00> : vector<32x512xf32>
    %97 = tpu.matmul %96, %95, %cst_41 {dimension_numbers = #tpu.dot_dimension_numbers<[1], [0], [0], [1], [0, 0, 1, 1], [], []>} : vector<32x32xf32>, vector<32x512xf32>, vector<32x512xf32> -> vector<32x512xf32>
    %98 = arith.addf %91, %97 : vector<32x512xf32>
    %c9_i32 = arith.constant 9 : i32
    %99 = tpu.dynamic_rotate %33 by %c9_i32 dim 1 : vector<32x512xf32>, i32 -> vector<32x512xf32>
    %c9 = arith.constant 9 : index
    %c0_42 = arith.constant 0 : index
    %100 = vector.load %arg1[%c9, %c0_42] : memref<27x512xf32, #tpu.memory_space<vmem>>, vector<1x512xf32>
    %101 = vector.broadcast %100 : vector<1x512xf32> to vector<32x512xf32>
    %102 = arith.mulf %99, %101 : vector<32x512xf32>
    %c0_43 = arith.constant 0 : index
    %c288 = arith.constant 288 : index
    %103 = vector.load %arg2[%c0_43, %c288] : memref<32x864xf32, #tpu.memory_space<vmem>>, vector<32x32xf32>
    %cst_44 = arith.constant dense<0.000000e+00> : vector<32x512xf32>
    %104 = tpu.matmul %103, %102, %cst_44 {dimension_numbers = #tpu.dot_dimension_numbers<[1], [0], [0], [1], [0, 0, 1, 1], [], []>} : vector<32x32xf32>, vector<32x512xf32>, vector<32x512xf32> -> vector<32x512xf32>
    %105 = arith.addf %98, %104 : vector<32x512xf32>
    %c8_i32 = arith.constant 8 : i32
    %106 = tpu.dynamic_rotate %33 by %c8_i32 dim 1 : vector<32x512xf32>, i32 -> vector<32x512xf32>
    %c10 = arith.constant 10 : index
    %c0_45 = arith.constant 0 : index
    %107 = vector.load %arg1[%c10, %c0_45] : memref<27x512xf32, #tpu.memory_space<vmem>>, vector<1x512xf32>
    %108 = vector.broadcast %107 : vector<1x512xf32> to vector<32x512xf32>
    %109 = arith.mulf %106, %108 : vector<32x512xf32>
    %c0_46 = arith.constant 0 : index
    %c320 = arith.constant 320 : index
    %110 = vector.load %arg2[%c0_46, %c320] : memref<32x864xf32, #tpu.memory_space<vmem>>, vector<32x32xf32>
    %cst_47 = arith.constant dense<0.000000e+00> : vector<32x512xf32>
    %111 = tpu.matmul %110, %109, %cst_47 {dimension_numbers = #tpu.dot_dimension_numbers<[1], [0], [0], [1], [0, 0, 1, 1], [], []>} : vector<32x32xf32>, vector<32x512xf32>, vector<32x512xf32> -> vector<32x512xf32>
    %112 = arith.addf %105, %111 : vector<32x512xf32>
    %c7_i32 = arith.constant 7 : i32
    %113 = tpu.dynamic_rotate %33 by %c7_i32 dim 1 : vector<32x512xf32>, i32 -> vector<32x512xf32>
    %c11 = arith.constant 11 : index
    %c0_48 = arith.constant 0 : index
    %114 = vector.load %arg1[%c11, %c0_48] : memref<27x512xf32, #tpu.memory_space<vmem>>, vector<1x512xf32>
    %115 = vector.broadcast %114 : vector<1x512xf32> to vector<32x512xf32>
    %116 = arith.mulf %113, %115 : vector<32x512xf32>
    %c0_49 = arith.constant 0 : index
    %c352 = arith.constant 352 : index
    %117 = vector.load %arg2[%c0_49, %c352] : memref<32x864xf32, #tpu.memory_space<vmem>>, vector<32x32xf32>
    %cst_50 = arith.constant dense<0.000000e+00> : vector<32x512xf32>
    %118 = tpu.matmul %117, %116, %cst_50 {dimension_numbers = #tpu.dot_dimension_numbers<[1], [0], [0], [1], [0, 0, 1, 1], [], []>} : vector<32x32xf32>, vector<32x512xf32>, vector<32x512xf32> -> vector<32x512xf32>
    %119 = arith.addf %112, %118 : vector<32x512xf32>
    %c1_i32 = arith.constant 1 : i32
    %120 = tpu.dynamic_rotate %33 by %c1_i32 dim 1 : vector<32x512xf32>, i32 -> vector<32x512xf32>
    %c12 = arith.constant 12 : index
    %c0_51 = arith.constant 0 : index
    %121 = vector.load %arg1[%c12, %c0_51] : memref<27x512xf32, #tpu.memory_space<vmem>>, vector<1x512xf32>
    %122 = vector.broadcast %121 : vector<1x512xf32> to vector<32x512xf32>
    %123 = arith.mulf %120, %122 : vector<32x512xf32>
    %c0_52 = arith.constant 0 : index
    %c384 = arith.constant 384 : index
    %124 = vector.load %arg2[%c0_52, %c384] : memref<32x864xf32, #tpu.memory_space<vmem>>, vector<32x32xf32>
    %cst_53 = arith.constant dense<0.000000e+00> : vector<32x512xf32>
    %125 = tpu.matmul %124, %123, %cst_53 {dimension_numbers = #tpu.dot_dimension_numbers<[1], [0], [0], [1], [0, 0, 1, 1], [], []>} : vector<32x32xf32>, vector<32x512xf32>, vector<32x512xf32> -> vector<32x512xf32>
    %126 = arith.addf %119, %125 : vector<32x512xf32>
    %c511_i32 = arith.constant 511 : i32
    %127 = tpu.dynamic_rotate %33 by %c511_i32 dim 1 : vector<32x512xf32>, i32 -> vector<32x512xf32>
    %c14 = arith.constant 14 : index
    %c0_54 = arith.constant 0 : index
    %128 = vector.load %arg1[%c14, %c0_54] : memref<27x512xf32, #tpu.memory_space<vmem>>, vector<1x512xf32>
    %129 = vector.broadcast %128 : vector<1x512xf32> to vector<32x512xf32>
    %130 = arith.mulf %127, %129 : vector<32x512xf32>
    %c0_55 = arith.constant 0 : index
    %c448 = arith.constant 448 : index
    %131 = vector.load %arg2[%c0_55, %c448] : memref<32x864xf32, #tpu.memory_space<vmem>>, vector<32x32xf32>
    %cst_56 = arith.constant dense<0.000000e+00> : vector<32x512xf32>
    %132 = tpu.matmul %131, %130, %cst_56 {dimension_numbers = #tpu.dot_dimension_numbers<[1], [0], [0], [1], [0, 0, 1, 1], [], []>} : vector<32x32xf32>, vector<32x512xf32>, vector<32x512xf32> -> vector<32x512xf32>
    %133 = arith.addf %126, %132 : vector<32x512xf32>
    %c505_i32 = arith.constant 505 : i32
    %134 = tpu.dynamic_rotate %33 by %c505_i32 dim 1 : vector<32x512xf32>, i32 -> vector<32x512xf32>
    %c15 = arith.constant 15 : index
    %c0_57 = arith.constant 0 : index
    %135 = vector.load %arg1[%c15, %c0_57] : memref<27x512xf32, #tpu.memory_space<vmem>>, vector<1x512xf32>
    %136 = vector.broadcast %135 : vector<1x512xf32> to vector<32x512xf32>
    %137 = arith.mulf %134, %136 : vector<32x512xf32>
    %c0_58 = arith.constant 0 : index
    %c480 = arith.constant 480 : index
    %138 = vector.load %arg2[%c0_58, %c480] : memref<32x864xf32, #tpu.memory_space<vmem>>, vector<32x32xf32>
    %cst_59 = arith.constant dense<0.000000e+00> : vector<32x512xf32>
    %139 = tpu.matmul %138, %137, %cst_59 {dimension_numbers = #tpu.dot_dimension_numbers<[1], [0], [0], [1], [0, 0, 1, 1], [], []>} : vector<32x32xf32>, vector<32x512xf32>, vector<32x512xf32> -> vector<32x512xf32>
    %140 = arith.addf %133, %139 : vector<32x512xf32>
    %c504_i32 = arith.constant 504 : i32
    %141 = tpu.dynamic_rotate %33 by %c504_i32 dim 1 : vector<32x512xf32>, i32 -> vector<32x512xf32>
    %c16 = arith.constant 16 : index
    %c0_60 = arith.constant 0 : index
    %142 = vector.load %arg1[%c16, %c0_60] : memref<27x512xf32, #tpu.memory_space<vmem>>, vector<1x512xf32>
    %143 = vector.broadcast %142 : vector<1x512xf32> to vector<32x512xf32>
    %144 = arith.mulf %141, %143 : vector<32x512xf32>
    %c0_61 = arith.constant 0 : index
    %c512 = arith.constant 512 : index
    %145 = vector.load %arg2[%c0_61, %c512] : memref<32x864xf32, #tpu.memory_space<vmem>>, vector<32x32xf32>
    %cst_62 = arith.constant dense<0.000000e+00> : vector<32x512xf32>
    %146 = tpu.matmul %145, %144, %cst_62 {dimension_numbers = #tpu.dot_dimension_numbers<[1], [0], [0], [1], [0, 0, 1, 1], [], []>} : vector<32x32xf32>, vector<32x512xf32>, vector<32x512xf32> -> vector<32x512xf32>
    %147 = arith.addf %140, %146 : vector<32x512xf32>
    %c503_i32 = arith.constant 503 : i32
    %148 = tpu.dynamic_rotate %33 by %c503_i32 dim 1 : vector<32x512xf32>, i32 -> vector<32x512xf32>
    %c17 = arith.constant 17 : index
    %c0_63 = arith.constant 0 : index
    %149 = vector.load %arg1[%c17, %c0_63] : memref<27x512xf32, #tpu.memory_space<vmem>>, vector<1x512xf32>
    %150 = vector.broadcast %149 : vector<1x512xf32> to vector<32x512xf32>
    %151 = arith.mulf %148, %150 : vector<32x512xf32>
    %c0_64 = arith.constant 0 : index
    %c544 = arith.constant 544 : index
    %152 = vector.load %arg2[%c0_64, %c544] : memref<32x864xf32, #tpu.memory_space<vmem>>, vector<32x32xf32>
    %cst_65 = arith.constant dense<0.000000e+00> : vector<32x512xf32>
    %153 = tpu.matmul %152, %151, %cst_65 {dimension_numbers = #tpu.dot_dimension_numbers<[1], [0], [0], [1], [0, 0, 1, 1], [], []>} : vector<32x32xf32>, vector<32x512xf32>, vector<32x512xf32> -> vector<32x512xf32>
    %154 = arith.addf %147, %153 : vector<32x512xf32>
    %c457_i32 = arith.constant 457 : i32
    %155 = tpu.dynamic_rotate %33 by %c457_i32 dim 1 : vector<32x512xf32>, i32 -> vector<32x512xf32>
    %c18 = arith.constant 18 : index
    %c0_66 = arith.constant 0 : index
    %156 = vector.load %arg1[%c18, %c0_66] : memref<27x512xf32, #tpu.memory_space<vmem>>, vector<1x512xf32>
    %157 = vector.broadcast %156 : vector<1x512xf32> to vector<32x512xf32>
    %158 = arith.mulf %155, %157 : vector<32x512xf32>
    %c0_67 = arith.constant 0 : index
    %c576 = arith.constant 576 : index
    %159 = vector.load %arg2[%c0_67, %c576] : memref<32x864xf32, #tpu.memory_space<vmem>>, vector<32x32xf32>
    %cst_68 = arith.constant dense<0.000000e+00> : vector<32x512xf32>
    %160 = tpu.matmul %159, %158, %cst_68 {dimension_numbers = #tpu.dot_dimension_numbers<[1], [0], [0], [1], [0, 0, 1, 1], [], []>} : vector<32x32xf32>, vector<32x512xf32>, vector<32x512xf32> -> vector<32x512xf32>
    %161 = arith.addf %154, %160 : vector<32x512xf32>
    %c456_i32 = arith.constant 456 : i32
    %162 = tpu.dynamic_rotate %33 by %c456_i32 dim 1 : vector<32x512xf32>, i32 -> vector<32x512xf32>
    %c19 = arith.constant 19 : index
    %c0_69 = arith.constant 0 : index
    %163 = vector.load %arg1[%c19, %c0_69] : memref<27x512xf32, #tpu.memory_space<vmem>>, vector<1x512xf32>
    %164 = vector.broadcast %163 : vector<1x512xf32> to vector<32x512xf32>
    %165 = arith.mulf %162, %164 : vector<32x512xf32>
    %c0_70 = arith.constant 0 : index
    %c608 = arith.constant 608 : index
    %166 = vector.load %arg2[%c0_70, %c608] : memref<32x864xf32, #tpu.memory_space<vmem>>, vector<32x32xf32>
    %cst_71 = arith.constant dense<0.000000e+00> : vector<32x512xf32>
    %167 = tpu.matmul %166, %165, %cst_71 {dimension_numbers = #tpu.dot_dimension_numbers<[1], [0], [0], [1], [0, 0, 1, 1], [], []>} : vector<32x32xf32>, vector<32x512xf32>, vector<32x512xf32> -> vector<32x512xf32>
    %168 = arith.addf %161, %167 : vector<32x512xf32>
    %c455_i32 = arith.constant 455 : i32
    %169 = tpu.dynamic_rotate %33 by %c455_i32 dim 1 : vector<32x512xf32>, i32 -> vector<32x512xf32>
    %c20 = arith.constant 20 : index
    %c0_72 = arith.constant 0 : index
    %170 = vector.load %arg1[%c20, %c0_72] : memref<27x512xf32, #tpu.memory_space<vmem>>, vector<1x512xf32>
    %171 = vector.broadcast %170 : vector<1x512xf32> to vector<32x512xf32>
    %172 = arith.mulf %169, %171 : vector<32x512xf32>
    %c0_73 = arith.constant 0 : index
    %c640 = arith.constant 640 : index
    %173 = vector.load %arg2[%c0_73, %c640] : memref<32x864xf32, #tpu.memory_space<vmem>>, vector<32x32xf32>
    %cst_74 = arith.constant dense<0.000000e+00> : vector<32x512xf32>
    %174 = tpu.matmul %173, %172, %cst_74 {dimension_numbers = #tpu.dot_dimension_numbers<[1], [0], [0], [1], [0, 0, 1, 1], [], []>} : vector<32x32xf32>, vector<32x512xf32>, vector<32x512xf32> -> vector<32x512xf32>
    %175 = arith.addf %168, %174 : vector<32x512xf32>
    %c449_i32 = arith.constant 449 : i32
    %176 = tpu.dynamic_rotate %33 by %c449_i32 dim 1 : vector<32x512xf32>, i32 -> vector<32x512xf32>
    %c21 = arith.constant 21 : index
    %c0_75 = arith.constant 0 : index
    %177 = vector.load %arg1[%c21, %c0_75] : memref<27x512xf32, #tpu.memory_space<vmem>>, vector<1x512xf32>
    %178 = vector.broadcast %177 : vector<1x512xf32> to vector<32x512xf32>
    %179 = arith.mulf %176, %178 : vector<32x512xf32>
    %c0_76 = arith.constant 0 : index
    %c672 = arith.constant 672 : index
    %180 = vector.load %arg2[%c0_76, %c672] : memref<32x864xf32, #tpu.memory_space<vmem>>, vector<32x32xf32>
    %cst_77 = arith.constant dense<0.000000e+00> : vector<32x512xf32>
    %181 = tpu.matmul %180, %179, %cst_77 {dimension_numbers = #tpu.dot_dimension_numbers<[1], [0], [0], [1], [0, 0, 1, 1], [], []>} : vector<32x32xf32>, vector<32x512xf32>, vector<32x512xf32> -> vector<32x512xf32>
    %182 = arith.addf %175, %181 : vector<32x512xf32>
    %c448_i32 = arith.constant 448 : i32
    %183 = tpu.dynamic_rotate %33 by %c448_i32 dim 1 : vector<32x512xf32>, i32 -> vector<32x512xf32>
    %c22 = arith.constant 22 : index
    %c0_78 = arith.constant 0 : index
    %184 = vector.load %arg1[%c22, %c0_78] : memref<27x512xf32, #tpu.memory_space<vmem>>, vector<1x512xf32>
    %185 = vector.broadcast %184 : vector<1x512xf32> to vector<32x512xf32>
    %186 = arith.mulf %183, %185 : vector<32x512xf32>
    %c0_79 = arith.constant 0 : index
    %c704 = arith.constant 704 : index
    %187 = vector.load %arg2[%c0_79, %c704] : memref<32x864xf32, #tpu.memory_space<vmem>>, vector<32x32xf32>
    %cst_80 = arith.constant dense<0.000000e+00> : vector<32x512xf32>
    %188 = tpu.matmul %187, %186, %cst_80 {dimension_numbers = #tpu.dot_dimension_numbers<[1], [0], [0], [1], [0, 0, 1, 1], [], []>} : vector<32x32xf32>, vector<32x512xf32>, vector<32x512xf32> -> vector<32x512xf32>
    %189 = arith.addf %182, %188 : vector<32x512xf32>
    %c447_i32 = arith.constant 447 : i32
    %190 = tpu.dynamic_rotate %33 by %c447_i32 dim 1 : vector<32x512xf32>, i32 -> vector<32x512xf32>
    %c23 = arith.constant 23 : index
    %c0_81 = arith.constant 0 : index
    %191 = vector.load %arg1[%c23, %c0_81] : memref<27x512xf32, #tpu.memory_space<vmem>>, vector<1x512xf32>
    %192 = vector.broadcast %191 : vector<1x512xf32> to vector<32x512xf32>
    %193 = arith.mulf %190, %192 : vector<32x512xf32>
    %c0_82 = arith.constant 0 : index
    %c736 = arith.constant 736 : index
    %194 = vector.load %arg2[%c0_82, %c736] : memref<32x864xf32, #tpu.memory_space<vmem>>, vector<32x32xf32>
    %cst_83 = arith.constant dense<0.000000e+00> : vector<32x512xf32>
    %195 = tpu.matmul %194, %193, %cst_83 {dimension_numbers = #tpu.dot_dimension_numbers<[1], [0], [0], [1], [0, 0, 1, 1], [], []>} : vector<32x32xf32>, vector<32x512xf32>, vector<32x512xf32> -> vector<32x512xf32>
    %196 = arith.addf %189, %195 : vector<32x512xf32>
    %c441_i32 = arith.constant 441 : i32
    %197 = tpu.dynamic_rotate %33 by %c441_i32 dim 1 : vector<32x512xf32>, i32 -> vector<32x512xf32>
    %c24 = arith.constant 24 : index
    %c0_84 = arith.constant 0 : index
    %198 = vector.load %arg1[%c24, %c0_84] : memref<27x512xf32, #tpu.memory_space<vmem>>, vector<1x512xf32>
    %199 = vector.broadcast %198 : vector<1x512xf32> to vector<32x512xf32>
    %200 = arith.mulf %197, %199 : vector<32x512xf32>
    %c0_85 = arith.constant 0 : index
    %c768 = arith.constant 768 : index
    %201 = vector.load %arg2[%c0_85, %c768] : memref<32x864xf32, #tpu.memory_space<vmem>>, vector<32x32xf32>
    %cst_86 = arith.constant dense<0.000000e+00> : vector<32x512xf32>
    %202 = tpu.matmul %201, %200, %cst_86 {dimension_numbers = #tpu.dot_dimension_numbers<[1], [0], [0], [1], [0, 0, 1, 1], [], []>} : vector<32x32xf32>, vector<32x512xf32>, vector<32x512xf32> -> vector<32x512xf32>
    %203 = arith.addf %196, %202 : vector<32x512xf32>
    %c440_i32 = arith.constant 440 : i32
    %204 = tpu.dynamic_rotate %33 by %c440_i32 dim 1 : vector<32x512xf32>, i32 -> vector<32x512xf32>
    %c25 = arith.constant 25 : index
    %c0_87 = arith.constant 0 : index
    %205 = vector.load %arg1[%c25, %c0_87] : memref<27x512xf32, #tpu.memory_space<vmem>>, vector<1x512xf32>
    %206 = vector.broadcast %205 : vector<1x512xf32> to vector<32x512xf32>
    %207 = arith.mulf %204, %206 : vector<32x512xf32>
    %c0_88 = arith.constant 0 : index
    %c800 = arith.constant 800 : index
    %208 = vector.load %arg2[%c0_88, %c800] : memref<32x864xf32, #tpu.memory_space<vmem>>, vector<32x32xf32>
    %cst_89 = arith.constant dense<0.000000e+00> : vector<32x512xf32>
    %209 = tpu.matmul %208, %207, %cst_89 {dimension_numbers = #tpu.dot_dimension_numbers<[1], [0], [0], [1], [0, 0, 1, 1], [], []>} : vector<32x32xf32>, vector<32x512xf32>, vector<32x512xf32> -> vector<32x512xf32>
    %210 = arith.addf %203, %209 : vector<32x512xf32>
    %c439_i32 = arith.constant 439 : i32
    %211 = tpu.dynamic_rotate %33 by %c439_i32 dim 1 : vector<32x512xf32>, i32 -> vector<32x512xf32>
    %c26 = arith.constant 26 : index
    %c0_90 = arith.constant 0 : index
    %212 = vector.load %arg1[%c26, %c0_90] : memref<27x512xf32, #tpu.memory_space<vmem>>, vector<1x512xf32>
    %213 = vector.broadcast %212 : vector<1x512xf32> to vector<32x512xf32>
    %214 = arith.mulf %211, %213 : vector<32x512xf32>
    %c0_91 = arith.constant 0 : index
    %c832 = arith.constant 832 : index
    %215 = vector.load %arg2[%c0_91, %c832] : memref<32x864xf32, #tpu.memory_space<vmem>>, vector<32x32xf32>
    %cst_92 = arith.constant dense<0.000000e+00> : vector<32x512xf32>
    %216 = tpu.matmul %215, %214, %cst_92 {dimension_numbers = #tpu.dot_dimension_numbers<[1], [0], [0], [1], [0, 0, 1, 1], [], []>} : vector<32x32xf32>, vector<32x512xf32>, vector<32x512xf32> -> vector<32x512xf32>
    %217 = arith.addf %210, %216 : vector<32x512xf32>
    %c0_93 = arith.constant 0 : index
    %c106 = arith.constant 106 : index
    %218 = vector.load %arg3[%c0_93, %c106] : memref<32x128xf32, #tpu.memory_space<vmem>>, vector<32x1xf32>
    %c0_94 = arith.constant 0 : index
    %c107 = arith.constant 107 : index
    %219 = vector.load %arg3[%c0_94, %c107] : memref<32x128xf32, #tpu.memory_space<vmem>>, vector<32x1xf32>
    %cst_95 = arith.constant dense<0.000000e+00> : vector<32xf32>
    %220 = vector.multi_reduction <add>, %217, %cst_95 [1] : vector<32x512xf32> to vector<32xf32>
    %221 = vector.shape_cast %220 : vector<32xf32> to vector<32x1xf32>
    %222 = vector.extract_strided_slice %221 {offsets = [0, 0], sizes = [16, 1], strides = [1, 1]} : vector<32x1xf32> to vector<16x1xf32>
    %223 = vector.extract_strided_slice %221 {offsets = [16, 0], sizes = [16, 1], strides = [1, 1]} : vector<32x1xf32> to vector<16x1xf32>
    %224 = arith.addf %222, %223 : vector<16x1xf32>
    %225 = tpu.concatenate %224, %224 in 0 : vector<16x1xf32>, vector<16x1xf32> -> vector<32x1xf32>
    %cst_96 = arith.constant 9.765625E-4 : f32
    %226 = vector.broadcast %cst_96 : f32 to vector<32x1xf32>
    %227 = arith.mulf %225, %226 : vector<32x1xf32>
    %228 = vector.broadcast %227 : vector<32x1xf32> to vector<32x512xf32>
    %229 = arith.subf %217, %228 : vector<32x512xf32>
    %230 = arith.mulf %229, %229 : vector<32x512xf32>
    %cst_97 = arith.constant dense<0.000000e+00> : vector<32xf32>
    %231 = vector.multi_reduction <add>, %230, %cst_97 [1] : vector<32x512xf32> to vector<32xf32>
    %232 = vector.shape_cast %231 : vector<32xf32> to vector<32x1xf32>
    %233 = vector.extract_strided_slice %232 {offsets = [0, 0], sizes = [16, 1], strides = [1, 1]} : vector<32x1xf32> to vector<16x1xf32>
    %234 = vector.extract_strided_slice %232 {offsets = [16, 0], sizes = [16, 1], strides = [1, 1]} : vector<32x1xf32> to vector<16x1xf32>
    %235 = arith.addf %233, %234 : vector<16x1xf32>
    %236 = tpu.concatenate %235, %235 in 0 : vector<16x1xf32>, vector<16x1xf32> -> vector<32x1xf32>
    %cst_98 = arith.constant 9.765625E-4 : f32
    %237 = vector.broadcast %cst_98 : f32 to vector<32x1xf32>
    %238 = arith.mulf %236, %237 : vector<32x1xf32>
    %cst_99 = arith.constant 9.99999974E-6 : f32
    %239 = vector.broadcast %cst_99 : f32 to vector<32x1xf32>
    %240 = arith.addf %238, %239 : vector<32x1xf32>
    %241 = math.rsqrt %240 : vector<32x1xf32>
    %242 = arith.mulf %218, %241 : vector<32x1xf32>
    %243 = vector.broadcast %242 : vector<32x1xf32> to vector<32x512xf32>
    %244 = arith.mulf %229, %243 : vector<32x512xf32>
    %245 = vector.broadcast %219 : vector<32x1xf32> to vector<32x512xf32>
    %246 = arith.addf %244, %245 : vector<32x512xf32>
    %cst_100 = arith.constant 0.000000e+00 : f32
    %247 = vector.broadcast %cst_100 : f32 to vector<32x512xf32>
    %248 = arith.maximumf %246, %247 : vector<32x512xf32>
    %c0_101 = arith.constant 0 : index
    %c32_102 = arith.constant 32 : index
    %249 = vector.load %arg3[%c0_101, %c32_102] : memref<32x128xf32, #tpu.memory_space<vmem>>, vector<32x32xf32>
    %cst_103 = arith.constant dense<0.000000e+00> : vector<32x512xf32>
    %250 = tpu.matmul %249, %248, %cst_103 {dimension_numbers = #tpu.dot_dimension_numbers<[1], [0], [0], [1], [0, 0, 1, 1], [], []>} : vector<32x32xf32>, vector<32x512xf32>, vector<32x512xf32> -> vector<32x512xf32>
    %c0_104 = arith.constant 0 : index
    %c108 = arith.constant 108 : index
    %251 = vector.load %arg3[%c0_104, %c108] : memref<32x128xf32, #tpu.memory_space<vmem>>, vector<32x1xf32>
    %c0_105 = arith.constant 0 : index
    %c109 = arith.constant 109 : index
    %252 = vector.load %arg3[%c0_105, %c109] : memref<32x128xf32, #tpu.memory_space<vmem>>, vector<32x1xf32>
    %cst_106 = arith.constant dense<0.000000e+00> : vector<32xf32>
    %253 = vector.multi_reduction <add>, %250, %cst_106 [1] : vector<32x512xf32> to vector<32xf32>
    %254 = vector.shape_cast %253 : vector<32xf32> to vector<32x1xf32>
    %255 = vector.extract_strided_slice %254 {offsets = [0, 0], sizes = [16, 1], strides = [1, 1]} : vector<32x1xf32> to vector<16x1xf32>
    %256 = vector.extract_strided_slice %254 {offsets = [16, 0], sizes = [16, 1], strides = [1, 1]} : vector<32x1xf32> to vector<16x1xf32>
    %257 = arith.addf %255, %256 : vector<16x1xf32>
    %258 = tpu.concatenate %257, %257 in 0 : vector<16x1xf32>, vector<16x1xf32> -> vector<32x1xf32>
    %cst_107 = arith.constant 9.765625E-4 : f32
    %259 = vector.broadcast %cst_107 : f32 to vector<32x1xf32>
    %260 = arith.mulf %258, %259 : vector<32x1xf32>
    %261 = vector.broadcast %260 : vector<32x1xf32> to vector<32x512xf32>
    %262 = arith.subf %250, %261 : vector<32x512xf32>
    %263 = arith.mulf %262, %262 : vector<32x512xf32>
    %cst_108 = arith.constant dense<0.000000e+00> : vector<32xf32>
    %264 = vector.multi_reduction <add>, %263, %cst_108 [1] : vector<32x512xf32> to vector<32xf32>
    %265 = vector.shape_cast %264 : vector<32xf32> to vector<32x1xf32>
    %266 = vector.extract_strided_slice %265 {offsets = [0, 0], sizes = [16, 1], strides = [1, 1]} : vector<32x1xf32> to vector<16x1xf32>
    %267 = vector.extract_strided_slice %265 {offsets = [16, 0], sizes = [16, 1], strides = [1, 1]} : vector<32x1xf32> to vector<16x1xf32>
    %268 = arith.addf %266, %267 : vector<16x1xf32>
    %269 = tpu.concatenate %268, %268 in 0 : vector<16x1xf32>, vector<16x1xf32> -> vector<32x1xf32>
    %cst_109 = arith.constant 9.765625E-4 : f32
    %270 = vector.broadcast %cst_109 : f32 to vector<32x1xf32>
    %271 = arith.mulf %269, %270 : vector<32x1xf32>
    %cst_110 = arith.constant 9.99999974E-6 : f32
    %272 = vector.broadcast %cst_110 : f32 to vector<32x1xf32>
    %273 = arith.addf %271, %272 : vector<32x1xf32>
    %274 = math.rsqrt %273 : vector<32x1xf32>
    %275 = arith.mulf %251, %274 : vector<32x1xf32>
    %276 = vector.broadcast %275 : vector<32x1xf32> to vector<32x512xf32>
    %277 = arith.mulf %262, %276 : vector<32x512xf32>
    %278 = vector.broadcast %252 : vector<32x1xf32> to vector<32x512xf32>
    %279 = arith.addf %277, %278 : vector<32x512xf32>
    %cst_111 = arith.constant dense<0.000000e+00> : vector<32xf32>
    %280 = vector.multi_reduction <add>, %279, %cst_111 [1] : vector<32x512xf32> to vector<32xf32>
    %281 = vector.shape_cast %280 : vector<32xf32> to vector<32x1xf32>
    %cst_112 = arith.constant 0.001953125 : f32
    %282 = vector.broadcast %cst_112 : f32 to vector<32x1xf32>
    %283 = arith.mulf %281, %282 : vector<32x1xf32>
    %c0_113 = arith.constant 0 : index
    %c72 = arith.constant 72 : index
    %284 = vector.load %arg3[%c0_113, %c72] : memref<32x128xf32, #tpu.memory_space<vmem>>, vector<8x32xf32>
    %cst_114 = arith.constant dense<0.000000e+00> : vector<8x1xf32>
    %285 = tpu.matmul %284, %283, %cst_114 {dimension_numbers = #tpu.dot_dimension_numbers<[1], [0], [0], [1], [0, 0, 1, 1], [], []>} : vector<8x32xf32>, vector<32x1xf32>, vector<8x1xf32> -> vector<8x1xf32>
    %c0_115 = arith.constant 0 : index
    %c111 = arith.constant 111 : index
    %286 = vector.load %arg3[%c0_115, %c111] : memref<32x128xf32, #tpu.memory_space<vmem>>, vector<8x1xf32>
    %287 = arith.addf %285, %286 : vector<8x1xf32>
    %cst_116 = arith.constant 0.000000e+00 : f32
    %288 = vector.broadcast %cst_116 : f32 to vector<8x1xf32>
    %289 = arith.maximumf %287, %288 : vector<8x1xf32>
    %c0_117 = arith.constant 0 : index
    %c64_118 = arith.constant 64 : index
    %290 = vector.load %arg3[%c0_117, %c64_118] : memref<32x128xf32, #tpu.memory_space<vmem>>, vector<32x8xf32>
    %cst_119 = arith.constant dense<0.000000e+00> : vector<32x1xf32>
    %291 = tpu.matmul %290, %289, %cst_119 {dimension_numbers = #tpu.dot_dimension_numbers<[1], [0], [0], [1], [0, 0, 1, 1], [], []>} : vector<32x8xf32>, vector<8x1xf32>, vector<32x1xf32> -> vector<32x1xf32>
    %c0_120 = arith.constant 0 : index
    %c110 = arith.constant 110 : index
    %292 = vector.load %arg3[%c0_120, %c110] : memref<32x128xf32, #tpu.memory_space<vmem>>, vector<32x1xf32>
    %293 = arith.addf %291, %292 : vector<32x1xf32>
    %294 = arith.negf %293 : vector<32x1xf32>
    %295 = math.exp %294 : vector<32x1xf32>
    %cst_121 = arith.constant 1.000000e+00 : f32
    %296 = vector.broadcast %cst_121 : f32 to vector<32x1xf32>
    %297 = arith.addf %296, %295 : vector<32x1xf32>
    %298 = arith.divf %296, %297 : vector<32x1xf32>
    %299 = vector.broadcast %298 : vector<32x1xf32> to vector<32x512xf32>
    %300 = arith.mulf %279, %299 : vector<32x512xf32>
    %c0_122 = arith.constant 0 : index
    %c0_123 = arith.constant 0 : index
    %301 = vector.load %arg0[%c0_122, %c0_123] : memref<32x512xf32, #tpu.memory_space<vmem>>, vector<32x512xf32>
    %302 = arith.addf %300, %301 : vector<32x512xf32>
    %cst_124 = arith.constant 0.000000e+00 : f32
    %303 = vector.broadcast %cst_124 : f32 to vector<32x512xf32>
    %304 = arith.maximumf %302, %303 : vector<32x512xf32>
    %c0_125 = arith.constant 0 : index
    %c0_126 = arith.constant 0 : index
    %305 = vector.load %arg4[%c0_125, %c0_126] : memref<32x512xf32, #tpu.memory_space<vmem>>, vector<32x512xf32>
    tpu.vector_store %arg4[%c0_125, %c0_126], %304 {strides = array<i32>} : memref<32x512xf32, #tpu.memory_space<vmem>>, vector<32x512xf32>,
    return
  }
}

</mosaic_0001>

<llo_original>
// kernel: se_block_pallas.1
$region0: #{se_block_pallas.1}
  #allocation0 [shape = 'u32[]', space=smem, size = 0x4, offset = 0x4, fixed_abs, tag = 'smem constant byte address 0x4 - core index']
  #allocation1 [shape = 'u32[72,128]{1,0:T(1,128)}', space=vmem, size = 0x9000, scoped, tag = 'internal scratch']
  %s0 = inlined_call_operand.vmem [shape: f32[32,512], index: 0, kind: input, shape index: {}]
  %s1 = inlined_call_operand.vmem [shape: f32[27,512], index: 1, kind: input, shape index: {}]
  %s2 = inlined_call_operand.vmem [shape: f32[32,864], index: 2, kind: input, shape index: {}]
  %s3 = inlined_call_operand.vmem [shape: f32[32,128], index: 3, kind: input, shape index: {}]
  %s4 = inlined_call_operand.vmem [shape: f32[32,512], index: 4, kind: output, shape index: {}]
  %s5 = sld [smem:[#allocation0]]
  $region26: #{se_block_pallas.1} parent=0
    _
  %s7 = ssub.s32 1, %s5
  %s8 = scalar_select 0, %s7, %s5
  // Predicated region
  $region2: #{se_block_pallas.1} parent=0 // pred_check
    _
  $region3: #{se_block_pallas.1} parent=0 // pred_check_branch
    %10 = sbr.rel (0) target = $region5
  $region4: #{se_block_pallas.1} parent=0 // pred_region
    _
  $region5: #{se_block_pallas.1} parent=0 // pred_fallthru
    _
  // Predicated region
  $region6: #{se_block_pallas.1} parent=0 // pred_check
    _
  $region7: #{se_block_pallas.1} parent=0 // pred_check_branch
    %12 = sbr.rel (0) target = $region9
  $region8: #{se_block_pallas.1} parent=0 // pred_region
    _
  $region9: #{se_block_pallas.1} parent=0 // pred_fallthru
    _
  // Predicated region
  $region10: #{se_block_pallas.1} parent=0 // pred_check
    _
  $region11: #{se_block_pallas.1} parent=0 // pred_check_branch
    %14 = sbr.rel (0) target = $region13
  $region12: #{se_block_pallas.1} parent=0 // pred_region
    _
  $region13: #{se_block_pallas.1} parent=0 // pred_fallthru
    _
  // Predicated region
  $region14: #{se_block_pallas.1} parent=0 // pred_check
    _
  $region15: #{se_block_pallas.1} parent=0 // pred_check_branch
    %16 = sbr.rel (0) target = $region17
  $region16: #{se_block_pallas.1} parent=0 // pred_region
    _
  $region17: #{se_block_pallas.1} parent=0 // pred_fallthru
    _
  %v17 = vld [vmem:[%s3] sm:$0xff]
  %v18 = vld [vmem:[%s3 + $0x8] sm:$0xff]
  %v19 = vld [vmem:[%s3 + $0x10] sm:$0xff]
  %v20 = vld [vmem:[%s3 + $0x18] sm:$0xff]
  %v21 = vld [vmem:[%s0] sm:$0xff]
  %v22 = vld [vmem:[%s0 + $0x8] sm:$0xff]
  %v23 = vld [vmem:[%s0 + $0x10] sm:$0xff]
  %v24 = vld [vmem:[%s0 + $0x18] sm:$0xff]
  %v25 = vld [vmem:[%s0 + $0x20] sm:$0xff]
  %v26 = vld [vmem:[%s0 + $0x28] sm:$0xff]
  %v27 = vld [vmem:[%s0 + $0x30] sm:$0xff]
  %v28 = vld [vmem:[%s0 + $0x38] sm:$0xff]
  %v29 = vld [vmem:[%s0 + $0x40] sm:$0xff]
  %v30 = vld [vmem:[%s0 + $0x48] sm:$0xff]
  %v31 = vld [vmem:[%s0 + $0x50] sm:$0xff]
  %v32 = vld [vmem:[%s0 + $0x58] sm:$0xff]
  %v33 = vld [vmem:[%s0 + $0x60] sm:$0xff]
  %v34 = vld [vmem:[%s0 + $0x68] sm:$0xff]
  %v35 = vld [vmem:[%s0 + $0x70] sm:$0xff]
  %v36 = vld [vmem:[%s0 + $0x78] sm:$0xff]
  %vm37 = vcmask 261120
  %v39 = vsel %vm37, %v17, 0
  %v42 = vsel %vm37, %v18, 0
  %v45 = vsel %vm37, %v19, 0
  %v48 = vsel %vm37, %v20, 0
  %50 = vmatpush.msra.mxu0 0.0
  %51 = vmatpush.msra.mxu0 0.0
  %52 = vmatpush.msra.mxu0 0.0
  %53 = vmatpush.msra.mxu0 0.0
  %54 = vmatpush.msra.mxu0 0.0
  %55 = vmatpush.msra.mxu0 0.0
  %56 = vmatpush.msra.mxu0 0.0
  %57 = vmatpush.msra.mxu0 0.0
  %58 = vmatpush.msra.mxu0 0.0
  %59 = vmatpush.msra.mxu0 0.0
  %60 = vmatpush.msra.mxu0 0.0
  %61 = vmatpush.msra.mxu0 0.0
  %62 = vmatpush.msra.mxu0 %v33
  %63 = vmatpush.msra.mxu0 %v29
  %64 = vmatpush.msra.mxu0 %v25
  %65 = vmatpush.msra.mxu0 %v21
  %66 = vmatmul.f32.gmra.mxu0 %v39
  %v67 = vpop.f32.mrf.mxu0
  %v68 = vadd.f32 0.0, %v67
  %69 = vmatmul.f32.gmra.mxu0 %v42
  %v70 = vpop.f32.mrf.mxu0
  %v71 = vadd.f32 0.0, %v70
  %72 = vmatmul.f32.gmra.mxu0 %v45
  %v73 = vpop.f32.mrf.mxu0
  %v74 = vadd.f32 0.0, %v73
  %75 = vmatmul.f32.gmra.mxu0 %v48
  %v76 = vpop.f32.mrf.mxu0
  %v77 = vadd.f32 0.0, %v76
  %78 = vdwg.mxu0
  %79 = vmatpush.msra.mxu0 0.0
  %80 = vmatpush.msra.mxu0 0.0
  %81 = vmatpush.msra.mxu0 0.0
  %82 = vmatpush.msra.mxu0 0.0
  %83 = vmatpush.msra.mxu0 0.0
  %84 = vmatpush.msra.mxu0 0.0
  %85 = vmatpush.msra.mxu0 0.0
  %86 = vmatpush.msra.mxu0 0.0
  %87 = vmatpush.msra.mxu0 0.0
  %88 = vmatpush.msra.mxu0 0.0
  %89 = vmatpush.msra.mxu0 0.0
  %90 = vmatpush.msra.mxu0 0.0
  %91 = vmatpush.msra.mxu0 %v34
  %92 = vmatpush.msra.mxu0 %v30
  %93 = vmatpush.msra.mxu0 %v26
  %94 = vmatpush.msra.mxu0 %v22
  %95 = vmatmul.f32.gmra.mxu0 %v39
  %v96 = vpop.f32.mrf.mxu0
  %v97 = vadd.f32 0.0, %v96
  %98 = vmatmul.f32.gmra.mxu0 %v42
  %v99 = vpop.f32.mrf.mxu0
  %v100 = vadd.f32 0.0, %v99
  %101 = vmatmul.f32.gmra.mxu0 %v45
  %v102 = vpop.f32.mrf.mxu0
  %v103 = vadd.f32 0.0, %v102
  %104 = vmatmul.f32.gmra.mxu0 %v48
  %v105 = vpop.f32.mrf.mxu0
  %v106 = vadd.f32 0.0, %v105
  %107 = vdwg.mxu0
  %108 = vmatpush.msra.mxu0 0.0
  %109 = vmatpush.msra.mxu0 0.0
  %110 = vmatpush.msra.mxu0 0.0
  %111 = vmatpush.msra.mxu0 0.0
  %112 = vmatpush.msra.mxu0 0.0
  %113 = vmatpush.msra.mxu0 0.0
  %114 = vmatpush.msra.mxu0 0.0
  %115 = vmatpush.msra.mxu0 0.0
  %116 = vmatpush.msra.mxu0 0.0
  %117 = vmatpush.msra.mxu0 0.0
  %118 = vmatpush.msra.mxu0 0.0
  %119 = vmatpush.msra.mxu0 0.0
  %120 = vmatpush.msra.mxu0 %v35
  %121 = vmatpush.msra.mxu0 %v31
  %122 = vmatpush.msra.mxu0 %v27
  %123 = vmatpush.msra.mxu0 %v23
  %124 = vmatmul.f32.gmra.mxu0 %v39
  %v125 = vpop.f32.mrf.mxu0
  %v126 = vadd.f32 0.0, %v125
  %127 = vmatmul.f32.gmra.mxu0 %v42
  %v128 = vpop.f32.mrf.mxu0
  %v129 = vadd.f32 0.0, %v128
  %130 = vmatmul.f32.gmra.mxu0 %v45
  %v131 = vpop.f32.mrf.mxu0
  %v132 = vadd.f32 0.0, %v131
  %133 = vmatmul.f32.gmra.mxu0 %v48
  %v134 = vpop.f32.mrf.mxu0
  %v135 = vadd.f32 0.0, %v134
  %136 = vdwg.mxu0
  %137 = vmatpush.msra.mxu0 0.0
  %138 = vmatpush.msra.mxu0 0.0
  %139 = vmatpush.msra.mxu0 0.0
  %140 = vmatpush.msra.mxu0 0.0
  %141 = vmatpush.msra.mxu0 0.0
  %142 = vmatpush.msra.mxu0 0.0
  %143 = vmatpush.msra.mxu0 0.0
  %144 = vmatpush.msra.mxu0 0.0
  %145 = vmatpush.msra.mxu0 0.0
  %146 = vmatpush.msra.mxu0 0.0
  %147 = vmatpush.msra.mxu0 0.0
  %148 = vmatpush.msra.mxu0 0.0
  %149 = vmatpush.msra.mxu0 %v36
  %150 = vmatpush.msra.mxu0 %v32
  %151 = vmatpush.msra.mxu0 %v28
  %152 = vmatpush.msra.mxu0 %v24
  %153 = vmatmul.f32.gmra.mxu0 %v39
  %v154 = vpop.f32.mrf.mxu0
  %v155 = vadd.f32 0.0, %v154
  %156 = vmatmul.f32.gmra.mxu0 %v42
  %v157 = vpop.f32.mrf.mxu0
  %v158 = vadd.f32 0.0, %v157
  %159 = vmatmul.f32.gmra.mxu0 %v45
  %v160 = vpop.f32.mrf.mxu0
  %v161 = vadd.f32 0.0, %v160
  %162 = vmatmul.f32.gmra.mxu0 %v48
  %v163 = vpop.f32.mrf.mxu0
  %v164 = vadd.f32 0.0, %v163
  %165 = vdwg.mxu0
  %v166 = vadd.f32 %v68, %v97
  %v167 = vadd.f32 %v166, %v126
  %v168 = vadd.f32 %v167, %v155
  %169 = vadd.xlane.f32.xlu0 %v168
  %v170 = vpop.xlane.xlu0 %169
  %v171 = vadd.f32 %v71, %v100
  %v172 = vadd.f32 %v171, %v129
  %v173 = vadd.f32 %v172, %v158
  %174 = vadd.xlane.f32.xlu0 %v173
  %v175 = vpop.xlane.xlu0 %174
  %v176 = vadd.f32 %v74, %v103
  %v177 = vadd.f32 %v176, %v132
  %v178 = vadd.f32 %v177, %v161
  %179 = vadd.xlane.f32.xlu0 %v178
  %v180 = vpop.xlane.xlu0 %179
  %v181 = vadd.f32 %v77, %v106
  %v182 = vadd.f32 %v181, %v135
  %v183 = vadd.f32 %v182, %v164
  %184 = vadd.xlane.f32.xlu0 %v183
  %v185 = vpop.xlane.xlu0 %184
  %v186 = vadd.f32 %v170, %v180
  %v187 = vadd.f32 %v175, %v185
  %v188 = vmul.f32 %v186, 0.0009765625
  %v189 = vmul.f32 %v187, 0.0009765625
  %191 = vset.pattern.permute.xlu0 0
  %192 = vperm.xlu0 %191, %v188
  %v193 = vpop.permute.xlu0 %192
  %196 = vset.pattern.permute.xlu0 0
  %197 = vperm.xlu0 %196, %v189
  %v198 = vpop.permute.xlu0 %197
  %v200 = vsub.f32 %v68, %v193
  %v201 = vsub.f32 %v97, %v193
  %v202 = vsub.f32 %v126, %v193
  %v203 = vsub.f32 %v155, %v193
  %v204 = vsub.f32 %v71, %v198
  %v205 = vsub.f32 %v100, %v198
  %v206 = vsub.f32 %v129, %v198
  %v207 = vsub.f32 %v158, %v198
  %v208 = vsub.f32 %v74, %v193
  %v209 = vsub.f32 %v103, %v193
  %v210 = vsub.f32 %v132, %v193
  %v211 = vsub.f32 %v161, %v193
  %v212 = vsub.f32 %v77, %v198
  %v213 = vsub.f32 %v106, %v198
  %v214 = vsub.f32 %v135, %v198
  %v215 = vsub.f32 %v164, %v198
  %v216 = vmul.f32 %v200, %v200
  %v217 = vmul.f32 %v201, %v201
  %v218 = vmul.f32 %v202, %v202
  %v219 = vmul.f32 %v203, %v203
  %v220 = vmul.f32 %v204, %v204
  %v221 = vmul.f32 %v205, %v205
  %v222 = vmul.f32 %v206, %v206
  %v223 = vmul.f32 %v207, %v207
  %v224 = vmul.f32 %v208, %v208
  %v225 = vmul.f32 %v209, %v209
  %v226 = vmul.f32 %v210, %v210
  %v227 = vmul.f32 %v211, %v211
  %v228 = vmul.f32 %v212, %v212
  %v229 = vmul.f32 %v213, %v213
  %v230 = vmul.f32 %v214, %v214
  %v231 = vmul.f32 %v215, %v215
  %v232 = vadd.f32 %v216, %v217
  %v233 = vadd.f32 %v232, %v218
  %v234 = vadd.f32 %v233, %v219
  %235 = vadd.xlane.f32.xlu0 %v234
  %v236 = vpop.xlane.xlu0 %235
  %v237 = vadd.f32 %v220, %v221
  %v238 = vadd.f32 %v237, %v222
  %v239 = vadd.f32 %v238, %v223
  %240 = vadd.xlane.f32.xlu0 %v239
  %v241 = vpop.xlane.xlu0 %240
  %v242 = vadd.f32 %v224, %v225
  %v243 = vadd.f32 %v242, %v226
  %v244 = vadd.f32 %v243, %v227
  %245 = vadd.xlane.f32.xlu0 %v244
  %v246 = vpop.xlane.xlu0 %245
  %v247 = vadd.f32 %v228, %v229
  %v248 = vadd.f32 %v247, %v230
  %v249 = vadd.f32 %v248, %v231
  %250 = vadd.xlane.f32.xlu0 %v249
  %v251 = vpop.xlane.xlu0 %250
  %v252 = vadd.f32 %v236, %v246
  %v253 = vadd.f32 %v241, %v251
  %v254 = vmul.f32 %v252, 0.0009765625
  %v255 = vmul.f32 %v253, 0.0009765625
  %v256 = vadd.f32 %v254, 1e-05
  %v257 = vadd.f32 %v255, 1e-05
  %v258 = vrsqrt.pop %v256
  %v259 = vmul.f32 %v258, %v256
  %v260 = vmul.f32 %v259, %v258
  %v261 = vmul.f32 0.5, %v260
  %v262 = vsub.f32 1.5, %v261
  %v263 = vmul.f32 %v258, %v262
  %vm264 = vweird.f32 %v256
  %vm265 = vweird.f32 %v258
  %vm266 = vmor %vm264, %vm265
  %v267 = vsel %vm266, %v258, %v263
  %v268 = vrsqrt.pop %v257
  %v269 = vmul.f32 %v268, %v257
  %v270 = vmul.f32 %v269, %v268
  %v271 = vmul.f32 0.5, %v270
  %v272 = vsub.f32 1.5, %v271
  %v273 = vmul.f32 %v268, %v272
  %vm274 = vweird.f32 %v257
  %vm275 = vweird.f32 %v268
  %vm276 = vmor %vm274, %vm275
  %v277 = vsel %vm276, %v268, %v273
  %280 = vrot.lane.b32.xlu0 %v267, 104
  %v281 = vpop.permute.xlu0 %280
  %282 = vrot.lane.b32.xlu0 %v277, 104
  %v283 = vpop.permute.xlu0 %282
  %v286 = vmul.f32 %v17, %v281
  %v287 = vmul.f32 %v18, %v283
  %v288 = vmul.f32 %v19, %v281
  %v289 = vmul.f32 %v20, %v283
  %291 = vset.pattern.permute.xlu0 104
  %292 = vperm.xlu0 %291, %v286
  %v293 = vpop.permute.xlu0 %292
  %296 = vset.pattern.permute.xlu0 104
  %297 = vperm.xlu0 %296, %v287
  %v298 = vpop.permute.xlu0 %297
  %301 = vset.pattern.permute.xlu0 104
  %302 = vperm.xlu0 %301, %v288
  %v303 = vpop.permute.xlu0 %302
  %306 = vset.pattern.permute.xlu0 104
  %307 = vperm.xlu0 %306, %v289
  %v308 = vpop.permute.xlu0 %307
  %v310 = vmul.f32 %v200, %v293
  %v311 = vmul.f32 %v201, %v293
  %v312 = vmul.f32 %v202, %v293
  %v313 = vmul.f32 %v203, %v293
  %v314 = vmul.f32 %v204, %v298
  %v315 = vmul.f32 %v205, %v298
  %v316 = vmul.f32 %v206, %v298
  %v317 = vmul.f32 %v207, %v298
  %v318 = vmul.f32 %v208, %v303
  %v319 = vmul.f32 %v209, %v303
  %v320 = vmul.f32 %v210, %v303
  %v321 = vmul.f32 %v211, %v303
  %v322 = vmul.f32 %v212, %v308
  %v323 = vmul.f32 %v213, %v308
  %v324 = vmul.f32 %v214, %v308
  %v325 = vmul.f32 %v215, %v308
  %326 = vset.pattern.permute.xlu0 105
  %327 = vperm.xlu0 %326, %v17
  %v328 = vpop.permute.xlu0 %327
  %330 = vset.pattern.permute.xlu0 105
  %331 = vperm.xlu0 %330, %v18
  %v332 = vpop.permute.xlu0 %331
  %334 = vset.pattern.permute.xlu0 105
  %335 = vperm.xlu0 %334, %v19
  %v336 = vpop.permute.xlu0 %335
  %338 = vset.pattern.permute.xlu0 105
  %339 = vperm.xlu0 %338, %v20
  %v340 = vpop.permute.xlu0 %339
  %v342 = vadd.f32 %v310, %v328
  %v343 = vadd.f32 %v311, %v328
  %v344 = vadd.f32 %v312, %v328
  %v345 = vadd.f32 %v313, %v328
  %v346 = vadd.f32 %v314, %v332
  %v347 = vadd.f32 %v315, %v332
  %v348 = vadd.f32 %v316, %v332
  %v349 = vadd.f32 %v317, %v332
  %v350 = vadd.f32 %v318, %v336
  %v351 = vadd.f32 %v319, %v336
  %v352 = vadd.f32 %v320, %v336
  %v353 = vadd.f32 %v321, %v336
  %v354 = vadd.f32 %v322, %v340
  %v355 = vadd.f32 %v323, %v340
  %v356 = vadd.f32 %v324, %v340
  %v357 = vadd.f32 %v325, %v340
  %v358 = vmax.f32 %v342, 0.0
  %v359 = vmax.f32 %v343, 0.0
  %v360 = vmax.f32 %v344, 0.0
  %v361 = vmax.f32 %v345, 0.0
  %v362 = vmax.f32 %v346, 0.0
  %v363 = vmax.f32 %v347, 0.0
  %v364 = vmax.f32 %v348, 0.0
  %v365 = vmax.f32 %v349, 0.0
  %v366 = vmax.f32 %v350, 0.0
  %v367 = vmax.f32 %v351, 0.0
  %v368 = vmax.f32 %v352, 0.0
  %v369 = vmax.f32 %v353, 0.0
  %v370 = vmax.f32 %v354, 0.0
  %v371 = vmax.f32 %v355, 0.0
  %v372 = vmax.f32 %v356, 0.0
  %v373 = vmax.f32 %v357, 0.0
  %v374 = vld [vmem:[%s2 + $0x18] sm:$0xff]
  %v375 = vld [vmem:[%s2 + $0x50] sm:$0xff]
  %v376 = vld [vmem:[%s2 + $0x88] sm:$0xff]
  %v377 = vld [vmem:[%s2 + $0xc0] sm:$0xff]
  %378 = vrot.lane.b32.xlu0 %v358, 73
  %v379 = vpop.permute.xlu0 %378
  %380 = vrot.lane.b32.xlu0 %v362, 73
  %v381 = vpop.permute.xlu0 %380
  %382 = vrot.lane.b32.xlu0 %v366, 73
  %v383 = vpop.permute.xlu0 %382
  %384 = vrot.lane.b32.xlu0 %v370, 73
  %v385 = vpop.permute.xlu0 %384
  %386 = vrot.lane.b32.xlu0 %v359, 73
  %v387 = vpop.permute.xlu0 %386
  %388 = vrot.lane.b32.xlu0 %v363, 73
  %v389 = vpop.permute.xlu0 %388
  %390 = vrot.lane.b32.xlu0 %v367, 73
  %v391 = vpop.permute.xlu0 %390
  %392 = vrot.lane.b32.xlu0 %v371, 73
  %v393 = vpop.permute.xlu0 %392
  %394 = vrot.lane.b32.xlu0 %v360, 73
  %v395 = vpop.permute.xlu0 %394
  %396 = vrot.lane.b32.xlu0 %v364, 73
  %v397 = vpop.permute.xlu0 %396
  %398 = vrot.lane.b32.xlu0 %v368, 73
  %v399 = vpop.permute.xlu0 %398
  %400 = vrot.lane.b32.xlu0 %v372, 73
  %v401 = vpop.permute.xlu0 %400
  %402 = vrot.lane.b32.xlu0 %v361, 73
  %v403 = vpop.permute.xlu0 %402
  %404 = vrot.lane.b32.xlu0 %v365, 73
  %v405 = vpop.permute.xlu0 %404
  %406 = vrot.lane.b32.xlu0 %v369, 73
  %v407 = vpop.permute.xlu0 %406
  %408 = vrot.lane.b32.xlu0 %v373, 73
  %v409 = vpop.permute.xlu0 %408
  %v410 = vlaneseq
  %v411 = vand.u32 %v410, 127
  %vm412 = vcmp.lt.s32.totalorder %v411, 73
  %v413 = vsel %vm412, %v395, %v403
  %v414 = vsel %vm412, %v397, %v405
  %v415 = vsel %vm412, %v399, %v407
  %v416 = vsel %vm412, %v401, %v409
  %v417 = vsel %vm412, %v387, %v395
  %v418 = vsel %vm412, %v389, %v397
  %v419 = vsel %vm412, %v391, %v399
  %v420 = vsel %vm412, %v393, %v401
  %v421 = vsel %vm412, %v379, %v387
  %v422 = vsel %vm412, %v381, %v389
  %v423 = vsel %vm412, %v383, %v391
  %v424 = vsel %vm412, %v385, %v393
  %v425 = vsel %vm412, %v403, %v379
  %v426 = vsel %vm412, %v405, %v381
  %v427 = vsel %vm412, %v407, %v383
  %v428 = vsel %vm412, %v409, %v385
  %v429 = vld [vmem:[%s1] ss:$8 sm:$0xf]
  %v431 = vperm.slane %v429, 0
  %v432 = vperm.slane %v429, 1
  %v433 = vperm.slane %v429, 2
  %v434 = vperm.slane %v429, 3
  %v439 = vmul.f32 %v425, %v431
  %v440 = vmul.f32 %v421, %v432
  %v441 = vmul.f32 %v417, %v433
  %v442 = vmul.f32 %v413, %v434
  %v443 = vmul.f32 %v426, %v431
  %v444 = vmul.f32 %v422, %v432
  %v445 = vmul.f32 %v418, %v433
  %v446 = vmul.f32 %v414, %v434
  %v447 = vmul.f32 %v427, %v431
  %v448 = vmul.f32 %v423, %v432
  %v449 = vmul.f32 %v419, %v433
  %v450 = vmul.f32 %v415, %v434
  %v451 = vmul.f32 %v428, %v431
  %v452 = vmul.f32 %v424, %v432
  %v453 = vmul.f32 %v420, %v433
  %v454 = vmul.f32 %v416, %v434
  %v455 = vld [vmem:[%s2] sm:$0xff]
  %v456 = vld [vmem:[%s2 + $0x38] sm:$0xff]
  %v457 = vld [vmem:[%s2 + $0x70] sm:$0xff]
  %v458 = vld [vmem:[%s2 + $0xa8] sm:$0xff]
  %v460 = vsel %vm37, %v455, 0
  %v463 = vsel %vm37, %v456, 0
  %v466 = vsel %vm37, %v457, 0
  %v469 = vsel %vm37, %v458, 0
  %471 = vmatpush.msra.mxu0 0.0
  %472 = vmatpush.msra.mxu0 0.0
  %473 = vmatpush.msra.mxu0 0.0
  %474 = vmatpush.msra.mxu0 0.0
  %475 = vmatpush.msra.mxu0 0.0
  %476 = vmatpush.msra.mxu0 0.0
  %477 = vmatpush.msra.mxu0 0.0
  %478 = vmatpush.msra.mxu0 0.0
  %479 = vmatpush.msra.mxu0 0.0
  %480 = vmatpush.msra.mxu0 0.0
  %481 = vmatpush.msra.mxu0 0.0
  %482 = vmatpush.msra.mxu0 0.0
  %483 = vmatpush.msra.mxu0 %v451
  %484 = vmatpush.msra.mxu0 %v447
  %485 = vmatpush.msra.mxu0 %v443
  %486 = vmatpush.msra.mxu0 %v439
  %487 = vmatmul.f32.gmra.mxu0 %v460
  %v488 = vpop.f32.mrf.mxu0
  %v489 = vadd.f32 0.0, %v488
  %490 = vmatmul.f32.gmra.mxu0 %v463
  %v491 = vpop.f32.mrf.mxu0
  %v492 = vadd.f32 0.0, %v491
  %493 = vmatmul.f32.gmra.mxu0 %v466
  %v494 = vpop.f32.mrf.mxu0
  %v495 = vadd.f32 0.0, %v494
  %496 = vmatmul.f32.gmra.mxu0 %v469
  %v497 = vpop.f32.mrf.mxu0
  %v498 = vadd.f32 0.0, %v497
  %499 = vdwg.mxu0
  %500 = vmatpush.msra.mxu0 0.0
  %501 = vmatpush.msra.mxu0 0.0
  %502 = vmatpush.msra.mxu0 0.0
  %503 = vmatpush.msra.mxu0 0.0
  %504 = vmatpush.msra.mxu0 0.0
  %505 = vmatpush.msra.mxu0 0.0
  %506 = vmatpush.msra.mxu0 0.0
  %507 = vmatpush.msra.mxu0 0.0
  %508 = vmatpush.msra.mxu0 0.0
  %509 = vmatpush.msra.mxu0 0.0
  %510 = vmatpush.msra.mxu0 0.0
  %511 = vmatpush.msra.mxu0 0.0
  %512 = vmatpush.msra.mxu0 %v452
  %513 = vmatpush.msra.mxu0 %v448
  %514 = vmatpush.msra.mxu0 %v444
  %515 = vmatpush.msra.mxu0 %v440
  %516 = vmatmul.f32.gmra.mxu0 %v460
  %v517 = vpop.f32.mrf.mxu0
  %v518 = vadd.f32 0.0, %v517
  %519 = vmatmul.f32.gmra.mxu0 %v463
  %v520 = vpop.f32.mrf.mxu0
  %v521 = vadd.f32 0.0, %v520
  %522 = vmatmul.f32.gmra.mxu0 %v466
  %v523 = vpop.f32.mrf.mxu0
  %v524 = vadd.f32 0.0, %v523
  %525 = vmatmul.f32.gmra.mxu0 %v469
  %v526 = vpop.f32.mrf.mxu0
  %v527 = vadd.f32 0.0, %v526
  %528 = vdwg.mxu0
  %529 = vmatpush.msra.mxu0 0.0
  %530 = vmatpush.msra.mxu0 0.0
  %531 = vmatpush.msra.mxu0 0.0
  %532 = vmatpush.msra.mxu0 0.0
  %533 = vmatpush.msra.mxu0 0.0
  %534 = vmatpush.msra.mxu0 0.0
  %535 = vmatpush.msra.mxu0 0.0
  %536 = vmatpush.msra.mxu0 0.0
  %537 = vmatpush.msra.mxu0 0.0
  %538 = vmatpush.msra.mxu0 0.0
  %539 = vmatpush.msra.mxu0 0.0
  %540 = vmatpush.msra.mxu0 0.0
  %541 = vmatpush.msra.mxu0 %v453
  %542 = vmatpush.msra.mxu0 %v449
  %543 = vmatpush.msra.mxu0 %v445
  %544 = vmatpush.msra.mxu0 %v441
  %545 = vmatmul.f32.gmra.mxu0 %v460
  %v546 = vpop.f32.mrf.mxu0
  %v547 = vadd.f32 0.0, %v546
  %548 = vmatmul.f32.gmra.mxu0 %v463
  %v549 = vpop.f32.mrf.mxu0
  %v550 = vadd.f32 0.0, %v549
  %551 = vmatmul.f32.gmra.mxu0 %v466
  %v552 = vpop.f32.mrf.mxu0
  %v553 = vadd.f32 0.0, %v552
  %554 = vmatmul.f32.gmra.mxu0 %v469
  %v555 = vpop.f32.mrf.mxu0
  %v556 = vadd.f32 0.0, %v555
  %557 = vdwg.mxu0
  %558 = vmatpush.msra.mxu0 0.0
  %559 = vmatpush.msra.mxu0 0.0
  %560 = vmatpush.msra.mxu0 0.0
  %561 = vmatpush.msra.mxu0 0.0
  %562 = vmatpush.msra.mxu0 0.0
  %563 = vmatpush.msra.mxu0 0.0
  %564 = vmatpush.msra.mxu0 0.0
  %565 = vmatpush.msra.mxu0 0.0
  %566 = vmatpush.msra.mxu0 0.0
  %567 = vmatpush.msra.mxu0 0.0
  %568 = vmatpush.msra.mxu0 0.0
  %569 = vmatpush.msra.mxu0 0.0
  %570 = vmatpush.msra.mxu0 %v454
  %571 = vmatpush.msra.mxu0 %v450
  %572 = vmatpush.msra.mxu0 %v446
  %573 = vmatpush.msra.mxu0 %v442
  %574 = vmatmul.f32.gmra.mxu0 %v460
  %v575 = vpop.f32.mrf.mxu0
  %v576 = vadd.f32 0.0, %v575
  %577 = vmatmul.f32.gmra.mxu0 %v463
  %v578 = vpop.f32.mrf.mxu0
  %v579 = vadd.f32 0.0, %v578
  %580 = vmatmul.f32.gmra.mxu0 %v466
  %v581 = vpop.f32.mrf.mxu0
  %v582 = vadd.f32 0.0, %v581
  %583 = vmatmul.f32.gmra.mxu0 %v469
  %v584 = vpop.f32.mrf.mxu0
  %v585 = vadd.f32 0.0, %v584
  %586 = vdwg.mxu0
  %591 = vrot.lane.b32.xlu0 %v374, 96
  %v592 = vpop.permute.xlu0 %591
  %593 = vrot.lane.b32.xlu0 %v375, 96
  %v594 = vpop.permute.xlu0 %593
  %595 = vrot.lane.b32.xlu0 %v376, 96
  %v596 = vpop.permute.xlu0 %595
  %597 = vrot.lane.b32.xlu0 %v377, 96
  %v598 = vpop.permute.xlu0 %597
  %v599 = vsel %vm37, %v592, 0
  %v601 = vsel %vm37, %v594, 0
  %v603 = vsel %vm37, %v596, 0
  %v605 = vsel %vm37, %v598, 0
  %607 = vmatpush.msra.mxu0 0.0
  %608 = vmatpush.msra.mxu0 0.0
  %609 = vmatpush.msra.mxu0 0.0
  %610 = vmatpush.msra.mxu0 0.0
  %611 = vmatpush.msra.mxu0 0.0
  %612 = vmatpush.msra.mxu0 0.0
  %613 = vmatpush.msra.mxu0 0.0
  %614 = vmatpush.msra.mxu0 0.0
  %615 = vmatpush.msra.mxu0 0.0
  %616 = vmatpush.msra.mxu0 0.0
  %617 = vmatpush.msra.mxu0 0.0
  %618 = vmatpush.msra.mxu0 0.0
  %619 = vmatpush.msra.mxu0 %v370
  %620 = vmatpush.msra.mxu0 %v366
  %621 = vmatpush.msra.mxu0 %v362
  %622 = vmatpush.msra.mxu0 %v358
  %623 = vmatmul.f32.gmra.mxu0 %v599
  %v624 = vpop.f32.mrf.mxu0
  %v625 = vadd.f32 %v489, %v624
  %626 = vmatmul.f32.gmra.mxu0 %v601
  %v627 = vpop.f32.mrf.mxu0
  %v628 = vadd.f32 %v492, %v627
  %629 = vmatmul.f32.gmra.mxu0 %v603
  %v630 = vpop.f32.mrf.mxu0
  %v631 = vadd.f32 %v495, %v630
  %632 = vmatmul.f32.gmra.mxu0 %v605
  %v633 = vpop.f32.mrf.mxu0
  %v634 = vadd.f32 %v498, %v633
  %635 = vdwg.mxu0
  %636 = vmatpush.msra.mxu0 0.0
  %637 = vmatpush.msra.mxu0 0.0
  %638 = vmatpush.msra.mxu0 0.0
  %639 = vmatpush.msra.mxu0 0.0
  %640 = vmatpush.msra.mxu0 0.0
  %641 = vmatpush.msra.mxu0 0.0
  %642 = vmatpush.msra.mxu0 0.0
  %643 = vmatpush.msra.mxu0 0.0
  %644 = vmatpush.msra.mxu0 0.0
  %645 = vmatpush.msra.mxu0 0.0
  %646 = vmatpush.msra.mxu0 0.0
  %647 = vmatpush.msra.mxu0 0.0
  %648 = vmatpush.msra.mxu0 %v371
  %649 = vmatpush.msra.mxu0 %v367
  %650 = vmatpush.msra.mxu0 %v363
  %651 = vmatpush.msra.mxu0 %v359
  %652 = vmatmul.f32.gmra.mxu0 %v599
  %v653 = vpop.f32.mrf.mxu0
  %v654 = vadd.f32 %v518, %v653
  %655 = vmatmul.f32.gmra.mxu0 %v601
  %v656 = vpop.f32.mrf.mxu0
  %v657 = vadd.f32 %v521, %v656
  %658 = vmatmul.f32.gmra.mxu0 %v603
  %v659 = vpop.f32.mrf.mxu0
  %v660 = vadd.f32 %v524, %v659
  %661 = vmatmul.f32.gmra.mxu0 %v605
  %v662 = vpop.f32.mrf.mxu0
  %v663 = vadd.f32 %v527, %v662
  %664 = vdwg.mxu0
  %665 = vmatpush.msra.mxu0 0.0
  %666 = vmatpush.msra.mxu0 0.0
  %667 = vmatpush.msra.mxu0 0.0
  %668 = vmatpush.msra.mxu0 0.0
  %669 = vmatpush.msra.mxu0 0.0
  %670 = vmatpush.msra.mxu0 0.0
  %671 = vmatpush.msra.mxu0 0.0
  %672 = vmatpush.msra.mxu0 0.0
  %673 = vmatpush.msra.mxu0 0.0
  %674 = vmatpush.msra.mxu0 0.0
  %675 = vmatpush.msra.mxu0 0.0
  %676 = vmatpush.msra.mxu0 0.0
  %677 = vmatpush.msra.mxu0 %v372
  %678 = vmatpush.msra.mxu0 %v368
  %679 = vmatpush.msra.mxu0 %v364
  %680 = vmatpush.msra.mxu0 %v360
  %681 = vmatmul.f32.gmra.mxu0 %v599
  %v682 = vpop.f32.mrf.mxu0
  %v683 = vadd.f32 %v547, %v682
  %684 = vmatmul.f32.gmra.mxu0 %v601
  %v685 = vpop.f32.mrf.mxu0
  %v686 = vadd.f32 %v550, %v685
  %687 = vmatmul.f32.gmra.mxu0 %v603
  %v688 = vpop.f32.mrf.mxu0
  %v689 = vadd.f32 %v553, %v688
  %690 = vmatmul.f32.gmra.mxu0 %v605
  %v691 = vpop.f32.mrf.mxu0
  %v692 = vadd.f32 %v556, %v691
  %693 = vdwg.mxu0
  %694 = vmatpush.msra.mxu0 0.0
  %695 = vmatpush.msra.mxu0 0.0
  %696 = vmatpush.msra.mxu0 0.0
  %697 = vmatpush.msra.mxu0 0.0
  %698 = vmatpush.msra.mxu0 0.0
  %699 = vmatpush.msra.mxu0 0.0
  %700 = vmatpush.msra.mxu0 0.0
  %701 = vmatpush.msra.mxu0 0.0
  %702 = vmatpush.msra.mxu0 0.0
  %703 = vmatpush.msra.mxu0 0.0
  %704 = vmatpush.msra.mxu0 0.0
  %705 = vmatpush.msra.mxu0 0.0
  %706 = vmatpush.msra.mxu0 %v373
  %707 = vmatpush.msra.mxu0 %v369
  %708 = vmatpush.msra.mxu0 %v365
  %709 = vmatpush.msra.mxu0 %v361
  %710 = vmatmul.f32.gmra.mxu0 %v599
  %v711 = vpop.f32.mrf.mxu0
  %v712 = vadd.f32 %v576, %v711
  %713 = vmatmul.f32.gmra.mxu0 %v601
  %v714 = vpop.f32.mrf.mxu0
  %v715 = vadd.f32 %v579, %v714
  %716 = vmatmul.f32.gmra.mxu0 %v603
  %v717 = vpop.f32.mrf.mxu0
  %v718 = vadd.f32 %v582, %v717
  %719 = vmatmul.f32.gmra.mxu0 %v605
  %v720 = vpop.f32.mrf.mxu0
  %v721 = vadd.f32 %v585, %v720
  %722 = vdwg.mxu0
  %723 = vrot.lane.b32.xlu0 %v358, 72
  %v724 = vpop.permute.xlu0 %723
  %725 = vrot.lane.b32.xlu0 %v362, 72
  %v726 = vpop.permute.xlu0 %725
  %727 = vrot.lane.b32.xlu0 %v366, 72
  %v728 = vpop.permute.xlu0 %727
  %729 = vrot.lane.b32.xlu0 %v370, 72
  %v730 = vpop.permute.xlu0 %729
  %731 = vrot.lane.b32.xlu0 %v359, 72
  %v732 = vpop.permute.xlu0 %731
  %733 = vrot.lane.b32.xlu0 %v363, 72
  %v734 = vpop.permute.xlu0 %733
  %735 = vrot.lane.b32.xlu0 %v367, 72
  %v736 = vpop.permute.xlu0 %735
  %737 = vrot.lane.b32.xlu0 %v371, 72
  %v738 = vpop.permute.xlu0 %737
  %739 = vrot.lane.b32.xlu0 %v360, 72
  %v740 = vpop.permute.xlu0 %739
  %741 = vrot.lane.b32.xlu0 %v364, 72
  %v742 = vpop.permute.xlu0 %741
  %743 = vrot.lane.b32.xlu0 %v368, 72
  %v744 = vpop.permute.xlu0 %743
  %745 = vrot.lane.b32.xlu0 %v372, 72
  %v746 = vpop.permute.xlu0 %745
  %747 = vrot.lane.b32.xlu0 %v361, 72
  %v748 = vpop.permute.xlu0 %747
  %749 = vrot.lane.b32.xlu0 %v365, 72
  %v750 = vpop.permute.xlu0 %749
  %751 = vrot.lane.b32.xlu0 %v369, 72
  %v752 = vpop.permute.xlu0 %751
  %753 = vrot.lane.b32.xlu0 %v373, 72
  %v754 = vpop.permute.xlu0 %753
  %vm755 = vcmp.lt.s32.totalorder %v411, 72
  %v756 = vsel %vm755, %v740, %v748
  %v757 = vsel %vm755, %v742, %v750
  %v758 = vsel %vm755, %v744, %v752
  %v759 = vsel %vm755, %v746, %v754
  %v760 = vsel %vm755, %v732, %v740
  %v761 = vsel %vm755, %v734, %v742
  %v762 = vsel %vm755, %v736, %v744
  %v763 = vsel %vm755, %v738, %v746
  %v764 = vsel %vm755, %v724, %v732
  %v765 = vsel %vm755, %v726, %v734
  %v766 = vsel %vm755, %v728, %v736
  %v767 = vsel %vm755, %v730, %v738
  %v768 = vsel %vm755, %v748, %v724
  %v769 = vsel %vm755, %v750, %v726
  %v770 = vsel %vm755, %v752, %v728
  %v771 = vsel %vm755, %v754, %v730
  %s772 = scalar_lea.vmem %s1, 1
  %v773 = vld [vmem:[%s772] ss:$8 sm:$0xf]
  %v775 = vperm.slane %v773, 0
  %v776 = vperm.slane %v773, 1
  %v777 = vperm.slane %v773, 2
  %v778 = vperm.slane %v773, 3
  %v783 = vmul.f32 %v768, %v775
  %v784 = vmul.f32 %v764, %v776
  %v785 = vmul.f32 %v760, %v777
  %v786 = vmul.f32 %v756, %v778
  %v787 = vmul.f32 %v769, %v775
  %v788 = vmul.f32 %v765, %v776
  %v789 = vmul.f32 %v761, %v777
  %v790 = vmul.f32 %v757, %v778
  %v791 = vmul.f32 %v770, %v775
  %v792 = vmul.f32 %v766, %v776
  %v793 = vmul.f32 %v762, %v777
  %v794 = vmul.f32 %v758, %v778
  %v795 = vmul.f32 %v771, %v775
  %v796 = vmul.f32 %v767, %v776
  %v797 = vmul.f32 %v763, %v777
  %v798 = vmul.f32 %v759, %v778
  %799 = vrot.lane.b32.xlu0 %v455, 96
  %v800 = vpop.permute.xlu0 %799
  %801 = vrot.lane.b32.xlu0 %v456, 96
  %v802 = vpop.permute.xlu0 %801
  %803 = vrot.lane.b32.xlu0 %v457, 96
  %v804 = vpop.permute.xlu0 %803
  %805 = vrot.lane.b32.xlu0 %v458, 96
  %v806 = vpop.permute.xlu0 %805
  %v807 = vsel %vm37, %v800, 0
  %v809 = vsel %vm37, %v802, 0
  %v811 = vsel %vm37, %v804, 0
  %v813 = vsel %vm37, %v806, 0
  %815 = vmatpush.msra.mxu0 0.0
  %816 = vmatpush.msra.mxu0 0.0
  %817 = vmatpush.msra.mxu0 0.0
  %818 = vmatpush.msra.mxu0 0.0
  %819 = vmatpush.msra.mxu0 0.0
  %820 = vmatpush.msra.mxu0 0.0
  %821 = vmatpush.msra.mxu0 0.0
  %822 = vmatpush.msra.mxu0 0.0
  %823 = vmatpush.msra.mxu0 0.0
  %824 = vmatpush.msra.mxu0 0.0
  %825 = vmatpush.msra.mxu0 0.0
  %826 = vmatpush.msra.mxu0 0.0
  %827 = vmatpush.msra.mxu0 %v795
  %828 = vmatpush.msra.mxu0 %v791
  %829 = vmatpush.msra.mxu0 %v787
  %830 = vmatpush.msra.mxu0 %v783
  %831 = vmatmul.f32.gmra.mxu0 %v807
  %v832 = vpop.f32.mrf.mxu0
  %v833 = vadd.f32 0.0, %v832
  %834 = vmatmul.f32.gmra.mxu0 %v809
  %v835 = vpop.f32.mrf.mxu0
  %v836 = vadd.f32 0.0, %v835
  %837 = vmatmul.f32.gmra.mxu0 %v811
  %v838 = vpop.f32.mrf.mxu0
  %v839 = vadd.f32 0.0, %v838
  %840 = vmatmul.f32.gmra.mxu0 %v813
  %v841 = vpop.f32.mrf.mxu0
  %v842 = vadd.f32 0.0, %v841
  %843 = vdwg.mxu0
  %844 = vmatpush.msra.mxu0 0.0
  %845 = vmatpush.msra.mxu0 0.0
  %846 = vmatpush.msra.mxu0 0.0
  %847 = vmatpush.msra.mxu0 0.0
  %848 = vmatpush.msra.mxu0 0.0
  %849 = vmatpush.msra.mxu0 0.0
  %850 = vmatpush.msra.mxu0 0.0
  %851 = vmatpush.msra.mxu0 0.0
  %852 = vmatpush.msra.mxu0 0.0
  %853 = vmatpush.msra.mxu0 0.0
  %854 = vmatpush.msra.mxu0 0.0
  %855 = vmatpush.msra.mxu0 0.0
  %856 = vmatpush.msra.mxu0 %v796
  %857 = vmatpush.msra.mxu0 %v792
  %858 = vmatpush.msra.mxu0 %v788
  %859 = vmatpush.msra.mxu0 %v784
  %860 = vmatmul.f32.gmra.mxu0 %v807
  %v861 = vpop.f32.mrf.mxu0
  %v862 = vadd.f32 0.0, %v861
  %863 = vmatmul.f32.gmra.mxu0 %v809
  %v864 = vpop.f32.mrf.mxu0
  %v865 = vadd.f32 0.0, %v864
  %866 = vmatmul.f32.gmra.mxu0 %v811
  %v867 = vpop.f32.mrf.mxu0
  %v868 = vadd.f32 0.0, %v867
  %869 = vmatmul.f32.gmra.mxu0 %v813
  %v870 = vpop.f32.mrf.mxu0
  %v871 = vadd.f32 0.0, %v870
  %872 = vdwg.mxu0
  %873 = vmatpush.msra.mxu0 0.0
  %874 = vmatpush.msra.mxu0 0.0
  %875 = vmatpush.msra.mxu0 0.0
  %876 = vmatpush.msra.mxu0 0.0
  %877 = vmatpush.msra.mxu0 0.0
  %878 = vmatpush.msra.mxu0 0.0
  %879 = vmatpush.msra.mxu0 0.0
  %880 = vmatpush.msra.mxu0 0.0
  %881 = vmatpush.msra.mxu0 0.0
  %882 = vmatpush.msra.mxu0 0.0
  %883 = vmatpush.msra.mxu0 0.0
  %884 = vmatpush.msra.mxu0 0.0
  %885 = vmatpush.msra.mxu0 %v797
  %886 = vmatpush.msra.mxu0 %v793
  %887 = vmatpush.msra.mxu0 %v789
  %888 = vmatpush.msra.mxu0 %v785
  %889 = vmatmul.f32.gmra.mxu0 %v807
  %v890 = vpop.f32.mrf.mxu0
  %v891 = vadd.f32 0.0, %v890
  %892 = vmatmul.f32.gmra.mxu0 %v809
  %v893 = vpop.f32.mrf.mxu0
  %v894 = vadd.f32 0.0, %v893
  %895 = vmatmul.f32.gmra.mxu0 %v811
  %v896 = vpop.f32.mrf.mxu0
  %v897 = vadd.f32 0.0, %v896
  %898 = vmatmul.f32.gmra.mxu0 %v813
  %v899 = vpop.f32.mrf.mxu0
  %v900 = vadd.f32 0.0, %v899
  %901 = vdwg.mxu0
  %902 = vmatpush.msra.mxu0 0.0
  %903 = vmatpush.msra.mxu0 0.0
  %904 = vmatpush.msra.mxu0 0.0
  %905 = vmatpush.msra.mxu0 0.0
  %906 = vmatpush.msra.mxu0 0.0
  %907 = vmatpush.msra.mxu0 0.0
  %908 = vmatpush.msra.mxu0 0.0
  %909 = vmatpush.msra.mxu0 0.0
  %910 = vmatpush.msra.mxu0 0.0
  %911 = vmatpush.msra.mxu0 0.0
  %912 = vmatpush.msra.mxu0 0.0
  %913 = vmatpush.msra.mxu0 0.0
  %914 = vmatpush.msra.mxu0 %v798
  %915 = vmatpush.msra.mxu0 %v794
  %916 = vmatpush.msra.mxu0 %v790
  %917 = vmatpush.msra.mxu0 %v786
  %918 = vmatmul.f32.gmra.mxu0 %v807
  %v919 = vpop.f32.mrf.mxu0
  %v920 = vadd.f32 0.0, %v919
  %921 = vmatmul.f32.gmra.mxu0 %v809
  %v922 = vpop.f32.mrf.mxu0
  %v923 = vadd.f32 0.0, %v922
  %924 = vmatmul.f32.gmra.mxu0 %v811
  %v925 = vpop.f32.mrf.mxu0
  %v926 = vadd.f32 0.0, %v925
  %927 = vmatmul.f32.gmra.mxu0 %v813
  %v928 = vpop.f32.mrf.mxu0
  %v929 = vadd.f32 0.0, %v928
  %930 = vdwg.mxu0
  %v931 = vadd.f32 %v625, %v833
  %v932 = vadd.f32 %v654, %v862
  %v933 = vadd.f32 %v683, %v891
  %v934 = vadd.f32 %v712, %v920
  %v935 = vadd.f32 %v628, %v836
  %v936 = vadd.f32 %v657, %v865
  %v937 = vadd.f32 %v686, %v894
  %v938 = vadd.f32 %v715, %v923
  %v939 = vadd.f32 %v631, %v839
  %v940 = vadd.f32 %v660, %v868
  %v941 = vadd.f32 %v689, %v897
  %v942 = vadd.f32 %v718, %v926
  %v943 = vadd.f32 %v634, %v842
  %v944 = vadd.f32 %v663, %v871
  %v945 = vadd.f32 %v692, %v900
  %v946 = vadd.f32 %v721, %v929
  %947 = vrot.lane.b32.xlu0 %v358, 71
  %v948 = vpop.permute.xlu0 %947
  %949 = vrot.lane.b32.xlu0 %v362, 71
  %v950 = vpop.permute.xlu0 %949
  %951 = vrot.lane.b32.xlu0 %v366, 71
  %v952 = vpop.permute.xlu0 %951
  %953 = vrot.lane.b32.xlu0 %v370, 71
  %v954 = vpop.permute.xlu0 %953
  %955 = vrot.lane.b32.xlu0 %v359, 71
  %v956 = vpop.permute.xlu0 %955
  %957 = vrot.lane.b32.xlu0 %v363, 71
  %v958 = vpop.permute.xlu0 %957
  %959 = vrot.lane.b32.xlu0 %v367, 71
  %v960 = vpop.permute.xlu0 %959
  %961 = vrot.lane.b32.xlu0 %v371, 71
  %v962 = vpop.permute.xlu0 %961
  %963 = vrot.lane.b32.xlu0 %v360, 71
  %v964 = vpop.permute.xlu0 %963
  %965 = vrot.lane.b32.xlu0 %v364, 71
  %v966 = vpop.permute.xlu0 %965
  %967 = vrot.lane.b32.xlu0 %v368, 71
  %v968 = vpop.permute.xlu0 %967
  %969 = vrot.lane.b32.xlu0 %v372, 71
  %v970 = vpop.permute.xlu0 %969
  %971 = vrot.lane.b32.xlu0 %v361, 71
  %v972 = vpop.permute.xlu0 %971
  %973 = vrot.lane.b32.xlu0 %v365, 71
  %v974 = vpop.permute.xlu0 %973
  %975 = vrot.lane.b32.xlu0 %v369, 71
  %v976 = vpop.permute.xlu0 %975
  %977 = vrot.lane.b32.xlu0 %v373, 71
  %v978 = vpop.permute.xlu0 %977
  %vm979 = vcmp.lt.s32.totalorder %v411, 71
  %v980 = vsel %vm979, %v964, %v972
  %v981 = vsel %vm979, %v966, %v974
  %v982 = vsel %vm979, %v968, %v976
  %v983 = vsel %vm979, %v970, %v978
  %v984 = vsel %vm979, %v956, %v964
  %v985 = vsel %vm979, %v958, %v966
  %v986 = vsel %vm979, %v960, %v968
  %v987 = vsel %vm979, %v962, %v970
  %v988 = vsel %vm979, %v948, %v956
  %v989 = vsel %vm979, %v950, %v958
  %v990 = vsel %vm979, %v952, %v960
  %v991 = vsel %vm979, %v954, %v962
  %v992 = vsel %vm979, %v972, %v948
  %v993 = vsel %vm979, %v974, %v950
  %v994 = vsel %vm979, %v976, %v952
  %v995 = vsel %vm979, %v978, %v954
  %s996 = scalar_lea.vmem %s1, 2
  %v997 = vld [vmem:[%s996] ss:$8 sm:$0xf]
  %v999 = vperm.slane %v997, 0
  %v1000 = vperm.slane %v997, 1
  %v1001 = vperm.slane %v997, 2
  %v1002 = vperm.slane %v997, 3
  %v1007 = vmul.f32 %v992, %v999
  %v1008 = vmul.f32 %v988, %v1000
  %v1009 = vmul.f32 %v984, %v1001
  %v1010 = vmul.f32 %v980, %v1002
  %v1011 = vmul.f32 %v993, %v999
  %v1012 = vmul.f32 %v989, %v1000
  %v1013 = vmul.f32 %v985, %v1001
  %v1014 = vmul.f32 %v981, %v1002
  %v1015 = vmul.f32 %v994, %v999
  %v1016 = vmul.f32 %v990, %v1000
  %v1017 = vmul.f32 %v986, %v1001
  %v1018 = vmul.f32 %v982, %v1002
  %v1019 = vmul.f32 %v995, %v999
  %v1020 = vmul.f32 %v991, %v1000
  %v1021 = vmul.f32 %v987, %v1001
  %v1022 = vmul.f32 %v983, %v1002
  %1023 = vrot.lane.b32.xlu0 %v455, 64
  %v1024 = vpop.permute.xlu0 %1023
  %1025 = vrot.lane.b32.xlu0 %v456, 64
  %v1026 = vpop.permute.xlu0 %1025
  %1027 = vrot.lane.b32.xlu0 %v457, 64
  %v1028 = vpop.permute.xlu0 %1027
  %1029 = vrot.lane.b32.xlu0 %v458, 64
  %v1030 = vpop.permute.xlu0 %1029
  %v1031 = vsel %vm37, %v1024, 0
  %v1033 = vsel %vm37, %v1026, 0
  %v1035 = vsel %vm37, %v1028, 0
  %v1037 = vsel %vm37, %v1030, 0
  %1039 = vmatpush.msra.mxu0 0.0
  %1040 = vmatpush.msra.mxu0 0.0
  %1041 = vmatpush.msra.mxu0 0.0
  %1042 = vmatpush.msra.mxu0 0.0
  %1043 = vmatpush.msra.mxu0 0.0
  %1044 = vmatpush.msra.mxu0 0.0
  %1045 = vmatpush.msra.mxu0 0.0
  %1046 = vmatpush.msra.mxu0 0.0
  %1047 = vmatpush.msra.mxu0 0.0
  %1048 = vmatpush.msra.mxu0 0.0
  %1049 = vmatpush.msra.mxu0 0.0
  %1050 = vmatpush.msra.mxu0 0.0
  %1051 = vmatpush.msra.mxu0 %v1019
  %1052 = vmatpush.msra.mxu0 %v1015
  %1053 = vmatpush.msra.mxu0 %v1011
  %1054 = vmatpush.msra.mxu0 %v1007
  %1055 = vmatmul.f32.gmra.mxu0 %v1031
  %v1056 = vpop.f32.mrf.mxu0
  %v1057 = vadd.f32 0.0, %v1056
  %1058 = vmatmul.f32.gmra.mxu0 %v1033
  %v1059 = vpop.f32.mrf.mxu0
  %v1060 = vadd.f32 0.0, %v1059
  %1061 = vmatmul.f32.gmra.mxu0 %v1035
  %v1062 = vpop.f32.mrf.mxu0
  %v1063 = vadd.f32 0.0, %v1062
  %1064 = vmatmul.f32.gmra.mxu0 %v1037
  %v1065 = vpop.f32.mrf.mxu0
  %v1066 = vadd.f32 0.0, %v1065
  %1067 = vdwg.mxu0
  %1068 = vmatpush.msra.mxu0 0.0
  %1069 = vmatpush.msra.mxu0 0.0
  %1070 = vmatpush.msra.mxu0 0.0
  %1071 = vmatpush.msra.mxu0 0.0
  %1072 = vmatpush.msra.mxu0 0.0
  %1073 = vmatpush.msra.mxu0 0.0
  %1074 = vmatpush.msra.mxu0 0.0
  %1075 = vmatpush.msra.mxu0 0.0
  %1076 = vmatpush.msra.mxu0 0.0
  %1077 = vmatpush.msra.mxu0 0.0
  %1078 = vmatpush.msra.mxu0 0.0
  %1079 = vmatpush.msra.mxu0 0.0
  %1080 = vmatpush.msra.mxu0 %v1020
  %1081 = vmatpush.msra.mxu0 %v1016
  %1082 = vmatpush.msra.mxu0 %v1012
  %1083 = vmatpush.msra.mxu0 %v1008
  %1084 = vmatmul.f32.gmra.mxu0 %v1031
  %v1085 = vpop.f32.mrf.mxu0
  %v1086 = vadd.f32 0.0, %v1085
  %1087 = vmatmul.f32.gmra.mxu0 %v1033
  %v1088 = vpop.f32.mrf.mxu0
  %v1089 = vadd.f32 0.0, %v1088
  %1090 = vmatmul.f32.gmra.mxu0 %v1035
  %v1091 = vpop.f32.mrf.mxu0
  %v1092 = vadd.f32 0.0, %v1091
  %1093 = vmatmul.f32.gmra.mxu0 %v1037
  %v1094 = vpop.f32.mrf.mxu0
  %v1095 = vadd.f32 0.0, %v1094
  %1096 = vdwg.mxu0
  %1097 = vmatpush.msra.mxu0 0.0
  %1098 = vmatpush.msra.mxu0 0.0
  %1099 = vmatpush.msra.mxu0 0.0
  %1100 = vmatpush.msra.mxu0 0.0
  %1101 = vmatpush.msra.mxu0 0.0
  %1102 = vmatpush.msra.mxu0 0.0
  %1103 = vmatpush.msra.mxu0 0.0
  %1104 = vmatpush.msra.mxu0 0.0
  %1105 = vmatpush.msra.mxu0 0.0
  %1106 = vmatpush.msra.mxu0 0.0
  %1107 = vmatpush.msra.mxu0 0.0
  %1108 = vmatpush.msra.mxu0 0.0
  %1109 = vmatpush.msra.mxu0 %v1021
  %1110 = vmatpush.msra.mxu0 %v1017
  %1111 = vmatpush.msra.mxu0 %v1013
  %1112 = vmatpush.msra.mxu0 %v1009
  %1113 = vmatmul.f32.gmra.mxu0 %v1031
  %v1114 = vpop.f32.mrf.mxu0
  %v1115 = vadd.f32 0.0, %v1114
  %1116 = vmatmul.f32.gmra.mxu0 %v1033
  %v1117 = vpop.f32.mrf.mxu0
  %v1118 = vadd.f32 0.0, %v1117
  %1119 = vmatmul.f32.gmra.mxu0 %v1035
  %v1120 = vpop.f32.mrf.mxu0
  %v1121 = vadd.f32 0.0, %v1120
  %1122 = vmatmul.f32.gmra.mxu0 %v1037
  %v1123 = vpop.f32.mrf.mxu0
  %v1124 = vadd.f32 0.0, %v1123
  %1125 = vdwg.mxu0
  %1126 = vmatpush.msra.mxu0 0.0
  %1127 = vmatpush.msra.mxu0 0.0
  %1128 = vmatpush.msra.mxu0 0.0
  %1129 = vmatpush.msra.mxu0 0.0
  %1130 = vmatpush.msra.mxu0 0.0
  %1131 = vmatpush.msra.mxu0 0.0
  %1132 = vmatpush.msra.mxu0 0.0
  %1133 = vmatpush.msra.mxu0 0.0
  %1134 = vmatpush.msra.mxu0 0.0
  %1135 = vmatpush.msra.mxu0 0.0
  %1136 = vmatpush.msra.mxu0 0.0
  %1137 = vmatpush.msra.mxu0 0.0
  %1138 = vmatpush.msra.mxu0 %v1022
  %1139 = vmatpush.msra.mxu0 %v1018
  %1140 = vmatpush.msra.mxu0 %v1014
  %1141 = vmatpush.msra.mxu0 %v1010
  %1142 = vmatmul.f32.gmra.mxu0 %v1031
  %v1143 = vpop.f32.mrf.mxu0
  %v1144 = vadd.f32 0.0, %v1143
  %1145 = vmatmul.f32.gmra.mxu0 %v1033
  %v1146 = vpop.f32.mrf.mxu0
  %v1147 = vadd.f32 0.0, %v1146
  %1148 = vmatmul.f32.gmra.mxu0 %v1035
  %v1149 = vpop.f32.mrf.mxu0
  %v1150 = vadd.f32 0.0, %v1149
  %1151 = vmatmul.f32.gmra.mxu0 %v1037
  %v1152 = vpop.f32.mrf.mxu0
  %v1153 = vadd.f32 0.0, %v1152
  %1154 = vdwg.mxu0
  %v1155 = vadd.f32 %v931, %v1057
  %v1156 = vadd.f32 %v932, %v1086
  %v1157 = vadd.f32 %v933, %v1115
  %v1158 = vadd.f32 %v934, %v1144
  %v1159 = vadd.f32 %v935, %v1060
  %v1160 = vadd.f32 %v936, %v1089
  %v1161 = vadd.f32 %v937, %v1118
  %v1162 = vadd.f32 %v938, %v1147
  %v1163 = vadd.f32 %v939, %v1063
  %v1164 = vadd.f32 %v940, %v1092
  %v1165 = vadd.f32 %v941, %v1121
  %v1166 = vadd.f32 %v942, %v1150
  %v1167 = vadd.f32 %v943, %v1066
  %v1168 = vadd.f32 %v944, %v1095
  %v1169 = vadd.f32 %v945, %v1124
  %v1170 = vadd.f32 %v946, %v1153
  %1171 = vrot.lane.b32.xlu0 %v358, 65
  %v1172 = vpop.permute.xlu0 %1171
  %1173 = vrot.lane.b32.xlu0 %v362, 65
  %v1174 = vpop.permute.xlu0 %1173
  %1175 = vrot.lane.b32.xlu0 %v366, 65
  %v1176 = vpop.permute.xlu0 %1175
  %1177 = vrot.lane.b32.xlu0 %v370, 65
  %v1178 = vpop.permute.xlu0 %1177
  %1179 = vrot.lane.b32.xlu0 %v359, 65
  %v1180 = vpop.permute.xlu0 %1179
  %1181 = vrot.lane.b32.xlu0 %v363, 65
  %v1182 = vpop.permute.xlu0 %1181
  %1183 = vrot.lane.b32.xlu0 %v367, 65
  %v1184 = vpop.permute.xlu0 %1183
  %1185 = vrot.lane.b32.xlu0 %v371, 65
  %v1186 = vpop.permute.xlu0 %1185
  %1187 = vrot.lane.b32.xlu0 %v360, 65
  %v1188 = vpop.permute.xlu0 %1187
  %1189 = vrot.lane.b32.xlu0 %v364, 65
  %v1190 = vpop.permute.xlu0 %1189
  %1191 = vrot.lane.b32.xlu0 %v368, 65
  %v1192 = vpop.permute.xlu0 %1191
  %1193 = vrot.lane.b32.xlu0 %v372, 65
  %v1194 = vpop.permute.xlu0 %1193
  %1195 = vrot.lane.b32.xlu0 %v361, 65
  %v1196 = vpop.permute.xlu0 %1195
  %1197 = vrot.lane.b32.xlu0 %v365, 65
  %v1198 = vpop.permute.xlu0 %1197
  %1199 = vrot.lane.b32.xlu0 %v369, 65
  %v1200 = vpop.permute.xlu0 %1199
  %1201 = vrot.lane.b32.xlu0 %v373, 65
  %v1202 = vpop.permute.xlu0 %1201
  %vm1203 = vcmp.lt.s32.totalorder %v411, 65
  %v1204 = vsel %vm1203, %v1188, %v1196
  %v1205 = vsel %vm1203, %v1190, %v1198
  %v1206 = vsel %vm1203, %v1192, %v1200
  %v1207 = vsel %vm1203, %v1194, %v1202
  %v1208 = vsel %vm1203, %v1180, %v1188
  %v1209 = vsel %vm1203, %v1182, %v1190
  %v1210 = vsel %vm1203, %v1184, %v1192
  %v1211 = vsel %vm1203, %v1186, %v1194
  %v1212 = vsel %vm1203, %v1172, %v1180
  %v1213 = vsel %vm1203, %v1174, %v1182
  %v1214 = vsel %vm1203, %v1176, %v1184
  %v1215 = vsel %vm1203, %v1178, %v1186
  %v1216 = vsel %vm1203, %v1196, %v1172
  %v1217 = vsel %vm1203, %v1198, %v1174
  %v1218 = vsel %vm1203, %v1200, %v1176
  %v1219 = vsel %vm1203, %v1202, %v1178
  %s1220 = scalar_lea.vmem %s1, 3
  %v1221 = vld [vmem:[%s1220] ss:$8 sm:$0xf]
  %v1223 = vperm.slane %v1221, 0
  %v1224 = vperm.slane %v1221, 1
  %v1225 = vperm.slane %v1221, 2
  %v1226 = vperm.slane %v1221, 3
  %v1231 = vmul.f32 %v1216, %v1223
  %v1232 = vmul.f32 %v1212, %v1224
  %v1233 = vmul.f32 %v1208, %v1225
  %v1234 = vmul.f32 %v1204, %v1226
  %v1235 = vmul.f32 %v1217, %v1223
  %v1236 = vmul.f32 %v1213, %v1224
  %v1237 = vmul.f32 %v1209, %v1225
  %v1238 = vmul.f32 %v1205, %v1226
  %v1239 = vmul.f32 %v1218, %v1223
  %v1240 = vmul.f32 %v1214, %v1224
  %v1241 = vmul.f32 %v1210, %v1225
  %v1242 = vmul.f32 %v1206, %v1226
  %v1243 = vmul.f32 %v1219, %v1223
  %v1244 = vmul.f32 %v1215, %v1224
  %v1245 = vmul.f32 %v1211, %v1225
  %v1246 = vmul.f32 %v1207, %v1226
  %1247 = vrot.lane.b32.xlu0 %v455, 32
  %v1248 = vpop.permute.xlu0 %1247
  %1249 = vrot.lane.b32.xlu0 %v456, 32
  %v1250 = vpop.permute.xlu0 %1249
  %1251 = vrot.lane.b32.xlu0 %v457, 32
  %v1252 = vpop.permute.xlu0 %1251
  %1253 = vrot.lane.b32.xlu0 %v458, 32
  %v1254 = vpop.permute.xlu0 %1253
  %v1255 = vsel %vm37, %v1248, 0
  %v1257 = vsel %vm37, %v1250, 0
  %v1259 = vsel %vm37, %v1252, 0
  %v1261 = vsel %vm37, %v1254, 0
  %1263 = vmatpush.msra.mxu0 0.0
  %1264 = vmatpush.msra.mxu0 0.0
  %1265 = vmatpush.msra.mxu0 0.0
  %1266 = vmatpush.msra.mxu0 0.0
  %1267 = vmatpush.msra.mxu0 0.0
  %1268 = vmatpush.msra.mxu0 0.0
  %1269 = vmatpush.msra.mxu0 0.0
  %1270 = vmatpush.msra.mxu0 0.0
  %1271 = vmatpush.msra.mxu0 0.0
  %1272 = vmatpush.msra.mxu0 0.0
  %1273 = vmatpush.msra.mxu0 0.0
  %1274 = vmatpush.msra.mxu0 0.0
  %1275 = vmatpush.msra.mxu0 %v1243
  %1276 = vmatpush.msra.mxu0 %v1239
  %1277 = vmatpush.msra.mxu0 %v1235
  %1278 = vmatpush.msra.mxu0 %v1231
  %1279 = vmatmul.f32.gmra.mxu0 %v1255
  %v1280 = vpop.f32.mrf.mxu0
  %v1281 = vadd.f32 0.0, %v1280
  %1282 = vmatmul.f32.gmra.mxu0 %v1257
  %v1283 = vpop.f32.mrf.mxu0
  %v1284 = vadd.f32 0.0, %v1283
  %1285 = vmatmul.f32.gmra.mxu0 %v1259
  %v1286 = vpop.f32.mrf.mxu0
  %v1287 = vadd.f32 0.0, %v1286
  %1288 = vmatmul.f32.gmra.mxu0 %v1261
  %v1289 = vpop.f32.mrf.mxu0
  %v1290 = vadd.f32 0.0, %v1289
  %1291 = vdwg.mxu0
  %1292 = vmatpush.msra.mxu0 0.0
  %1293 = vmatpush.msra.mxu0 0.0
  %1294 = vmatpush.msra.mxu0 0.0
  %1295 = vmatpush.msra.mxu0 0.0
  %1296 = vmatpush.msra.mxu0 0.0
  %1297 = vmatpush.msra.mxu0 0.0
  %1298 = vmatpush.msra.mxu0 0.0
  %1299 = vmatpush.msra.mxu0 0.0
  %1300 = vmatpush.msra.mxu0 0.0
  %1301 = vmatpush.msra.mxu0 0.0
  %1302 = vmatpush.msra.mxu0 0.0
  %1303 = vmatpush.msra.mxu0 0.0
  %1304 = vmatpush.msra.mxu0 %v1244
  %1305 = vmatpush.msra.mxu0 %v1240
  %1306 = vmatpush.msra.mxu0 %v1236
  %1307 = vmatpush.msra.mxu0 %v1232
  %1308 = vmatmul.f32.gmra.mxu0 %v1255
  %v1309 = vpop.f32.mrf.mxu0
  %v1310 = vadd.f32 0.0, %v1309
  %1311 = vmatmul.f32.gmra.mxu0 %v1257
  %v1312 = vpop.f32.mrf.mxu0
  %v1313 = vadd.f32 0.0, %v1312
  %1314 = vmatmul.f32.gmra.mxu0 %v1259
  %v1315 = vpop.f32.mrf.mxu0
  %v1316 = vadd.f32 0.0, %v1315
  %1317 = vmatmul.f32.gmra.mxu0 %v1261
  %v1318 = vpop.f32.mrf.mxu0
  %v1319 = vadd.f32 0.0, %v1318
  %1320 = vdwg.mxu0
  %1321 = vmatpush.msra.mxu0 0.0
  %1322 = vmatpush.msra.mxu0 0.0
  %1323 = vmatpush.msra.mxu0 0.0
  %1324 = vmatpush.msra.mxu0 0.0
  %1325 = vmatpush.msra.mxu0 0.0
  %1326 = vmatpush.msra.mxu0 0.0
  %1327 = vmatpush.msra.mxu0 0.0
  %1328 = vmatpush.msra.mxu0 0.0
  %1329 = vmatpush.msra.mxu0 0.0
  %1330 = vmatpush.msra.mxu0 0.0
  %1331 = vmatpush.msra.mxu0 0.0
  %1332 = vmatpush.msra.mxu0 0.0
  %1333 = vmatpush.msra.mxu0 %v1245
  %1334 = vmatpush.msra.mxu0 %v1241
  %1335 = vmatpush.msra.mxu0 %v1237
  %1336 = vmatpush.msra.mxu0 %v1233
  %1337 = vmatmul.f32.gmra.mxu0 %v1255
  %v1338 = vpop.f32.mrf.mxu0
  %v1339 = vadd.f32 0.0, %v1338
  %1340 = vmatmul.f32.gmra.mxu0 %v1257
  %v1341 = vpop.f32.mrf.mxu0
  %v1342 = vadd.f32 0.0, %v1341
  %1343 = vmatmul.f32.gmra.mxu0 %v1259
  %v1344 = vpop.f32.mrf.mxu0
  %v1345 = vadd.f32 0.0, %v1344
  %1346 = vmatmul.f32.gmra.mxu0 %v1261
  %v1347 = vpop.f32.mrf.mxu0
  %v1348 = vadd.f32 0.0, %v1347
  %1349 = vdwg.mxu0
  %1350 = vmatpush.msra.mxu0 0.0
  %1351 = vmatpush.msra.mxu0 0.0
  %1352 = vmatpush.msra.mxu0 0.0
  %1353 = vmatpush.msra.mxu0 0.0
  %1354 = vmatpush.msra.mxu0 0.0
  %1355 = vmatpush.msra.mxu0 0.0
  %1356 = vmatpush.msra.mxu0 0.0
  %1357 = vmatpush.msra.mxu0 0.0
  %1358 = vmatpush.msra.mxu0 0.0
  %1359 = vmatpush.msra.mxu0 0.0
  %1360 = vmatpush.msra.mxu0 0.0
  %1361 = vmatpush.msra.mxu0 0.0
  %1362 = vmatpush.msra.mxu0 %v1246
  %1363 = vmatpush.msra.mxu0 %v1242
  %1364 = vmatpush.msra.mxu0 %v1238
  %1365 = vmatpush.msra.mxu0 %v1234
  %1366 = vmatmul.f32.gmra.mxu0 %v1255
  %v1367 = vpop.f32.mrf.mxu0
  %v1368 = vadd.f32 0.0, %v1367
  %1369 = vmatmul.f32.gmra.mxu0 %v1257
  %v1370 = vpop.f32.mrf.mxu0
  %v1371 = vadd.f32 0.0, %v1370
  %1372 = vmatmul.f32.gmra.mxu0 %v1259
  %v1373 = vpop.f32.mrf.mxu0
  %v1374 = vadd.f32 0.0, %v1373
  %1375 = vmatmul.f32.gmra.mxu0 %v1261
  %v1376 = vpop.f32.mrf.mxu0
  %v1377 = vadd.f32 0.0, %v1376
  %1378 = vdwg.mxu0
  %v1379 = vadd.f32 %v1155, %v1281
  %v1380 = vadd.f32 %v1156, %v1310
  %v1381 = vadd.f32 %v1157, %v1339
  %v1382 = vadd.f32 %v1158, %v1368
  %v1383 = vadd.f32 %v1159, %v1284
  %v1384 = vadd.f32 %v1160, %v1313
  %v1385 = vadd.f32 %v1161, %v1342
  %v1386 = vadd.f32 %v1162, %v1371
  %v1387 = vadd.f32 %v1163, %v1287
  %v1388 = vadd.f32 %v1164, %v1316
  %v1389 = vadd.f32 %v1165, %v1345
  %v1390 = vadd.f32 %v1166, %v1374
  %v1391 = vadd.f32 %v1167, %v1290
  %v1392 = vadd.f32 %v1168, %v1319
  %v1393 = vadd.f32 %v1169, %v1348
  %v1394 = vadd.f32 %v1170, %v1377
  %1395 = vrot.lane.b32.xlu0 %v358, 64
  %v1396 = vpop.permute.xlu0 %1395
  %1397 = vrot.lane.b32.xlu0 %v362, 64
  %v1398 = vpop.permute.xlu0 %1397
  %1399 = vrot.lane.b32.xlu0 %v366, 64
  %v1400 = vpop.permute.xlu0 %1399
  %1401 = vrot.lane.b32.xlu0 %v370, 64
  %v1402 = vpop.permute.xlu0 %1401
  %1403 = vrot.lane.b32.xlu0 %v359, 64
  %v1404 = vpop.permute.xlu0 %1403
  %1405 = vrot.lane.b32.xlu0 %v363, 64
  %v1406 = vpop.permute.xlu0 %1405
  %1407 = vrot.lane.b32.xlu0 %v367, 64
  %v1408 = vpop.permute.xlu0 %1407
  %1409 = vrot.lane.b32.xlu0 %v371, 64
  %v1410 = vpop.permute.xlu0 %1409
  %1411 = vrot.lane.b32.xlu0 %v360, 64
  %v1412 = vpop.permute.xlu0 %1411
  %1413 = vrot.lane.b32.xlu0 %v364, 64
  %v1414 = vpop.permute.xlu0 %1413
  %1415 = vrot.lane.b32.xlu0 %v368, 64
  %v1416 = vpop.permute.xlu0 %1415
  %1417 = vrot.lane.b32.xlu0 %v372, 64
  %v1418 = vpop.permute.xlu0 %1417
  %1419 = vrot.lane.b32.xlu0 %v361, 64
  %v1420 = vpop.permute.xlu0 %1419
  %1421 = vrot.lane.b32.xlu0 %v365, 64
  %v1422 = vpop.permute.xlu0 %1421
  %1423 = vrot.lane.b32.xlu0 %v369, 64
  %v1424 = vpop.permute.xlu0 %1423
  %1425 = vrot.lane.b32.xlu0 %v373, 64
  %v1426 = vpop.permute.xlu0 %1425
  %vm1427 = vcmp.lt.s32.totalorder %v411, 64
  %v1428 = vsel %vm1427, %v1412, %v1420
  %v1429 = vsel %vm1427, %v1414, %v1422
  %v1430 = vsel %vm1427, %v1416, %v1424
  %v1431 = vsel %vm1427, %v1418, %v1426
  %v1432 = vsel %vm1427, %v1404, %v1412
  %v1433 = vsel %vm1427, %v1406, %v1414
  %v1434 = vsel %vm1427, %v1408, %v1416
  %v1435 = vsel %vm1427, %v1410, %v1418
  %v1436 = vsel %vm1427, %v1396, %v1404
  %v1437 = vsel %vm1427, %v1398, %v1406
  %v1438 = vsel %vm1427, %v1400, %v1408
  %v1439 = vsel %vm1427, %v1402, %v1410
  %v1440 = vsel %vm1427, %v1420, %v1396
  %v1441 = vsel %vm1427, %v1422, %v1398
  %v1442 = vsel %vm1427, %v1424, %v1400
  %v1443 = vsel %vm1427, %v1426, %v1402
  %s1444 = scalar_lea.vmem %s1, 4
  %v1445 = vld [vmem:[%s1444] ss:$8 sm:$0xf]
  %v1447 = vperm.slane %v1445, 0
  %v1448 = vperm.slane %v1445, 1
  %v1449 = vperm.slane %v1445, 2
  %v1450 = vperm.slane %v1445, 3
  %v1455 = vmul.f32 %v1440, %v1447
  %v1456 = vmul.f32 %v1436, %v1448
  %v1457 = vmul.f32 %v1432, %v1449
  %v1458 = vmul.f32 %v1428, %v1450
  %v1459 = vmul.f32 %v1441, %v1447
  %v1460 = vmul.f32 %v1437, %v1448
  %v1461 = vmul.f32 %v1433, %v1449
  %v1462 = vmul.f32 %v1429, %v1450
  %v1463 = vmul.f32 %v1442, %v1447
  %v1464 = vmul.f32 %v1438, %v1448
  %v1465 = vmul.f32 %v1434, %v1449
  %v1466 = vmul.f32 %v1430, %v1450
  %v1467 = vmul.f32 %v1443, %v1447
  %v1468 = vmul.f32 %v1439, %v1448
  %v1469 = vmul.f32 %v1435, %v1449
  %v1470 = vmul.f32 %v1431, %v1450
  %v1471 = vld [vmem:[%s2 + $0x8] sm:$0xff]
  %v1472 = vld [vmem:[%s2 + $0x40] sm:$0xff]
  %v1473 = vld [vmem:[%s2 + $0x78] sm:$0xff]
  %v1474 = vld [vmem:[%s2 + $0xb0] sm:$0xff]
  %v1476 = vsel %vm37, %v1471, 0
  %v1479 = vsel %vm37, %v1472, 0
  %v1482 = vsel %vm37, %v1473, 0
  %v1485 = vsel %vm37, %v1474, 0
  %1487 = vmatpush.msra.mxu0 0.0
  %1488 = vmatpush.msra.mxu0 0.0
  %1489 = vmatpush.msra.mxu0 0.0
  %1490 = vmatpush.msra.mxu0 0.0
  %1491 = vmatpush.msra.mxu0 0.0
  %1492 = vmatpush.msra.mxu0 0.0
  %1493 = vmatpush.msra.mxu0 0.0
  %1494 = vmatpush.msra.mxu0 0.0
  %1495 = vmatpush.msra.mxu0 0.0
  %1496 = vmatpush.msra.mxu0 0.0
  %1497 = vmatpush.msra.mxu0 0.0
  %1498 = vmatpush.msra.mxu0 0.0
  %1499 = vmatpush.msra.mxu0 %v1467
  %1500 = vmatpush.msra.mxu0 %v1463
  %1501 = vmatpush.msra.mxu0 %v1459
  %1502 = vmatpush.msra.mxu0 %v1455
  %1503 = vmatmul.f32.gmra.mxu0 %v1476
  %v1504 = vpop.f32.mrf.mxu0
  %v1505 = vadd.f32 0.0, %v1504
  %1506 = vmatmul.f32.gmra.mxu0 %v1479
  %v1507 = vpop.f32.mrf.mxu0
  %v1508 = vadd.f32 0.0, %v1507
  %1509 = vmatmul.f32.gmra.mxu0 %v1482
  %v1510 = vpop.f32.mrf.mxu0
  %v1511 = vadd.f32 0.0, %v1510
  %1512 = vmatmul.f32.gmra.mxu0 %v1485
  %v1513 = vpop.f32.mrf.mxu0
  %v1514 = vadd.f32 0.0, %v1513
  %1515 = vdwg.mxu0
  %1516 = vmatpush.msra.mxu0 0.0
  %1517 = vmatpush.msra.mxu0 0.0
  %1518 = vmatpush.msra.mxu0 0.0
  %1519 = vmatpush.msra.mxu0 0.0
  %1520 = vmatpush.msra.mxu0 0.0
  %1521 = vmatpush.msra.mxu0 0.0
  %1522 = vmatpush.msra.mxu0 0.0
  %1523 = vmatpush.msra.mxu0 0.0
  %1524 = vmatpush.msra.mxu0 0.0
  %1525 = vmatpush.msra.mxu0 0.0
  %1526 = vmatpush.msra.mxu0 0.0
  %1527 = vmatpush.msra.mxu0 0.0
  %1528 = vmatpush.msra.mxu0 %v1468
  %1529 = vmatpush.msra.mxu0 %v1464
  %1530 = vmatpush.msra.mxu0 %v1460
  %1531 = vmatpush.msra.mxu0 %v1456
  %1532 = vmatmul.f32.gmra.mxu0 %v1476
  %v1533 = vpop.f32.mrf.mxu0
  %v1534 = vadd.f32 0.0, %v1533
  %1535 = vmatmul.f32.gmra.mxu0 %v1479
  %v1536 = vpop.f32.mrf.mxu0
  %v1537 = vadd.f32 0.0, %v1536
  %1538 = vmatmul.f32.gmra.mxu0 %v1482
  %v1539 = vpop.f32.mrf.mxu0
  %v1540 = vadd.f32 0.0, %v1539
  %1541 = vmatmul.f32.gmra.mxu0 %v1485
  %v1542 = vpop.f32.mrf.mxu0
  %v1543 = vadd.f32 0.0, %v1542
  %1544 = vdwg.mxu0
  %1545 = vmatpush.msra.mxu0 0.0
  %1546 = vmatpush.msra.mxu0 0.0
  %1547 = vmatpush.msra.mxu0 0.0
  %1548 = vmatpush.msra.mxu0 0.0
  %1549 = vmatpush.msra.mxu0 0.0
  %1550 = vmatpush.msra.mxu0 0.0
  %1551 = vmatpush.msra.mxu0 0.0
  %1552 = vmatpush.msra.mxu0 0.0
  %1553 = vmatpush.msra.mxu0 0.0
  %1554 = vmatpush.msra.mxu0 0.0
  %1555 = vmatpush.msra.mxu0 0.0
  %1556 = vmatpush.msra.mxu0 0.0
  %1557 = vmatpush.msra.mxu0 %v1469
  %1558 = vmatpush.msra.mxu0 %v1465
  %1559 = vmatpush.msra.mxu0 %v1461
  %1560 = vmatpush.msra.mxu0 %v1457
  %1561 = vmatmul.f32.gmra.mxu0 %v1476
  %v1562 = vpop.f32.mrf.mxu0
  %v1563 = vadd.f32 0.0, %v1562
  %1564 = vmatmul.f32.gmra.mxu0 %v1479
  %v1565 = vpop.f32.mrf.mxu0
  %v1566 = vadd.f32 0.0, %v1565
  %1567 = vmatmul.f32.gmra.mxu0 %v1482
  %v1568 = vpop.f32.mrf.mxu0
  %v1569 = vadd.f32 0.0, %v1568
  %1570 = vmatmul.f32.gmra.mxu0 %v1485
  %v1571 = vpop.f32.mrf.mxu0
  %v1572 = vadd.f32 0.0, %v1571
  %1573 = vdwg.mxu0
  %1574 = vmatpush.msra.mxu0 0.0
  %1575 = vmatpush.msra.mxu0 0.0
  %1576 = vmatpush.msra.mxu0 0.0
  %1577 = vmatpush.msra.mxu0 0.0
  %1578 = vmatpush.msra.mxu0 0.0
  %1579 = vmatpush.msra.mxu0 0.0
  %1580 = vmatpush.msra.mxu0 0.0
  %1581 = vmatpush.msra.mxu0 0.0
  %1582 = vmatpush.msra.mxu0 0.0
  %1583 = vmatpush.msra.mxu0 0.0
  %1584 = vmatpush.msra.mxu0 0.0
  %1585 = vmatpush.msra.mxu0 0.0
  %1586 = vmatpush.msra.mxu0 %v1470
  %1587 = vmatpush.msra.mxu0 %v1466
  %1588 = vmatpush.msra.mxu0 %v1462
  %1589 = vmatpush.msra.mxu0 %v1458
  %1590 = vmatmul.f32.gmra.mxu0 %v1476
  %v1591 = vpop.f32.mrf.mxu0
  %v1592 = vadd.f32 0.0, %v1591
  %1593 = vmatmul.f32.gmra.mxu0 %v1479
  %v1594 = vpop.f32.mrf.mxu0
  %v1595 = vadd.f32 0.0, %v1594
  %1596 = vmatmul.f32.gmra.mxu0 %v1482
  %v1597 = vpop.f32.mrf.mxu0
  %v1598 = vadd.f32 0.0, %v1597
  %1599 = vmatmul.f32.gmra.mxu0 %v1485
  %v1600 = vpop.f32.mrf.mxu0
  %v1601 = vadd.f32 0.0, %v1600
  %1602 = vdwg.mxu0
  %v1603 = vadd.f32 %v1379, %v1505
  %v1604 = vadd.f32 %v1380, %v1534
  %v1605 = vadd.f32 %v1381, %v1563
  %v1606 = vadd.f32 %v1382, %v1592
  %v1607 = vadd.f32 %v1383, %v1508
  %v1608 = vadd.f32 %v1384, %v1537
  %v1609 = vadd.f32 %v1385, %v1566
  %v1610 = vadd.f32 %v1386, %v1595
  %v1611 = vadd.f32 %v1387, %v1511
  %v1612 = vadd.f32 %v1388, %v1540
  %v1613 = vadd.f32 %v1389, %v1569
  %v1614 = vadd.f32 %v1390, %v1598
  %v1615 = vadd.f32 %v1391, %v1514
  %v1616 = vadd.f32 %v1392, %v1543
  %v1617 = vadd.f32 %v1393, %v1572
  %v1618 = vadd.f32 %v1394, %v1601
  %1619 = vrot.lane.b32.xlu0 %v358, 63
  %v1620 = vpop.permute.xlu0 %1619
  %1621 = vrot.lane.b32.xlu0 %v362, 63
  %v1622 = vpop.permute.xlu0 %1621
  %1623 = vrot.lane.b32.xlu0 %v366, 63
  %v1624 = vpop.permute.xlu0 %1623
  %1625 = vrot.lane.b32.xlu0 %v370, 63
  %v1626 = vpop.permute.xlu0 %1625
  %1627 = vrot.lane.b32.xlu0 %v359, 63
  %v1628 = vpop.permute.xlu0 %1627
  %1629 = vrot.lane.b32.xlu0 %v363, 63
  %v1630 = vpop.permute.xlu0 %1629
  %1631 = vrot.lane.b32.xlu0 %v367, 63
  %v1632 = vpop.permute.xlu0 %1631
  %1633 = vrot.lane.b32.xlu0 %v371, 63
  %v1634 = vpop.permute.xlu0 %1633
  %1635 = vrot.lane.b32.xlu0 %v360, 63
  %v1636 = vpop.permute.xlu0 %1635
  %1637 = vrot.lane.b32.xlu0 %v364, 63
  %v1638 = vpop.permute.xlu0 %1637
  %1639 = vrot.lane.b32.xlu0 %v368, 63
  %v1640 = vpop.permute.xlu0 %1639
  %1641 = vrot.lane.b32.xlu0 %v372, 63
  %v1642 = vpop.permute.xlu0 %1641
  %1643 = vrot.lane.b32.xlu0 %v361, 63
  %v1644 = vpop.permute.xlu0 %1643
  %1645 = vrot.lane.b32.xlu0 %v365, 63
  %v1646 = vpop.permute.xlu0 %1645
  %1647 = vrot.lane.b32.xlu0 %v369, 63
  %v1648 = vpop.permute.xlu0 %1647
  %1649 = vrot.lane.b32.xlu0 %v373, 63
  %v1650 = vpop.permute.xlu0 %1649
  %vm1651 = vcmp.lt.s32.totalorder %v411, 63
  %v1652 = vsel %vm1651, %v1636, %v1644
  %v1653 = vsel %vm1651, %v1638, %v1646
  %v1654 = vsel %vm1651, %v1640, %v1648
  %v1655 = vsel %vm1651, %v1642, %v1650
  %v1656 = vsel %vm1651, %v1628, %v1636
  %v1657 = vsel %vm1651, %v1630, %v1638
  %v1658 = vsel %vm1651, %v1632, %v1640
  %v1659 = vsel %vm1651, %v1634, %v1642
  %v1660 = vsel %vm1651, %v1620, %v1628
  %v1661 = vsel %vm1651, %v1622, %v1630
  %v1662 = vsel %vm1651, %v1624, %v1632
  %v1663 = vsel %vm1651, %v1626, %v1634
  %v1664 = vsel %vm1651, %v1644, %v1620
  %v1665 = vsel %vm1651, %v1646, %v1622
  %v1666 = vsel %vm1651, %v1648, %v1624
  %v1667 = vsel %vm1651, %v1650, %v1626
  %s1668 = scalar_lea.vmem %s1, 5
  %v1669 = vld [vmem:[%s1668] ss:$8 sm:$0xf]
  %v1671 = vperm.slane %v1669, 0
  %v1672 = vperm.slane %v1669, 1
  %v1673 = vperm.slane %v1669, 2
  %v1674 = vperm.slane %v1669, 3
  %v1679 = vmul.f32 %v1664, %v1671
  %v1680 = vmul.f32 %v1660, %v1672
  %v1681 = vmul.f32 %v1656, %v1673
  %v1682 = vmul.f32 %v1652, %v1674
  %v1683 = vmul.f32 %v1665, %v1671
  %v1684 = vmul.f32 %v1661, %v1672
  %v1685 = vmul.f32 %v1657, %v1673
  %v1686 = vmul.f32 %v1653, %v1674
  %v1687 = vmul.f32 %v1666, %v1671
  %v1688 = vmul.f32 %v1662, %v1672
  %v1689 = vmul.f32 %v1658, %v1673
  %v1690 = vmul.f32 %v1654, %v1674
  %v1691 = vmul.f32 %v1667, %v1671
  %v1692 = vmul.f32 %v1663, %v1672
  %v1693 = vmul.f32 %v1659, %v1673
  %v1694 = vmul.f32 %v1655, %v1674
  %1695 = vrot.lane.b32.xlu0 %v1471, 96
  %v1696 = vpop.permute.xlu0 %1695
  %1697 = vrot.lane.b32.xlu0 %v1472, 96
  %v1698 = vpop.permute.xlu0 %1697
  %1699 = vrot.lane.b32.xlu0 %v1473, 96
  %v1700 = vpop.permute.xlu0 %1699
  %1701 = vrot.lane.b32.xlu0 %v1474, 96
  %v1702 = vpop.permute.xlu0 %1701
  %v1703 = vsel %vm37, %v1696, 0
  %v1705 = vsel %vm37, %v1698, 0
  %v1707 = vsel %vm37, %v1700, 0
  %v1709 = vsel %vm37, %v1702, 0
  %1711 = vmatpush.msra.mxu0 0.0
  %1712 = vmatpush.msra.mxu0 0.0
  %1713 = vmatpush.msra.mxu0 0.0
  %1714 = vmatpush.msra.mxu0 0.0
  %1715 = vmatpush.msra.mxu0 0.0
  %1716 = vmatpush.msra.mxu0 0.0
  %1717 = vmatpush.msra.mxu0 0.0
  %1718 = vmatpush.msra.mxu0 0.0
  %1719 = vmatpush.msra.mxu0 0.0
  %1720 = vmatpush.msra.mxu0 0.0
  %1721 = vmatpush.msra.mxu0 0.0
  %1722 = vmatpush.msra.mxu0 0.0
  %1723 = vmatpush.msra.mxu0 %v1691
  %1724 = vmatpush.msra.mxu0 %v1687
  %1725 = vmatpush.msra.mxu0 %v1683
  %1726 = vmatpush.msra.mxu0 %v1679
  %1727 = vmatmul.f32.gmra.mxu0 %v1703
  %v1728 = vpop.f32.mrf.mxu0
  %v1729 = vadd.f32 0.0, %v1728
  %1730 = vmatmul.f32.gmra.mxu0 %v1705
  %v1731 = vpop.f32.mrf.mxu0
  %v1732 = vadd.f32 0.0, %v1731
  %1733 = vmatmul.f32.gmra.mxu0 %v1707
  %v1734 = vpop.f32.mrf.mxu0
  %v1735 = vadd.f32 0.0, %v1734
  %1736 = vmatmul.f32.gmra.mxu0 %v1709
  %v1737 = vpop.f32.mrf.mxu0
  %v1738 = vadd.f32 0.0, %v1737
  %1739 = vdwg.mxu0
  %1740 = vmatpush.msra.mxu0 0.0
  %1741 = vmatpush.msra.mxu0 0.0
  %1742 = vmatpush.msra.mxu0 0.0
  %1743 = vmatpush.msra.mxu0 0.0
  %1744 = vmatpush.msra.mxu0 0.0
  %1745 = vmatpush.msra.mxu0 0.0
  %1746 = vmatpush.msra.mxu0 0.0
  %1747 = vmatpush.msra.mxu0 0.0
  %1748 = vmatpush.msra.mxu0 0.0
  %1749 = vmatpush.msra.mxu0 0.0
  %1750 = vmatpush.msra.mxu0 0.0
  %1751 = vmatpush.msra.mxu0 0.0
  %1752 = vmatpush.msra.mxu0 %v1692
  %1753 = vmatpush.msra.mxu0 %v1688
  %1754 = vmatpush.msra.mxu0 %v1684
  %1755 = vmatpush.msra.mxu0 %v1680
  %1756 = vmatmul.f32.gmra.mxu0 %v1703
  %v1757 = vpop.f32.mrf.mxu0
  %v1758 = vadd.f32 0.0, %v1757
  %1759 = vmatmul.f32.gmra.mxu0 %v1705
  %v1760 = vpop.f32.mrf.mxu0
  %v1761 = vadd.f32 0.0, %v1760
  %1762 = vmatmul.f32.gmra.mxu0 %v1707
  %v1763 = vpop.f32.mrf.mxu0
  %v1764 = vadd.f32 0.0, %v1763
  %1765 = vmatmul.f32.gmra.mxu0 %v1709
  %v1766 = vpop.f32.mrf.mxu0
  %v1767 = vadd.f32 0.0, %v1766
  %1768 = vdwg.mxu0
  %1769 = vmatpush.msra.mxu0 0.0
  %1770 = vmatpush.msra.mxu0 0.0
  %1771 = vmatpush.msra.mxu0 0.0
  %1772 = vmatpush.msra.mxu0 0.0
  %1773 = vmatpush.msra.mxu0 0.0
  %1774 = vmatpush.msra.mxu0 0.0
  %1775 = vmatpush.msra.mxu0 0.0
  %1776 = vmatpush.msra.mxu0 0.0
  %1777 = vmatpush.msra.mxu0 0.0
  %1778 = vmatpush.msra.mxu0 0.0
  %1779 = vmatpush.msra.mxu0 0.0
  %1780 = vmatpush.msra.mxu0 0.0
  %1781 = vmatpush.msra.mxu0 %v1693
  %1782 = vmatpush.msra.mxu0 %v1689
  %1783 = vmatpush.msra.mxu0 %v1685
  %1784 = vmatpush.msra.mxu0 %v1681
  %1785 = vmatmul.f32.gmra.mxu0 %v1703
  %v1786 = vpop.f32.mrf.mxu0
  %v1787 = vadd.f32 0.0, %v1786
  %1788 = vmatmul.f32.gmra.mxu0 %v1705
  %v1789 = vpop.f32.mrf.mxu0
  %v1790 = vadd.f32 0.0, %v1789
  %1791 = vmatmul.f32.gmra.mxu0 %v1707
  %v1792 = vpop.f32.mrf.mxu0
  %v1793 = vadd.f32 0.0, %v1792
  %1794 = vmatmul.f32.gmra.mxu0 %v1709
  %v1795 = vpop.f32.mrf.mxu0
  %v1796 = vadd.f32 0.0, %v1795
  %1797 = vdwg.mxu0
  %1798 = vmatpush.msra.mxu0 0.0
  %1799 = vmatpush.msra.mxu0 0.0
  %1800 = vmatpush.msra.mxu0 0.0
  %1801 = vmatpush.msra.mxu0 0.0
  %1802 = vmatpush.msra.mxu0 0.0
  %1803 = vmatpush.msra.mxu0 0.0
  %1804 = vmatpush.msra.mxu0 0.0
  %1805 = vmatpush.msra.mxu0 0.0
  %1806 = vmatpush.msra.mxu0 0.0
  %1807 = vmatpush.msra.mxu0 0.0
  %1808 = vmatpush.msra.mxu0 0.0
  %1809 = vmatpush.msra.mxu0 0.0
  %1810 = vmatpush.msra.mxu0 %v1694
  %1811 = vmatpush.msra.mxu0 %v1690
  %1812 = vmatpush.msra.mxu0 %v1686
  %1813 = vmatpush.msra.mxu0 %v1682
  %1814 = vmatmul.f32.gmra.mxu0 %v1703
  %v1815 = vpop.f32.mrf.mxu0
  %v1816 = vadd.f32 0.0, %v1815
  %1817 = vmatmul.f32.gmra.mxu0 %v1705
  %v1818 = vpop.f32.mrf.mxu0
  %v1819 = vadd.f32 0.0, %v1818
  %1820 = vmatmul.f32.gmra.mxu0 %v1707
  %v1821 = vpop.f32.mrf.mxu0
  %v1822 = vadd.f32 0.0, %v1821
  %1823 = vmatmul.f32.gmra.mxu0 %v1709
  %v1824 = vpop.f32.mrf.mxu0
  %v1825 = vadd.f32 0.0, %v1824
  %1826 = vdwg.mxu0
  %v1827 = vadd.f32 %v1603, %v1729
  %v1828 = vadd.f32 %v1604, %v1758
  %v1829 = vadd.f32 %v1605, %v1787
  %v1830 = vadd.f32 %v1606, %v1816
  %v1831 = vadd.f32 %v1607, %v1732
  %v1832 = vadd.f32 %v1608, %v1761
  %v1833 = vadd.f32 %v1609, %v1790
  %v1834 = vadd.f32 %v1610, %v1819
  %v1835 = vadd.f32 %v1611, %v1735
  %v1836 = vadd.f32 %v1612, %v1764
  %v1837 = vadd.f32 %v1613, %v1793
  %v1838 = vadd.f32 %v1614, %v1822
  %v1839 = vadd.f32 %v1615, %v1738
  %v1840 = vadd.f32 %v1616, %v1767
  %v1841 = vadd.f32 %v1617, %v1796
  %v1842 = vadd.f32 %v1618, %v1825
  %1843 = vrot.lane.b32.xlu0 %v358, 57
  %v1844 = vpop.permute.xlu0 %1843
  %1845 = vrot.lane.b32.xlu0 %v362, 57
  %v1846 = vpop.permute.xlu0 %1845
  %1847 = vrot.lane.b32.xlu0 %v366, 57
  %v1848 = vpop.permute.xlu0 %1847
  %1849 = vrot.lane.b32.xlu0 %v370, 57
  %v1850 = vpop.permute.xlu0 %1849
  %1851 = vrot.lane.b32.xlu0 %v359, 57
  %v1852 = vpop.permute.xlu0 %1851
  %1853 = vrot.lane.b32.xlu0 %v363, 57
  %v1854 = vpop.permute.xlu0 %1853
  %1855 = vrot.lane.b32.xlu0 %v367, 57
  %v1856 = vpop.permute.xlu0 %1855
  %1857 = vrot.lane.b32.xlu0 %v371, 57
  %v1858 = vpop.permute.xlu0 %1857
  %1859 = vrot.lane.b32.xlu0 %v360, 57
  %v1860 = vpop.permute.xlu0 %1859
  %1861 = vrot.lane.b32.xlu0 %v364, 57
  %v1862 = vpop.permute.xlu0 %1861
  %1863 = vrot.lane.b32.xlu0 %v368, 57
  %v1864 = vpop.permute.xlu0 %1863
  %1865 = vrot.lane.b32.xlu0 %v372, 57
  %v1866 = vpop.permute.xlu0 %1865
  %1867 = vrot.lane.b32.xlu0 %v361, 57
  %v1868 = vpop.permute.xlu0 %1867
  %1869 = vrot.lane.b32.xlu0 %v365, 57
  %v1870 = vpop.permute.xlu0 %1869
  %1871 = vrot.lane.b32.xlu0 %v369, 57
  %v1872 = vpop.permute.xlu0 %1871
  %1873 = vrot.lane.b32.xlu0 %v373, 57
  %v1874 = vpop.permute.xlu0 %1873
  %vm1875 = vcmp.lt.s32.totalorder %v411, 57
  %v1876 = vsel %vm1875, %v1860, %v1868
  %v1877 = vsel %vm1875, %v1862, %v1870
  %v1878 = vsel %vm1875, %v1864, %v1872
  %v1879 = vsel %vm1875, %v1866, %v1874
  %v1880 = vsel %vm1875, %v1852, %v1860
  %v1881 = vsel %vm1875, %v1854, %v1862
  %v1882 = vsel %vm1875, %v1856, %v1864
  %v1883 = vsel %vm1875, %v1858, %v1866
  %v1884 = vsel %vm1875, %v1844, %v1852
  %v1885 = vsel %vm1875, %v1846, %v1854
  %v1886 = vsel %vm1875, %v1848, %v1856
  %v1887 = vsel %vm1875, %v1850, %v1858
  %v1888 = vsel %vm1875, %v1868, %v1844
  %v1889 = vsel %vm1875, %v1870, %v1846
  %v1890 = vsel %vm1875, %v1872, %v1848
  %v1891 = vsel %vm1875, %v1874, %v1850
  %s1892 = scalar_lea.vmem %s1, 6
  %v1893 = vld [vmem:[%s1892] ss:$8 sm:$0xf]
  %v1895 = vperm.slane %v1893, 0
  %v1896 = vperm.slane %v1893, 1
  %v1897 = vperm.slane %v1893, 2
  %v1898 = vperm.slane %v1893, 3
  %v1903 = vmul.f32 %v1888, %v1895
  %v1904 = vmul.f32 %v1884, %v1896
  %v1905 = vmul.f32 %v1880, %v1897
  %v1906 = vmul.f32 %v1876, %v1898
  %v1907 = vmul.f32 %v1889, %v1895
  %v1908 = vmul.f32 %v1885, %v1896
  %v1909 = vmul.f32 %v1881, %v1897
  %v1910 = vmul.f32 %v1877, %v1898
  %v1911 = vmul.f32 %v1890, %v1895
  %v1912 = vmul.f32 %v1886, %v1896
  %v1913 = vmul.f32 %v1882, %v1897
  %v1914 = vmul.f32 %v1878, %v1898
  %v1915 = vmul.f32 %v1891, %v1895
  %v1916 = vmul.f32 %v1887, %v1896
  %v1917 = vmul.f32 %v1883, %v1897
  %v1918 = vmul.f32 %v1879, %v1898
  %1919 = vrot.lane.b32.xlu0 %v1471, 64
  %v1920 = vpop.permute.xlu0 %1919
  %1921 = vrot.lane.b32.xlu0 %v1472, 64
  %v1922 = vpop.permute.xlu0 %1921
  %1923 = vrot.lane.b32.xlu0 %v1473, 64
  %v1924 = vpop.permute.xlu0 %1923
  %1925 = vrot.lane.b32.xlu0 %v1474, 64
  %v1926 = vpop.permute.xlu0 %1925
  %v1927 = vsel %vm37, %v1920, 0
  %v1929 = vsel %vm37, %v1922, 0
  %v1931 = vsel %vm37, %v1924, 0
  %v1933 = vsel %vm37, %v1926, 0
  %1935 = vmatpush.msra.mxu0 0.0
  %1936 = vmatpush.msra.mxu0 0.0
  %1937 = vmatpush.msra.mxu0 0.0
  %1938 = vmatpush.msra.mxu0 0.0
  %1939 = vmatpush.msra.mxu0 0.0
  %1940 = vmatpush.msra.mxu0 0.0
  %1941 = vmatpush.msra.mxu0 0.0
  %1942 = vmatpush.msra.mxu0 0.0
  %1943 = vmatpush.msra.mxu0 0.0
  %1944 = vmatpush.msra.mxu0 0.0
  %1945 = vmatpush.msra.mxu0 0.0
  %1946 = vmatpush.msra.mxu0 0.0
  %1947 = vmatpush.msra.mxu0 %v1915
  %1948 = vmatpush.msra.mxu0 %v1911
  %1949 = vmatpush.msra.mxu0 %v1907
  %1950 = vmatpush.msra.mxu0 %v1903
  %1951 = vmatmul.f32.gmra.mxu0 %v1927
  %v1952 = vpop.f32.mrf.mxu0
  %v1953 = vadd.f32 0.0, %v1952
  %1954 = vmatmul.f32.gmra.mxu0 %v1929
  %v1955 = vpop.f32.mrf.mxu0
  %v1956 = vadd.f32 0.0, %v1955
  %1957 = vmatmul.f32.gmra.mxu0 %v1931
  %v1958 = vpop.f32.mrf.mxu0
  %v1959 = vadd.f32 0.0, %v1958
  %1960 = vmatmul.f32.gmra.mxu0 %v1933
  %v1961 = vpop.f32.mrf.mxu0
  %v1962 = vadd.f32 0.0, %v1961
  %1963 = vdwg.mxu0
  %1964 = vmatpush.msra.mxu0 0.0
  %1965 = vmatpush.msra.mxu0 0.0
  %1966 = vmatpush.msra.mxu0 0.0
  %1967 = vmatpush.msra.mxu0 0.0
  %1968 = vmatpush.msra.mxu0 0.0
  %1969 = vmatpush.msra.mxu0 0.0
  %1970 = vmatpush.msra.mxu0 0.0
  %1971 = vmatpush.msra.mxu0 0.0
  %1972 = vmatpush.msra.mxu0 0.0
  %1973 = vmatpush.msra.mxu0 0.0
  %1974 = vmatpush.msra.mxu0 0.0
  %1975 = vmatpush.msra.mxu0 0.0
  %1976 = vmatpush.msra.mxu0 %v1916
  %1977 = vmatpush.msra.mxu0 %v1912
  %1978 = vmatpush.msra.mxu0 %v1908
  %1979 = vmatpush.msra.mxu0 %v1904
  %1980 = vmatmul.f32.gmra.mxu0 %v1927
  %v1981 = vpop.f32.mrf.mxu0
  %v1982 = vadd.f32 0.0, %v1981
  %1983 = vmatmul.f32.gmra.mxu0 %v1929
  %v1984 = vpop.f32.mrf.mxu0
  %v1985 = vadd.f32 0.0, %v1984
  %1986 = vmatmul.f32.gmra.mxu0 %v1931
  %v1987 = vpop.f32.mrf.mxu0
  %v1988 = vadd.f32 0.0, %v1987
  %1989 = vmatmul.f32.gmra.mxu0 %v1933
  %v1990 = vpop.f32.mrf.mxu0
  %v1991 = vadd.f32 0.0, %v1990
  %1992 = vdwg.mxu0
  %1993 = vmatpush.msra.mxu0 0.0
  %1994 = vmatpush.msra.mxu0 0.0
  %1995 = vmatpush.msra.mxu0 0.0
  %1996 = vmatpush.msra.mxu0 0.0
  %1997 = vmatpush.msra.mxu0 0.0
  %1998 = vmatpush.msra.mxu0 0.0
  %1999 = vmatpush.msra.mxu0 0.0
  %2000 = vmatpush.msra.mxu0 0.0
  %2001 = vmatpush.msra.mxu0 0.0
  %2002 = vmatpush.msra.mxu0 0.0
  %2003 = vmatpush.msra.mxu0 0.0
  %2004 = vmatpush.msra.mxu0 0.0
  %2005 = vmatpush.msra.mxu0 %v1917
  %2006 = vmatpush.msra.mxu0 %v1913
  %2007 = vmatpush.msra.mxu0 %v1909
  %2008 = vmatpush.msra.mxu0 %v1905
  %2009 = vmatmul.f32.gmra.mxu0 %v1927
  %v2010 = vpop.f32.mrf.mxu0
  %v2011 = vadd.f32 0.0, %v2010
  %2012 = vmatmul.f32.gmra.mxu0 %v1929
  %v2013 = vpop.f32.mrf.mxu0
  %v2014 = vadd.f32 0.0, %v2013
  %2015 = vmatmul.f32.gmra.mxu0 %v1931
  %v2016 = vpop.f32.mrf.mxu0
  %v2017 = vadd.f32 0.0, %v2016
  %2018 = vmatmul.f32.gmra.mxu0 %v1933
  %v2019 = vpop.f32.mrf.mxu0
  %v2020 = vadd.f32 0.0, %v2019
  %2021 = vdwg.mxu0
  %2022 = vmatpush.msra.mxu0 0.0
  %2023 = vmatpush.msra.mxu0 0.0
  %2024 = vmatpush.msra.mxu0 0.0
  %2025 = vmatpush.msra.mxu0 0.0
  %2026 = vmatpush.msra.mxu0 0.0
  %2027 = vmatpush.msra.mxu0 0.0
  %2028 = vmatpush.msra.mxu0 0.0
  %2029 = vmatpush.msra.mxu0 0.0
  %2030 = vmatpush.msra.mxu0 0.0
  %2031 = vmatpush.msra.mxu0 0.0
  %2032 = vmatpush.msra.mxu0 0.0
  %2033 = vmatpush.msra.mxu0 0.0
  %2034 = vmatpush.msra.mxu0 %v1918
  %2035 = vmatpush.msra.mxu0 %v1914
  %2036 = vmatpush.msra.mxu0 %v1910
  %2037 = vmatpush.msra.mxu0 %v1906
  %2038 = vmatmul.f32.gmra.mxu0 %v1927
  %v2039 = vpop.f32.mrf.mxu0
  %v2040 = vadd.f32 0.0, %v2039
  %2041 = vmatmul.f32.gmra.mxu0 %v1929
  %v2042 = vpop.f32.mrf.mxu0
  %v2043 = vadd.f32 0.0, %v2042
  %2044 = vmatmul.f32.gmra.mxu0 %v1931
  %v2045 = vpop.f32.mrf.mxu0
  %v2046 = vadd.f32 0.0, %v2045
  %2047 = vmatmul.f32.gmra.mxu0 %v1933
  %v2048 = vpop.f32.mrf.mxu0
  %v2049 = vadd.f32 0.0, %v2048
  %2050 = vdwg.mxu0
  %v2051 = vadd.f32 %v1827, %v1953
  %v2052 = vadd.f32 %v1828, %v1982
  %v2053 = vadd.f32 %v1829, %v2011
  %v2054 = vadd.f32 %v1830, %v2040
  %v2055 = vadd.f32 %v1831, %v1956
  %v2056 = vadd.f32 %v1832, %v1985
  %v2057 = vadd.f32 %v1833, %v2014
  %v2058 = vadd.f32 %v1834, %v2043
  %v2059 = vadd.f32 %v1835, %v1959
  %v2060 = vadd.f32 %v1836, %v1988
  %v2061 = vadd.f32 %v1837, %v2017
  %v2062 = vadd.f32 %v1838, %v2046
  %v2063 = vadd.f32 %v1839, %v1962
  %v2064 = vadd.f32 %v1840, %v1991
  %v2065 = vadd.f32 %v1841, %v2020
  %v2066 = vadd.f32 %v1842, %v2049
  %2067 = vrot.lane.b32.xlu0 %v358, 56
  %v2068 = vpop.permute.xlu0 %2067
  %2069 = vrot.lane.b32.xlu0 %v362, 56
  %v2070 = vpop.permute.xlu0 %2069
  %2071 = vrot.lane.b32.xlu0 %v366, 56
  %v2072 = vpop.permute.xlu0 %2071
  %2073 = vrot.lane.b32.xlu0 %v370, 56
  %v2074 = vpop.permute.xlu0 %2073
  %2075 = vrot.lane.b32.xlu0 %v359, 56
  %v2076 = vpop.permute.xlu0 %2075
  %2077 = vrot.lane.b32.xlu0 %v363, 56
  %v2078 = vpop.permute.xlu0 %2077
  %2079 = vrot.lane.b32.xlu0 %v367, 56
  %v2080 = vpop.permute.xlu0 %2079
  %2081 = vrot.lane.b32.xlu0 %v371, 56
  %v2082 = vpop.permute.xlu0 %2081
  %2083 = vrot.lane.b32.xlu0 %v360, 56
  %v2084 = vpop.permute.xlu0 %2083
  %2085 = vrot.lane.b32.xlu0 %v364, 56
  %v2086 = vpop.permute.xlu0 %2085
  %2087 = vrot.lane.b32.xlu0 %v368, 56
  %v2088 = vpop.permute.xlu0 %2087
  %2089 = vrot.lane.b32.xlu0 %v372, 56
  %v2090 = vpop.permute.xlu0 %2089
  %2091 = vrot.lane.b32.xlu0 %v361, 56
  %v2092 = vpop.permute.xlu0 %2091
  %2093 = vrot.lane.b32.xlu0 %v365, 56
  %v2094 = vpop.permute.xlu0 %2093
  %2095 = vrot.lane.b32.xlu0 %v369, 56
  %v2096 = vpop.permute.xlu0 %2095
  %2097 = vrot.lane.b32.xlu0 %v373, 56
  %v2098 = vpop.permute.xlu0 %2097
  %vm2099 = vcmp.lt.s32.totalorder %v411, 56
  %v2100 = vsel %vm2099, %v2084, %v2092
  %v2101 = vsel %vm2099, %v2086, %v2094
  %v2102 = vsel %vm2099, %v2088, %v2096
  %v2103 = vsel %vm2099, %v2090, %v2098
  %v2104 = vsel %vm2099, %v2076, %v2084
  %v2105 = vsel %vm2099, %v2078, %v2086
  %v2106 = vsel %vm2099, %v2080, %v2088
  %v2107 = vsel %vm2099, %v2082, %v2090
  %v2108 = vsel %vm2099, %v2068, %v2076
  %v2109 = vsel %vm2099, %v2070, %v2078
  %v2110 = vsel %vm2099, %v2072, %v2080
  %v2111 = vsel %vm2099, %v2074, %v2082
  %v2112 = vsel %vm2099, %v2092, %v2068
  %v2113 = vsel %vm2099, %v2094, %v2070
  %v2114 = vsel %vm2099, %v2096, %v2072
  %v2115 = vsel %vm2099, %v2098, %v2074
  %s2116 = scalar_lea.vmem %s1, 7
  %v2117 = vld [vmem:[%s2116] ss:$8 sm:$0xf]
  %v2119 = vperm.slane %v2117, 0
  %v2120 = vperm.slane %v2117, 1
  %v2121 = vperm.slane %v2117, 2
  %v2122 = vperm.slane %v2117, 3
  %v2127 = vmul.f32 %v2112, %v2119
  %v2128 = vmul.f32 %v2108, %v2120
  %v2129 = vmul.f32 %v2104, %v2121
  %v2130 = vmul.f32 %v2100, %v2122
  %v2131 = vmul.f32 %v2113, %v2119
  %v2132 = vmul.f32 %v2109, %v2120
  %v2133 = vmul.f32 %v2105, %v2121
  %v2134 = vmul.f32 %v2101, %v2122
  %v2135 = vmul.f32 %v2114, %v2119
  %v2136 = vmul.f32 %v2110, %v2120
  %v2137 = vmul.f32 %v2106, %v2121
  %v2138 = vmul.f32 %v2102, %v2122
  %v2139 = vmul.f32 %v2115, %v2119
  %v2140 = vmul.f32 %v2111, %v2120
  %v2141 = vmul.f32 %v2107, %v2121
  %v2142 = vmul.f32 %v2103, %v2122
  %2143 = vrot.lane.b32.xlu0 %v1471, 32
  %v2144 = vpop.permute.xlu0 %2143
  %2145 = vrot.lane.b32.xlu0 %v1472, 32
  %v2146 = vpop.permute.xlu0 %2145
  %2147 = vrot.lane.b32.xlu0 %v1473, 32
  %v2148 = vpop.permute.xlu0 %2147
  %2149 = vrot.lane.b32.xlu0 %v1474, 32
  %v2150 = vpop.permute.xlu0 %2149
  %v2151 = vsel %vm37, %v2144, 0
  %v2153 = vsel %vm37, %v2146, 0
  %v2155 = vsel %vm37, %v2148, 0
  %v2157 = vsel %vm37, %v2150, 0
  %2159 = vmatpush.msra.mxu0 0.0
  %2160 = vmatpush.msra.mxu0 0.0
  %2161 = vmatpush.msra.mxu0 0.0
  %2162 = vmatpush.msra.mxu0 0.0
  %2163 = vmatpush.msra.mxu0 0.0
  %2164 = vmatpush.msra.mxu0 0.0
  %2165 = vmatpush.msra.mxu0 0.0
  %2166 = vmatpush.msra.mxu0 0.0
  %2167 = vmatpush.msra.mxu0 0.0
  %2168 = vmatpush.msra.mxu0 0.0
  %2169 = vmatpush.msra.mxu0 0.0
  %2170 = vmatpush.msra.mxu0 0.0
  %2171 = vmatpush.msra.mxu0 %v2139
  %2172 = vmatpush.msra.mxu0 %v2135
  %2173 = vmatpush.msra.mxu0 %v2131
  %2174 = vmatpush.msra.mxu0 %v2127
  %2175 = vmatmul.f32.gmra.mxu0 %v2151
  %v2176 = vpop.f32.mrf.mxu0
  %v2177 = vadd.f32 0.0, %v2176
  %2178 = vmatmul.f32.gmra.mxu0 %v2153
  %v2179 = vpop.f32.mrf.mxu0
  %v2180 = vadd.f32 0.0, %v2179
  %2181 = vmatmul.f32.gmra.mxu0 %v2155
  %v2182 = vpop.f32.mrf.mxu0
  %v2183 = vadd.f32 0.0, %v2182
  %2184 = vmatmul.f32.gmra.mxu0 %v2157
  %v2185 = vpop.f32.mrf.mxu0
  %v2186 = vadd.f32 0.0, %v2185
  %2187 = vdwg.mxu0
  %2188 = vmatpush.msra.mxu0 0.0
  %2189 = vmatpush.msra.mxu0 0.0
  %2190 = vmatpush.msra.mxu0 0.0
  %2191 = vmatpush.msra.mxu0 0.0
  %2192 = vmatpush.msra.mxu0 0.0
  %2193 = vmatpush.msra.mxu0 0.0
  %2194 = vmatpush.msra.mxu0 0.0
  %2195 = vmatpush.msra.mxu0 0.0
  %2196 = vmatpush.msra.mxu0 0.0
  %2197 = vmatpush.msra.mxu0 0.0
  %2198 = vmatpush.msra.mxu0 0.0
  %2199 = vmatpush.msra.mxu0 0.0
  %2200 = vmatpush.msra.mxu0 %v2140
  %2201 = vmatpush.msra.mxu0 %v2136
  %2202 = vmatpush.msra.mxu0 %v2132
  %2203 = vmatpush.msra.mxu0 %v2128
  %2204 = vmatmul.f32.gmra.mxu0 %v2151
  %v2205 = vpop.f32.mrf.mxu0
  %v2206 = vadd.f32 0.0, %v2205
  %2207 = vmatmul.f32.gmra.mxu0 %v2153
  %v2208 = vpop.f32.mrf.mxu0
  %v2209 = vadd.f32 0.0, %v2208
  %2210 = vmatmul.f32.gmra.mxu0 %v2155
  %v2211 = vpop.f32.mrf.mxu0
  %v2212 = vadd.f32 0.0, %v2211
  %2213 = vmatmul.f32.gmra.mxu0 %v2157
  %v2214 = vpop.f32.mrf.mxu0
  %v2215 = vadd.f32 0.0, %v2214
  %2216 = vdwg.mxu0
  %2217 = vmatpush.msra.mxu0 0.0
  %2218 = vmatpush.msra.mxu0 0.0
  %2219 = vmatpush.msra.mxu0 0.0
  %2220 = vmatpush.msra.mxu0 0.0
  %2221 = vmatpush.msra.mxu0 0.0
  %2222 = vmatpush.msra.mxu0 0.0
  %2223 = vmatpush.msra.mxu0 0.0
  %2224 = vmatpush.msra.mxu0 0.0
  %2225 = vmatpush.msra.mxu0 0.0
  %2226 = vmatpush.msra.mxu0 0.0
  %2227 = vmatpush.msra.mxu0 0.0
  %2228 = vmatpush.msra.mxu0 0.0
  %2229 = vmatpush.msra.mxu0 %v2141
  %2230 = vmatpush.msra.mxu0 %v2137
  %2231 = vmatpush.msra.mxu0 %v2133
  %2232 = vmatpush.msra.mxu0 %v2129
  %2233 = vmatmul.f32.gmra.mxu0 %v2151
  %v2234 = vpop.f32.mrf.mxu0
  %v2235 = vadd.f32 0.0, %v2234
  %2236 = vmatmul.f32.gmra.mxu0 %v2153
  %v2237 = vpop.f32.mrf.mxu0
  %v2238 = vadd.f32 0.0, %v2237
  %2239 = vmatmul.f32.gmra.mxu0 %v2155
  %v2240 = vpop.f32.mrf.mxu0
  %v2241 = vadd.f32 0.0, %v2240
  %2242 = vmatmul.f32.gmra.mxu0 %v2157
  %v2243 = vpop.f32.mrf.mxu0
  %v2244 = vadd.f32 0.0, %v2243
  %2245 = vdwg.mxu0
  %2246 = vmatpush.msra.mxu0 0.0
  %2247 = vmatpush.msra.mxu0 0.0
  %2248 = vmatpush.msra.mxu0 0.0
  %2249 = vmatpush.msra.mxu0 0.0
  %2250 = vmatpush.msra.mxu0 0.0
  %2251 = vmatpush.msra.mxu0 0.0
  %2252 = vmatpush.msra.mxu0 0.0
  %2253 = vmatpush.msra.mxu0 0.0
  %2254 = vmatpush.msra.mxu0 0.0
  %2255 = vmatpush.msra.mxu0 0.0
  %2256 = vmatpush.msra.mxu0 0.0
  %2257 = vmatpush.msra.mxu0 0.0
  %2258 = vmatpush.msra.mxu0 %v2142
  %2259 = vmatpush.msra.mxu0 %v2138
  %2260 = vmatpush.msra.mxu0 %v2134
  %2261 = vmatpush.msra.mxu0 %v2130
  %2262 = vmatmul.f32.gmra.mxu0 %v2151
  %v2263 = vpop.f32.mrf.mxu0
  %v2264 = vadd.f32 0.0, %v2263
  %2265 = vmatmul.f32.gmra.mxu0 %v2153
  %v2266 = vpop.f32.mrf.mxu0
  %v2267 = vadd.f32 0.0, %v2266
  %2268 = vmatmul.f32.gmra.mxu0 %v2155
  %v2269 = vpop.f32.mrf.mxu0
  %v2270 = vadd.f32 0.0, %v2269
  %2271 = vmatmul.f32.gmra.mxu0 %v2157
  %v2272 = vpop.f32.mrf.mxu0
  %v2273 = vadd.f32 0.0, %v2272
  %2274 = vdwg.mxu0
  %v2275 = vadd.f32 %v2051, %v2177
  %v2276 = vadd.f32 %v2052, %v2206
  %v2277 = vadd.f32 %v2053, %v2235
  %v2278 = vadd.f32 %v2054, %v2264
  %v2279 = vadd.f32 %v2055, %v2180
  %v2280 = vadd.f32 %v2056, %v2209
  %v2281 = vadd.f32 %v2057, %v2238
  %v2282 = vadd.f32 %v2058, %v2267
  %v2283 = vadd.f32 %v2059, %v2183
  %v2284 = vadd.f32 %v2060, %v2212
  %v2285 = vadd.f32 %v2061, %v2241
  %v2286 = vadd.f32 %v2062, %v2270
  %v2287 = vadd.f32 %v2063, %v2186
  %v2288 = vadd.f32 %v2064, %v2215
  %v2289 = vadd.f32 %v2065, %v2244
  %v2290 = vadd.f32 %v2066, %v2273
  %2291 = vrot.lane.b32.xlu0 %v358, 55
  %v2292 = vpop.permute.xlu0 %2291
  %2293 = vrot.lane.b32.xlu0 %v362, 55
  %v2294 = vpop.permute.xlu0 %2293
  %2295 = vrot.lane.b32.xlu0 %v366, 55
  %v2296 = vpop.permute.xlu0 %2295
  %2297 = vrot.lane.b32.xlu0 %v370, 55
  %v2298 = vpop.permute.xlu0 %2297
  %2299 = vrot.lane.b32.xlu0 %v359, 55
  %v2300 = vpop.permute.xlu0 %2299
  %2301 = vrot.lane.b32.xlu0 %v363, 55
  %v2302 = vpop.permute.xlu0 %2301
  %2303 = vrot.lane.b32.xlu0 %v367, 55
  %v2304 = vpop.permute.xlu0 %2303
  %2305 = vrot.lane.b32.xlu0 %v371, 55
  %v2306 = vpop.permute.xlu0 %2305
  %2307 = vrot.lane.b32.xlu0 %v360, 55
  %v2308 = vpop.permute.xlu0 %2307
  %2309 = vrot.lane.b32.xlu0 %v364, 55
  %v2310 = vpop.permute.xlu0 %2309
  %2311 = vrot.lane.b32.xlu0 %v368, 55
  %v2312 = vpop.permute.xlu0 %2311
  %2313 = vrot.lane.b32.xlu0 %v372, 55
  %v2314 = vpop.permute.xlu0 %2313
  %2315 = vrot.lane.b32.xlu0 %v361, 55
  %v2316 = vpop.permute.xlu0 %2315
  %2317 = vrot.lane.b32.xlu0 %v365, 55
  %v2318 = vpop.permute.xlu0 %2317
  %2319 = vrot.lane.b32.xlu0 %v369, 55
  %v2320 = vpop.permute.xlu0 %2319
  %2321 = vrot.lane.b32.xlu0 %v373, 55
  %v2322 = vpop.permute.xlu0 %2321
  %vm2323 = vcmp.lt.s32.totalorder %v411, 55
  %v2324 = vsel %vm2323, %v2308, %v2316
  %v2325 = vsel %vm2323, %v2310, %v2318
  %v2326 = vsel %vm2323, %v2312, %v2320
  %v2327 = vsel %vm2323, %v2314, %v2322
  %v2328 = vsel %vm2323, %v2300, %v2308
  %v2329 = vsel %vm2323, %v2302, %v2310
  %v2330 = vsel %vm2323, %v2304, %v2312
  %v2331 = vsel %vm2323, %v2306, %v2314
  %v2332 = vsel %vm2323, %v2292, %v2300
  %v2333 = vsel %vm2323, %v2294, %v2302
  %v2334 = vsel %vm2323, %v2296, %v2304
  %v2335 = vsel %vm2323, %v2298, %v2306
  %v2336 = vsel %vm2323, %v2316, %v2292
  %v2337 = vsel %vm2323, %v2318, %v2294
  %v2338 = vsel %vm2323, %v2320, %v2296
  %v2339 = vsel %vm2323, %v2322, %v2298
  %s2340 = scalar_lea.vmem %s1, 32
  %v2341 = vld [vmem:[%s2340] ss:$8 sm:$0xf]
  %v2343 = vperm.slane %v2341, 0
  %v2344 = vperm.slane %v2341, 1
  %v2345 = vperm.slane %v2341, 2
  %v2346 = vperm.slane %v2341, 3
  %v2351 = vmul.f32 %v2336, %v2343
  %v2352 = vmul.f32 %v2332, %v2344
  %v2353 = vmul.f32 %v2328, %v2345
  %v2354 = vmul.f32 %v2324, %v2346
  %v2355 = vmul.f32 %v2337, %v2343
  %v2356 = vmul.f32 %v2333, %v2344
  %v2357 = vmul.f32 %v2329, %v2345
  %v2358 = vmul.f32 %v2325, %v2346
  %v2359 = vmul.f32 %v2338, %v2343
  %v2360 = vmul.f32 %v2334, %v2344
  %v2361 = vmul.f32 %v2330, %v2345
  %v2362 = vmul.f32 %v2326, %v2346
  %v2363 = vmul.f32 %v2339, %v2343
  %v2364 = vmul.f32 %v2335, %v2344
  %v2365 = vmul.f32 %v2331, %v2345
  %v2366 = vmul.f32 %v2327, %v2346
  %v2367 = vld [vmem:[%s2 + $0x10] sm:$0xff]
  %v2368 = vld [vmem:[%s2 + $0x48] sm:$0xff]
  %v2369 = vld [vmem:[%s2 + $0x80] sm:$0xff]
  %v2370 = vld [vmem:[%s2 + $0xb8] sm:$0xff]
  %v2372 = vsel %vm37, %v2367, 0
  %v2375 = vsel %vm37, %v2368, 0
  %v2378 = vsel %vm37, %v2369, 0
  %v2381 = vsel %vm37, %v2370, 0
  %2383 = vmatpush.msra.mxu0 0.0
  %2384 = vmatpush.msra.mxu0 0.0
  %2385 = vmatpush.msra.mxu0 0.0
  %2386 = vmatpush.msra.mxu0 0.0
  %2387 = vmatpush.msra.mxu0 0.0
  %2388 = vmatpush.msra.mxu0 0.0
  %2389 = vmatpush.msra.mxu0 0.0
  %2390 = vmatpush.msra.mxu0 0.0
  %2391 = vmatpush.msra.mxu0 0.0
  %2392 = vmatpush.msra.mxu0 0.0
  %2393 = vmatpush.msra.mxu0 0.0
  %2394 = vmatpush.msra.mxu0 0.0
  %2395 = vmatpush.msra.mxu0 %v2363
  %2396 = vmatpush.msra.mxu0 %v2359
  %2397 = vmatpush.msra.mxu0 %v2355
  %2398 = vmatpush.msra.mxu0 %v2351
  %2399 = vmatmul.f32.gmra.mxu0 %v2372
  %v2400 = vpop.f32.mrf.mxu0
  %v2401 = vadd.f32 0.0, %v2400
  %2402 = vmatmul.f32.gmra.mxu0 %v2375
  %v2403 = vpop.f32.mrf.mxu0
  %v2404 = vadd.f32 0.0, %v2403
  %2405 = vmatmul.f32.gmra.mxu0 %v2378
  %v2406 = vpop.f32.mrf.mxu0
  %v2407 = vadd.f32 0.0, %v2406
  %2408 = vmatmul.f32.gmra.mxu0 %v2381
  %v2409 = vpop.f32.mrf.mxu0
  %v2410 = vadd.f32 0.0, %v2409
  %2411 = vdwg.mxu0
  %2412 = vmatpush.msra.mxu0 0.0
  %2413 = vmatpush.msra.mxu0 0.0
  %2414 = vmatpush.msra.mxu0 0.0
  %2415 = vmatpush.msra.mxu0 0.0
  %2416 = vmatpush.msra.mxu0 0.0
  %2417 = vmatpush.msra.mxu0 0.0
  %2418 = vmatpush.msra.mxu0 0.0
  %2419 = vmatpush.msra.mxu0 0.0
  %2420 = vmatpush.msra.mxu0 0.0
  %2421 = vmatpush.msra.mxu0 0.0
  %2422 = vmatpush.msra.mxu0 0.0
  %2423 = vmatpush.msra.mxu0 0.0
  %2424 = vmatpush.msra.mxu0 %v2364
  %2425 = vmatpush.msra.mxu0 %v2360
  %2426 = vmatpush.msra.mxu0 %v2356
  %2427 = vmatpush.msra.mxu0 %v2352
  %2428 = vmatmul.f32.gmra.mxu0 %v2372
  %v2429 = vpop.f32.mrf.mxu0
  %v2430 = vadd.f32 0.0, %v2429
  %2431 = vmatmul.f32.gmra.mxu0 %v2375
  %v2432 = vpop.f32.mrf.mxu0
  %v2433 = vadd.f32 0.0, %v2432
  %2434 = vmatmul.f32.gmra.mxu0 %v2378
  %v2435 = vpop.f32.mrf.mxu0
  %v2436 = vadd.f32 0.0, %v2435
  %2437 = vmatmul.f32.gmra.mxu0 %v2381
  %v2438 = vpop.f32.mrf.mxu0
  %v2439 = vadd.f32 0.0, %v2438
  %2440 = vdwg.mxu0
  %2441 = vmatpush.msra.mxu0 0.0
  %2442 = vmatpush.msra.mxu0 0.0
  %2443 = vmatpush.msra.mxu0 0.0
  %2444 = vmatpush.msra.mxu0 0.0
  %2445 = vmatpush.msra.mxu0 0.0
  %2446 = vmatpush.msra.mxu0 0.0
  %2447 = vmatpush.msra.mxu0 0.0
  %2448 = vmatpush.msra.mxu0 0.0
  %2449 = vmatpush.msra.mxu0 0.0
  %2450 = vmatpush.msra.mxu0 0.0
  %2451 = vmatpush.msra.mxu0 0.0
  %2452 = vmatpush.msra.mxu0 0.0
  %2453 = vmatpush.msra.mxu0 %v2365
  %2454 = vmatpush.msra.mxu0 %v2361
  %2455 = vmatpush.msra.mxu0 %v2357
  %2456 = vmatpush.msra.mxu0 %v2353
  %2457 = vmatmul.f32.gmra.mxu0 %v2372
  %v2458 = vpop.f32.mrf.mxu0
  %v2459 = vadd.f32 0.0, %v2458
  %2460 = vmatmul.f32.gmra.mxu0 %v2375
  %v2461 = vpop.f32.mrf.mxu0
  %v2462 = vadd.f32 0.0, %v2461
  %2463 = vmatmul.f32.gmra.mxu0 %v2378
  %v2464 = vpop.f32.mrf.mxu0
  %v2465 = vadd.f32 0.0, %v2464
  %2466 = vmatmul.f32.gmra.mxu0 %v2381
  %v2467 = vpop.f32.mrf.mxu0
  %v2468 = vadd.f32 0.0, %v2467
  %2469 = vdwg.mxu0
  %2470 = vmatpush.msra.mxu0 0.0
  %2471 = vmatpush.msra.mxu0 0.0
  %2472 = vmatpush.msra.mxu0 0.0
  %2473 = vmatpush.msra.mxu0 0.0
  %2474 = vmatpush.msra.mxu0 0.0
  %2475 = vmatpush.msra.mxu0 0.0
  %2476 = vmatpush.msra.mxu0 0.0
  %2477 = vmatpush.msra.mxu0 0.0
  %2478 = vmatpush.msra.mxu0 0.0
  %2479 = vmatpush.msra.mxu0 0.0
  %2480 = vmatpush.msra.mxu0 0.0
  %2481 = vmatpush.msra.mxu0 0.0
  %2482 = vmatpush.msra.mxu0 %v2366
  %2483 = vmatpush.msra.mxu0 %v2362
  %2484 = vmatpush.msra.mxu0 %v2358
  %2485 = vmatpush.msra.mxu0 %v2354
  %2486 = vmatmul.f32.gmra.mxu0 %v2372
  %v2487 = vpop.f32.mrf.mxu0
  %v2488 = vadd.f32 0.0, %v2487
  %2489 = vmatmul.f32.gmra.mxu0 %v2375
  %v2490 = vpop.f32.mrf.mxu0
  %v2491 = vadd.f32 0.0, %v2490
  %2492 = vmatmul.f32.gmra.mxu0 %v2378
  %v2493 = vpop.f32.mrf.mxu0
  %v2494 = vadd.f32 0.0, %v2493
  %2495 = vmatmul.f32.gmra.mxu0 %v2381
  %v2496 = vpop.f32.mrf.mxu0
  %v2497 = vadd.f32 0.0, %v2496
  %2498 = vdwg.mxu0
  %v2499 = vadd.f32 %v2275, %v2401
  %v2500 = vadd.f32 %v2276, %v2430
  %v2501 = vadd.f32 %v2277, %v2459
  %v2502 = vadd.f32 %v2278, %v2488
  %v2503 = vadd.f32 %v2279, %v2404
  %v2504 = vadd.f32 %v2280, %v2433
  %v2505 = vadd.f32 %v2281, %v2462
  %v2506 = vadd.f32 %v2282, %v2491
  %v2507 = vadd.f32 %v2283, %v2407
  %v2508 = vadd.f32 %v2284, %v2436
  %v2509 = vadd.f32 %v2285, %v2465
  %v2510 = vadd.f32 %v2286, %v2494
  %v2511 = vadd.f32 %v2287, %v2410
  %v2512 = vadd.f32 %v2288, %v2439
  %v2513 = vadd.f32 %v2289, %v2468
  %v2514 = vadd.f32 %v2290, %v2497
  %2515 = vrot.lane.b32.xlu0 %v358, 9
  %v2516 = vpop.permute.xlu0 %2515
  %2517 = vrot.lane.b32.xlu0 %v362, 9
  %v2518 = vpop.permute.xlu0 %2517
  %2519 = vrot.lane.b32.xlu0 %v366, 9
  %v2520 = vpop.permute.xlu0 %2519
  %2521 = vrot.lane.b32.xlu0 %v370, 9
  %v2522 = vpop.permute.xlu0 %2521
  %2523 = vrot.lane.b32.xlu0 %v359, 9
  %v2524 = vpop.permute.xlu0 %2523
  %2525 = vrot.lane.b32.xlu0 %v363, 9
  %v2526 = vpop.permute.xlu0 %2525
  %2527 = vrot.lane.b32.xlu0 %v367, 9
  %v2528 = vpop.permute.xlu0 %2527
  %2529 = vrot.lane.b32.xlu0 %v371, 9
  %v2530 = vpop.permute.xlu0 %2529
  %2531 = vrot.lane.b32.xlu0 %v360, 9
  %v2532 = vpop.permute.xlu0 %2531
  %2533 = vrot.lane.b32.xlu0 %v364, 9
  %v2534 = vpop.permute.xlu0 %2533
  %2535 = vrot.lane.b32.xlu0 %v368, 9
  %v2536 = vpop.permute.xlu0 %2535
  %2537 = vrot.lane.b32.xlu0 %v372, 9
  %v2538 = vpop.permute.xlu0 %2537
  %2539 = vrot.lane.b32.xlu0 %v361, 9
  %v2540 = vpop.permute.xlu0 %2539
  %2541 = vrot.lane.b32.xlu0 %v365, 9
  %v2542 = vpop.permute.xlu0 %2541
  %2543 = vrot.lane.b32.xlu0 %v369, 9
  %v2544 = vpop.permute.xlu0 %2543
  %2545 = vrot.lane.b32.xlu0 %v373, 9
  %v2546 = vpop.permute.xlu0 %2545
  %vm2547 = vcmp.lt.s32.totalorder %v411, 9
  %v2548 = vsel %vm2547, %v2532, %v2540
  %v2549 = vsel %vm2547, %v2534, %v2542
  %v2550 = vsel %vm2547, %v2536, %v2544
  %v2551 = vsel %vm2547, %v2538, %v2546
  %v2552 = vsel %vm2547, %v2524, %v2532
  %v2553 = vsel %vm2547, %v2526, %v2534
  %v2554 = vsel %vm2547, %v2528, %v2536
  %v2555 = vsel %vm2547, %v2530, %v2538
  %v2556 = vsel %vm2547, %v2516, %v2524
  %v2557 = vsel %vm2547, %v2518, %v2526
  %v2558 = vsel %vm2547, %v2520, %v2528
  %v2559 = vsel %vm2547, %v2522, %v2530
  %v2560 = vsel %vm2547, %v2540, %v2516
  %v2561 = vsel %vm2547, %v2542, %v2518
  %v2562 = vsel %vm2547, %v2544, %v2520
  %v2563 = vsel %vm2547, %v2546, %v2522
  %s2564 = scalar_lea.vmem %s1, 33
  %v2565 = vld [vmem:[%s2564] ss:$8 sm:$0xf]
  %v2567 = vperm.slane %v2565, 0
  %v2568 = vperm.slane %v2565, 1
  %v2569 = vperm.slane %v2565, 2
  %v2570 = vperm.slane %v2565, 3
  %v2575 = vmul.f32 %v2560, %v2567
  %v2576 = vmul.f32 %v2556, %v2568
  %v2577 = vmul.f32 %v2552, %v2569
  %v2578 = vmul.f32 %v2548, %v2570
  %v2579 = vmul.f32 %v2561, %v2567
  %v2580 = vmul.f32 %v2557, %v2568
  %v2581 = vmul.f32 %v2553, %v2569
  %v2582 = vmul.f32 %v2549, %v2570
  %v2583 = vmul.f32 %v2562, %v2567
  %v2584 = vmul.f32 %v2558, %v2568
  %v2585 = vmul.f32 %v2554, %v2569
  %v2586 = vmul.f32 %v2550, %v2570
  %v2587 = vmul.f32 %v2563, %v2567
  %v2588 = vmul.f32 %v2559, %v2568
  %v2589 = vmul.f32 %v2555, %v2569
  %v2590 = vmul.f32 %v2551, %v2570
  %2591 = vrot.lane.b32.xlu0 %v2367, 96
  %v2592 = vpop.permute.xlu0 %2591
  %2593 = vrot.lane.b32.xlu0 %v2368, 96
  %v2594 = vpop.permute.xlu0 %2593
  %2595 = vrot.lane.b32.xlu0 %v2369, 96
  %v2596 = vpop.permute.xlu0 %2595
  %2597 = vrot.lane.b32.xlu0 %v2370, 96
  %v2598 = vpop.permute.xlu0 %2597
  %v2599 = vsel %vm37, %v2592, 0
  %v2601 = vsel %vm37, %v2594, 0
  %v2603 = vsel %vm37, %v2596, 0
  %v2605 = vsel %vm37, %v2598, 0
  %2607 = vmatpush.msra.mxu0 0.0
  %2608 = vmatpush.msra.mxu0 0.0
  %2609 = vmatpush.msra.mxu0 0.0
  %2610 = vmatpush.msra.mxu0 0.0
  %2611 = vmatpush.msra.mxu0 0.0
  %2612 = vmatpush.msra.mxu0 0.0
  %2613 = vmatpush.msra.mxu0 0.0
  %2614 = vmatpush.msra.mxu0 0.0
  %2615 = vmatpush.msra.mxu0 0.0
  %2616 = vmatpush.msra.mxu0 0.0
  %2617 = vmatpush.msra.mxu0 0.0
  %2618 = vmatpush.msra.mxu0 0.0
  %2619 = vmatpush.msra.mxu0 %v2587
  %2620 = vmatpush.msra.mxu0 %v2583
  %2621 = vmatpush.msra.mxu0 %v2579
  %2622 = vmatpush.msra.mxu0 %v2575
  %2623 = vmatmul.f32.gmra.mxu0 %v2599
  %v2624 = vpop.f32.mrf.mxu0
  %v2625 = vadd.f32 0.0, %v2624
  %2626 = vmatmul.f32.gmra.mxu0 %v2601
  %v2627 = vpop.f32.mrf.mxu0
  %v2628 = vadd.f32 0.0, %v2627
  %2629 = vmatmul.f32.gmra.mxu0 %v2603
  %v2630 = vpop.f32.mrf.mxu0
  %v2631 = vadd.f32 0.0, %v2630
  %2632 = vmatmul.f32.gmra.mxu0 %v2605
  %v2633 = vpop.f32.mrf.mxu0
  %v2634 = vadd.f32 0.0, %v2633
  %2635 = vdwg.mxu0
  %2636 = vmatpush.msra.mxu0 0.0
  %2637 = vmatpush.msra.mxu0 0.0
  %2638 = vmatpush.msra.mxu0 0.0
  %2639 = vmatpush.msra.mxu0 0.0
  %2640 = vmatpush.msra.mxu0 0.0
  %2641 = vmatpush.msra.mxu0 0.0
  %2642 = vmatpush.msra.mxu0 0.0
  %2643 = vmatpush.msra.mxu0 0.0
  %2644 = vmatpush.msra.mxu0 0.0
  %2645 = vmatpush.msra.mxu0 0.0
  %2646 = vmatpush.msra.mxu0 0.0
  %2647 = vmatpush.msra.mxu0 0.0
  %2648 = vmatpush.msra.mxu0 %v2588
  %2649 = vmatpush.msra.mxu0 %v2584
  %2650 = vmatpush.msra.mxu0 %v2580
  %2651 = vmatpush.msra.mxu0 %v2576
  %2652 = vmatmul.f32.gmra.mxu0 %v2599
  %v2653 = vpop.f32.mrf.mxu0
  %v2654 = vadd.f32 0.0, %v2653
  %2655 = vmatmul.f32.gmra.mxu0 %v2601
  %v2656 = vpop.f32.mrf.mxu0
  %v2657 = vadd.f32 0.0, %v2656
  %2658 = vmatmul.f32.gmra.mxu0 %v2603
  %v2659 = vpop.f32.mrf.mxu0
  %v2660 = vadd.f32 0.0, %v2659
  %2661 = vmatmul.f32.gmra.mxu0 %v2605
  %v2662 = vpop.f32.mrf.mxu0
  %v2663 = vadd.f32 0.0, %v2662
  %2664 = vdwg.mxu0
  %2665 = vmatpush.msra.mxu0 0.0
  %2666 = vmatpush.msra.mxu0 0.0
  %2667 = vmatpush.msra.mxu0 0.0
  %2668 = vmatpush.msra.mxu0 0.0
  %2669 = vmatpush.msra.mxu0 0.0
  %2670 = vmatpush.msra.mxu0 0.0
  %2671 = vmatpush.msra.mxu0 0.0
  %2672 = vmatpush.msra.mxu0 0.0
  %2673 = vmatpush.msra.mxu0 0.0
  %2674 = vmatpush.msra.mxu0 0.0
  %2675 = vmatpush.msra.mxu0 0.0
  %2676 = vmatpush.msra.mxu0 0.0
  %2677 = vmatpush.msra.mxu0 %v2589
  %2678 = vmatpush.msra.mxu0 %v2585
  %2679 = vmatpush.msra.mxu0 %v2581
  %2680 = vmatpush.msra.mxu0 %v2577
  %2681 = vmatmul.f32.gmra.mxu0 %v2599
  %v2682 = vpop.f32.mrf.mxu0
  %v2683 = vadd.f32 0.0, %v2682
  %2684 = vmatmul.f32.gmra.mxu0 %v2601
  %v2685 = vpop.f32.mrf.mxu0
  %v2686 = vadd.f32 0.0, %v2685
  %2687 = vmatmul.f32.gmra.mxu0 %v2603
  %v2688 = vpop.f32.mrf.mxu0
  %v2689 = vadd.f32 0.0, %v2688
  %2690 = vmatmul.f32.gmra.mxu0 %v2605
  %v2691 = vpop.f32.mrf.mxu0
  %v2692 = vadd.f32 0.0, %v2691
  %2693 = vdwg.mxu0
  %2694 = vmatpush.msra.mxu0 0.0
  %2695 = vmatpush.msra.mxu0 0.0
  %2696 = vmatpush.msra.mxu0 0.0
  %2697 = vmatpush.msra.mxu0 0.0
  %2698 = vmatpush.msra.mxu0 0.0
  %2699 = vmatpush.msra.mxu0 0.0
  %2700 = vmatpush.msra.mxu0 0.0
  %2701 = vmatpush.msra.mxu0 0.0
  %2702 = vmatpush.msra.mxu0 0.0
  %2703 = vmatpush.msra.mxu0 0.0
  %2704 = vmatpush.msra.mxu0 0.0
  %2705 = vmatpush.msra.mxu0 0.0
  %2706 = vmatpush.msra.mxu0 %v2590
  %2707 = vmatpush.msra.mxu0 %v2586
  %2708 = vmatpush.msra.mxu0 %v2582
  %2709 = vmatpush.msra.mxu0 %v2578
  %2710 = vmatmul.f32.gmra.mxu0 %v2599
  %v2711 = vpop.f32.mrf.mxu0
  %v2712 = vadd.f32 0.0, %v2711
  %2713 = vmatmul.f32.gmra.mxu0 %v2601
  %v2714 = vpop.f32.mrf.mxu0
  %v2715 = vadd.f32 0.0, %v2714
  %2716 = vmatmul.f32.gmra.mxu0 %v2603
  %v2717 = vpop.f32.mrf.mxu0
  %v2718 = vadd.f32 0.0, %v2717
  %2719 = vmatmul.f32.gmra.mxu0 %v2605
  %v2720 = vpop.f32.mrf.mxu0
  %v2721 = vadd.f32 0.0, %v2720
  %2722 = vdwg.mxu0
  %v2723 = vadd.f32 %v2499, %v2625
  %v2724 = vadd.f32 %v2500, %v2654
  %v2725 = vadd.f32 %v2501, %v2683
  %v2726 = vadd.f32 %v2502, %v2712
  %v2727 = vadd.f32 %v2503, %v2628
  %v2728 = vadd.f32 %v2504, %v2657
  %v2729 = vadd.f32 %v2505, %v2686
  %v2730 = vadd.f32 %v2506, %v2715
  %v2731 = vadd.f32 %v2507, %v2631
  %v2732 = vadd.f32 %v2508, %v2660
  %v2733 = vadd.f32 %v2509, %v2689
  %v2734 = vadd.f32 %v2510, %v2718
  %v2735 = vadd.f32 %v2511, %v2634
  %v2736 = vadd.f32 %v2512, %v2663
  %v2737 = vadd.f32 %v2513, %v2692
  %v2738 = vadd.f32 %v2514, %v2721
  %2739 = vrot.lane.b32.xlu0 %v358, 8
  %v2740 = vpop.permute.xlu0 %2739
  %2741 = vrot.lane.b32.xlu0 %v362, 8
  %v2742 = vpop.permute.xlu0 %2741
  %2743 = vrot.lane.b32.xlu0 %v366, 8
  %v2744 = vpop.permute.xlu0 %2743
  %2745 = vrot.lane.b32.xlu0 %v370, 8
  %v2746 = vpop.permute.xlu0 %2745
  %2747 = vrot.lane.b32.xlu0 %v359, 8
  %v2748 = vpop.permute.xlu0 %2747
  %2749 = vrot.lane.b32.xlu0 %v363, 8
  %v2750 = vpop.permute.xlu0 %2749
  %2751 = vrot.lane.b32.xlu0 %v367, 8
  %v2752 = vpop.permute.xlu0 %2751
  %2753 = vrot.lane.b32.xlu0 %v371, 8
  %v2754 = vpop.permute.xlu0 %2753
  %2755 = vrot.lane.b32.xlu0 %v360, 8
  %v2756 = vpop.permute.xlu0 %2755
  %2757 = vrot.lane.b32.xlu0 %v364, 8
  %v2758 = vpop.permute.xlu0 %2757
  %2759 = vrot.lane.b32.xlu0 %v368, 8
  %v2760 = vpop.permute.xlu0 %2759
  %2761 = vrot.lane.b32.xlu0 %v372, 8
  %v2762 = vpop.permute.xlu0 %2761
  %2763 = vrot.lane.b32.xlu0 %v361, 8
  %v2764 = vpop.permute.xlu0 %2763
  %2765 = vrot.lane.b32.xlu0 %v365, 8
  %v2766 = vpop.permute.xlu0 %2765
  %2767 = vrot.lane.b32.xlu0 %v369, 8
  %v2768 = vpop.permute.xlu0 %2767
  %2769 = vrot.lane.b32.xlu0 %v373, 8
  %v2770 = vpop.permute.xlu0 %2769
  %vm2771 = vcmp.lt.s32.totalorder %v411, 8
  %v2772 = vsel %vm2771, %v2756, %v2764
  %v2773 = vsel %vm2771, %v2758, %v2766
  %v2774 = vsel %vm2771, %v2760, %v2768
  %v2775 = vsel %vm2771, %v2762, %v2770
  %v2776 = vsel %vm2771, %v2748, %v2756
  %v2777 = vsel %vm2771, %v2750, %v2758
  %v2778 = vsel %vm2771, %v2752, %v2760
  %v2779 = vsel %vm2771, %v2754, %v2762
  %v2780 = vsel %vm2771, %v2740, %v2748
  %v2781 = vsel %vm2771, %v2742, %v2750
  %v2782 = vsel %vm2771, %v2744, %v2752
  %v2783 = vsel %vm2771, %v2746, %v2754
  %v2784 = vsel %vm2771, %v2764, %v2740
  %v2785 = vsel %vm2771, %v2766, %v2742
  %v2786 = vsel %vm2771, %v2768, %v2744
  %v2787 = vsel %vm2771, %v2770, %v2746
  %s2788 = scalar_lea.vmem %s1, 34
  %v2789 = vld [vmem:[%s2788] ss:$8 sm:$0xf]
  %v2791 = vperm.slane %v2789, 0
  %v2792 = vperm.slane %v2789, 1
  %v2793 = vperm.slane %v2789, 2
  %v2794 = vperm.slane %v2789, 3
  %v2799 = vmul.f32 %v2784, %v2791
  %v2800 = vmul.f32 %v2780, %v2792
  %v2801 = vmul.f32 %v2776, %v2793
  %v2802 = vmul.f32 %v2772, %v2794
  %v2803 = vmul.f32 %v2785, %v2791
  %v2804 = vmul.f32 %v2781, %v2792
  %v2805 = vmul.f32 %v2777, %v2793
  %v2806 = vmul.f32 %v2773, %v2794
  %v2807 = vmul.f32 %v2786, %v2791
  %v2808 = vmul.f32 %v2782, %v2792
  %v2809 = vmul.f32 %v2778, %v2793
  %v2810 = vmul.f32 %v2774, %v2794
  %v2811 = vmul.f32 %v2787, %v2791
  %v2812 = vmul.f32 %v2783, %v2792
  %v2813 = vmul.f32 %v2779, %v2793
  %v2814 = vmul.f32 %v2775, %v2794
  %2815 = vrot.lane.b32.xlu0 %v2367, 64
  %v2816 = vpop.permute.xlu0 %2815
  %2817 = vrot.lane.b32.xlu0 %v2368, 64
  %v2818 = vpop.permute.xlu0 %2817
  %2819 = vrot.lane.b32.xlu0 %v2369, 64
  %v2820 = vpop.permute.xlu0 %2819
  %2821 = vrot.lane.b32.xlu0 %v2370, 64
  %v2822 = vpop.permute.xlu0 %2821
  %v2823 = vsel %vm37, %v2816, 0
  %v2825 = vsel %vm37, %v2818, 0
  %v2827 = vsel %vm37, %v2820, 0
  %v2829 = vsel %vm37, %v2822, 0
  %2831 = vmatpush.msra.mxu0 0.0
  %2832 = vmatpush.msra.mxu0 0.0
  %2833 = vmatpush.msra.mxu0 0.0
  %2834 = vmatpush.msra.mxu0 0.0
  %2835 = vmatpush.msra.mxu0 0.0
  %2836 = vmatpush.msra.mxu0 0.0
  %2837 = vmatpush.msra.mxu0 0.0
  %2838 = vmatpush.msra.mxu0 0.0
  %2839 = vmatpush.msra.mxu0 0.0
  %2840 = vmatpush.msra.mxu0 0.0
  %2841 = vmatpush.msra.mxu0 0.0
  %2842 = vmatpush.msra.mxu0 0.0
  %2843 = vmatpush.msra.mxu0 %v2811
  %2844 = vmatpush.msra.mxu0 %v2807
  %2845 = vmatpush.msra.mxu0 %v2803
  %2846 = vmatpush.msra.mxu0 %v2799
  %2847 = vmatmul.f32.gmra.mxu0 %v2823
  %v2848 = vpop.f32.mrf.mxu0
  %v2849 = vadd.f32 0.0, %v2848
  %2850 = vmatmul.f32.gmra.mxu0 %v2825
  %v2851 = vpop.f32.mrf.mxu0
  %v2852 = vadd.f32 0.0, %v2851
  %2853 = vmatmul.f32.gmra.mxu0 %v2827
  %v2854 = vpop.f32.mrf.mxu0
  %v2855 = vadd.f32 0.0, %v2854
  %2856 = vmatmul.f32.gmra.mxu0 %v2829
  %v2857 = vpop.f32.mrf.mxu0
  %v2858 = vadd.f32 0.0, %v2857
  %2859 = vdwg.mxu0
  %2860 = vmatpush.msra.mxu0 0.0
  %2861 = vmatpush.msra.mxu0 0.0
  %2862 = vmatpush.msra.mxu0 0.0
  %2863 = vmatpush.msra.mxu0 0.0
  %2864 = vmatpush.msra.mxu0 0.0
  %2865 = vmatpush.msra.mxu0 0.0
  %2866 = vmatpush.msra.mxu0 0.0
  %2867 = vmatpush.msra.mxu0 0.0
  %2868 = vmatpush.msra.mxu0 0.0
  %2869 = vmatpush.msra.mxu0 0.0
  %2870 = vmatpush.msra.mxu0 0.0
  %2871 = vmatpush.msra.mxu0 0.0
  %2872 = vmatpush.msra.mxu0 %v2812
  %2873 = vmatpush.msra.mxu0 %v2808
  %2874 = vmatpush.msra.mxu0 %v2804
  %2875 = vmatpush.msra.mxu0 %v2800
  %2876 = vmatmul.f32.gmra.mxu0 %v2823
  %v2877 = vpop.f32.mrf.mxu0
  %v2878 = vadd.f32 0.0, %v2877
  %2879 = vmatmul.f32.gmra.mxu0 %v2825
  %v2880 = vpop.f32.mrf.mxu0
  %v2881 = vadd.f32 0.0, %v2880
  %2882 = vmatmul.f32.gmra.mxu0 %v2827
  %v2883 = vpop.f32.mrf.mxu0
  %v2884 = vadd.f32 0.0, %v2883
  %2885 = vmatmul.f32.gmra.mxu0 %v2829
  %v2886 = vpop.f32.mrf.mxu0
  %v2887 = vadd.f32 0.0, %v2886
  %2888 = vdwg.mxu0
  %2889 = vmatpush.msra.mxu0 0.0
  %2890 = vmatpush.msra.mxu0 0.0
  %2891 = vmatpush.msra.mxu0 0.0
  %2892 = vmatpush.msra.mxu0 0.0
  %2893 = vmatpush.msra.mxu0 0.0
  %2894 = vmatpush.msra.mxu0 0.0
  %2895 = vmatpush.msra.mxu0 0.0
  %2896 = vmatpush.msra.mxu0 0.0
  %2897 = vmatpush.msra.mxu0 0.0
  %2898 = vmatpush.msra.mxu0 0.0
  %2899 = vmatpush.msra.mxu0 0.0
  %2900 = vmatpush.msra.mxu0 0.0
  %2901 = vmatpush.msra.mxu0 %v2813
  %2902 = vmatpush.msra.mxu0 %v2809
  %2903 = vmatpush.msra.mxu0 %v2805
  %2904 = vmatpush.msra.mxu0 %v2801
  %2905 = vmatmul.f32.gmra.mxu0 %v2823
  %v2906 = vpop.f32.mrf.mxu0
  %v2907 = vadd.f32 0.0, %v2906
  %2908 = vmatmul.f32.gmra.mxu0 %v2825
  %v2909 = vpop.f32.mrf.mxu0
  %v2910 = vadd.f32 0.0, %v2909
  %2911 = vmatmul.f32.gmra.mxu0 %v2827
  %v2912 = vpop.f32.mrf.mxu0
  %v2913 = vadd.f32 0.0, %v2912
  %2914 = vmatmul.f32.gmra.mxu0 %v2829
  %v2915 = vpop.f32.mrf.mxu0
  %v2916 = vadd.f32 0.0, %v2915
  %2917 = vdwg.mxu0
  %2918 = vmatpush.msra.mxu0 0.0
  %2919 = vmatpush.msra.mxu0 0.0
  %2920 = vmatpush.msra.mxu0 0.0
  %2921 = vmatpush.msra.mxu0 0.0
  %2922 = vmatpush.msra.mxu0 0.0
  %2923 = vmatpush.msra.mxu0 0.0
  %2924 = vmatpush.msra.mxu0 0.0
  %2925 = vmatpush.msra.mxu0 0.0
  %2926 = vmatpush.msra.mxu0 0.0
  %2927 = vmatpush.msra.mxu0 0.0
  %2928 = vmatpush.msra.mxu0 0.0
  %2929 = vmatpush.msra.mxu0 0.0
  %2930 = vmatpush.msra.mxu0 %v2814
  %2931 = vmatpush.msra.mxu0 %v2810
  %2932 = vmatpush.msra.mxu0 %v2806
  %2933 = vmatpush.msra.mxu0 %v2802
  %2934 = vmatmul.f32.gmra.mxu0 %v2823
  %v2935 = vpop.f32.mrf.mxu0
  %v2936 = vadd.f32 0.0, %v2935
  %2937 = vmatmul.f32.gmra.mxu0 %v2825
  %v2938 = vpop.f32.mrf.mxu0
  %v2939 = vadd.f32 0.0, %v2938
  %2940 = vmatmul.f32.gmra.mxu0 %v2827
  %v2941 = vpop.f32.mrf.mxu0
  %v2942 = vadd.f32 0.0, %v2941
  %2943 = vmatmul.f32.gmra.mxu0 %v2829
  %v2944 = vpop.f32.mrf.mxu0
  %v2945 = vadd.f32 0.0, %v2944
  %2946 = vdwg.mxu0
  %v2947 = vadd.f32 %v2723, %v2849
  %v2948 = vadd.f32 %v2724, %v2878
  %v2949 = vadd.f32 %v2725, %v2907
  %v2950 = vadd.f32 %v2726, %v2936
  %v2951 = vadd.f32 %v2727, %v2852
  %v2952 = vadd.f32 %v2728, %v2881
  %v2953 = vadd.f32 %v2729, %v2910
  %v2954 = vadd.f32 %v2730, %v2939
  %v2955 = vadd.f32 %v2731, %v2855
  %v2956 = vadd.f32 %v2732, %v2884
  %v2957 = vadd.f32 %v2733, %v2913
  %v2958 = vadd.f32 %v2734, %v2942
  %v2959 = vadd.f32 %v2735, %v2858
  %v2960 = vadd.f32 %v2736, %v2887
  %v2961 = vadd.f32 %v2737, %v2916
  %v2962 = vadd.f32 %v2738, %v2945
  %2963 = vrot.lane.b32.xlu0 %v358, 7
  %v2964 = vpop.permute.xlu0 %2963
  %2965 = vrot.lane.b32.xlu0 %v362, 7
  %v2966 = vpop.permute.xlu0 %2965
  %2967 = vrot.lane.b32.xlu0 %v366, 7
  %v2968 = vpop.permute.xlu0 %2967
  %2969 = vrot.lane.b32.xlu0 %v370, 7
  %v2970 = vpop.permute.xlu0 %2969
  %2971 = vrot.lane.b32.xlu0 %v359, 7
  %v2972 = vpop.permute.xlu0 %2971
  %2973 = vrot.lane.b32.xlu0 %v363, 7
  %v2974 = vpop.permute.xlu0 %2973
  %2975 = vrot.lane.b32.xlu0 %v367, 7
  %v2976 = vpop.permute.xlu0 %2975
  %2977 = vrot.lane.b32.xlu0 %v371, 7
  %v2978 = vpop.permute.xlu0 %2977
  %2979 = vrot.lane.b32.xlu0 %v360, 7
  %v2980 = vpop.permute.xlu0 %2979
  %2981 = vrot.lane.b32.xlu0 %v364, 7
  %v2982 = vpop.permute.xlu0 %2981
  %2983 = vrot.lane.b32.xlu0 %v368, 7
  %v2984 = vpop.permute.xlu0 %2983
  %2985 = vrot.lane.b32.xlu0 %v372, 7
  %v2986 = vpop.permute.xlu0 %2985
  %2987 = vrot.lane.b32.xlu0 %v361, 7
  %v2988 = vpop.permute.xlu0 %2987
  %2989 = vrot.lane.b32.xlu0 %v365, 7
  %v2990 = vpop.permute.xlu0 %2989
  %2991 = vrot.lane.b32.xlu0 %v369, 7
  %v2992 = vpop.permute.xlu0 %2991
  %2993 = vrot.lane.b32.xlu0 %v373, 7
  %v2994 = vpop.permute.xlu0 %2993
  %vm2995 = vcmp.lt.s32.totalorder %v411, 7
  %v2996 = vsel %vm2995, %v2980, %v2988
  %v2997 = vsel %vm2995, %v2982, %v2990
  %v2998 = vsel %vm2995, %v2984, %v2992
  %v2999 = vsel %vm2995, %v2986, %v2994
  %v3000 = vsel %vm2995, %v2972, %v2980
  %v3001 = vsel %vm2995, %v2974, %v2982
  %v3002 = vsel %vm2995, %v2976, %v2984
  %v3003 = vsel %vm2995, %v2978, %v2986
  %v3004 = vsel %vm2995, %v2964, %v2972
  %v3005 = vsel %vm2995, %v2966, %v2974
  %v3006 = vsel %vm2995, %v2968, %v2976
  %v3007 = vsel %vm2995, %v2970, %v2978
  %v3008 = vsel %vm2995, %v2988, %v2964
  %v3009 = vsel %vm2995, %v2990, %v2966
  %v3010 = vsel %vm2995, %v2992, %v2968
  %v3011 = vsel %vm2995, %v2994, %v2970
  %s3012 = scalar_lea.vmem %s1, 35
  %v3013 = vld [vmem:[%s3012] ss:$8 sm:$0xf]
  %v3015 = vperm.slane %v3013, 0
  %v3016 = vperm.slane %v3013, 1
  %v3017 = vperm.slane %v3013, 2
  %v3018 = vperm.slane %v3013, 3
  %v3023 = vmul.f32 %v3008, %v3015
  %v3024 = vmul.f32 %v3004, %v3016
  %v3025 = vmul.f32 %v3000, %v3017
  %v3026 = vmul.f32 %v2996, %v3018
  %v3027 = vmul.f32 %v3009, %v3015
  %v3028 = vmul.f32 %v3005, %v3016
  %v3029 = vmul.f32 %v3001, %v3017
  %v3030 = vmul.f32 %v2997, %v3018
  %v3031 = vmul.f32 %v3010, %v3015
  %v3032 = vmul.f32 %v3006, %v3016
  %v3033 = vmul.f32 %v3002, %v3017
  %v3034 = vmul.f32 %v2998, %v3018
  %v3035 = vmul.f32 %v3011, %v3015
  %v3036 = vmul.f32 %v3007, %v3016
  %v3037 = vmul.f32 %v3003, %v3017
  %v3038 = vmul.f32 %v2999, %v3018
  %3039 = vrot.lane.b32.xlu0 %v2367, 32
  %v3040 = vpop.permute.xlu0 %3039
  %3041 = vrot.lane.b32.xlu0 %v2368, 32
  %v3042 = vpop.permute.xlu0 %3041
  %3043 = vrot.lane.b32.xlu0 %v2369, 32
  %v3044 = vpop.permute.xlu0 %3043
  %3045 = vrot.lane.b32.xlu0 %v2370, 32
  %v3046 = vpop.permute.xlu0 %3045
  %v3047 = vsel %vm37, %v3040, 0
  %v3049 = vsel %vm37, %v3042, 0
  %v3051 = vsel %vm37, %v3044, 0
  %v3053 = vsel %vm37, %v3046, 0
  %3055 = vmatpush.msra.mxu0 0.0
  %3056 = vmatpush.msra.mxu0 0.0
  %3057 = vmatpush.msra.mxu0 0.0
  %3058 = vmatpush.msra.mxu0 0.0
  %3059 = vmatpush.msra.mxu0 0.0
  %3060 = vmatpush.msra.mxu0 0.0
  %3061 = vmatpush.msra.mxu0 0.0
  %3062 = vmatpush.msra.mxu0 0.0
  %3063 = vmatpush.msra.mxu0 0.0
  %3064 = vmatpush.msra.mxu0 0.0
  %3065 = vmatpush.msra.mxu0 0.0
  %3066 = vmatpush.msra.mxu0 0.0
  %3067 = vmatpush.msra.mxu0 %v3035
  %3068 = vmatpush.msra.mxu0 %v3031
  %3069 = vmatpush.msra.mxu0 %v3027
  %3070 = vmatpush.msra.mxu0 %v3023
  %3071 = vmatmul.f32.gmra.mxu0 %v3047
  %v3072 = vpop.f32.mrf.mxu0
  %v3073 = vadd.f32 0.0, %v3072
  %3074 = vmatmul.f32.gmra.mxu0 %v3049
  %v3075 = vpop.f32.mrf.mxu0
  %v3076 = vadd.f32 0.0, %v3075
  %3077 = vmatmul.f32.gmra.mxu0 %v3051
  %v3078 = vpop.f32.mrf.mxu0
  %v3079 = vadd.f32 0.0, %v3078
  %3080 = vmatmul.f32.gmra.mxu0 %v3053
  %v3081 = vpop.f32.mrf.mxu0
  %v3082 = vadd.f32 0.0, %v3081
  %3083 = vdwg.mxu0
  %3084 = vmatpush.msra.mxu0 0.0
  %3085 = vmatpush.msra.mxu0 0.0
  %3086 = vmatpush.msra.mxu0 0.0
  %3087 = vmatpush.msra.mxu0 0.0
  %3088 = vmatpush.msra.mxu0 0.0
  %3089 = vmatpush.msra.mxu0 0.0
  %3090 = vmatpush.msra.mxu0 0.0
  %3091 = vmatpush.msra.mxu0 0.0
  %3092 = vmatpush.msra.mxu0 0.0
  %3093 = vmatpush.msra.mxu0 0.0
  %3094 = vmatpush.msra.mxu0 0.0
  %3095 = vmatpush.msra.mxu0 0.0
  %3096 = vmatpush.msra.mxu0 %v3036
  %3097 = vmatpush.msra.mxu0 %v3032
  %3098 = vmatpush.msra.mxu0 %v3028
  %3099 = vmatpush.msra.mxu0 %v3024
  %3100 = vmatmul.f32.gmra.mxu0 %v3047
  %v3101 = vpop.f32.mrf.mxu0
  %v3102 = vadd.f32 0.0, %v3101
  %3103 = vmatmul.f32.gmra.mxu0 %v3049
  %v3104 = vpop.f32.mrf.mxu0
  %v3105 = vadd.f32 0.0, %v3104
  %3106 = vmatmul.f32.gmra.mxu0 %v3051
  %v3107 = vpop.f32.mrf.mxu0
  %v3108 = vadd.f32 0.0, %v3107
  %3109 = vmatmul.f32.gmra.mxu0 %v3053
  %v3110 = vpop.f32.mrf.mxu0
  %v3111 = vadd.f32 0.0, %v3110
  %3112 = vdwg.mxu0
  %3113 = vmatpush.msra.mxu0 0.0
  %3114 = vmatpush.msra.mxu0 0.0
  %3115 = vmatpush.msra.mxu0 0.0
  %3116 = vmatpush.msra.mxu0 0.0
  %3117 = vmatpush.msra.mxu0 0.0
  %3118 = vmatpush.msra.mxu0 0.0
  %3119 = vmatpush.msra.mxu0 0.0
  %3120 = vmatpush.msra.mxu0 0.0
  %3121 = vmatpush.msra.mxu0 0.0
  %3122 = vmatpush.msra.mxu0 0.0
  %3123 = vmatpush.msra.mxu0 0.0
  %3124 = vmatpush.msra.mxu0 0.0
  %3125 = vmatpush.msra.mxu0 %v3037
  %3126 = vmatpush.msra.mxu0 %v3033
  %3127 = vmatpush.msra.mxu0 %v3029
  %3128 = vmatpush.msra.mxu0 %v3025
  %3129 = vmatmul.f32.gmra.mxu0 %v3047
  %v3130 = vpop.f32.mrf.mxu0
  %v3131 = vadd.f32 0.0, %v3130
  %3132 = vmatmul.f32.gmra.mxu0 %v3049
  %v3133 = vpop.f32.mrf.mxu0
  %v3134 = vadd.f32 0.0, %v3133
  %3135 = vmatmul.f32.gmra.mxu0 %v3051
  %v3136 = vpop.f32.mrf.mxu0
  %v3137 = vadd.f32 0.0, %v3136
  %3138 = vmatmul.f32.gmra.mxu0 %v3053
  %v3139 = vpop.f32.mrf.mxu0
  %v3140 = vadd.f32 0.0, %v3139
  %3141 = vdwg.mxu0
  %3142 = vmatpush.msra.mxu0 0.0
  %3143 = vmatpush.msra.mxu0 0.0
  %3144 = vmatpush.msra.mxu0 0.0
  %3145 = vmatpush.msra.mxu0 0.0
  %3146 = vmatpush.msra.mxu0 0.0
  %3147 = vmatpush.msra.mxu0 0.0
  %3148 = vmatpush.msra.mxu0 0.0
  %3149 = vmatpush.msra.mxu0 0.0
  %3150 = vmatpush.msra.mxu0 0.0
  %3151 = vmatpush.msra.mxu0 0.0
  %3152 = vmatpush.msra.mxu0 0.0
  %3153 = vmatpush.msra.mxu0 0.0
  %3154 = vmatpush.msra.mxu0 %v3038
  %3155 = vmatpush.msra.mxu0 %v3034
  %3156 = vmatpush.msra.mxu0 %v3030
  %3157 = vmatpush.msra.mxu0 %v3026
  %3158 = vmatmul.f32.gmra.mxu0 %v3047
  %v3159 = vpop.f32.mrf.mxu0
  %v3160 = vadd.f32 0.0, %v3159
  %3161 = vmatmul.f32.gmra.mxu0 %v3049
  %v3162 = vpop.f32.mrf.mxu0
  %v3163 = vadd.f32 0.0, %v3162
  %3164 = vmatmul.f32.gmra.mxu0 %v3051
  %v3165 = vpop.f32.mrf.mxu0
  %v3166 = vadd.f32 0.0, %v3165
  %3167 = vmatmul.f32.gmra.mxu0 %v3053
  %v3168 = vpop.f32.mrf.mxu0
  %v3169 = vadd.f32 0.0, %v3168
  %3170 = vdwg.mxu0
  %v3171 = vadd.f32 %v2947, %v3073
  %v3172 = vadd.f32 %v2948, %v3102
  %v3173 = vadd.f32 %v2949, %v3131
  %v3174 = vadd.f32 %v2950, %v3160
  %v3175 = vadd.f32 %v2951, %v3076
  %v3176 = vadd.f32 %v2952, %v3105
  %v3177 = vadd.f32 %v2953, %v3134
  %v3178 = vadd.f32 %v2954, %v3163
  %v3179 = vadd.f32 %v2955, %v3079
  %v3180 = vadd.f32 %v2956, %v3108
  %v3181 = vadd.f32 %v2957, %v3137
  %v3182 = vadd.f32 %v2958, %v3166
  %v3183 = vadd.f32 %v2959, %v3082
  %v3184 = vadd.f32 %v2960, %v3111
  %v3185 = vadd.f32 %v2961, %v3140
  %v3186 = vadd.f32 %v2962, %v3169
  %3187 = vrot.lane.b32.xlu0 %v358, 1
  %v3188 = vpop.permute.xlu0 %3187
  %3189 = vrot.lane.b32.xlu0 %v362, 1
  %v3190 = vpop.permute.xlu0 %3189
  %3191 = vrot.lane.b32.xlu0 %v366, 1
  %v3192 = vpop.permute.xlu0 %3191
  %3193 = vrot.lane.b32.xlu0 %v370, 1
  %v3194 = vpop.permute.xlu0 %3193
  %3195 = vrot.lane.b32.xlu0 %v359, 1
  %v3196 = vpop.permute.xlu0 %3195
  %3197 = vrot.lane.b32.xlu0 %v363, 1
  %v3198 = vpop.permute.xlu0 %3197
  %3199 = vrot.lane.b32.xlu0 %v367, 1
  %v3200 = vpop.permute.xlu0 %3199
  %3201 = vrot.lane.b32.xlu0 %v371, 1
  %v3202 = vpop.permute.xlu0 %3201
  %3203 = vrot.lane.b32.xlu0 %v360, 1
  %v3204 = vpop.permute.xlu0 %3203
  %3205 = vrot.lane.b32.xlu0 %v364, 1
  %v3206 = vpop.permute.xlu0 %3205
  %3207 = vrot.lane.b32.xlu0 %v368, 1
  %v3208 = vpop.permute.xlu0 %3207
  %3209 = vrot.lane.b32.xlu0 %v372, 1
  %v3210 = vpop.permute.xlu0 %3209
  %3211 = vrot.lane.b32.xlu0 %v361, 1
  %v3212 = vpop.permute.xlu0 %3211
  %3213 = vrot.lane.b32.xlu0 %v365, 1
  %v3214 = vpop.permute.xlu0 %3213
  %3215 = vrot.lane.b32.xlu0 %v369, 1
  %v3216 = vpop.permute.xlu0 %3215
  %3217 = vrot.lane.b32.xlu0 %v373, 1
  %v3218 = vpop.permute.xlu0 %3217
  %vm3219 = vcmp.lt.s32.totalorder %v411, 1
  %v3220 = vsel %vm3219, %v3204, %v3212
  %v3221 = vsel %vm3219, %v3206, %v3214
  %v3222 = vsel %vm3219, %v3208, %v3216
  %v3223 = vsel %vm3219, %v3210, %v3218
  %v3224 = vsel %vm3219, %v3196, %v3204
  %v3225 = vsel %vm3219, %v3198, %v3206
  %v3226 = vsel %vm3219, %v3200, %v3208
  %v3227 = vsel %vm3219, %v3202, %v3210
  %v3228 = vsel %vm3219, %v3188, %v3196
  %v3229 = vsel %vm3219, %v3190, %v3198
  %v3230 = vsel %vm3219, %v3192, %v3200
  %v3231 = vsel %vm3219, %v3194, %v3202
  %v3232 = vsel %vm3219, %v3212, %v3188
  %v3233 = vsel %vm3219, %v3214, %v3190
  %v3234 = vsel %vm3219, %v3216, %v3192
  %v3235 = vsel %vm3219, %v3218, %v3194
  %s3236 = scalar_lea.vmem %s1, 36
  %v3237 = vld [vmem:[%s3236] ss:$8 sm:$0xf]
  %v3239 = vperm.slane %v3237, 0
  %v3240 = vperm.slane %v3237, 1
  %v3241 = vperm.slane %v3237, 2
  %v3242 = vperm.slane %v3237, 3
  %v3247 = vmul.f32 %v3232, %v3239
  %v3248 = vmul.f32 %v3228, %v3240
  %v3249 = vmul.f32 %v3224, %v3241
  %v3250 = vmul.f32 %v3220, %v3242
  %v3251 = vmul.f32 %v3233, %v3239
  %v3252 = vmul.f32 %v3229, %v3240
  %v3253 = vmul.f32 %v3225, %v3241
  %v3254 = vmul.f32 %v3221, %v3242
  %v3255 = vmul.f32 %v3234, %v3239
  %v3256 = vmul.f32 %v3230, %v3240
  %v3257 = vmul.f32 %v3226, %v3241
  %v3258 = vmul.f32 %v3222, %v3242
  %v3259 = vmul.f32 %v3235, %v3239
  %v3260 = vmul.f32 %v3231, %v3240
  %v3261 = vmul.f32 %v3227, %v3241
  %v3262 = vmul.f32 %v3223, %v3242
  %v3263 = vsel %vm37, %v374, 0
  %v3265 = vsel %vm37, %v375, 0
  %v3267 = vsel %vm37, %v376, 0
  %v3269 = vsel %vm37, %v377, 0
  %3271 = vmatpush.msra.mxu0 0.0
  %3272 = vmatpush.msra.mxu0 0.0
  %3273 = vmatpush.msra.mxu0 0.0
  %3274 = vmatpush.msra.mxu0 0.0
  %3275 = vmatpush.msra.mxu0 0.0
  %3276 = vmatpush.msra.mxu0 0.0
  %3277 = vmatpush.msra.mxu0 0.0
  %3278 = vmatpush.msra.mxu0 0.0
  %3279 = vmatpush.msra.mxu0 0.0
  %3280 = vmatpush.msra.mxu0 0.0
  %3281 = vmatpush.msra.mxu0 0.0
  %3282 = vmatpush.msra.mxu0 0.0
  %3283 = vmatpush.msra.mxu0 %v3259
  %3284 = vmatpush.msra.mxu0 %v3255
  %3285 = vmatpush.msra.mxu0 %v3251
  %3286 = vmatpush.msra.mxu0 %v3247
  %3287 = vmatmul.f32.gmra.mxu0 %v3263
  %v3288 = vpop.f32.mrf.mxu0
  %v3289 = vadd.f32 0.0, %v3288
  %3290 = vmatmul.f32.gmra.mxu0 %v3265
  %v3291 = vpop.f32.mrf.mxu0
  %v3292 = vadd.f32 0.0, %v3291
  %3293 = vmatmul.f32.gmra.mxu0 %v3267
  %v3294 = vpop.f32.mrf.mxu0
  %v3295 = vadd.f32 0.0, %v3294
  %3296 = vmatmul.f32.gmra.mxu0 %v3269
  %v3297 = vpop.f32.mrf.mxu0
  %v3298 = vadd.f32 0.0, %v3297
  %3299 = vdwg.mxu0
  %3300 = vmatpush.msra.mxu0 0.0
  %3301 = vmatpush.msra.mxu0 0.0
  %3302 = vmatpush.msra.mxu0 0.0
  %3303 = vmatpush.msra.mxu0 0.0
  %3304 = vmatpush.msra.mxu0 0.0
  %3305 = vmatpush.msra.mxu0 0.0
  %3306 = vmatpush.msra.mxu0 0.0
  %3307 = vmatpush.msra.mxu0 0.0
  %3308 = vmatpush.msra.mxu0 0.0
  %3309 = vmatpush.msra.mxu0 0.0
  %3310 = vmatpush.msra.mxu0 0.0
  %3311 = vmatpush.msra.mxu0 0.0
  %3312 = vmatpush.msra.mxu0 %v3260
  %3313 = vmatpush.msra.mxu0 %v3256
  %3314 = vmatpush.msra.mxu0 %v3252
  %3315 = vmatpush.msra.mxu0 %v3248
  %3316 = vmatmul.f32.gmra.mxu0 %v3263
  %v3317 = vpop.f32.mrf.mxu0
  %v3318 = vadd.f32 0.0, %v3317
  %3319 = vmatmul.f32.gmra.mxu0 %v3265
  %v3320 = vpop.f32.mrf.mxu0
  %v3321 = vadd.f32 0.0, %v3320
  %3322 = vmatmul.f32.gmra.mxu0 %v3267
  %v3323 = vpop.f32.mrf.mxu0
  %v3324 = vadd.f32 0.0, %v3323
  %3325 = vmatmul.f32.gmra.mxu0 %v3269
  %v3326 = vpop.f32.mrf.mxu0
  %v3327 = vadd.f32 0.0, %v3326
  %3328 = vdwg.mxu0
  %3329 = vmatpush.msra.mxu0 0.0
  %3330 = vmatpush.msra.mxu0 0.0
  %3331 = vmatpush.msra.mxu0 0.0
  %3332 = vmatpush.msra.mxu0 0.0
  %3333 = vmatpush.msra.mxu0 0.0
  %3334 = vmatpush.msra.mxu0 0.0
  %3335 = vmatpush.msra.mxu0 0.0
  %3336 = vmatpush.msra.mxu0 0.0
  %3337 = vmatpush.msra.mxu0 0.0
  %3338 = vmatpush.msra.mxu0 0.0
  %3339 = vmatpush.msra.mxu0 0.0
  %3340 = vmatpush.msra.mxu0 0.0
  %3341 = vmatpush.msra.mxu0 %v3261
  %3342 = vmatpush.msra.mxu0 %v3257
  %3343 = vmatpush.msra.mxu0 %v3253
  %3344 = vmatpush.msra.mxu0 %v3249
  %3345 = vmatmul.f32.gmra.mxu0 %v3263
  %v3346 = vpop.f32.mrf.mxu0
  %v3347 = vadd.f32 0.0, %v3346
  %3348 = vmatmul.f32.gmra.mxu0 %v3265
  %v3349 = vpop.f32.mrf.mxu0
  %v3350 = vadd.f32 0.0, %v3349
  %3351 = vmatmul.f32.gmra.mxu0 %v3267
  %v3352 = vpop.f32.mrf.mxu0
  %v3353 = vadd.f32 0.0, %v3352
  %3354 = vmatmul.f32.gmra.mxu0 %v3269
  %v3355 = vpop.f32.mrf.mxu0
  %v3356 = vadd.f32 0.0, %v3355
  %3357 = vdwg.mxu0
  %3358 = vmatpush.msra.mxu0 0.0
  %3359 = vmatpush.msra.mxu0 0.0
  %3360 = vmatpush.msra.mxu0 0.0
  %3361 = vmatpush.msra.mxu0 0.0
  %3362 = vmatpush.msra.mxu0 0.0
  %3363 = vmatpush.msra.mxu0 0.0
  %3364 = vmatpush.msra.mxu0 0.0
  %3365 = vmatpush.msra.mxu0 0.0
  %3366 = vmatpush.msra.mxu0 0.0
  %3367 = vmatpush.msra.mxu0 0.0
  %3368 = vmatpush.msra.mxu0 0.0
  %3369 = vmatpush.msra.mxu0 0.0
  %3370 = vmatpush.msra.mxu0 %v3262
  %3371 = vmatpush.msra.mxu0 %v3258
  %3372 = vmatpush.msra.mxu0 %v3254
  %3373 = vmatpush.msra.mxu0 %v3250
  %3374 = vmatmul.f32.gmra.mxu0 %v3263
  %v3375 = vpop.f32.mrf.mxu0
  %v3376 = vadd.f32 0.0, %v3375
  %3377 = vmatmul.f32.gmra.mxu0 %v3265
  %v3378 = vpop.f32.mrf.mxu0
  %v3379 = vadd.f32 0.0, %v3378
  %3380 = vmatmul.f32.gmra.mxu0 %v3267
  %v3381 = vpop.f32.mrf.mxu0
  %v3382 = vadd.f32 0.0, %v3381
  %3383 = vmatmul.f32.gmra.mxu0 %v3269
  %v3384 = vpop.f32.mrf.mxu0
  %v3385 = vadd.f32 0.0, %v3384
  %3386 = vdwg.mxu0
  %v3387 = vadd.f32 %v3171, %v3289
  %v3388 = vadd.f32 %v3172, %v3318
  %v3389 = vadd.f32 %v3173, %v3347
  %v3390 = vadd.f32 %v3174, %v3376
  %v3391 = vadd.f32 %v3175, %v3292
  %v3392 = vadd.f32 %v3176, %v3321
  %v3393 = vadd.f32 %v3177, %v3350
  %v3394 = vadd.f32 %v3178, %v3379
  %v3395 = vadd.f32 %v3179, %v3295
  %v3396 = vadd.f32 %v3180, %v3324
  %v3397 = vadd.f32 %v3181, %v3353
  %v3398 = vadd.f32 %v3182, %v3382
  %v3399 = vadd.f32 %v3183, %v3298
  %v3400 = vadd.f32 %v3184, %v3327
  %v3401 = vadd.f32 %v3185, %v3356
  %v3402 = vadd.f32 %v3186, %v3385
  %3403 = vrot.lane.b32.xlu0 %v358, 127
  %v3404 = vpop.permute.xlu0 %3403
  %3405 = vrot.lane.b32.xlu0 %v362, 127
  %v3406 = vpop.permute.xlu0 %3405
  %3407 = vrot.lane.b32.xlu0 %v366, 127
  %v3408 = vpop.permute.xlu0 %3407
  %3409 = vrot.lane.b32.xlu0 %v370, 127
  %v3410 = vpop.permute.xlu0 %3409
  %3411 = vrot.lane.b32.xlu0 %v359, 127
  %v3412 = vpop.permute.xlu0 %3411
  %3413 = vrot.lane.b32.xlu0 %v363, 127
  %v3414 = vpop.permute.xlu0 %3413
  %3415 = vrot.lane.b32.xlu0 %v367, 127
  %v3416 = vpop.permute.xlu0 %3415
  %3417 = vrot.lane.b32.xlu0 %v371, 127
  %v3418 = vpop.permute.xlu0 %3417
  %3419 = vrot.lane.b32.xlu0 %v360, 127
  %v3420 = vpop.permute.xlu0 %3419
  %3421 = vrot.lane.b32.xlu0 %v364, 127
  %v3422 = vpop.permute.xlu0 %3421
  %3423 = vrot.lane.b32.xlu0 %v368, 127
  %v3424 = vpop.permute.xlu0 %3423
  %3425 = vrot.lane.b32.xlu0 %v372, 127
  %v3426 = vpop.permute.xlu0 %3425
  %3427 = vrot.lane.b32.xlu0 %v361, 127
  %v3428 = vpop.permute.xlu0 %3427
  %3429 = vrot.lane.b32.xlu0 %v365, 127
  %v3430 = vpop.permute.xlu0 %3429
  %3431 = vrot.lane.b32.xlu0 %v369, 127
  %v3432 = vpop.permute.xlu0 %3431
  %3433 = vrot.lane.b32.xlu0 %v373, 127
  %v3434 = vpop.permute.xlu0 %3433
  %vm3435 = vcmp.lt.s32.totalorder %v411, 127
  %v3436 = vsel %vm3435, %v3420, %v3428
  %v3437 = vsel %vm3435, %v3422, %v3430
  %v3438 = vsel %vm3435, %v3424, %v3432
  %v3439 = vsel %vm3435, %v3426, %v3434
  %v3440 = vsel %vm3435, %v3412, %v3420
  %v3441 = vsel %vm3435, %v3414, %v3422
  %v3442 = vsel %vm3435, %v3416, %v3424
  %v3443 = vsel %vm3435, %v3418, %v3426
  %v3444 = vsel %vm3435, %v3404, %v3412
  %v3445 = vsel %vm3435, %v3406, %v3414
  %v3446 = vsel %vm3435, %v3408, %v3416
  %v3447 = vsel %vm3435, %v3410, %v3418
  %v3448 = vsel %vm3435, %v3428, %v3404
  %v3449 = vsel %vm3435, %v3430, %v3406
  %v3450 = vsel %vm3435, %v3432, %v3408
  %v3451 = vsel %vm3435, %v3434, %v3410
  %s3452 = scalar_lea.vmem %s1, 38
  %v3453 = vld [vmem:[%s3452] ss:$8 sm:$0xf]
  %v3455 = vperm.slane %v3453, 0
  %v3456 = vperm.slane %v3453, 1
  %v3457 = vperm.slane %v3453, 2
  %v3458 = vperm.slane %v3453, 3
  %v3463 = vmul.f32 %v3444, %v3455
  %v3464 = vmul.f32 %v3440, %v3456
  %v3465 = vmul.f32 %v3436, %v3457
  %v3466 = vmul.f32 %v3448, %v3458
  %v3467 = vmul.f32 %v3445, %v3455
  %v3468 = vmul.f32 %v3441, %v3456
  %v3469 = vmul.f32 %v3437, %v3457
  %v3470 = vmul.f32 %v3449, %v3458
  %v3471 = vmul.f32 %v3446, %v3455
  %v3472 = vmul.f32 %v3442, %v3456
  %v3473 = vmul.f32 %v3438, %v3457
  %v3474 = vmul.f32 %v3450, %v3458
  %v3475 = vmul.f32 %v3447, %v3455
  %v3476 = vmul.f32 %v3443, %v3456
  %v3477 = vmul.f32 %v3439, %v3457
  %v3478 = vmul.f32 %v3451, %v3458
  %3479 = vrot.lane.b32.xlu0 %v374, 64
  %v3480 = vpop.permute.xlu0 %3479
  %3481 = vrot.lane.b32.xlu0 %v375, 64
  %v3482 = vpop.permute.xlu0 %3481
  %3483 = vrot.lane.b32.xlu0 %v376, 64
  %v3484 = vpop.permute.xlu0 %3483
  %3485 = vrot.lane.b32.xlu0 %v377, 64
  %v3486 = vpop.permute.xlu0 %3485
  %v3487 = vsel %vm37, %v3480, 0
  %v3489 = vsel %vm37, %v3482, 0
  %v3491 = vsel %vm37, %v3484, 0
  %v3493 = vsel %vm37, %v3486, 0
  %3495 = vmatpush.msra.mxu0 0.0
  %3496 = vmatpush.msra.mxu0 0.0
  %3497 = vmatpush.msra.mxu0 0.0
  %3498 = vmatpush.msra.mxu0 0.0
  %3499 = vmatpush.msra.mxu0 0.0
  %3500 = vmatpush.msra.mxu0 0.0
  %3501 = vmatpush.msra.mxu0 0.0
  %3502 = vmatpush.msra.mxu0 0.0
  %3503 = vmatpush.msra.mxu0 0.0
  %3504 = vmatpush.msra.mxu0 0.0
  %3505 = vmatpush.msra.mxu0 0.0
  %3506 = vmatpush.msra.mxu0 0.0
  %3507 = vmatpush.msra.mxu0 %v3475
  %3508 = vmatpush.msra.mxu0 %v3471
  %3509 = vmatpush.msra.mxu0 %v3467
  %3510 = vmatpush.msra.mxu0 %v3463
  %3511 = vmatmul.f32.gmra.mxu0 %v3487
  %v3512 = vpop.f32.mrf.mxu0
  %v3513 = vadd.f32 0.0, %v3512
  %3514 = vmatmul.f32.gmra.mxu0 %v3489
  %v3515 = vpop.f32.mrf.mxu0
  %v3516 = vadd.f32 0.0, %v3515
  %3517 = vmatmul.f32.gmra.mxu0 %v3491
  %v3518 = vpop.f32.mrf.mxu0
  %v3519 = vadd.f32 0.0, %v3518
  %3520 = vmatmul.f32.gmra.mxu0 %v3493
  %v3521 = vpop.f32.mrf.mxu0
  %v3522 = vadd.f32 0.0, %v3521
  %3523 = vdwg.mxu0
  %3524 = vmatpush.msra.mxu0 0.0
  %3525 = vmatpush.msra.mxu0 0.0
  %3526 = vmatpush.msra.mxu0 0.0
  %3527 = vmatpush.msra.mxu0 0.0
  %3528 = vmatpush.msra.mxu0 0.0
  %3529 = vmatpush.msra.mxu0 0.0
  %3530 = vmatpush.msra.mxu0 0.0
  %3531 = vmatpush.msra.mxu0 0.0
  %3532 = vmatpush.msra.mxu0 0.0
  %3533 = vmatpush.msra.mxu0 0.0
  %3534 = vmatpush.msra.mxu0 0.0
  %3535 = vmatpush.msra.mxu0 0.0
  %3536 = vmatpush.msra.mxu0 %v3476
  %3537 = vmatpush.msra.mxu0 %v3472
  %3538 = vmatpush.msra.mxu0 %v3468
  %3539 = vmatpush.msra.mxu0 %v3464
  %3540 = vmatmul.f32.gmra.mxu0 %v3487
  %v3541 = vpop.f32.mrf.mxu0
  %v3542 = vadd.f32 0.0, %v3541
  %3543 = vmatmul.f32.gmra.mxu0 %v3489
  %v3544 = vpop.f32.mrf.mxu0
  %v3545 = vadd.f32 0.0, %v3544
  %3546 = vmatmul.f32.gmra.mxu0 %v3491
  %v3547 = vpop.f32.mrf.mxu0
  %v3548 = vadd.f32 0.0, %v3547
  %3549 = vmatmul.f32.gmra.mxu0 %v3493
  %v3550 = vpop.f32.mrf.mxu0
  %v3551 = vadd.f32 0.0, %v3550
  %3552 = vdwg.mxu0
  %3553 = vmatpush.msra.mxu0 0.0
  %3554 = vmatpush.msra.mxu0 0.0
  %3555 = vmatpush.msra.mxu0 0.0
  %3556 = vmatpush.msra.mxu0 0.0
  %3557 = vmatpush.msra.mxu0 0.0
  %3558 = vmatpush.msra.mxu0 0.0
  %3559 = vmatpush.msra.mxu0 0.0
  %3560 = vmatpush.msra.mxu0 0.0
  %3561 = vmatpush.msra.mxu0 0.0
  %3562 = vmatpush.msra.mxu0 0.0
  %3563 = vmatpush.msra.mxu0 0.0
  %3564 = vmatpush.msra.mxu0 0.0
  %3565 = vmatpush.msra.mxu0 %v3477
  %3566 = vmatpush.msra.mxu0 %v3473
  %3567 = vmatpush.msra.mxu0 %v3469
  %3568 = vmatpush.msra.mxu0 %v3465
  %3569 = vmatmul.f32.gmra.mxu0 %v3487
  %v3570 = vpop.f32.mrf.mxu0
  %v3571 = vadd.f32 0.0, %v3570
  %3572 = vmatmul.f32.gmra.mxu0 %v3489
  %v3573 = vpop.f32.mrf.mxu0
  %v3574 = vadd.f32 0.0, %v3573
  %3575 = vmatmul.f32.gmra.mxu0 %v3491
  %v3576 = vpop.f32.mrf.mxu0
  %v3577 = vadd.f32 0.0, %v3576
  %3578 = vmatmul.f32.gmra.mxu0 %v3493
  %v3579 = vpop.f32.mrf.mxu0
  %v3580 = vadd.f32 0.0, %v3579
  %3581 = vdwg.mxu0
  %3582 = vmatpush.msra.mxu0 0.0
  %3583 = vmatpush.msra.mxu0 0.0
  %3584 = vmatpush.msra.mxu0 0.0
  %3585 = vmatpush.msra.mxu0 0.0
  %3586 = vmatpush.msra.mxu0 0.0
  %3587 = vmatpush.msra.mxu0 0.0
  %3588 = vmatpush.msra.mxu0 0.0
  %3589 = vmatpush.msra.mxu0 0.0
  %3590 = vmatpush.msra.mxu0 0.0
  %3591 = vmatpush.msra.mxu0 0.0
  %3592 = vmatpush.msra.mxu0 0.0
  %3593 = vmatpush.msra.mxu0 0.0
  %3594 = vmatpush.msra.mxu0 %v3478
  %3595 = vmatpush.msra.mxu0 %v3474
  %3596 = vmatpush.msra.mxu0 %v3470
  %3597 = vmatpush.msra.mxu0 %v3466
  %3598 = vmatmul.f32.gmra.mxu0 %v3487
  %v3599 = vpop.f32.mrf.mxu0
  %v3600 = vadd.f32 0.0, %v3599
  %3601 = vmatmul.f32.gmra.mxu0 %v3489
  %v3602 = vpop.f32.mrf.mxu0
  %v3603 = vadd.f32 0.0, %v3602
  %3604 = vmatmul.f32.gmra.mxu0 %v3491
  %v3605 = vpop.f32.mrf.mxu0
  %v3606 = vadd.f32 0.0, %v3605
  %3607 = vmatmul.f32.gmra.mxu0 %v3493
  %v3608 = vpop.f32.mrf.mxu0
  %v3609 = vadd.f32 0.0, %v3608
  %3610 = vdwg.mxu0
  %v3611 = vadd.f32 %v3387, %v3513
  %v3612 = vadd.f32 %v3388, %v3542
  %v3613 = vadd.f32 %v3389, %v3571
  %v3614 = vadd.f32 %v3390, %v3600
  %v3615 = vadd.f32 %v3391, %v3516
  %v3616 = vadd.f32 %v3392, %v3545
  %v3617 = vadd.f32 %v3393, %v3574
  %v3618 = vadd.f32 %v3394, %v3603
  %v3619 = vadd.f32 %v3395, %v3519
  %v3620 = vadd.f32 %v3396, %v3548
  %v3621 = vadd.f32 %v3397, %v3577
  %v3622 = vadd.f32 %v3398, %v3606
  %v3623 = vadd.f32 %v3399, %v3522
  %v3624 = vadd.f32 %v3400, %v3551
  %v3625 = vadd.f32 %v3401, %v3580
  %v3626 = vadd.f32 %v3402, %v3609
  %3627 = vrot.lane.b32.xlu0 %v358, 121
  %v3628 = vpop.permute.xlu0 %3627
  %3629 = vrot.lane.b32.xlu0 %v362, 121
  %v3630 = vpop.permute.xlu0 %3629
  %3631 = vrot.lane.b32.xlu0 %v366, 121
  %v3632 = vpop.permute.xlu0 %3631
  %3633 = vrot.lane.b32.xlu0 %v370, 121
  %v3634 = vpop.permute.xlu0 %3633
  %3635 = vrot.lane.b32.xlu0 %v359, 121
  %v3636 = vpop.permute.xlu0 %3635
  %3637 = vrot.lane.b32.xlu0 %v363, 121
  %v3638 = vpop.permute.xlu0 %3637
  %3639 = vrot.lane.b32.xlu0 %v367, 121
  %v3640 = vpop.permute.xlu0 %3639
  %3641 = vrot.lane.b32.xlu0 %v371, 121
  %v3642 = vpop.permute.xlu0 %3641
  %3643 = vrot.lane.b32.xlu0 %v360, 121
  %v3644 = vpop.permute.xlu0 %3643
  %3645 = vrot.lane.b32.xlu0 %v364, 121
  %v3646 = vpop.permute.xlu0 %3645
  %3647 = vrot.lane.b32.xlu0 %v368, 121
  %v3648 = vpop.permute.xlu0 %3647
  %3649 = vrot.lane.b32.xlu0 %v372, 121
  %v3650 = vpop.permute.xlu0 %3649
  %3651 = vrot.lane.b32.xlu0 %v361, 121
  %v3652 = vpop.permute.xlu0 %3651
  %3653 = vrot.lane.b32.xlu0 %v365, 121
  %v3654 = vpop.permute.xlu0 %3653
  %3655 = vrot.lane.b32.xlu0 %v369, 121
  %v3656 = vpop.permute.xlu0 %3655
  %3657 = vrot.lane.b32.xlu0 %v373, 121
  %v3658 = vpop.permute.xlu0 %3657
  %vm3659 = vcmp.lt.s32.totalorder %v411, 121
  %v3660 = vsel %vm3659, %v3644, %v3652
  %v3661 = vsel %vm3659, %v3646, %v3654
  %v3662 = vsel %vm3659, %v3648, %v3656
  %v3663 = vsel %vm3659, %v3650, %v3658
  %v3664 = vsel %vm3659, %v3636, %v3644
  %v3665 = vsel %vm3659, %v3638, %v3646
  %v3666 = vsel %vm3659, %v3640, %v3648
  %v3667 = vsel %vm3659, %v3642, %v3650
  %v3668 = vsel %vm3659, %v3628, %v3636
  %v3669 = vsel %vm3659, %v3630, %v3638
  %v3670 = vsel %vm3659, %v3632, %v3640
  %v3671 = vsel %vm3659, %v3634, %v3642
  %v3672 = vsel %vm3659, %v3652, %v3628
  %v3673 = vsel %vm3659, %v3654, %v3630
  %v3674 = vsel %vm3659, %v3656, %v3632
  %v3675 = vsel %vm3659, %v3658, %v3634
  %s3676 = scalar_lea.vmem %s1, 39
  %v3677 = vld [vmem:[%s3676] ss:$8 sm:$0xf]
  %v3679 = vperm.slane %v3677, 0
  %v3680 = vperm.slane %v3677, 1
  %v3681 = vperm.slane %v3677, 2
  %v3682 = vperm.slane %v3677, 3
  %v3687 = vmul.f32 %v3668, %v3679
  %v3688 = vmul.f32 %v3664, %v3680
  %v3689 = vmul.f32 %v3660, %v3681
  %v3690 = vmul.f32 %v3672, %v3682
  %v3691 = vmul.f32 %v3669, %v3679
  %v3692 = vmul.f32 %v3665, %v3680
  %v3693 = vmul.f32 %v3661, %v3681
  %v3694 = vmul.f32 %v3673, %v3682
  %v3695 = vmul.f32 %v3670, %v3679
  %v3696 = vmul.f32 %v3666, %v3680
  %v3697 = vmul.f32 %v3662, %v3681
  %v3698 = vmul.f32 %v3674, %v3682
  %v3699 = vmul.f32 %v3671, %v3679
  %v3700 = vmul.f32 %v3667, %v3680
  %v3701 = vmul.f32 %v3663, %v3681
  %v3702 = vmul.f32 %v3675, %v3682
  %3703 = vrot.lane.b32.xlu0 %v374, 32
  %v3704 = vpop.permute.xlu0 %3703
  %3705 = vrot.lane.b32.xlu0 %v375, 32
  %v3706 = vpop.permute.xlu0 %3705
  %3707 = vrot.lane.b32.xlu0 %v376, 32
  %v3708 = vpop.permute.xlu0 %3707
  %3709 = vrot.lane.b32.xlu0 %v377, 32
  %v3710 = vpop.permute.xlu0 %3709
  %v3711 = vsel %vm37, %v3704, 0
  %v3713 = vsel %vm37, %v3706, 0
  %v3715 = vsel %vm37, %v3708, 0
  %v3717 = vsel %vm37, %v3710, 0
  %3719 = vmatpush.msra.mxu0 0.0
  %3720 = vmatpush.msra.mxu0 0.0
  %3721 = vmatpush.msra.mxu0 0.0
  %3722 = vmatpush.msra.mxu0 0.0
  %3723 = vmatpush.msra.mxu0 0.0
  %3724 = vmatpush.msra.mxu0 0.0
  %3725 = vmatpush.msra.mxu0 0.0
  %3726 = vmatpush.msra.mxu0 0.0
  %3727 = vmatpush.msra.mxu0 0.0
  %3728 = vmatpush.msra.mxu0 0.0
  %3729 = vmatpush.msra.mxu0 0.0
  %3730 = vmatpush.msra.mxu0 0.0
  %3731 = vmatpush.msra.mxu0 %v3699
  %3732 = vmatpush.msra.mxu0 %v3695
  %3733 = vmatpush.msra.mxu0 %v3691
  %3734 = vmatpush.msra.mxu0 %v3687
  %3735 = vmatmul.f32.gmra.mxu0 %v3711
  %v3736 = vpop.f32.mrf.mxu0
  %v3737 = vadd.f32 0.0, %v3736
  %3738 = vmatmul.f32.gmra.mxu0 %v3713
  %v3739 = vpop.f32.mrf.mxu0
  %v3740 = vadd.f32 0.0, %v3739
  %3741 = vmatmul.f32.gmra.mxu0 %v3715
  %v3742 = vpop.f32.mrf.mxu0
  %v3743 = vadd.f32 0.0, %v3742
  %3744 = vmatmul.f32.gmra.mxu0 %v3717
  %v3745 = vpop.f32.mrf.mxu0
  %v3746 = vadd.f32 0.0, %v3745
  %3747 = vdwg.mxu0
  %3748 = vmatpush.msra.mxu0 0.0
  %3749 = vmatpush.msra.mxu0 0.0
  %3750 = vmatpush.msra.mxu0 0.0
  %3751 = vmatpush.msra.mxu0 0.0
  %3752 = vmatpush.msra.mxu0 0.0
  %3753 = vmatpush.msra.mxu0 0.0
  %3754 = vmatpush.msra.mxu0 0.0
  %3755 = vmatpush.msra.mxu0 0.0
  %3756 = vmatpush.msra.mxu0 0.0
  %3757 = vmatpush.msra.mxu0 0.0
  %3758 = vmatpush.msra.mxu0 0.0
  %3759 = vmatpush.msra.mxu0 0.0
  %3760 = vmatpush.msra.mxu0 %v3700
  %3761 = vmatpush.msra.mxu0 %v3696
  %3762 = vmatpush.msra.mxu0 %v3692
  %3763 = vmatpush.msra.mxu0 %v3688
  %3764 = vmatmul.f32.gmra.mxu0 %v3711
  %v3765 = vpop.f32.mrf.mxu0
  %v3766 = vadd.f32 0.0, %v3765
  %3767 = vmatmul.f32.gmra.mxu0 %v3713
  %v3768 = vpop.f32.mrf.mxu0
  %v3769 = vadd.f32 0.0, %v3768
  %3770 = vmatmul.f32.gmra.mxu0 %v3715
  %v3771 = vpop.f32.mrf.mxu0
  %v3772 = vadd.f32 0.0, %v3771
  %3773 = vmatmul.f32.gmra.mxu0 %v3717
  %v3774 = vpop.f32.mrf.mxu0
  %v3775 = vadd.f32 0.0, %v3774
  %3776 = vdwg.mxu0
  %3777 = vmatpush.msra.mxu0 0.0
  %3778 = vmatpush.msra.mxu0 0.0
  %3779 = vmatpush.msra.mxu0 0.0
  %3780 = vmatpush.msra.mxu0 0.0
  %3781 = vmatpush.msra.mxu0 0.0
  %3782 = vmatpush.msra.mxu0 0.0
  %3783 = vmatpush.msra.mxu0 0.0
  %3784 = vmatpush.msra.mxu0 0.0
  %3785 = vmatpush.msra.mxu0 0.0
  %3786 = vmatpush.msra.mxu0 0.0
  %3787 = vmatpush.msra.mxu0 0.0
  %3788 = vmatpush.msra.mxu0 0.0
  %3789 = vmatpush.msra.mxu0 %v3701
  %3790 = vmatpush.msra.mxu0 %v3697
  %3791 = vmatpush.msra.mxu0 %v3693
  %3792 = vmatpush.msra.mxu0 %v3689
  %3793 = vmatmul.f32.gmra.mxu0 %v3711
  %v3794 = vpop.f32.mrf.mxu0
  %v3795 = vadd.f32 0.0, %v3794
  %3796 = vmatmul.f32.gmra.mxu0 %v3713
  %v3797 = vpop.f32.mrf.mxu0
  %v3798 = vadd.f32 0.0, %v3797
  %3799 = vmatmul.f32.gmra.mxu0 %v3715
  %v3800 = vpop.f32.mrf.mxu0
  %v3801 = vadd.f32 0.0, %v3800
  %3802 = vmatmul.f32.gmra.mxu0 %v3717
  %v3803 = vpop.f32.mrf.mxu0
  %v3804 = vadd.f32 0.0, %v3803
  %3805 = vdwg.mxu0
  %3806 = vmatpush.msra.mxu0 0.0
  %3807 = vmatpush.msra.mxu0 0.0
  %3808 = vmatpush.msra.mxu0 0.0
  %3809 = vmatpush.msra.mxu0 0.0
  %3810 = vmatpush.msra.mxu0 0.0
  %3811 = vmatpush.msra.mxu0 0.0
  %3812 = vmatpush.msra.mxu0 0.0
  %3813 = vmatpush.msra.mxu0 0.0
  %3814 = vmatpush.msra.mxu0 0.0
  %3815 = vmatpush.msra.mxu0 0.0
  %3816 = vmatpush.msra.mxu0 0.0
  %3817 = vmatpush.msra.mxu0 0.0
  %3818 = vmatpush.msra.mxu0 %v3702
  %3819 = vmatpush.msra.mxu0 %v3698
  %3820 = vmatpush.msra.mxu0 %v3694
  %3821 = vmatpush.msra.mxu0 %v3690
  %3822 = vmatmul.f32.gmra.mxu0 %v3711
  %v3823 = vpop.f32.mrf.mxu0
  %v3824 = vadd.f32 0.0, %v3823
  %3825 = vmatmul.f32.gmra.mxu0 %v3713
  %v3826 = vpop.f32.mrf.mxu0
  %v3827 = vadd.f32 0.0, %v3826
  %3828 = vmatmul.f32.gmra.mxu0 %v3715
  %v3829 = vpop.f32.mrf.mxu0
  %v3830 = vadd.f32 0.0, %v3829
  %3831 = vmatmul.f32.gmra.mxu0 %v3717
  %v3832 = vpop.f32.mrf.mxu0
  %v3833 = vadd.f32 0.0, %v3832
  %3834 = vdwg.mxu0
  %v3835 = vadd.f32 %v3611, %v3737
  %v3836 = vadd.f32 %v3612, %v3766
  %v3837 = vadd.f32 %v3613, %v3795
  %v3838 = vadd.f32 %v3614, %v3824
  %v3839 = vadd.f32 %v3615, %v3740
  %v3840 = vadd.f32 %v3616, %v3769
  %v3841 = vadd.f32 %v3617, %v3798
  %v3842 = vadd.f32 %v3618, %v3827
  %v3843 = vadd.f32 %v3619, %v3743
  %v3844 = vadd.f32 %v3620, %v3772
  %v3845 = vadd.f32 %v3621, %v3801
  %v3846 = vadd.f32 %v3622, %v3830
  %v3847 = vadd.f32 %v3623, %v3746
  %v3848 = vadd.f32 %v3624, %v3775
  %v3849 = vadd.f32 %v3625, %v3804
  %v3850 = vadd.f32 %v3626, %v3833
  %3851 = vrot.lane.b32.xlu0 %v358, 120
  %v3852 = vpop.permute.xlu0 %3851
  %3853 = vrot.lane.b32.xlu0 %v362, 120
  %v3854 = vpop.permute.xlu0 %3853
  %3855 = vrot.lane.b32.xlu0 %v366, 120
  %v3856 = vpop.permute.xlu0 %3855
  %3857 = vrot.lane.b32.xlu0 %v370, 120
  %v3858 = vpop.permute.xlu0 %3857
  %3859 = vrot.lane.b32.xlu0 %v359, 120
  %v3860 = vpop.permute.xlu0 %3859
  %3861 = vrot.lane.b32.xlu0 %v363, 120
  %v3862 = vpop.permute.xlu0 %3861
  %3863 = vrot.lane.b32.xlu0 %v367, 120
  %v3864 = vpop.permute.xlu0 %3863
  %3865 = vrot.lane.b32.xlu0 %v371, 120
  %v3866 = vpop.permute.xlu0 %3865
  %3867 = vrot.lane.b32.xlu0 %v360, 120
  %v3868 = vpop.permute.xlu0 %3867
  %3869 = vrot.lane.b32.xlu0 %v364, 120
  %v3870 = vpop.permute.xlu0 %3869
  %3871 = vrot.lane.b32.xlu0 %v368, 120
  %v3872 = vpop.permute.xlu0 %3871
  %3873 = vrot.lane.b32.xlu0 %v372, 120
  %v3874 = vpop.permute.xlu0 %3873
  %3875 = vrot.lane.b32.xlu0 %v361, 120
  %v3876 = vpop.permute.xlu0 %3875
  %3877 = vrot.lane.b32.xlu0 %v365, 120
  %v3878 = vpop.permute.xlu0 %3877
  %3879 = vrot.lane.b32.xlu0 %v369, 120
  %v3880 = vpop.permute.xlu0 %3879
  %3881 = vrot.lane.b32.xlu0 %v373, 120
  %v3882 = vpop.permute.xlu0 %3881
  %vm3883 = vcmp.lt.s32.totalorder %v411, 120
  %v3884 = vsel %vm3883, %v3868, %v3876
  %v3885 = vsel %vm3883, %v3870, %v3878
  %v3886 = vsel %vm3883, %v3872, %v3880
  %v3887 = vsel %vm3883, %v3874, %v3882
  %v3888 = vsel %vm3883, %v3860, %v3868
  %v3889 = vsel %vm3883, %v3862, %v3870
  %v3890 = vsel %vm3883, %v3864, %v3872
  %v3891 = vsel %vm3883, %v3866, %v3874
  %v3892 = vsel %vm3883, %v3852, %v3860
  %v3893 = vsel %vm3883, %v3854, %v3862
  %v3894 = vsel %vm3883, %v3856, %v3864
  %v3895 = vsel %vm3883, %v3858, %v3866
  %v3896 = vsel %vm3883, %v3876, %v3852
  %v3897 = vsel %vm3883, %v3878, %v3854
  %v3898 = vsel %vm3883, %v3880, %v3856
  %v3899 = vsel %vm3883, %v3882, %v3858
  %s3900 = scalar_lea.vmem %s1, 64
  %v3901 = vld [vmem:[%s3900] ss:$8 sm:$0xf]
  %v3903 = vperm.slane %v3901, 0
  %v3904 = vperm.slane %v3901, 1
  %v3905 = vperm.slane %v3901, 2
  %v3906 = vperm.slane %v3901, 3
  %v3911 = vmul.f32 %v3892, %v3903
  %v3912 = vmul.f32 %v3888, %v3904
  %v3913 = vmul.f32 %v3884, %v3905
  %v3914 = vmul.f32 %v3896, %v3906
  %v3915 = vmul.f32 %v3893, %v3903
  %v3916 = vmul.f32 %v3889, %v3904
  %v3917 = vmul.f32 %v3885, %v3905
  %v3918 = vmul.f32 %v3897, %v3906
  %v3919 = vmul.f32 %v3894, %v3903
  %v3920 = vmul.f32 %v3890, %v3904
  %v3921 = vmul.f32 %v3886, %v3905
  %v3922 = vmul.f32 %v3898, %v3906
  %v3923 = vmul.f32 %v3895, %v3903
  %v3924 = vmul.f32 %v3891, %v3904
  %v3925 = vmul.f32 %v3887, %v3905
  %v3926 = vmul.f32 %v3899, %v3906
  %v3927 = vld [vmem:[%s2 + $0x20] sm:$0xff]
  %v3928 = vld [vmem:[%s2 + $0x58] sm:$0xff]
  %v3929 = vld [vmem:[%s2 + $0x90] sm:$0xff]
  %v3930 = vld [vmem:[%s2 + $0xc8] sm:$0xff]
  %v3932 = vsel %vm37, %v3927, 0
  %v3935 = vsel %vm37, %v3928, 0
  %v3938 = vsel %vm37, %v3929, 0
  %v3941 = vsel %vm37, %v3930, 0
  %3943 = vmatpush.msra.mxu0 0.0
  %3944 = vmatpush.msra.mxu0 0.0
  %3945 = vmatpush.msra.mxu0 0.0
  %3946 = vmatpush.msra.mxu0 0.0
  %3947 = vmatpush.msra.mxu0 0.0
  %3948 = vmatpush.msra.mxu0 0.0
  %3949 = vmatpush.msra.mxu0 0.0
  %3950 = vmatpush.msra.mxu0 0.0
  %3951 = vmatpush.msra.mxu0 0.0
  %3952 = vmatpush.msra.mxu0 0.0
  %3953 = vmatpush.msra.mxu0 0.0
  %3954 = vmatpush.msra.mxu0 0.0
  %3955 = vmatpush.msra.mxu0 %v3923
  %3956 = vmatpush.msra.mxu0 %v3919
  %3957 = vmatpush.msra.mxu0 %v3915
  %3958 = vmatpush.msra.mxu0 %v3911
  %3959 = vmatmul.f32.gmra.mxu0 %v3932
  %v3960 = vpop.f32.mrf.mxu0
  %v3961 = vadd.f32 0.0, %v3960
  %3962 = vmatmul.f32.gmra.mxu0 %v3935
  %v3963 = vpop.f32.mrf.mxu0
  %v3964 = vadd.f32 0.0, %v3963
  %3965 = vmatmul.f32.gmra.mxu0 %v3938
  %v3966 = vpop.f32.mrf.mxu0
  %v3967 = vadd.f32 0.0, %v3966
  %3968 = vmatmul.f32.gmra.mxu0 %v3941
  %v3969 = vpop.f32.mrf.mxu0
  %v3970 = vadd.f32 0.0, %v3969
  %3971 = vdwg.mxu0
  %3972 = vmatpush.msra.mxu0 0.0
  %3973 = vmatpush.msra.mxu0 0.0
  %3974 = vmatpush.msra.mxu0 0.0
  %3975 = vmatpush.msra.mxu0 0.0
  %3976 = vmatpush.msra.mxu0 0.0
  %3977 = vmatpush.msra.mxu0 0.0
  %3978 = vmatpush.msra.mxu0 0.0
  %3979 = vmatpush.msra.mxu0 0.0
  %3980 = vmatpush.msra.mxu0 0.0
  %3981 = vmatpush.msra.mxu0 0.0
  %3982 = vmatpush.msra.mxu0 0.0
  %3983 = vmatpush.msra.mxu0 0.0
  %3984 = vmatpush.msra.mxu0 %v3924
  %3985 = vmatpush.msra.mxu0 %v3920
  %3986 = vmatpush.msra.mxu0 %v3916
  %3987 = vmatpush.msra.mxu0 %v3912
  %3988 = vmatmul.f32.gmra.mxu0 %v3932
  %v3989 = vpop.f32.mrf.mxu0
  %v3990 = vadd.f32 0.0, %v3989
  %3991 = vmatmul.f32.gmra.mxu0 %v3935
  %v3992 = vpop.f32.mrf.mxu0
  %v3993 = vadd.f32 0.0, %v3992
  %3994 = vmatmul.f32.gmra.mxu0 %v3938
  %v3995 = vpop.f32.mrf.mxu0
  %v3996 = vadd.f32 0.0, %v3995
  %3997 = vmatmul.f32.gmra.mxu0 %v3941
  %v3998 = vpop.f32.mrf.mxu0
  %v3999 = vadd.f32 0.0, %v3998
  %4000 = vdwg.mxu0
  %4001 = vmatpush.msra.mxu0 0.0
  %4002 = vmatpush.msra.mxu0 0.0
  %4003 = vmatpush.msra.mxu0 0.0
  %4004 = vmatpush.msra.mxu0 0.0
  %4005 = vmatpush.msra.mxu0 0.0
  %4006 = vmatpush.msra.mxu0 0.0
  %4007 = vmatpush.msra.mxu0 0.0
  %4008 = vmatpush.msra.mxu0 0.0
  %4009 = vmatpush.msra.mxu0 0.0
  %4010 = vmatpush.msra.mxu0 0.0
  %4011 = vmatpush.msra.mxu0 0.0
  %4012 = vmatpush.msra.mxu0 0.0
  %4013 = vmatpush.msra.mxu0 %v3925
  %4014 = vmatpush.msra.mxu0 %v3921
  %4015 = vmatpush.msra.mxu0 %v3917
  %4016 = vmatpush.msra.mxu0 %v3913
  %4017 = vmatmul.f32.gmra.mxu0 %v3932
  %v4018 = vpop.f32.mrf.mxu0
  %v4019 = vadd.f32 0.0, %v4018
  %4020 = vmatmul.f32.gmra.mxu0 %v3935
  %v4021 = vpop.f32.mrf.mxu0
  %v4022 = vadd.f32 0.0, %v4021
  %4023 = vmatmul.f32.gmra.mxu0 %v3938
  %v4024 = vpop.f32.mrf.mxu0
  %v4025 = vadd.f32 0.0, %v4024
  %4026 = vmatmul.f32.gmra.mxu0 %v3941
  %v4027 = vpop.f32.mrf.mxu0
  %v4028 = vadd.f32 0.0, %v4027
  %4029 = vdwg.mxu0
  %4030 = vmatpush.msra.mxu0 0.0
  %4031 = vmatpush.msra.mxu0 0.0
  %4032 = vmatpush.msra.mxu0 0.0
  %4033 = vmatpush.msra.mxu0 0.0
  %4034 = vmatpush.msra.mxu0 0.0
  %4035 = vmatpush.msra.mxu0 0.0
  %4036 = vmatpush.msra.mxu0 0.0
  %4037 = vmatpush.msra.mxu0 0.0
  %4038 = vmatpush.msra.mxu0 0.0
  %4039 = vmatpush.msra.mxu0 0.0
  %4040 = vmatpush.msra.mxu0 0.0
  %4041 = vmatpush.msra.mxu0 0.0
  %4042 = vmatpush.msra.mxu0 %v3926
  %4043 = vmatpush.msra.mxu0 %v3922
  %4044 = vmatpush.msra.mxu0 %v3918
  %4045 = vmatpush.msra.mxu0 %v3914
  %4046 = vmatmul.f32.gmra.mxu0 %v3932
  %v4047 = vpop.f32.mrf.mxu0
  %v4048 = vadd.f32 0.0, %v4047
  %4049 = vmatmul.f32.gmra.mxu0 %v3935
  %v4050 = vpop.f32.mrf.mxu0
  %v4051 = vadd.f32 0.0, %v4050
  %4052 = vmatmul.f32.gmra.mxu0 %v3938
  %v4053 = vpop.f32.mrf.mxu0
  %v4054 = vadd.f32 0.0, %v4053
  %4055 = vmatmul.f32.gmra.mxu0 %v3941
  %v4056 = vpop.f32.mrf.mxu0
  %v4057 = vadd.f32 0.0, %v4056
  %4058 = vdwg.mxu0
  %v4059 = vadd.f32 %v3835, %v3961
  %v4060 = vadd.f32 %v3836, %v3990
  %v4061 = vadd.f32 %v3837, %v4019
  %v4062 = vadd.f32 %v3838, %v4048
  %v4063 = vadd.f32 %v3839, %v3964
  %v4064 = vadd.f32 %v3840, %v3993
  %v4065 = vadd.f32 %v3841, %v4022
  %v4066 = vadd.f32 %v3842, %v4051
  %v4067 = vadd.f32 %v3843, %v3967
  %v4068 = vadd.f32 %v3844, %v3996
  %v4069 = vadd.f32 %v3845, %v4025
  %v4070 = vadd.f32 %v3846, %v4054
  %v4071 = vadd.f32 %v3847, %v3970
  %v4072 = vadd.f32 %v3848, %v3999
  %v4073 = vadd.f32 %v3849, %v4028
  %v4074 = vadd.f32 %v3850, %v4057
  %4075 = vrot.lane.b32.xlu0 %v358, 119
  %v4076 = vpop.permute.xlu0 %4075
  %4077 = vrot.lane.b32.xlu0 %v362, 119
  %v4078 = vpop.permute.xlu0 %4077
  %4079 = vrot.lane.b32.xlu0 %v366, 119
  %v4080 = vpop.permute.xlu0 %4079
  %4081 = vrot.lane.b32.xlu0 %v370, 119
  %v4082 = vpop.permute.xlu0 %4081
  %4083 = vrot.lane.b32.xlu0 %v359, 119
  %v4084 = vpop.permute.xlu0 %4083
  %4085 = vrot.lane.b32.xlu0 %v363, 119
  %v4086 = vpop.permute.xlu0 %4085
  %4087 = vrot.lane.b32.xlu0 %v367, 119
  %v4088 = vpop.permute.xlu0 %4087
  %4089 = vrot.lane.b32.xlu0 %v371, 119
  %v4090 = vpop.permute.xlu0 %4089
  %4091 = vrot.lane.b32.xlu0 %v360, 119
  %v4092 = vpop.permute.xlu0 %4091
  %4093 = vrot.lane.b32.xlu0 %v364, 119
  %v4094 = vpop.permute.xlu0 %4093
  %4095 = vrot.lane.b32.xlu0 %v368, 119
  %v4096 = vpop.permute.xlu0 %4095
  %4097 = vrot.lane.b32.xlu0 %v372, 119
  %v4098 = vpop.permute.xlu0 %4097
  %4099 = vrot.lane.b32.xlu0 %v361, 119
  %v4100 = vpop.permute.xlu0 %4099
  %4101 = vrot.lane.b32.xlu0 %v365, 119
  %v4102 = vpop.permute.xlu0 %4101
  %4103 = vrot.lane.b32.xlu0 %v369, 119
  %v4104 = vpop.permute.xlu0 %4103
  %4105 = vrot.lane.b32.xlu0 %v373, 119
  %v4106 = vpop.permute.xlu0 %4105
  %vm4107 = vcmp.lt.s32.totalorder %v411, 119
  %v4108 = vsel %vm4107, %v4092, %v4100
  %v4109 = vsel %vm4107, %v4094, %v4102
  %v4110 = vsel %vm4107, %v4096, %v4104
  %v4111 = vsel %vm4107, %v4098, %v4106
  %v4112 = vsel %vm4107, %v4084, %v4092
  %v4113 = vsel %vm4107, %v4086, %v4094
  %v4114 = vsel %vm4107, %v4088, %v4096
  %v4115 = vsel %vm4107, %v4090, %v4098
  %v4116 = vsel %vm4107, %v4076, %v4084
  %v4117 = vsel %vm4107, %v4078, %v4086
  %v4118 = vsel %vm4107, %v4080, %v4088
  %v4119 = vsel %vm4107, %v4082, %v4090
  %v4120 = vsel %vm4107, %v4100, %v4076
  %v4121 = vsel %vm4107, %v4102, %v4078
  %v4122 = vsel %vm4107, %v4104, %v4080
  %v4123 = vsel %vm4107, %v4106, %v4082
  %s4124 = scalar_lea.vmem %s1, 65
  %v4125 = vld [vmem:[%s4124] ss:$8 sm:$0xf]
  %v4127 = vperm.slane %v4125, 0
  %v4128 = vperm.slane %v4125, 1
  %v4129 = vperm.slane %v4125, 2
  %v4130 = vperm.slane %v4125, 3
  %v4135 = vmul.f32 %v4116, %v4127
  %v4136 = vmul.f32 %v4112, %v4128
  %v4137 = vmul.f32 %v4108, %v4129
  %v4138 = vmul.f32 %v4120, %v4130
  %v4139 = vmul.f32 %v4117, %v4127
  %v4140 = vmul.f32 %v4113, %v4128
  %v4141 = vmul.f32 %v4109, %v4129
  %v4142 = vmul.f32 %v4121, %v4130
  %v4143 = vmul.f32 %v4118, %v4127
  %v4144 = vmul.f32 %v4114, %v4128
  %v4145 = vmul.f32 %v4110, %v4129
  %v4146 = vmul.f32 %v4122, %v4130
  %v4147 = vmul.f32 %v4119, %v4127
  %v4148 = vmul.f32 %v4115, %v4128
  %v4149 = vmul.f32 %v4111, %v4129
  %v4150 = vmul.f32 %v4123, %v4130
  %4151 = vrot.lane.b32.xlu0 %v3927, 96
  %v4152 = vpop.permute.xlu0 %4151
  %4153 = vrot.lane.b32.xlu0 %v3928, 96
  %v4154 = vpop.permute.xlu0 %4153
  %4155 = vrot.lane.b32.xlu0 %v3929, 96
  %v4156 = vpop.permute.xlu0 %4155
  %4157 = vrot.lane.b32.xlu0 %v3930, 96
  %v4158 = vpop.permute.xlu0 %4157
  %v4159 = vsel %vm37, %v4152, 0
  %v4161 = vsel %vm37, %v4154, 0
  %v4163 = vsel %vm37, %v4156, 0
  %v4165 = vsel %vm37, %v4158, 0
  %4167 = vmatpush.msra.mxu0 0.0
  %4168 = vmatpush.msra.mxu0 0.0
  %4169 = vmatpush.msra.mxu0 0.0
  %4170 = vmatpush.msra.mxu0 0.0
  %4171 = vmatpush.msra.mxu0 0.0
  %4172 = vmatpush.msra.mxu0 0.0
  %4173 = vmatpush.msra.mxu0 0.0
  %4174 = vmatpush.msra.mxu0 0.0
  %4175 = vmatpush.msra.mxu0 0.0
  %4176 = vmatpush.msra.mxu0 0.0
  %4177 = vmatpush.msra.mxu0 0.0
  %4178 = vmatpush.msra.mxu0 0.0
  %4179 = vmatpush.msra.mxu0 %v4147
  %4180 = vmatpush.msra.mxu0 %v4143
  %4181 = vmatpush.msra.mxu0 %v4139
  %4182 = vmatpush.msra.mxu0 %v4135
  %4183 = vmatmul.f32.gmra.mxu0 %v4159
  %v4184 = vpop.f32.mrf.mxu0
  %v4185 = vadd.f32 0.0, %v4184
  %4186 = vmatmul.f32.gmra.mxu0 %v4161
  %v4187 = vpop.f32.mrf.mxu0
  %v4188 = vadd.f32 0.0, %v4187
  %4189 = vmatmul.f32.gmra.mxu0 %v4163
  %v4190 = vpop.f32.mrf.mxu0
  %v4191 = vadd.f32 0.0, %v4190
  %4192 = vmatmul.f32.gmra.mxu0 %v4165
  %v4193 = vpop.f32.mrf.mxu0
  %v4194 = vadd.f32 0.0, %v4193
  %4195 = vdwg.mxu0
  %4196 = vmatpush.msra.mxu0 0.0
  %4197 = vmatpush.msra.mxu0 0.0
  %4198 = vmatpush.msra.mxu0 0.0
  %4199 = vmatpush.msra.mxu0 0.0
  %4200 = vmatpush.msra.mxu0 0.0
  %4201 = vmatpush.msra.mxu0 0.0
  %4202 = vmatpush.msra.mxu0 0.0
  %4203 = vmatpush.msra.mxu0 0.0
  %4204 = vmatpush.msra.mxu0 0.0
  %4205 = vmatpush.msra.mxu0 0.0
  %4206 = vmatpush.msra.mxu0 0.0
  %4207 = vmatpush.msra.mxu0 0.0
  %4208 = vmatpush.msra.mxu0 %v4148
  %4209 = vmatpush.msra.mxu0 %v4144
  %4210 = vmatpush.msra.mxu0 %v4140
  %4211 = vmatpush.msra.mxu0 %v4136
  %4212 = vmatmul.f32.gmra.mxu0 %v4159
  %v4213 = vpop.f32.mrf.mxu0
  %v4214 = vadd.f32 0.0, %v4213
  %4215 = vmatmul.f32.gmra.mxu0 %v4161
  %v4216 = vpop.f32.mrf.mxu0
  %v4217 = vadd.f32 0.0, %v4216
  %4218 = vmatmul.f32.gmra.mxu0 %v4163
  %v4219 = vpop.f32.mrf.mxu0
  %v4220 = vadd.f32 0.0, %v4219
  %4221 = vmatmul.f32.gmra.mxu0 %v4165
  %v4222 = vpop.f32.mrf.mxu0
  %v4223 = vadd.f32 0.0, %v4222
  %4224 = vdwg.mxu0
  %4225 = vmatpush.msra.mxu0 0.0
  %4226 = vmatpush.msra.mxu0 0.0
  %4227 = vmatpush.msra.mxu0 0.0
  %4228 = vmatpush.msra.mxu0 0.0
  %4229 = vmatpush.msra.mxu0 0.0
  %4230 = vmatpush.msra.mxu0 0.0
  %4231 = vmatpush.msra.mxu0 0.0
  %4232 = vmatpush.msra.mxu0 0.0
  %4233 = vmatpush.msra.mxu0 0.0
  %4234 = vmatpush.msra.mxu0 0.0
  %4235 = vmatpush.msra.mxu0 0.0
  %4236 = vmatpush.msra.mxu0 0.0
  %4237 = vmatpush.msra.mxu0 %v4149
  %4238 = vmatpush.msra.mxu0 %v4145
  %4239 = vmatpush.msra.mxu0 %v4141
  %4240 = vmatpush.msra.mxu0 %v4137
  %4241 = vmatmul.f32.gmra.mxu0 %v4159
  %v4242 = vpop.f32.mrf.mxu0
  %v4243 = vadd.f32 0.0, %v4242
  %4244 = vmatmul.f32.gmra.mxu0 %v4161
  %v4245 = vpop.f32.mrf.mxu0
  %v4246 = vadd.f32 0.0, %v4245
  %4247 = vmatmul.f32.gmra.mxu0 %v4163
  %v4248 = vpop.f32.mrf.mxu0
  %v4249 = vadd.f32 0.0, %v4248
  %4250 = vmatmul.f32.gmra.mxu0 %v4165
  %v4251 = vpop.f32.mrf.mxu0
  %v4252 = vadd.f32 0.0, %v4251
  %4253 = vdwg.mxu0
  %4254 = vmatpush.msra.mxu0 0.0
  %4255 = vmatpush.msra.mxu0 0.0
  %4256 = vmatpush.msra.mxu0 0.0
  %4257 = vmatpush.msra.mxu0 0.0
  %4258 = vmatpush.msra.mxu0 0.0
  %4259 = vmatpush.msra.mxu0 0.0
  %4260 = vmatpush.msra.mxu0 0.0
  %4261 = vmatpush.msra.mxu0 0.0
  %4262 = vmatpush.msra.mxu0 0.0
  %4263 = vmatpush.msra.mxu0 0.0
  %4264 = vmatpush.msra.mxu0 0.0
  %4265 = vmatpush.msra.mxu0 0.0
  %4266 = vmatpush.msra.mxu0 %v4150
  %4267 = vmatpush.msra.mxu0 %v4146
  %4268 = vmatpush.msra.mxu0 %v4142
  %4269 = vmatpush.msra.mxu0 %v4138
  %4270 = vmatmul.f32.gmra.mxu0 %v4159
  %v4271 = vpop.f32.mrf.mxu0
  %v4272 = vadd.f32 0.0, %v4271
  %4273 = vmatmul.f32.gmra.mxu0 %v4161
  %v4274 = vpop.f32.mrf.mxu0
  %v4275 = vadd.f32 0.0, %v4274
  %4276 = vmatmul.f32.gmra.mxu0 %v4163
  %v4277 = vpop.f32.mrf.mxu0
  %v4278 = vadd.f32 0.0, %v4277
  %4279 = vmatmul.f32.gmra.mxu0 %v4165
  %v4280 = vpop.f32.mrf.mxu0
  %v4281 = vadd.f32 0.0, %v4280
  %4282 = vdwg.mxu0
  %v4283 = vadd.f32 %v4059, %v4185
  %v4284 = vadd.f32 %v4060, %v4214
  %v4285 = vadd.f32 %v4061, %v4243
  %v4286 = vadd.f32 %v4062, %v4272
  %v4287 = vadd.f32 %v4063, %v4188
  %v4288 = vadd.f32 %v4064, %v4217
  %v4289 = vadd.f32 %v4065, %v4246
  %v4290 = vadd.f32 %v4066, %v4275
  %v4291 = vadd.f32 %v4067, %v4191
  %v4292 = vadd.f32 %v4068, %v4220
  %v4293 = vadd.f32 %v4069, %v4249
  %v4294 = vadd.f32 %v4070, %v4278
  %v4295 = vadd.f32 %v4071, %v4194
  %v4296 = vadd.f32 %v4072, %v4223
  %v4297 = vadd.f32 %v4073, %v4252
  %v4298 = vadd.f32 %v4074, %v4281
  %s4299 = scalar_lea.vmem %s1, 66
  %v4300 = vld [vmem:[%s4299] ss:$8 sm:$0xf]
  %v4302 = vperm.slane %v4300, 0
  %v4303 = vperm.slane %v4300, 1
  %v4304 = vperm.slane %v4300, 2
  %v4305 = vperm.slane %v4300, 3
  %v4310 = vmul.f32 %v421, %v4302
  %v4311 = vmul.f32 %v417, %v4303
  %v4312 = vmul.f32 %v413, %v4304
  %v4313 = vmul.f32 %v425, %v4305
  %v4314 = vmul.f32 %v422, %v4302
  %v4315 = vmul.f32 %v418, %v4303
  %v4316 = vmul.f32 %v414, %v4304
  %v4317 = vmul.f32 %v426, %v4305
  %v4318 = vmul.f32 %v423, %v4302
  %v4319 = vmul.f32 %v419, %v4303
  %v4320 = vmul.f32 %v415, %v4304
  %v4321 = vmul.f32 %v427, %v4305
  %v4322 = vmul.f32 %v424, %v4302
  %v4323 = vmul.f32 %v420, %v4303
  %v4324 = vmul.f32 %v416, %v4304
  %v4325 = vmul.f32 %v428, %v4305
  %4326 = vrot.lane.b32.xlu0 %v3927, 64
  %v4327 = vpop.permute.xlu0 %4326
  %4328 = vrot.lane.b32.xlu0 %v3928, 64
  %v4329 = vpop.permute.xlu0 %4328
  %4330 = vrot.lane.b32.xlu0 %v3929, 64
  %v4331 = vpop.permute.xlu0 %4330
  %4332 = vrot.lane.b32.xlu0 %v3930, 64
  %v4333 = vpop.permute.xlu0 %4332
  %v4334 = vsel %vm37, %v4327, 0
  %v4336 = vsel %vm37, %v4329, 0
  %v4338 = vsel %vm37, %v4331, 0
  %v4340 = vsel %vm37, %v4333, 0
  %4342 = vmatpush.msra.mxu0 0.0
  %4343 = vmatpush.msra.mxu0 0.0
  %4344 = vmatpush.msra.mxu0 0.0
  %4345 = vmatpush.msra.mxu0 0.0
  %4346 = vmatpush.msra.mxu0 0.0
  %4347 = vmatpush.msra.mxu0 0.0
  %4348 = vmatpush.msra.mxu0 0.0
  %4349 = vmatpush.msra.mxu0 0.0
  %4350 = vmatpush.msra.mxu0 0.0
  %4351 = vmatpush.msra.mxu0 0.0
  %4352 = vmatpush.msra.mxu0 0.0
  %4353 = vmatpush.msra.mxu0 0.0
  %4354 = vmatpush.msra.mxu0 %v4322
  %4355 = vmatpush.msra.mxu0 %v4318
  %4356 = vmatpush.msra.mxu0 %v4314
  %4357 = vmatpush.msra.mxu0 %v4310
  %4358 = vmatmul.f32.gmra.mxu0 %v4334
  %v4359 = vpop.f32.mrf.mxu0
  %v4360 = vadd.f32 0.0, %v4359
  %4361 = vmatmul.f32.gmra.mxu0 %v4336
  %v4362 = vpop.f32.mrf.mxu0
  %v4363 = vadd.f32 0.0, %v4362
  %4364 = vmatmul.f32.gmra.mxu0 %v4338
  %v4365 = vpop.f32.mrf.mxu0
  %v4366 = vadd.f32 0.0, %v4365
  %4367 = vmatmul.f32.gmra.mxu0 %v4340
  %v4368 = vpop.f32.mrf.mxu0
  %v4369 = vadd.f32 0.0, %v4368
  %4370 = vdwg.mxu0
  %4371 = vmatpush.msra.mxu0 0.0
  %4372 = vmatpush.msra.mxu0 0.0
  %4373 = vmatpush.msra.mxu0 0.0
  %4374 = vmatpush.msra.mxu0 0.0
  %4375 = vmatpush.msra.mxu0 0.0
  %4376 = vmatpush.msra.mxu0 0.0
  %4377 = vmatpush.msra.mxu0 0.0
  %4378 = vmatpush.msra.mxu0 0.0
  %4379 = vmatpush.msra.mxu0 0.0
  %4380 = vmatpush.msra.mxu0 0.0
  %4381 = vmatpush.msra.mxu0 0.0
  %4382 = vmatpush.msra.mxu0 0.0
  %4383 = vmatpush.msra.mxu0 %v4323
  %4384 = vmatpush.msra.mxu0 %v4319
  %4385 = vmatpush.msra.mxu0 %v4315
  %4386 = vmatpush.msra.mxu0 %v4311
  %4387 = vmatmul.f32.gmra.mxu0 %v4334
  %v4388 = vpop.f32.mrf.mxu0
  %v4389 = vadd.f32 0.0, %v4388
  %4390 = vmatmul.f32.gmra.mxu0 %v4336
  %v4391 = vpop.f32.mrf.mxu0
  %v4392 = vadd.f32 0.0, %v4391
  %4393 = vmatmul.f32.gmra.mxu0 %v4338
  %v4394 = vpop.f32.mrf.mxu0
  %v4395 = vadd.f32 0.0, %v4394
  %4396 = vmatmul.f32.gmra.mxu0 %v4340
  %v4397 = vpop.f32.mrf.mxu0
  %v4398 = vadd.f32 0.0, %v4397
  %4399 = vdwg.mxu0
  %4400 = vmatpush.msra.mxu0 0.0
  %4401 = vmatpush.msra.mxu0 0.0
  %4402 = vmatpush.msra.mxu0 0.0
  %4403 = vmatpush.msra.mxu0 0.0
  %4404 = vmatpush.msra.mxu0 0.0
  %4405 = vmatpush.msra.mxu0 0.0
  %4406 = vmatpush.msra.mxu0 0.0
  %4407 = vmatpush.msra.mxu0 0.0
  %4408 = vmatpush.msra.mxu0 0.0
  %4409 = vmatpush.msra.mxu0 0.0
  %4410 = vmatpush.msra.mxu0 0.0
  %4411 = vmatpush.msra.mxu0 0.0
  %4412 = vmatpush.msra.mxu0 %v4324
  %4413 = vmatpush.msra.mxu0 %v4320
  %4414 = vmatpush.msra.mxu0 %v4316
  %4415 = vmatpush.msra.mxu0 %v4312
  %4416 = vmatmul.f32.gmra.mxu0 %v4334
  %v4417 = vpop.f32.mrf.mxu0
  %v4418 = vadd.f32 0.0, %v4417
  %4419 = vmatmul.f32.gmra.mxu0 %v4336
  %v4420 = vpop.f32.mrf.mxu0
  %v4421 = vadd.f32 0.0, %v4420
  %4422 = vmatmul.f32.gmra.mxu0 %v4338
  %v4423 = vpop.f32.mrf.mxu0
  %v4424 = vadd.f32 0.0, %v4423
  %4425 = vmatmul.f32.gmra.mxu0 %v4340
  %v4426 = vpop.f32.mrf.mxu0
  %v4427 = vadd.f32 0.0, %v4426
  %4428 = vdwg.mxu0
  %4429 = vmatpush.msra.mxu0 0.0
  %4430 = vmatpush.msra.mxu0 0.0
  %4431 = vmatpush.msra.mxu0 0.0
  %4432 = vmatpush.msra.mxu0 0.0
  %4433 = vmatpush.msra.mxu0 0.0
  %4434 = vmatpush.msra.mxu0 0.0
  %4435 = vmatpush.msra.mxu0 0.0
  %4436 = vmatpush.msra.mxu0 0.0
  %4437 = vmatpush.msra.mxu0 0.0
  %4438 = vmatpush.msra.mxu0 0.0
  %4439 = vmatpush.msra.mxu0 0.0
  %4440 = vmatpush.msra.mxu0 0.0
  %4441 = vmatpush.msra.mxu0 %v4325
  %4442 = vmatpush.msra.mxu0 %v4321
  %4443 = vmatpush.msra.mxu0 %v4317
  %4444 = vmatpush.msra.mxu0 %v4313
  %4445 = vmatmul.f32.gmra.mxu0 %v4334
  %v4446 = vpop.f32.mrf.mxu0
  %v4447 = vadd.f32 0.0, %v4446
  %4448 = vmatmul.f32.gmra.mxu0 %v4336
  %v4449 = vpop.f32.mrf.mxu0
  %v4450 = vadd.f32 0.0, %v4449
  %4451 = vmatmul.f32.gmra.mxu0 %v4338
  %v4452 = vpop.f32.mrf.mxu0
  %v4453 = vadd.f32 0.0, %v4452
  %4454 = vmatmul.f32.gmra.mxu0 %v4340
  %v4455 = vpop.f32.mrf.mxu0
  %v4456 = vadd.f32 0.0, %v4455
  %4457 = vdwg.mxu0
  %v4458 = vadd.f32 %v4283, %v4360
  %v4459 = vadd.f32 %v4284, %v4389
  %v4460 = vadd.f32 %v4285, %v4418
  %v4461 = vadd.f32 %v4286, %v4447
  %v4462 = vadd.f32 %v4287, %v4363
  %v4463 = vadd.f32 %v4288, %v4392
  %v4464 = vadd.f32 %v4289, %v4421
  %v4465 = vadd.f32 %v4290, %v4450
  %v4466 = vadd.f32 %v4291, %v4366
  %v4467 = vadd.f32 %v4292, %v4395
  %v4468 = vadd.f32 %v4293, %v4424
  %v4469 = vadd.f32 %v4294, %v4453
  %v4470 = vadd.f32 %v4295, %v4369
  %v4471 = vadd.f32 %v4296, %v4398
  %v4472 = vadd.f32 %v4297, %v4427
  %v4473 = vadd.f32 %v4298, %v4456
  %s4474 = scalar_lea.vmem %s1, 67
  %v4475 = vld [vmem:[%s4474] ss:$8 sm:$0xf]
  %v4477 = vperm.slane %v4475, 0
  %v4478 = vperm.slane %v4475, 1
  %v4479 = vperm.slane %v4475, 2
  %v4480 = vperm.slane %v4475, 3
  %v4485 = vmul.f32 %v764, %v4477
  %v4486 = vmul.f32 %v760, %v4478
  %v4487 = vmul.f32 %v756, %v4479
  %v4488 = vmul.f32 %v768, %v4480
  %v4489 = vmul.f32 %v765, %v4477
  %v4490 = vmul.f32 %v761, %v4478
  %v4491 = vmul.f32 %v757, %v4479
  %v4492 = vmul.f32 %v769, %v4480
  %v4493 = vmul.f32 %v766, %v4477
  %v4494 = vmul.f32 %v762, %v4478
  %v4495 = vmul.f32 %v758, %v4479
  %v4496 = vmul.f32 %v770, %v4480
  %v4497 = vmul.f32 %v767, %v4477
  %v4498 = vmul.f32 %v763, %v4478
  %v4499 = vmul.f32 %v759, %v4479
  %v4500 = vmul.f32 %v771, %v4480
  %4501 = vrot.lane.b32.xlu0 %v3927, 32
  %v4502 = vpop.permute.xlu0 %4501
  %4503 = vrot.lane.b32.xlu0 %v3928, 32
  %v4504 = vpop.permute.xlu0 %4503
  %4505 = vrot.lane.b32.xlu0 %v3929, 32
  %v4506 = vpop.permute.xlu0 %4505
  %4507 = vrot.lane.b32.xlu0 %v3930, 32
  %v4508 = vpop.permute.xlu0 %4507
  %v4509 = vsel %vm37, %v4502, 0
  %v4511 = vsel %vm37, %v4504, 0
  %v4513 = vsel %vm37, %v4506, 0
  %v4515 = vsel %vm37, %v4508, 0
  %4517 = vmatpush.msra.mxu0 0.0
  %4518 = vmatpush.msra.mxu0 0.0
  %4519 = vmatpush.msra.mxu0 0.0
  %4520 = vmatpush.msra.mxu0 0.0
  %4521 = vmatpush.msra.mxu0 0.0
  %4522 = vmatpush.msra.mxu0 0.0
  %4523 = vmatpush.msra.mxu0 0.0
  %4524 = vmatpush.msra.mxu0 0.0
  %4525 = vmatpush.msra.mxu0 0.0
  %4526 = vmatpush.msra.mxu0 0.0
  %4527 = vmatpush.msra.mxu0 0.0
  %4528 = vmatpush.msra.mxu0 0.0
  %4529 = vmatpush.msra.mxu0 %v4497
  %4530 = vmatpush.msra.mxu0 %v4493
  %4531 = vmatpush.msra.mxu0 %v4489
  %4532 = vmatpush.msra.mxu0 %v4485
  %4533 = vmatmul.f32.gmra.mxu0 %v4509
  %v4534 = vpop.f32.mrf.mxu0
  %v4535 = vadd.f32 0.0, %v4534
  %4536 = vmatmul.f32.gmra.mxu0 %v4511
  %v4537 = vpop.f32.mrf.mxu0
  %v4538 = vadd.f32 0.0, %v4537
  %4539 = vmatmul.f32.gmra.mxu0 %v4513
  %v4540 = vpop.f32.mrf.mxu0
  %v4541 = vadd.f32 0.0, %v4540
  %4542 = vmatmul.f32.gmra.mxu0 %v4515
  %v4543 = vpop.f32.mrf.mxu0
  %v4544 = vadd.f32 0.0, %v4543
  %4545 = vdwg.mxu0
  %4546 = vmatpush.msra.mxu0 0.0
  %4547 = vmatpush.msra.mxu0 0.0
  %4548 = vmatpush.msra.mxu0 0.0
  %4549 = vmatpush.msra.mxu0 0.0
  %4550 = vmatpush.msra.mxu0 0.0
  %4551 = vmatpush.msra.mxu0 0.0
  %4552 = vmatpush.msra.mxu0 0.0
  %4553 = vmatpush.msra.mxu0 0.0
  %4554 = vmatpush.msra.mxu0 0.0
  %4555 = vmatpush.msra.mxu0 0.0
  %4556 = vmatpush.msra.mxu0 0.0
  %4557 = vmatpush.msra.mxu0 0.0
  %4558 = vmatpush.msra.mxu0 %v4498
  %4559 = vmatpush.msra.mxu0 %v4494
  %4560 = vmatpush.msra.mxu0 %v4490
  %4561 = vmatpush.msra.mxu0 %v4486
  %4562 = vmatmul.f32.gmra.mxu0 %v4509
  %v4563 = vpop.f32.mrf.mxu0
  %v4564 = vadd.f32 0.0, %v4563
  %4565 = vmatmul.f32.gmra.mxu0 %v4511
  %v4566 = vpop.f32.mrf.mxu0
  %v4567 = vadd.f32 0.0, %v4566
  %4568 = vmatmul.f32.gmra.mxu0 %v4513
  %v4569 = vpop.f32.mrf.mxu0
  %v4570 = vadd.f32 0.0, %v4569
  %4571 = vmatmul.f32.gmra.mxu0 %v4515
  %v4572 = vpop.f32.mrf.mxu0
  %v4573 = vadd.f32 0.0, %v4572
  %4574 = vdwg.mxu0
  %4575 = vmatpush.msra.mxu0 0.0
  %4576 = vmatpush.msra.mxu0 0.0
  %4577 = vmatpush.msra.mxu0 0.0
  %4578 = vmatpush.msra.mxu0 0.0
  %4579 = vmatpush.msra.mxu0 0.0
  %4580 = vmatpush.msra.mxu0 0.0
  %4581 = vmatpush.msra.mxu0 0.0
  %4582 = vmatpush.msra.mxu0 0.0
  %4583 = vmatpush.msra.mxu0 0.0
  %4584 = vmatpush.msra.mxu0 0.0
  %4585 = vmatpush.msra.mxu0 0.0
  %4586 = vmatpush.msra.mxu0 0.0
  %4587 = vmatpush.msra.mxu0 %v4499
  %4588 = vmatpush.msra.mxu0 %v4495
  %4589 = vmatpush.msra.mxu0 %v4491
  %4590 = vmatpush.msra.mxu0 %v4487
  %4591 = vmatmul.f32.gmra.mxu0 %v4509
  %v4592 = vpop.f32.mrf.mxu0
  %v4593 = vadd.f32 0.0, %v4592
  %4594 = vmatmul.f32.gmra.mxu0 %v4511
  %v4595 = vpop.f32.mrf.mxu0
  %v4596 = vadd.f32 0.0, %v4595
  %4597 = vmatmul.f32.gmra.mxu0 %v4513
  %v4598 = vpop.f32.mrf.mxu0
  %v4599 = vadd.f32 0.0, %v4598
  %4600 = vmatmul.f32.gmra.mxu0 %v4515
  %v4601 = vpop.f32.mrf.mxu0
  %v4602 = vadd.f32 0.0, %v4601
  %4603 = vdwg.mxu0
  %4604 = vmatpush.msra.mxu0 0.0
  %4605 = vmatpush.msra.mxu0 0.0
  %4606 = vmatpush.msra.mxu0 0.0
  %4607 = vmatpush.msra.mxu0 0.0
  %4608 = vmatpush.msra.mxu0 0.0
  %4609 = vmatpush.msra.mxu0 0.0
  %4610 = vmatpush.msra.mxu0 0.0
  %4611 = vmatpush.msra.mxu0 0.0
  %4612 = vmatpush.msra.mxu0 0.0
  %4613 = vmatpush.msra.mxu0 0.0
  %4614 = vmatpush.msra.mxu0 0.0
  %4615 = vmatpush.msra.mxu0 0.0
  %4616 = vmatpush.msra.mxu0 %v4500
  %4617 = vmatpush.msra.mxu0 %v4496
  %4618 = vmatpush.msra.mxu0 %v4492
  %4619 = vmatpush.msra.mxu0 %v4488
  %4620 = vmatmul.f32.gmra.mxu0 %v4509
  %v4621 = vpop.f32.mrf.mxu0
  %v4622 = vadd.f32 0.0, %v4621
  %4623 = vmatmul.f32.gmra.mxu0 %v4511
  %v4624 = vpop.f32.mrf.mxu0
  %v4625 = vadd.f32 0.0, %v4624
  %4626 = vmatmul.f32.gmra.mxu0 %v4513
  %v4627 = vpop.f32.mrf.mxu0
  %v4628 = vadd.f32 0.0, %v4627
  %4629 = vmatmul.f32.gmra.mxu0 %v4515
  %v4630 = vpop.f32.mrf.mxu0
  %v4631 = vadd.f32 0.0, %v4630
  %4632 = vdwg.mxu0
  %v4633 = vadd.f32 %v4458, %v4535
  %v4634 = vadd.f32 %v4459, %v4564
  %v4635 = vadd.f32 %v4460, %v4593
  %v4636 = vadd.f32 %v4461, %v4622
  %v4637 = vadd.f32 %v4462, %v4538
  %v4638 = vadd.f32 %v4463, %v4567
  %v4639 = vadd.f32 %v4464, %v4596
  %v4640 = vadd.f32 %v4465, %v4625
  %v4641 = vadd.f32 %v4466, %v4541
  %v4642 = vadd.f32 %v4467, %v4570
  %v4643 = vadd.f32 %v4468, %v4599
  %v4644 = vadd.f32 %v4469, %v4628
  %v4645 = vadd.f32 %v4470, %v4544
  %v4646 = vadd.f32 %v4471, %v4573
  %v4647 = vadd.f32 %v4472, %v4602
  %v4648 = vadd.f32 %v4473, %v4631
  %s4649 = scalar_lea.vmem %s1, 68
  %v4650 = vld [vmem:[%s4649] ss:$8 sm:$0xf]
  %v4652 = vperm.slane %v4650, 0
  %v4653 = vperm.slane %v4650, 1
  %v4654 = vperm.slane %v4650, 2
  %v4655 = vperm.slane %v4650, 3
  %v4660 = vmul.f32 %v988, %v4652
  %v4661 = vmul.f32 %v984, %v4653
  %v4662 = vmul.f32 %v980, %v4654
  %v4663 = vmul.f32 %v992, %v4655
  %v4664 = vmul.f32 %v989, %v4652
  %v4665 = vmul.f32 %v985, %v4653
  %v4666 = vmul.f32 %v981, %v4654
  %v4667 = vmul.f32 %v993, %v4655
  %v4668 = vmul.f32 %v990, %v4652
  %v4669 = vmul.f32 %v986, %v4653
  %v4670 = vmul.f32 %v982, %v4654
  %v4671 = vmul.f32 %v994, %v4655
  %v4672 = vmul.f32 %v991, %v4652
  %v4673 = vmul.f32 %v987, %v4653
  %v4674 = vmul.f32 %v983, %v4654
  %v4675 = vmul.f32 %v995, %v4655
  %v4676 = vld [vmem:[%s2 + $0x28] sm:$0xff]
  %v4677 = vld [vmem:[%s2 + $0x60] sm:$0xff]
  %v4678 = vld [vmem:[%s2 + $0x98] sm:$0xff]
  %v4679 = vld [vmem:[%s2 + $0xd0] sm:$0xff]
  %v4681 = vsel %vm37, %v4676, 0
  %v4684 = vsel %vm37, %v4677, 0
  %v4687 = vsel %vm37, %v4678, 0
  %v4690 = vsel %vm37, %v4679, 0
  %4692 = vmatpush.msra.mxu0 0.0
  %4693 = vmatpush.msra.mxu0 0.0
  %4694 = vmatpush.msra.mxu0 0.0
  %4695 = vmatpush.msra.mxu0 0.0
  %4696 = vmatpush.msra.mxu0 0.0
  %4697 = vmatpush.msra.mxu0 0.0
  %4698 = vmatpush.msra.mxu0 0.0
  %4699 = vmatpush.msra.mxu0 0.0
  %4700 = vmatpush.msra.mxu0 0.0
  %4701 = vmatpush.msra.mxu0 0.0
  %4702 = vmatpush.msra.mxu0 0.0
  %4703 = vmatpush.msra.mxu0 0.0
  %4704 = vmatpush.msra.mxu0 %v4672
  %4705 = vmatpush.msra.mxu0 %v4668
  %4706 = vmatpush.msra.mxu0 %v4664
  %4707 = vmatpush.msra.mxu0 %v4660
  %4708 = vmatmul.f32.gmra.mxu0 %v4681
  %v4709 = vpop.f32.mrf.mxu0
  %v4710 = vadd.f32 0.0, %v4709
  %4711 = vmatmul.f32.gmra.mxu0 %v4684
  %v4712 = vpop.f32.mrf.mxu0
  %v4713 = vadd.f32 0.0, %v4712
  %4714 = vmatmul.f32.gmra.mxu0 %v4687
  %v4715 = vpop.f32.mrf.mxu0
  %v4716 = vadd.f32 0.0, %v4715
  %4717 = vmatmul.f32.gmra.mxu0 %v4690
  %v4718 = vpop.f32.mrf.mxu0
  %v4719 = vadd.f32 0.0, %v4718
  %4720 = vdwg.mxu0
  %4721 = vmatpush.msra.mxu0 0.0
  %4722 = vmatpush.msra.mxu0 0.0
  %4723 = vmatpush.msra.mxu0 0.0
  %4724 = vmatpush.msra.mxu0 0.0
  %4725 = vmatpush.msra.mxu0 0.0
  %4726 = vmatpush.msra.mxu0 0.0
  %4727 = vmatpush.msra.mxu0 0.0
  %4728 = vmatpush.msra.mxu0 0.0
  %4729 = vmatpush.msra.mxu0 0.0
  %4730 = vmatpush.msra.mxu0 0.0
  %4731 = vmatpush.msra.mxu0 0.0
  %4732 = vmatpush.msra.mxu0 0.0
  %4733 = vmatpush.msra.mxu0 %v4673
  %4734 = vmatpush.msra.mxu0 %v4669
  %4735 = vmatpush.msra.mxu0 %v4665
  %4736 = vmatpush.msra.mxu0 %v4661
  %4737 = vmatmul.f32.gmra.mxu0 %v4681
  %v4738 = vpop.f32.mrf.mxu0
  %v4739 = vadd.f32 0.0, %v4738
  %4740 = vmatmul.f32.gmra.mxu0 %v4684
  %v4741 = vpop.f32.mrf.mxu0
  %v4742 = vadd.f32 0.0, %v4741
  %4743 = vmatmul.f32.gmra.mxu0 %v4687
  %v4744 = vpop.f32.mrf.mxu0
  %v4745 = vadd.f32 0.0, %v4744
  %4746 = vmatmul.f32.gmra.mxu0 %v4690
  %v4747 = vpop.f32.mrf.mxu0
  %v4748 = vadd.f32 0.0, %v4747
  %4749 = vdwg.mxu0
  %4750 = vmatpush.msra.mxu0 0.0
  %4751 = vmatpush.msra.mxu0 0.0
  %4752 = vmatpush.msra.mxu0 0.0
  %4753 = vmatpush.msra.mxu0 0.0
  %4754 = vmatpush.msra.mxu0 0.0
  %4755 = vmatpush.msra.mxu0 0.0
  %4756 = vmatpush.msra.mxu0 0.0
  %4757 = vmatpush.msra.mxu0 0.0
  %4758 = vmatpush.msra.mxu0 0.0
  %4759 = vmatpush.msra.mxu0 0.0
  %4760 = vmatpush.msra.mxu0 0.0
  %4761 = vmatpush.msra.mxu0 0.0
  %4762 = vmatpush.msra.mxu0 %v4674
  %4763 = vmatpush.msra.mxu0 %v4670
  %4764 = vmatpush.msra.mxu0 %v4666
  %4765 = vmatpush.msra.mxu0 %v4662
  %4766 = vmatmul.f32.gmra.mxu0 %v4681
  %v4767 = vpop.f32.mrf.mxu0
  %v4768 = vadd.f32 0.0, %v4767
  %4769 = vmatmul.f32.gmra.mxu0 %v4684
  %v4770 = vpop.f32.mrf.mxu0
  %v4771 = vadd.f32 0.0, %v4770
  %4772 = vmatmul.f32.gmra.mxu0 %v4687
  %v4773 = vpop.f32.mrf.mxu0
  %v4774 = vadd.f32 0.0, %v4773
  %4775 = vmatmul.f32.gmra.mxu0 %v4690
  %v4776 = vpop.f32.mrf.mxu0
  %v4777 = vadd.f32 0.0, %v4776
  %4778 = vdwg.mxu0
  %4779 = vmatpush.msra.mxu0 0.0
  %4780 = vmatpush.msra.mxu0 0.0
  %4781 = vmatpush.msra.mxu0 0.0
  %4782 = vmatpush.msra.mxu0 0.0
  %4783 = vmatpush.msra.mxu0 0.0
  %4784 = vmatpush.msra.mxu0 0.0
  %4785 = vmatpush.msra.mxu0 0.0
  %4786 = vmatpush.msra.mxu0 0.0
  %4787 = vmatpush.msra.mxu0 0.0
  %4788 = vmatpush.msra.mxu0 0.0
  %4789 = vmatpush.msra.mxu0 0.0
  %4790 = vmatpush.msra.mxu0 0.0
  %4791 = vmatpush.msra.mxu0 %v4675
  %4792 = vmatpush.msra.mxu0 %v4671
  %4793 = vmatpush.msra.mxu0 %v4667
  %4794 = vmatpush.msra.mxu0 %v4663
  %4795 = vmatmul.f32.gmra.mxu0 %v4681
  %v4796 = vpop.f32.mrf.mxu0
  %v4797 = vadd.f32 0.0, %v4796
  %4798 = vmatmul.f32.gmra.mxu0 %v4684
  %v4799 = vpop.f32.mrf.mxu0
  %v4800 = vadd.f32 0.0, %v4799
  %4801 = vmatmul.f32.gmra.mxu0 %v4687
  %v4802 = vpop.f32.mrf.mxu0
  %v4803 = vadd.f32 0.0, %v4802
  %4804 = vmatmul.f32.gmra.mxu0 %v4690
  %v4805 = vpop.f32.mrf.mxu0
  %v4806 = vadd.f32 0.0, %v4805
  %4807 = vdwg.mxu0
  %v4808 = vadd.f32 %v4633, %v4710
  %v4809 = vadd.f32 %v4634, %v4739
  %v4810 = vadd.f32 %v4635, %v4768
  %v4811 = vadd.f32 %v4636, %v4797
  %v4812 = vadd.f32 %v4637, %v4713
  %v4813 = vadd.f32 %v4638, %v4742
  %v4814 = vadd.f32 %v4639, %v4771
  %v4815 = vadd.f32 %v4640, %v4800
  %v4816 = vadd.f32 %v4641, %v4716
  %v4817 = vadd.f32 %v4642, %v4745
  %v4818 = vadd.f32 %v4643, %v4774
  %v4819 = vadd.f32 %v4644, %v4803
  %v4820 = vadd.f32 %v4645, %v4719
  %v4821 = vadd.f32 %v4646, %v4748
  %v4822 = vadd.f32 %v4647, %v4777
  %v4823 = vadd.f32 %v4648, %v4806
  %s4824 = scalar_lea.vmem %s1, 69
  %v4825 = vld [vmem:[%s4824] ss:$8 sm:$0xf]
  %v4827 = vperm.slane %v4825, 0
  %v4828 = vperm.slane %v4825, 1
  %v4829 = vperm.slane %v4825, 2
  %v4830 = vperm.slane %v4825, 3
  %v4835 = vmul.f32 %v1212, %v4827
  %v4836 = vmul.f32 %v1208, %v4828
  %v4837 = vmul.f32 %v1204, %v4829
  %v4838 = vmul.f32 %v1216, %v4830
  %v4839 = vmul.f32 %v1213, %v4827
  %v4840 = vmul.f32 %v1209, %v4828
  %v4841 = vmul.f32 %v1205, %v4829
  %v4842 = vmul.f32 %v1217, %v4830
  %v4843 = vmul.f32 %v1214, %v4827
  %v4844 = vmul.f32 %v1210, %v4828
  %v4845 = vmul.f32 %v1206, %v4829
  %v4846 = vmul.f32 %v1218, %v4830
  %v4847 = vmul.f32 %v1215, %v4827
  %v4848 = vmul.f32 %v1211, %v4828
  %v4849 = vmul.f32 %v1207, %v4829
  %v4850 = vmul.f32 %v1219, %v4830
  %4851 = vrot.lane.b32.xlu0 %v4676, 96
  %v4852 = vpop.permute.xlu0 %4851
  %4853 = vrot.lane.b32.xlu0 %v4677, 96
  %v4854 = vpop.permute.xlu0 %4853
  %4855 = vrot.lane.b32.xlu0 %v4678, 96
  %v4856 = vpop.permute.xlu0 %4855
  %4857 = vrot.lane.b32.xlu0 %v4679, 96
  %v4858 = vpop.permute.xlu0 %4857
  %v4859 = vsel %vm37, %v4852, 0
  %v4861 = vsel %vm37, %v4854, 0
  %v4863 = vsel %vm37, %v4856, 0
  %v4865 = vsel %vm37, %v4858, 0
  %4867 = vmatpush.msra.mxu0 0.0
  %4868 = vmatpush.msra.mxu0 0.0
  %4869 = vmatpush.msra.mxu0 0.0
  %4870 = vmatpush.msra.mxu0 0.0
  %4871 = vmatpush.msra.mxu0 0.0
  %4872 = vmatpush.msra.mxu0 0.0
  %4873 = vmatpush.msra.mxu0 0.0
  %4874 = vmatpush.msra.mxu0 0.0
  %4875 = vmatpush.msra.mxu0 0.0
  %4876 = vmatpush.msra.mxu0 0.0
  %4877 = vmatpush.msra.mxu0 0.0
  %4878 = vmatpush.msra.mxu0 0.0
  %4879 = vmatpush.msra.mxu0 %v4847
  %4880 = vmatpush.msra.mxu0 %v4843
  %4881 = vmatpush.msra.mxu0 %v4839
  %4882 = vmatpush.msra.mxu0 %v4835
  %4883 = vmatmul.f32.gmra.mxu0 %v4859
  %v4884 = vpop.f32.mrf.mxu0
  %v4885 = vadd.f32 0.0, %v4884
  %4886 = vmatmul.f32.gmra.mxu0 %v4861
  %v4887 = vpop.f32.mrf.mxu0
  %v4888 = vadd.f32 0.0, %v4887
  %4889 = vmatmul.f32.gmra.mxu0 %v4863
  %v4890 = vpop.f32.mrf.mxu0
  %v4891 = vadd.f32 0.0, %v4890
  %4892 = vmatmul.f32.gmra.mxu0 %v4865
  %v4893 = vpop.f32.mrf.mxu0
  %v4894 = vadd.f32 0.0, %v4893
  %4895 = vdwg.mxu0
  %4896 = vmatpush.msra.mxu0 0.0
  %4897 = vmatpush.msra.mxu0 0.0
  %4898 = vmatpush.msra.mxu0 0.0
  %4899 = vmatpush.msra.mxu0 0.0
  %4900 = vmatpush.msra.mxu0 0.0
  %4901 = vmatpush.msra.mxu0 0.0
  %4902 = vmatpush.msra.mxu0 0.0
  %4903 = vmatpush.msra.mxu0 0.0
  %4904 = vmatpush.msra.mxu0 0.0
  %4905 = vmatpush.msra.mxu0 0.0
  %4906 = vmatpush.msra.mxu0 0.0
  %4907 = vmatpush.msra.mxu0 0.0
  %4908 = vmatpush.msra.mxu0 %v4848
  %4909 = vmatpush.msra.mxu0 %v4844
  %4910 = vmatpush.msra.mxu0 %v4840
  %4911 = vmatpush.msra.mxu0 %v4836
  %4912 = vmatmul.f32.gmra.mxu0 %v4859
  %v4913 = vpop.f32.mrf.mxu0
  %v4914 = vadd.f32 0.0, %v4913
  %4915 = vmatmul.f32.gmra.mxu0 %v4861
  %v4916 = vpop.f32.mrf.mxu0
  %v4917 = vadd.f32 0.0, %v4916
  %4918 = vmatmul.f32.gmra.mxu0 %v4863
  %v4919 = vpop.f32.mrf.mxu0
  %v4920 = vadd.f32 0.0, %v4919
  %4921 = vmatmul.f32.gmra.mxu0 %v4865
  %v4922 = vpop.f32.mrf.mxu0
  %v4923 = vadd.f32 0.0, %v4922
  %4924 = vdwg.mxu0
  %4925 = vmatpush.msra.mxu0 0.0
  %4926 = vmatpush.msra.mxu0 0.0
  %4927 = vmatpush.msra.mxu0 0.0
  %4928 = vmatpush.msra.mxu0 0.0
  %4929 = vmatpush.msra.mxu0 0.0
  %4930 = vmatpush.msra.mxu0 0.0
  %4931 = vmatpush.msra.mxu0 0.0
  %4932 = vmatpush.msra.mxu0 0.0
  %4933 = vmatpush.msra.mxu0 0.0
  %4934 = vmatpush.msra.mxu0 0.0
  %4935 = vmatpush.msra.mxu0 0.0
  %4936 = vmatpush.msra.mxu0 0.0
  %4937 = vmatpush.msra.mxu0 %v4849
  %4938 = vmatpush.msra.mxu0 %v4845
  %4939 = vmatpush.msra.mxu0 %v4841
  %4940 = vmatpush.msra.mxu0 %v4837
  %4941 = vmatmul.f32.gmra.mxu0 %v4859
  %v4942 = vpop.f32.mrf.mxu0
  %v4943 = vadd.f32 0.0, %v4942
  %4944 = vmatmul.f32.gmra.mxu0 %v4861
  %v4945 = vpop.f32.mrf.mxu0
  %v4946 = vadd.f32 0.0, %v4945
  %4947 = vmatmul.f32.gmra.mxu0 %v4863
  %v4948 = vpop.f32.mrf.mxu0
  %v4949 = vadd.f32 0.0, %v4948
  %4950 = vmatmul.f32.gmra.mxu0 %v4865
  %v4951 = vpop.f32.mrf.mxu0
  %v4952 = vadd.f32 0.0, %v4951
  %4953 = vdwg.mxu0
  %4954 = vmatpush.msra.mxu0 0.0
  %4955 = vmatpush.msra.mxu0 0.0
  %4956 = vmatpush.msra.mxu0 0.0
  %4957 = vmatpush.msra.mxu0 0.0
  %4958 = vmatpush.msra.mxu0 0.0
  %4959 = vmatpush.msra.mxu0 0.0
  %4960 = vmatpush.msra.mxu0 0.0
  %4961 = vmatpush.msra.mxu0 0.0
  %4962 = vmatpush.msra.mxu0 0.0
  %4963 = vmatpush.msra.mxu0 0.0
  %4964 = vmatpush.msra.mxu0 0.0
  %4965 = vmatpush.msra.mxu0 0.0
  %4966 = vmatpush.msra.mxu0 %v4850
  %4967 = vmatpush.msra.mxu0 %v4846
  %4968 = vmatpush.msra.mxu0 %v4842
  %4969 = vmatpush.msra.mxu0 %v4838
  %4970 = vmatmul.f32.gmra.mxu0 %v4859
  %v4971 = vpop.f32.mrf.mxu0
  %v4972 = vadd.f32 0.0, %v4971
  %4973 = vmatmul.f32.gmra.mxu0 %v4861
  %v4974 = vpop.f32.mrf.mxu0
  %v4975 = vadd.f32 0.0, %v4974
  %4976 = vmatmul.f32.gmra.mxu0 %v4863
  %v4977 = vpop.f32.mrf.mxu0
  %v4978 = vadd.f32 0.0, %v4977
  %4979 = vmatmul.f32.gmra.mxu0 %v4865
  %v4980 = vpop.f32.mrf.mxu0
  %v4981 = vadd.f32 0.0, %v4980
  %4982 = vdwg.mxu0
  %v4983 = vadd.f32 %v4808, %v4885
  %v4984 = vadd.f32 %v4809, %v4914
  %v4985 = vadd.f32 %v4810, %v4943
  %v4986 = vadd.f32 %v4811, %v4972
  %v4987 = vadd.f32 %v4812, %v4888
  %v4988 = vadd.f32 %v4813, %v4917
  %v4989 = vadd.f32 %v4814, %v4946
  %v4990 = vadd.f32 %v4815, %v4975
  %v4991 = vadd.f32 %v4816, %v4891
  %v4992 = vadd.f32 %v4817, %v4920
  %v4993 = vadd.f32 %v4818, %v4949
  %v4994 = vadd.f32 %v4819, %v4978
  %v4995 = vadd.f32 %v4820, %v4894
  %v4996 = vadd.f32 %v4821, %v4923
  %v4997 = vadd.f32 %v4822, %v4952
  %v4998 = vadd.f32 %v4823, %v4981
  %s4999 = scalar_lea.vmem %s1, 70
  %v5000 = vld [vmem:[%s4999] ss:$8 sm:$0xf]
  %v5002 = vperm.slane %v5000, 0
  %v5003 = vperm.slane %v5000, 1
  %v5004 = vperm.slane %v5000, 2
  %v5005 = vperm.slane %v5000, 3
  %v5010 = vmul.f32 %v1436, %v5002
  %v5011 = vmul.f32 %v1432, %v5003
  %v5012 = vmul.f32 %v1428, %v5004
  %v5013 = vmul.f32 %v1440, %v5005
  %v5014 = vmul.f32 %v1437, %v5002
  %v5015 = vmul.f32 %v1433, %v5003
  %v5016 = vmul.f32 %v1429, %v5004
  %v5017 = vmul.f32 %v1441, %v5005
  %v5018 = vmul.f32 %v1438, %v5002
  %v5019 = vmul.f32 %v1434, %v5003
  %v5020 = vmul.f32 %v1430, %v5004
  %v5021 = vmul.f32 %v1442, %v5005
  %v5022 = vmul.f32 %v1439, %v5002
  %v5023 = vmul.f32 %v1435, %v5003
  %v5024 = vmul.f32 %v1431, %v5004
  %v5025 = vmul.f32 %v1443, %v5005
  %5026 = vrot.lane.b32.xlu0 %v4676, 64
  %v5027 = vpop.permute.xlu0 %5026
  %5028 = vrot.lane.b32.xlu0 %v4677, 64
  %v5029 = vpop.permute.xlu0 %5028
  %5030 = vrot.lane.b32.xlu0 %v4678, 64
  %v5031 = vpop.permute.xlu0 %5030
  %5032 = vrot.lane.b32.xlu0 %v4679, 64
  %v5033 = vpop.permute.xlu0 %5032
  %v5034 = vsel %vm37, %v5027, 0
  %v5036 = vsel %vm37, %v5029, 0
  %v5038 = vsel %vm37, %v5031, 0
  %v5040 = vsel %vm37, %v5033, 0
  %5042 = vmatpush.msra.mxu0 0.0
  %5043 = vmatpush.msra.mxu0 0.0
  %5044 = vmatpush.msra.mxu0 0.0
  %5045 = vmatpush.msra.mxu0 0.0
  %5046 = vmatpush.msra.mxu0 0.0
  %5047 = vmatpush.msra.mxu0 0.0
  %5048 = vmatpush.msra.mxu0 0.0
  %5049 = vmatpush.msra.mxu0 0.0
  %5050 = vmatpush.msra.mxu0 0.0
  %5051 = vmatpush.msra.mxu0 0.0
  %5052 = vmatpush.msra.mxu0 0.0
  %5053 = vmatpush.msra.mxu0 0.0
  %5054 = vmatpush.msra.mxu0 %v5022
  %5055 = vmatpush.msra.mxu0 %v5018
  %5056 = vmatpush.msra.mxu0 %v5014
  %5057 = vmatpush.msra.mxu0 %v5010
  %5058 = vmatmul.f32.gmra.mxu0 %v5034
  %v5059 = vpop.f32.mrf.mxu0
  %v5060 = vadd.f32 0.0, %v5059
  %5061 = vmatmul.f32.gmra.mxu0 %v5036
  %v5062 = vpop.f32.mrf.mxu0
  %v5063 = vadd.f32 0.0, %v5062
  %5064 = vmatmul.f32.gmra.mxu0 %v5038
  %v5065 = vpop.f32.mrf.mxu0
  %v5066 = vadd.f32 0.0, %v5065
  %5067 = vmatmul.f32.gmra.mxu0 %v5040
  %v5068 = vpop.f32.mrf.mxu0
  %v5069 = vadd.f32 0.0, %v5068
  %5070 = vdwg.mxu0
  %5071 = vmatpush.msra.mxu0 0.0
  %5072 = vmatpush.msra.mxu0 0.0
  %5073 = vmatpush.msra.mxu0 0.0
  %5074 = vmatpush.msra.mxu0 0.0
  %5075 = vmatpush.msra.mxu0 0.0
  %5076 = vmatpush.msra.mxu0 0.0
  %5077 = vmatpush.msra.mxu0 0.0
  %5078 = vmatpush.msra.mxu0 0.0
  %5079 = vmatpush.msra.mxu0 0.0
  %5080 = vmatpush.msra.mxu0 0.0
  %5081 = vmatpush.msra.mxu0 0.0
  %5082 = vmatpush.msra.mxu0 0.0
  %5083 = vmatpush.msra.mxu0 %v5023
  %5084 = vmatpush.msra.mxu0 %v5019
  %5085 = vmatpush.msra.mxu0 %v5015
  %5086 = vmatpush.msra.mxu0 %v5011
  %5087 = vmatmul.f32.gmra.mxu0 %v5034
  %v5088 = vpop.f32.mrf.mxu0
  %v5089 = vadd.f32 0.0, %v5088
  %5090 = vmatmul.f32.gmra.mxu0 %v5036
  %v5091 = vpop.f32.mrf.mxu0
  %v5092 = vadd.f32 0.0, %v5091
  %5093 = vmatmul.f32.gmra.mxu0 %v5038
  %v5094 = vpop.f32.mrf.mxu0
  %v5095 = vadd.f32 0.0, %v5094
  %5096 = vmatmul.f32.gmra.mxu0 %v5040
  %v5097 = vpop.f32.mrf.mxu0
  %v5098 = vadd.f32 0.0, %v5097
  %5099 = vdwg.mxu0
  %5100 = vmatpush.msra.mxu0 0.0
  %5101 = vmatpush.msra.mxu0 0.0
  %5102 = vmatpush.msra.mxu0 0.0
  %5103 = vmatpush.msra.mxu0 0.0
  %5104 = vmatpush.msra.mxu0 0.0
  %5105 = vmatpush.msra.mxu0 0.0
  %5106 = vmatpush.msra.mxu0 0.0
  %5107 = vmatpush.msra.mxu0 0.0
  %5108 = vmatpush.msra.mxu0 0.0
  %5109 = vmatpush.msra.mxu0 0.0
  %5110 = vmatpush.msra.mxu0 0.0
  %5111 = vmatpush.msra.mxu0 0.0
  %5112 = vmatpush.msra.mxu0 %v5024
  %5113 = vmatpush.msra.mxu0 %v5020
  %5114 = vmatpush.msra.mxu0 %v5016
  %5115 = vmatpush.msra.mxu0 %v5012
  %5116 = vmatmul.f32.gmra.mxu0 %v5034
  %v5117 = vpop.f32.mrf.mxu0
  %v5118 = vadd.f32 0.0, %v5117
  %5119 = vmatmul.f32.gmra.mxu0 %v5036
  %v5120 = vpop.f32.mrf.mxu0
  %v5121 = vadd.f32 0.0, %v5120
  %5122 = vmatmul.f32.gmra.mxu0 %v5038
  %v5123 = vpop.f32.mrf.mxu0
  %v5124 = vadd.f32 0.0, %v5123
  %5125 = vmatmul.f32.gmra.mxu0 %v5040
  %v5126 = vpop.f32.mrf.mxu0
  %v5127 = vadd.f32 0.0, %v5126
  %5128 = vdwg.mxu0
  %5129 = vmatpush.msra.mxu0 0.0
  %5130 = vmatpush.msra.mxu0 0.0
  %5131 = vmatpush.msra.mxu0 0.0
  %5132 = vmatpush.msra.mxu0 0.0
  %5133 = vmatpush.msra.mxu0 0.0
  %5134 = vmatpush.msra.mxu0 0.0
  %5135 = vmatpush.msra.mxu0 0.0
  %5136 = vmatpush.msra.mxu0 0.0
  %5137 = vmatpush.msra.mxu0 0.0
  %5138 = vmatpush.msra.mxu0 0.0
  %5139 = vmatpush.msra.mxu0 0.0
  %5140 = vmatpush.msra.mxu0 0.0
  %5141 = vmatpush.msra.mxu0 %v5025
  %5142 = vmatpush.msra.mxu0 %v5021
  %5143 = vmatpush.msra.mxu0 %v5017
  %5144 = vmatpush.msra.mxu0 %v5013
  %5145 = vmatmul.f32.gmra.mxu0 %v5034
  %v5146 = vpop.f32.mrf.mxu0
  %v5147 = vadd.f32 0.0, %v5146
  %5148 = vmatmul.f32.gmra.mxu0 %v5036
  %v5149 = vpop.f32.mrf.mxu0
  %v5150 = vadd.f32 0.0, %v5149
  %5151 = vmatmul.f32.gmra.mxu0 %v5038
  %v5152 = vpop.f32.mrf.mxu0
  %v5153 = vadd.f32 0.0, %v5152
  %5154 = vmatmul.f32.gmra.mxu0 %v5040
  %v5155 = vpop.f32.mrf.mxu0
  %v5156 = vadd.f32 0.0, %v5155
  %5157 = vdwg.mxu0
  %v5158 = vadd.f32 %v4983, %v5060
  %v5159 = vadd.f32 %v4984, %v5089
  %v5160 = vadd.f32 %v4985, %v5118
  %v5161 = vadd.f32 %v4986, %v5147
  %v5162 = vadd.f32 %v4987, %v5063
  %v5163 = vadd.f32 %v4988, %v5092
  %v5164 = vadd.f32 %v4989, %v5121
  %v5165 = vadd.f32 %v4990, %v5150
  %v5166 = vadd.f32 %v4991, %v5066
  %v5167 = vadd.f32 %v4992, %v5095
  %v5168 = vadd.f32 %v4993, %v5124
  %v5169 = vadd.f32 %v4994, %v5153
  %v5170 = vadd.f32 %v4995, %v5069
  %v5171 = vadd.f32 %v4996, %v5098
  %v5172 = vadd.f32 %v4997, %v5127
  %v5173 = vadd.f32 %v4998, %v5156
  %s5174 = scalar_lea.vmem %s1, 71
  %v5175 = vld [vmem:[%s5174] ss:$8 sm:$0xf]
  %v5177 = vperm.slane %v5175, 0
  %v5178 = vperm.slane %v5175, 1
  %v5179 = vperm.slane %v5175, 2
  %v5180 = vperm.slane %v5175, 3
  %v5185 = vmul.f32 %v1660, %v5177
  %v5186 = vmul.f32 %v1656, %v5178
  %v5187 = vmul.f32 %v1652, %v5179
  %v5188 = vmul.f32 %v1664, %v5180
  %v5189 = vmul.f32 %v1661, %v5177
  %v5190 = vmul.f32 %v1657, %v5178
  %v5191 = vmul.f32 %v1653, %v5179
  %v5192 = vmul.f32 %v1665, %v5180
  %v5193 = vmul.f32 %v1662, %v5177
  %v5194 = vmul.f32 %v1658, %v5178
  %v5195 = vmul.f32 %v1654, %v5179
  %v5196 = vmul.f32 %v1666, %v5180
  %v5197 = vmul.f32 %v1663, %v5177
  %v5198 = vmul.f32 %v1659, %v5178
  %v5199 = vmul.f32 %v1655, %v5179
  %v5200 = vmul.f32 %v1667, %v5180
  %5201 = vrot.lane.b32.xlu0 %v4676, 32
  %v5202 = vpop.permute.xlu0 %5201
  %5203 = vrot.lane.b32.xlu0 %v4677, 32
  %v5204 = vpop.permute.xlu0 %5203
  %5205 = vrot.lane.b32.xlu0 %v4678, 32
  %v5206 = vpop.permute.xlu0 %5205
  %5207 = vrot.lane.b32.xlu0 %v4679, 32
  %v5208 = vpop.permute.xlu0 %5207
  %v5209 = vsel %vm37, %v5202, 0
  %v5211 = vsel %vm37, %v5204, 0
  %v5213 = vsel %vm37, %v5206, 0
  %v5215 = vsel %vm37, %v5208, 0
  %5217 = vmatpush.msra.mxu0 0.0
  %5218 = vmatpush.msra.mxu0 0.0
  %5219 = vmatpush.msra.mxu0 0.0
  %5220 = vmatpush.msra.mxu0 0.0
  %5221 = vmatpush.msra.mxu0 0.0
  %5222 = vmatpush.msra.mxu0 0.0
  %5223 = vmatpush.msra.mxu0 0.0
  %5224 = vmatpush.msra.mxu0 0.0
  %5225 = vmatpush.msra.mxu0 0.0
  %5226 = vmatpush.msra.mxu0 0.0
  %5227 = vmatpush.msra.mxu0 0.0
  %5228 = vmatpush.msra.mxu0 0.0
  %5229 = vmatpush.msra.mxu0 %v5197
  %5230 = vmatpush.msra.mxu0 %v5193
  %5231 = vmatpush.msra.mxu0 %v5189
  %5232 = vmatpush.msra.mxu0 %v5185
  %5233 = vmatmul.f32.gmra.mxu0 %v5209
  %v5234 = vpop.f32.mrf.mxu0
  %v5235 = vadd.f32 0.0, %v5234
  %5236 = vmatmul.f32.gmra.mxu0 %v5211
  %v5237 = vpop.f32.mrf.mxu0
  %v5238 = vadd.f32 0.0, %v5237
  %5239 = vmatmul.f32.gmra.mxu0 %v5213
  %v5240 = vpop.f32.mrf.mxu0
  %v5241 = vadd.f32 0.0, %v5240
  %5242 = vmatmul.f32.gmra.mxu0 %v5215
  %v5243 = vpop.f32.mrf.mxu0
  %v5244 = vadd.f32 0.0, %v5243
  %5245 = vdwg.mxu0
  %5246 = vmatpush.msra.mxu0 0.0
  %5247 = vmatpush.msra.mxu0 0.0
  %5248 = vmatpush.msra.mxu0 0.0
  %5249 = vmatpush.msra.mxu0 0.0
  %5250 = vmatpush.msra.mxu0 0.0
  %5251 = vmatpush.msra.mxu0 0.0
  %5252 = vmatpush.msra.mxu0 0.0
  %5253 = vmatpush.msra.mxu0 0.0
  %5254 = vmatpush.msra.mxu0 0.0
  %5255 = vmatpush.msra.mxu0 0.0
  %5256 = vmatpush.msra.mxu0 0.0
  %5257 = vmatpush.msra.mxu0 0.0
  %5258 = vmatpush.msra.mxu0 %v5198
  %5259 = vmatpush.msra.mxu0 %v5194
  %5260 = vmatpush.msra.mxu0 %v5190
  %5261 = vmatpush.msra.mxu0 %v5186
  %5262 = vmatmul.f32.gmra.mxu0 %v5209
  %v5263 = vpop.f32.mrf.mxu0
  %v5264 = vadd.f32 0.0, %v5263
  %5265 = vmatmul.f32.gmra.mxu0 %v5211
  %v5266 = vpop.f32.mrf.mxu0
  %v5267 = vadd.f32 0.0, %v5266
  %5268 = vmatmul.f32.gmra.mxu0 %v5213
  %v5269 = vpop.f32.mrf.mxu0
  %v5270 = vadd.f32 0.0, %v5269
  %5271 = vmatmul.f32.gmra.mxu0 %v5215
  %v5272 = vpop.f32.mrf.mxu0
  %v5273 = vadd.f32 0.0, %v5272
  %5274 = vdwg.mxu0
  %5275 = vmatpush.msra.mxu0 0.0
  %5276 = vmatpush.msra.mxu0 0.0
  %5277 = vmatpush.msra.mxu0 0.0
  %5278 = vmatpush.msra.mxu0 0.0
  %5279 = vmatpush.msra.mxu0 0.0
  %5280 = vmatpush.msra.mxu0 0.0
  %5281 = vmatpush.msra.mxu0 0.0
  %5282 = vmatpush.msra.mxu0 0.0
  %5283 = vmatpush.msra.mxu0 0.0
  %5284 = vmatpush.msra.mxu0 0.0
  %5285 = vmatpush.msra.mxu0 0.0
  %5286 = vmatpush.msra.mxu0 0.0
  %5287 = vmatpush.msra.mxu0 %v5199
  %5288 = vmatpush.msra.mxu0 %v5195
  %5289 = vmatpush.msra.mxu0 %v5191
  %5290 = vmatpush.msra.mxu0 %v5187
  %5291 = vmatmul.f32.gmra.mxu0 %v5209
  %v5292 = vpop.f32.mrf.mxu0
  %v5293 = vadd.f32 0.0, %v5292
  %5294 = vmatmul.f32.gmra.mxu0 %v5211
  %v5295 = vpop.f32.mrf.mxu0
  %v5296 = vadd.f32 0.0, %v5295
  %5297 = vmatmul.f32.gmra.mxu0 %v5213
  %v5298 = vpop.f32.mrf.mxu0
  %v5299 = vadd.f32 0.0, %v5298
  %5300 = vmatmul.f32.gmra.mxu0 %v5215
  %v5301 = vpop.f32.mrf.mxu0
  %v5302 = vadd.f32 0.0, %v5301
  %5303 = vdwg.mxu0
  %5304 = vmatpush.msra.mxu0 0.0
  %5305 = vmatpush.msra.mxu0 0.0
  %5306 = vmatpush.msra.mxu0 0.0
  %5307 = vmatpush.msra.mxu0 0.0
  %5308 = vmatpush.msra.mxu0 0.0
  %5309 = vmatpush.msra.mxu0 0.0
  %5310 = vmatpush.msra.mxu0 0.0
  %5311 = vmatpush.msra.mxu0 0.0
  %5312 = vmatpush.msra.mxu0 0.0
  %5313 = vmatpush.msra.mxu0 0.0
  %5314 = vmatpush.msra.mxu0 0.0
  %5315 = vmatpush.msra.mxu0 0.0
  %5316 = vmatpush.msra.mxu0 %v5200
  %5317 = vmatpush.msra.mxu0 %v5196
  %5318 = vmatpush.msra.mxu0 %v5192
  %5319 = vmatpush.msra.mxu0 %v5188
  %5320 = vmatmul.f32.gmra.mxu0 %v5209
  %v5321 = vpop.f32.mrf.mxu0
  %v5322 = vadd.f32 0.0, %v5321
  %5323 = vmatmul.f32.gmra.mxu0 %v5211
  %v5324 = vpop.f32.mrf.mxu0
  %v5325 = vadd.f32 0.0, %v5324
  %5326 = vmatmul.f32.gmra.mxu0 %v5213
  %v5327 = vpop.f32.mrf.mxu0
  %v5328 = vadd.f32 0.0, %v5327
  %5329 = vmatmul.f32.gmra.mxu0 %v5215
  %v5330 = vpop.f32.mrf.mxu0
  %v5331 = vadd.f32 0.0, %v5330
  %5332 = vdwg.mxu0
  %v5333 = vadd.f32 %v5158, %v5235
  %v5334 = vadd.f32 %v5159, %v5264
  %v5335 = vadd.f32 %v5160, %v5293
  %v5336 = vadd.f32 %v5161, %v5322
  %v5337 = vadd.f32 %v5162, %v5238
  %v5338 = vadd.f32 %v5163, %v5267
  %v5339 = vadd.f32 %v5164, %v5296
  %v5340 = vadd.f32 %v5165, %v5325
  %v5341 = vadd.f32 %v5166, %v5241
  %v5342 = vadd.f32 %v5167, %v5270
  %v5343 = vadd.f32 %v5168, %v5299
  %v5344 = vadd.f32 %v5169, %v5328
  %v5345 = vadd.f32 %v5170, %v5244
  %v5346 = vadd.f32 %v5171, %v5273
  %v5347 = vadd.f32 %v5172, %v5302
  %v5348 = vadd.f32 %v5173, %v5331
  %s5349 = scalar_lea.vmem %s1, 96
  %v5350 = vld [vmem:[%s5349] ss:$8 sm:$0xf]
  %v5352 = vperm.slane %v5350, 0
  %v5353 = vperm.slane %v5350, 1
  %v5354 = vperm.slane %v5350, 2
  %v5355 = vperm.slane %v5350, 3
  %v5360 = vmul.f32 %v1884, %v5352
  %v5361 = vmul.f32 %v1880, %v5353
  %v5362 = vmul.f32 %v1876, %v5354
  %v5363 = vmul.f32 %v1888, %v5355
  %v5364 = vmul.f32 %v1885, %v5352
  %v5365 = vmul.f32 %v1881, %v5353
  %v5366 = vmul.f32 %v1877, %v5354
  %v5367 = vmul.f32 %v1889, %v5355
  %v5368 = vmul.f32 %v1886, %v5352
  %v5369 = vmul.f32 %v1882, %v5353
  %v5370 = vmul.f32 %v1878, %v5354
  %v5371 = vmul.f32 %v1890, %v5355
  %v5372 = vmul.f32 %v1887, %v5352
  %v5373 = vmul.f32 %v1883, %v5353
  %v5374 = vmul.f32 %v1879, %v5354
  %v5375 = vmul.f32 %v1891, %v5355
  %v5376 = vld [vmem:[%s2 + $0x30] sm:$0xff]
  %v5377 = vld [vmem:[%s2 + $0x68] sm:$0xff]
  %v5378 = vld [vmem:[%s2 + $0xa0] sm:$0xff]
  %v5379 = vld [vmem:[%s2 + $0xd8] sm:$0xff]
  %v5381 = vsel %vm37, %v5376, 0
  %v5384 = vsel %vm37, %v5377, 0
  %v5387 = vsel %vm37, %v5378, 0
  %v5390 = vsel %vm37, %v5379, 0
  %5392 = vmatpush.msra.mxu0 0.0
  %5393 = vmatpush.msra.mxu0 0.0
  %5394 = vmatpush.msra.mxu0 0.0
  %5395 = vmatpush.msra.mxu0 0.0
  %5396 = vmatpush.msra.mxu0 0.0
  %5397 = vmatpush.msra.mxu0 0.0
  %5398 = vmatpush.msra.mxu0 0.0
  %5399 = vmatpush.msra.mxu0 0.0
  %5400 = vmatpush.msra.mxu0 0.0
  %5401 = vmatpush.msra.mxu0 0.0
  %5402 = vmatpush.msra.mxu0 0.0
  %5403 = vmatpush.msra.mxu0 0.0
  %5404 = vmatpush.msra.mxu0 %v5372
  %5405 = vmatpush.msra.mxu0 %v5368
  %5406 = vmatpush.msra.mxu0 %v5364
  %5407 = vmatpush.msra.mxu0 %v5360
  %5408 = vmatmul.f32.gmra.mxu0 %v5381
  %v5409 = vpop.f32.mrf.mxu0
  %v5410 = vadd.f32 0.0, %v5409
  %5411 = vmatmul.f32.gmra.mxu0 %v5384
  %v5412 = vpop.f32.mrf.mxu0
  %v5413 = vadd.f32 0.0, %v5412
  %5414 = vmatmul.f32.gmra.mxu0 %v5387
  %v5415 = vpop.f32.mrf.mxu0
  %v5416 = vadd.f32 0.0, %v5415
  %5417 = vmatmul.f32.gmra.mxu0 %v5390
  %v5418 = vpop.f32.mrf.mxu0
  %v5419 = vadd.f32 0.0, %v5418
  %5420 = vdwg.mxu0
  %5421 = vmatpush.msra.mxu0 0.0
  %5422 = vmatpush.msra.mxu0 0.0
  %5423 = vmatpush.msra.mxu0 0.0
  %5424 = vmatpush.msra.mxu0 0.0
  %5425 = vmatpush.msra.mxu0 0.0
  %5426 = vmatpush.msra.mxu0 0.0
  %5427 = vmatpush.msra.mxu0 0.0
  %5428 = vmatpush.msra.mxu0 0.0
  %5429 = vmatpush.msra.mxu0 0.0
  %5430 = vmatpush.msra.mxu0 0.0
  %5431 = vmatpush.msra.mxu0 0.0
  %5432 = vmatpush.msra.mxu0 0.0
  %5433 = vmatpush.msra.mxu0 %v5373
  %5434 = vmatpush.msra.mxu0 %v5369
  %5435 = vmatpush.msra.mxu0 %v5365
  %5436 = vmatpush.msra.mxu0 %v5361
  %5437 = vmatmul.f32.gmra.mxu0 %v5381
  %v5438 = vpop.f32.mrf.mxu0
  %v5439 = vadd.f32 0.0, %v5438
  %5440 = vmatmul.f32.gmra.mxu0 %v5384
  %v5441 = vpop.f32.mrf.mxu0
  %v5442 = vadd.f32 0.0, %v5441
  %5443 = vmatmul.f32.gmra.mxu0 %v5387
  %v5444 = vpop.f32.mrf.mxu0
  %v5445 = vadd.f32 0.0, %v5444
  %5446 = vmatmul.f32.gmra.mxu0 %v5390
  %v5447 = vpop.f32.mrf.mxu0
  %v5448 = vadd.f32 0.0, %v5447
  %5449 = vdwg.mxu0
  %5450 = vmatpush.msra.mxu0 0.0
  %5451 = vmatpush.msra.mxu0 0.0
  %5452 = vmatpush.msra.mxu0 0.0
  %5453 = vmatpush.msra.mxu0 0.0
  %5454 = vmatpush.msra.mxu0 0.0
  %5455 = vmatpush.msra.mxu0 0.0
  %5456 = vmatpush.msra.mxu0 0.0
  %5457 = vmatpush.msra.mxu0 0.0
  %5458 = vmatpush.msra.mxu0 0.0
  %5459 = vmatpush.msra.mxu0 0.0
  %5460 = vmatpush.msra.mxu0 0.0
  %5461 = vmatpush.msra.mxu0 0.0
  %5462 = vmatpush.msra.mxu0 %v5374
  %5463 = vmatpush.msra.mxu0 %v5370
  %5464 = vmatpush.msra.mxu0 %v5366
  %5465 = vmatpush.msra.mxu0 %v5362
  %5466 = vmatmul.f32.gmra.mxu0 %v5381
  %v5467 = vpop.f32.mrf.mxu0
  %v5468 = vadd.f32 0.0, %v5467
  %5469 = vmatmul.f32.gmra.mxu0 %v5384
  %v5470 = vpop.f32.mrf.mxu0
  %v5471 = vadd.f32 0.0, %v5470
  %5472 = vmatmul.f32.gmra.mxu0 %v5387
  %v5473 = vpop.f32.mrf.mxu0
  %v5474 = vadd.f32 0.0, %v5473
  %5475 = vmatmul.f32.gmra.mxu0 %v5390
  %v5476 = vpop.f32.mrf.mxu0
  %v5477 = vadd.f32 0.0, %v5476
  %5478 = vdwg.mxu0
  %5479 = vmatpush.msra.mxu0 0.0
  %5480 = vmatpush.msra.mxu0 0.0
  %5481 = vmatpush.msra.mxu0 0.0
  %5482 = vmatpush.msra.mxu0 0.0
  %5483 = vmatpush.msra.mxu0 0.0
  %5484 = vmatpush.msra.mxu0 0.0
  %5485 = vmatpush.msra.mxu0 0.0
  %5486 = vmatpush.msra.mxu0 0.0
  %5487 = vmatpush.msra.mxu0 0.0
  %5488 = vmatpush.msra.mxu0 0.0
  %5489 = vmatpush.msra.mxu0 0.0
  %5490 = vmatpush.msra.mxu0 0.0
  %5491 = vmatpush.msra.mxu0 %v5375
  %5492 = vmatpush.msra.mxu0 %v5371
  %5493 = vmatpush.msra.mxu0 %v5367
  %5494 = vmatpush.msra.mxu0 %v5363
  %5495 = vmatmul.f32.gmra.mxu0 %v5381
  %v5496 = vpop.f32.mrf.mxu0
  %v5497 = vadd.f32 0.0, %v5496
  %5498 = vmatmul.f32.gmra.mxu0 %v5384
  %v5499 = vpop.f32.mrf.mxu0
  %v5500 = vadd.f32 0.0, %v5499
  %5501 = vmatmul.f32.gmra.mxu0 %v5387
  %v5502 = vpop.f32.mrf.mxu0
  %v5503 = vadd.f32 0.0, %v5502
  %5504 = vmatmul.f32.gmra.mxu0 %v5390
  %v5505 = vpop.f32.mrf.mxu0
  %v5506 = vadd.f32 0.0, %v5505
  %5507 = vdwg.mxu0
  %v5508 = vadd.f32 %v5333, %v5410
  %v5509 = vadd.f32 %v5334, %v5439
  %v5510 = vadd.f32 %v5335, %v5468
  %v5511 = vadd.f32 %v5336, %v5497
  %v5512 = vadd.f32 %v5337, %v5413
  %v5513 = vadd.f32 %v5338, %v5442
  %v5514 = vadd.f32 %v5339, %v5471
  %v5515 = vadd.f32 %v5340, %v5500
  %v5516 = vadd.f32 %v5341, %v5416
  %v5517 = vadd.f32 %v5342, %v5445
  %v5518 = vadd.f32 %v5343, %v5474
  %v5519 = vadd.f32 %v5344, %v5503
  %v5520 = vadd.f32 %v5345, %v5419
  %v5521 = vadd.f32 %v5346, %v5448
  %v5522 = vadd.f32 %v5347, %v5477
  %v5523 = vadd.f32 %v5348, %v5506
  %s5524 = scalar_lea.vmem %s1, 97
  %v5525 = vld [vmem:[%s5524] ss:$8 sm:$0xf]
  %v5527 = vperm.slane %v5525, 0
  %v5528 = vperm.slane %v5525, 1
  %v5529 = vperm.slane %v5525, 2
  %v5530 = vperm.slane %v5525, 3
  %v5535 = vmul.f32 %v2108, %v5527
  %v5536 = vmul.f32 %v2104, %v5528
  %v5537 = vmul.f32 %v2100, %v5529
  %v5538 = vmul.f32 %v2112, %v5530
  %v5539 = vmul.f32 %v2109, %v5527
  %v5540 = vmul.f32 %v2105, %v5528
  %v5541 = vmul.f32 %v2101, %v5529
  %v5542 = vmul.f32 %v2113, %v5530
  %v5543 = vmul.f32 %v2110, %v5527
  %v5544 = vmul.f32 %v2106, %v5528
  %v5545 = vmul.f32 %v2102, %v5529
  %v5546 = vmul.f32 %v2114, %v5530
  %v5547 = vmul.f32 %v2111, %v5527
  %v5548 = vmul.f32 %v2107, %v5528
  %v5549 = vmul.f32 %v2103, %v5529
  %v5550 = vmul.f32 %v2115, %v5530
  %5551 = vrot.lane.b32.xlu0 %v5376, 96
  %v5552 = vpop.permute.xlu0 %5551
  %5553 = vrot.lane.b32.xlu0 %v5377, 96
  %v5554 = vpop.permute.xlu0 %5553
  %5555 = vrot.lane.b32.xlu0 %v5378, 96
  %v5556 = vpop.permute.xlu0 %5555
  %5557 = vrot.lane.b32.xlu0 %v5379, 96
  %v5558 = vpop.permute.xlu0 %5557
  %v5559 = vsel %vm37, %v5552, 0
  %v5561 = vsel %vm37, %v5554, 0
  %v5563 = vsel %vm37, %v5556, 0
  %v5565 = vsel %vm37, %v5558, 0
  %5567 = vmatpush.msra.mxu0 0.0
  %5568 = vmatpush.msra.mxu0 0.0
  %5569 = vmatpush.msra.mxu0 0.0
  %5570 = vmatpush.msra.mxu0 0.0
  %5571 = vmatpush.msra.mxu0 0.0
  %5572 = vmatpush.msra.mxu0 0.0
  %5573 = vmatpush.msra.mxu0 0.0
  %5574 = vmatpush.msra.mxu0 0.0
  %5575 = vmatpush.msra.mxu0 0.0
  %5576 = vmatpush.msra.mxu0 0.0
  %5577 = vmatpush.msra.mxu0 0.0
  %5578 = vmatpush.msra.mxu0 0.0
  %5579 = vmatpush.msra.mxu0 %v5547
  %5580 = vmatpush.msra.mxu0 %v5543
  %5581 = vmatpush.msra.mxu0 %v5539
  %5582 = vmatpush.msra.mxu0 %v5535
  %5583 = vmatmul.f32.gmra.mxu0 %v5559
  %v5584 = vpop.f32.mrf.mxu0
  %v5585 = vadd.f32 0.0, %v5584
  %5586 = vmatmul.f32.gmra.mxu0 %v5561
  %v5587 = vpop.f32.mrf.mxu0
  %v5588 = vadd.f32 0.0, %v5587
  %5589 = vmatmul.f32.gmra.mxu0 %v5563
  %v5590 = vpop.f32.mrf.mxu0
  %v5591 = vadd.f32 0.0, %v5590
  %5592 = vmatmul.f32.gmra.mxu0 %v5565
  %v5593 = vpop.f32.mrf.mxu0
  %v5594 = vadd.f32 0.0, %v5593
  %5595 = vdwg.mxu0
  %5596 = vmatpush.msra.mxu0 0.0
  %5597 = vmatpush.msra.mxu0 0.0
  %5598 = vmatpush.msra.mxu0 0.0
  %5599 = vmatpush.msra.mxu0 0.0
  %5600 = vmatpush.msra.mxu0 0.0
  %5601 = vmatpush.msra.mxu0 0.0
  %5602 = vmatpush.msra.mxu0 0.0
  %5603 = vmatpush.msra.mxu0 0.0
  %5604 = vmatpush.msra.mxu0 0.0
  %5605 = vmatpush.msra.mxu0 0.0
  %5606 = vmatpush.msra.mxu0 0.0
  %5607 = vmatpush.msra.mxu0 0.0
  %5608 = vmatpush.msra.mxu0 %v5548
  %5609 = vmatpush.msra.mxu0 %v5544
  %5610 = vmatpush.msra.mxu0 %v5540
  %5611 = vmatpush.msra.mxu0 %v5536
  %5612 = vmatmul.f32.gmra.mxu0 %v5559
  %v5613 = vpop.f32.mrf.mxu0
  %v5614 = vadd.f32 0.0, %v5613
  %5615 = vmatmul.f32.gmra.mxu0 %v5561
  %v5616 = vpop.f32.mrf.mxu0
  %v5617 = vadd.f32 0.0, %v5616
  %5618 = vmatmul.f32.gmra.mxu0 %v5563
  %v5619 = vpop.f32.mrf.mxu0
  %v5620 = vadd.f32 0.0, %v5619
  %5621 = vmatmul.f32.gmra.mxu0 %v5565
  %v5622 = vpop.f32.mrf.mxu0
  %v5623 = vadd.f32 0.0, %v5622
  %5624 = vdwg.mxu0
  %5625 = vmatpush.msra.mxu0 0.0
  %5626 = vmatpush.msra.mxu0 0.0
  %5627 = vmatpush.msra.mxu0 0.0
  %5628 = vmatpush.msra.mxu0 0.0
  %5629 = vmatpush.msra.mxu0 0.0
  %5630 = vmatpush.msra.mxu0 0.0
  %5631 = vmatpush.msra.mxu0 0.0
  %5632 = vmatpush.msra.mxu0 0.0
  %5633 = vmatpush.msra.mxu0 0.0
  %5634 = vmatpush.msra.mxu0 0.0
  %5635 = vmatpush.msra.mxu0 0.0
  %5636 = vmatpush.msra.mxu0 0.0
  %5637 = vmatpush.msra.mxu0 %v5549
  %5638 = vmatpush.msra.mxu0 %v5545
  %5639 = vmatpush.msra.mxu0 %v5541
  %5640 = vmatpush.msra.mxu0 %v5537
  %5641 = vmatmul.f32.gmra.mxu0 %v5559
  %v5642 = vpop.f32.mrf.mxu0
  %v5643 = vadd.f32 0.0, %v5642
  %5644 = vmatmul.f32.gmra.mxu0 %v5561
  %v5645 = vpop.f32.mrf.mxu0
  %v5646 = vadd.f32 0.0, %v5645
  %5647 = vmatmul.f32.gmra.mxu0 %v5563
  %v5648 = vpop.f32.mrf.mxu0
  %v5649 = vadd.f32 0.0, %v5648
  %5650 = vmatmul.f32.gmra.mxu0 %v5565
  %v5651 = vpop.f32.mrf.mxu0
  %v5652 = vadd.f32 0.0, %v5651
  %5653 = vdwg.mxu0
  %5654 = vmatpush.msra.mxu0 0.0
  %5655 = vmatpush.msra.mxu0 0.0
  %5656 = vmatpush.msra.mxu0 0.0
  %5657 = vmatpush.msra.mxu0 0.0
  %5658 = vmatpush.msra.mxu0 0.0
  %5659 = vmatpush.msra.mxu0 0.0
  %5660 = vmatpush.msra.mxu0 0.0
  %5661 = vmatpush.msra.mxu0 0.0
  %5662 = vmatpush.msra.mxu0 0.0
  %5663 = vmatpush.msra.mxu0 0.0
  %5664 = vmatpush.msra.mxu0 0.0
  %5665 = vmatpush.msra.mxu0 0.0
  %5666 = vmatpush.msra.mxu0 %v5550
  %5667 = vmatpush.msra.mxu0 %v5546
  %5668 = vmatpush.msra.mxu0 %v5542
  %5669 = vmatpush.msra.mxu0 %v5538
  %5670 = vmatmul.f32.gmra.mxu0 %v5559
  %v5671 = vpop.f32.mrf.mxu0
  %v5672 = vadd.f32 0.0, %v5671
  %5673 = vmatmul.f32.gmra.mxu0 %v5561
  %v5674 = vpop.f32.mrf.mxu0
  %v5675 = vadd.f32 0.0, %v5674
  %5676 = vmatmul.f32.gmra.mxu0 %v5563
  %v5677 = vpop.f32.mrf.mxu0
  %v5678 = vadd.f32 0.0, %v5677
  %5679 = vmatmul.f32.gmra.mxu0 %v5565
  %v5680 = vpop.f32.mrf.mxu0
  %v5681 = vadd.f32 0.0, %v5680
  %5682 = vdwg.mxu0
  %v5683 = vadd.f32 %v5508, %v5585
  %v5684 = vadd.f32 %v5509, %v5614
  %v5685 = vadd.f32 %v5510, %v5643
  %v5686 = vadd.f32 %v5511, %v5672
  %v5687 = vadd.f32 %v5512, %v5588
  %v5688 = vadd.f32 %v5513, %v5617
  %v5689 = vadd.f32 %v5514, %v5646
  %v5690 = vadd.f32 %v5515, %v5675
  %v5691 = vadd.f32 %v5516, %v5591
  %v5692 = vadd.f32 %v5517, %v5620
  %v5693 = vadd.f32 %v5518, %v5649
  %v5694 = vadd.f32 %v5519, %v5678
  %v5695 = vadd.f32 %v5520, %v5594
  %v5696 = vadd.f32 %v5521, %v5623
  %v5697 = vadd.f32 %v5522, %v5652
  %v5698 = vadd.f32 %v5523, %v5681
  %s5699 = scalar_lea.vmem %s1, 98
  %v5700 = vld [vmem:[%s5699] ss:$8 sm:$0xf]
  %v5702 = vperm.slane %v5700, 0
  %v5703 = vperm.slane %v5700, 1
  %v5704 = vperm.slane %v5700, 2
  %v5705 = vperm.slane %v5700, 3
  %v5710 = vmul.f32 %v2332, %v5702
  %v5711 = vmul.f32 %v2328, %v5703
  %v5712 = vmul.f32 %v2324, %v5704
  %v5713 = vmul.f32 %v2336, %v5705
  %v5714 = vmul.f32 %v2333, %v5702
  %v5715 = vmul.f32 %v2329, %v5703
  %v5716 = vmul.f32 %v2325, %v5704
  %v5717 = vmul.f32 %v2337, %v5705
  %v5718 = vmul.f32 %v2334, %v5702
  %v5719 = vmul.f32 %v2330, %v5703
  %v5720 = vmul.f32 %v2326, %v5704
  %v5721 = vmul.f32 %v2338, %v5705
  %v5722 = vmul.f32 %v2335, %v5702
  %v5723 = vmul.f32 %v2331, %v5703
  %v5724 = vmul.f32 %v2327, %v5704
  %v5725 = vmul.f32 %v2339, %v5705
  %5726 = vrot.lane.b32.xlu0 %v5376, 64
  %v5727 = vpop.permute.xlu0 %5726
  %5728 = vrot.lane.b32.xlu0 %v5377, 64
  %v5729 = vpop.permute.xlu0 %5728
  %5730 = vrot.lane.b32.xlu0 %v5378, 64
  %v5731 = vpop.permute.xlu0 %5730
  %5732 = vrot.lane.b32.xlu0 %v5379, 64
  %v5733 = vpop.permute.xlu0 %5732
  %v5734 = vsel %vm37, %v5727, 0
  %v5736 = vsel %vm37, %v5729, 0
  %v5738 = vsel %vm37, %v5731, 0
  %v5740 = vsel %vm37, %v5733, 0
  %5742 = vmatpush.msra.mxu0 0.0
  %5743 = vmatpush.msra.mxu0 0.0
  %5744 = vmatpush.msra.mxu0 0.0
  %5745 = vmatpush.msra.mxu0 0.0
  %5746 = vmatpush.msra.mxu0 0.0
  %5747 = vmatpush.msra.mxu0 0.0
  %5748 = vmatpush.msra.mxu0 0.0
  %5749 = vmatpush.msra.mxu0 0.0
  %5750 = vmatpush.msra.mxu0 0.0
  %5751 = vmatpush.msra.mxu0 0.0
  %5752 = vmatpush.msra.mxu0 0.0
  %5753 = vmatpush.msra.mxu0 0.0
  %5754 = vmatpush.msra.mxu0 %v5722
  %5755 = vmatpush.msra.mxu0 %v5718
  %5756 = vmatpush.msra.mxu0 %v5714
  %5757 = vmatpush.msra.mxu0 %v5710
  %5758 = vmatmul.f32.gmra.mxu0 %v5734
  %v5759 = vpop.f32.mrf.mxu0
  %v5760 = vadd.f32 0.0, %v5759
  %5761 = vmatmul.f32.gmra.mxu0 %v5736
  %v5762 = vpop.f32.mrf.mxu0
  %v5763 = vadd.f32 0.0, %v5762
  %5764 = vmatmul.f32.gmra.mxu0 %v5738
  %v5765 = vpop.f32.mrf.mxu0
  %v5766 = vadd.f32 0.0, %v5765
  %5767 = vmatmul.f32.gmra.mxu0 %v5740
  %v5768 = vpop.f32.mrf.mxu0
  %v5769 = vadd.f32 0.0, %v5768
  %5770 = vdwg.mxu0
  %5771 = vmatpush.msra.mxu0 0.0
  %5772 = vmatpush.msra.mxu0 0.0
  %5773 = vmatpush.msra.mxu0 0.0
  %5774 = vmatpush.msra.mxu0 0.0
  %5775 = vmatpush.msra.mxu0 0.0
  %5776 = vmatpush.msra.mxu0 0.0
  %5777 = vmatpush.msra.mxu0 0.0
  %5778 = vmatpush.msra.mxu0 0.0
  %5779 = vmatpush.msra.mxu0 0.0
  %5780 = vmatpush.msra.mxu0 0.0
  %5781 = vmatpush.msra.mxu0 0.0
  %5782 = vmatpush.msra.mxu0 0.0
  %5783 = vmatpush.msra.mxu0 %v5723
  %5784 = vmatpush.msra.mxu0 %v5719
  %5785 = vmatpush.msra.mxu0 %v5715
  %5786 = vmatpush.msra.mxu0 %v5711
  %5787 = vmatmul.f32.gmra.mxu0 %v5734
  %v5788 = vpop.f32.mrf.mxu0
  %v5789 = vadd.f32 0.0, %v5788
  %5790 = vmatmul.f32.gmra.mxu0 %v5736
  %v5791 = vpop.f32.mrf.mxu0
  %v5792 = vadd.f32 0.0, %v5791
  %5793 = vmatmul.f32.gmra.mxu0 %v5738
  %v5794 = vpop.f32.mrf.mxu0
  %v5795 = vadd.f32 0.0, %v5794
  %5796 = vmatmul.f32.gmra.mxu0 %v5740
  %v5797 = vpop.f32.mrf.mxu0
  %v5798 = vadd.f32 0.0, %v5797
  %5799 = vdwg.mxu0
  %5800 = vmatpush.msra.mxu0 0.0
  %5801 = vmatpush.msra.mxu0 0.0
  %5802 = vmatpush.msra.mxu0 0.0
  %5803 = vmatpush.msra.mxu0 0.0
  %5804 = vmatpush.msra.mxu0 0.0
  %5805 = vmatpush.msra.mxu0 0.0
  %5806 = vmatpush.msra.mxu0 0.0
  %5807 = vmatpush.msra.mxu0 0.0
  %5808 = vmatpush.msra.mxu0 0.0
  %5809 = vmatpush.msra.mxu0 0.0
  %5810 = vmatpush.msra.mxu0 0.0
  %5811 = vmatpush.msra.mxu0 0.0
  %5812 = vmatpush.msra.mxu0 %v5724
  %5813 = vmatpush.msra.mxu0 %v5720
  %5814 = vmatpush.msra.mxu0 %v5716
  %5815 = vmatpush.msra.mxu0 %v5712
  %5816 = vmatmul.f32.gmra.mxu0 %v5734
  %v5817 = vpop.f32.mrf.mxu0
  %v5818 = vadd.f32 0.0, %v5817
  %5819 = vmatmul.f32.gmra.mxu0 %v5736
  %v5820 = vpop.f32.mrf.mxu0
  %v5821 = vadd.f32 0.0, %v5820
  %5822 = vmatmul.f32.gmra.mxu0 %v5738
  %v5823 = vpop.f32.mrf.mxu0
  %v5824 = vadd.f32 0.0, %v5823
  %5825 = vmatmul.f32.gmra.mxu0 %v5740
  %v5826 = vpop.f32.mrf.mxu0
  %v5827 = vadd.f32 0.0, %v5826
  %5828 = vdwg.mxu0
  %5829 = vmatpush.msra.mxu0 0.0
  %5830 = vmatpush.msra.mxu0 0.0
  %5831 = vmatpush.msra.mxu0 0.0
  %5832 = vmatpush.msra.mxu0 0.0
  %5833 = vmatpush.msra.mxu0 0.0
  %5834 = vmatpush.msra.mxu0 0.0
  %5835 = vmatpush.msra.mxu0 0.0
  %5836 = vmatpush.msra.mxu0 0.0
  %5837 = vmatpush.msra.mxu0 0.0
  %5838 = vmatpush.msra.mxu0 0.0
  %5839 = vmatpush.msra.mxu0 0.0
  %5840 = vmatpush.msra.mxu0 0.0
  %5841 = vmatpush.msra.mxu0 %v5725
  %5842 = vmatpush.msra.mxu0 %v5721
  %5843 = vmatpush.msra.mxu0 %v5717
  %5844 = vmatpush.msra.mxu0 %v5713
  %5845 = vmatmul.f32.gmra.mxu0 %v5734
  %v5846 = vpop.f32.mrf.mxu0
  %v5847 = vadd.f32 0.0, %v5846
  %5848 = vmatmul.f32.gmra.mxu0 %v5736
  %v5849 = vpop.f32.mrf.mxu0
  %v5850 = vadd.f32 0.0, %v5849
  %5851 = vmatmul.f32.gmra.mxu0 %v5738
  %v5852 = vpop.f32.mrf.mxu0
  %v5853 = vadd.f32 0.0, %v5852
  %5854 = vmatmul.f32.gmra.mxu0 %v5740
  %v5855 = vpop.f32.mrf.mxu0
  %v5856 = vadd.f32 0.0, %v5855
  %5857 = vdwg.mxu0
  %v5858 = vadd.f32 %v5683, %v5760
  %v5859 = vadd.f32 %v5684, %v5789
  %v5860 = vadd.f32 %v5685, %v5818
  %v5861 = vadd.f32 %v5686, %v5847
  %v5862 = vadd.f32 %v5687, %v5763
  %v5863 = vadd.f32 %v5688, %v5792
  %v5864 = vadd.f32 %v5689, %v5821
  %v5865 = vadd.f32 %v5690, %v5850
  %v5866 = vadd.f32 %v5691, %v5766
  %v5867 = vadd.f32 %v5692, %v5795
  %v5868 = vadd.f32 %v5693, %v5824
  %v5869 = vadd.f32 %v5694, %v5853
  %v5870 = vadd.f32 %v5695, %v5769
  %v5871 = vadd.f32 %v5696, %v5798
  %v5872 = vadd.f32 %v5697, %v5827
  %v5873 = vadd.f32 %v5698, %v5856
  %v5874 = vadd.f32 %v5858, %v5859
  %v5875 = vadd.f32 %v5874, %v5860
  %v5876 = vadd.f32 %v5875, %v5861
  %5877 = vadd.xlane.f32.xlu0 %v5876
  %v5878 = vpop.xlane.xlu0 %5877
  %v5879 = vadd.f32 %v5862, %v5863
  %v5880 = vadd.f32 %v5879, %v5864
  %v5881 = vadd.f32 %v5880, %v5865
  %5882 = vadd.xlane.f32.xlu0 %v5881
  %v5883 = vpop.xlane.xlu0 %5882
  %v5884 = vadd.f32 %v5866, %v5867
  %v5885 = vadd.f32 %v5884, %v5868
  %v5886 = vadd.f32 %v5885, %v5869
  %5887 = vadd.xlane.f32.xlu0 %v5886
  %v5888 = vpop.xlane.xlu0 %5887
  %v5889 = vadd.f32 %v5870, %v5871
  %v5890 = vadd.f32 %v5889, %v5872
  %v5891 = vadd.f32 %v5890, %v5873
  %5892 = vadd.xlane.f32.xlu0 %v5891
  %v5893 = vpop.xlane.xlu0 %5892
  %v5894 = vadd.f32 %v5878, %v5888
  %v5895 = vadd.f32 %v5883, %v5893
  %v5896 = vmul.f32 %v5894, 0.0009765625
  %v5897 = vmul.f32 %v5895, 0.0009765625
  %5899 = vset.pattern.permute.xlu0 0
  %5900 = vperm.xlu0 %5899, %v5896
  %v5901 = vpop.permute.xlu0 %5900
  %5904 = vset.pattern.permute.xlu0 0
  %5905 = vperm.xlu0 %5904, %v5897
  %v5906 = vpop.permute.xlu0 %5905
  %v5908 = vsub.f32 %v5858, %v5901
  %v5909 = vsub.f32 %v5859, %v5901
  %v5910 = vsub.f32 %v5860, %v5901
  %v5911 = vsub.f32 %v5861, %v5901
  %v5912 = vsub.f32 %v5862, %v5906
  %v5913 = vsub.f32 %v5863, %v5906
  %v5914 = vsub.f32 %v5864, %v5906
  %v5915 = vsub.f32 %v5865, %v5906
  %v5916 = vsub.f32 %v5866, %v5901
  %v5917 = vsub.f32 %v5867, %v5901
  %v5918 = vsub.f32 %v5868, %v5901
  %v5919 = vsub.f32 %v5869, %v5901
  %v5920 = vsub.f32 %v5870, %v5906
  %v5921 = vsub.f32 %v5871, %v5906
  %v5922 = vsub.f32 %v5872, %v5906
  %v5923 = vsub.f32 %v5873, %v5906
  %v5924 = vmul.f32 %v5908, %v5908
  %v5925 = vmul.f32 %v5909, %v5909
  %v5926 = vmul.f32 %v5910, %v5910
  %v5927 = vmul.f32 %v5911, %v5911
  %v5928 = vmul.f32 %v5912, %v5912
  %v5929 = vmul.f32 %v5913, %v5913
  %v5930 = vmul.f32 %v5914, %v5914
  %v5931 = vmul.f32 %v5915, %v5915
  %v5932 = vmul.f32 %v5916, %v5916
  %v5933 = vmul.f32 %v5917, %v5917
  %v5934 = vmul.f32 %v5918, %v5918
  %v5935 = vmul.f32 %v5919, %v5919
  %v5936 = vmul.f32 %v5920, %v5920
  %v5937 = vmul.f32 %v5921, %v5921
  %v5938 = vmul.f32 %v5922, %v5922
  %v5939 = vmul.f32 %v5923, %v5923
  %v5940 = vadd.f32 %v5924, %v5925
  %v5941 = vadd.f32 %v5940, %v5926
  %v5942 = vadd.f32 %v5941, %v5927
  %5943 = vadd.xlane.f32.xlu0 %v5942
  %v5944 = vpop.xlane.xlu0 %5943
  %v5945 = vadd.f32 %v5928, %v5929
  %v5946 = vadd.f32 %v5945, %v5930
  %v5947 = vadd.f32 %v5946, %v5931
  %5948 = vadd.xlane.f32.xlu0 %v5947
  %v5949 = vpop.xlane.xlu0 %5948
  %v5950 = vadd.f32 %v5932, %v5933
  %v5951 = vadd.f32 %v5950, %v5934
  %v5952 = vadd.f32 %v5951, %v5935
  %5953 = vadd.xlane.f32.xlu0 %v5952
  %v5954 = vpop.xlane.xlu0 %5953
  %v5955 = vadd.f32 %v5936, %v5937
  %v5956 = vadd.f32 %v5955, %v5938
  %v5957 = vadd.f32 %v5956, %v5939
  %5958 = vadd.xlane.f32.xlu0 %v5957
  %v5959 = vpop.xlane.xlu0 %5958
  %v5960 = vadd.f32 %v5944, %v5954
  %v5961 = vadd.f32 %v5949, %v5959
  %v5962 = vmul.f32 %v5960, 0.0009765625
  %v5963 = vmul.f32 %v5961, 0.0009765625
  %v5964 = vadd.f32 %v5962, 1e-05
  %v5965 = vadd.f32 %v5963, 1e-05
  %v5966 = vrsqrt.pop %v5964
  %v5967 = vmul.f32 %v5966, %v5964
  %v5968 = vmul.f32 %v5967, %v5966
  %v5969 = vmul.f32 0.5, %v5968
  %v5970 = vsub.f32 1.5, %v5969
  %v5971 = vmul.f32 %v5966, %v5970
  %vm5972 = vweird.f32 %v5964
  %vm5973 = vweird.f32 %v5966
  %vm5974 = vmor %vm5972, %vm5973
  %v5975 = vsel %vm5974, %v5966, %v5971
  %v5976 = vrsqrt.pop %v5965
  %v5977 = vmul.f32 %v5976, %v5965
  %v5978 = vmul.f32 %v5977, %v5976
  %v5979 = vmul.f32 0.5, %v5978
  %v5980 = vsub.f32 1.5, %v5979
  %v5981 = vmul.f32 %v5976, %v5980
  %vm5982 = vweird.f32 %v5965
  %vm5983 = vweird.f32 %v5976
  %vm5984 = vmor %vm5982, %vm5983
  %v5985 = vsel %vm5984, %v5976, %v5981
  %5988 = vrot.lane.b32.xlu0 %v5975, 106
  %v5989 = vpop.permute.xlu0 %5988
  %5990 = vrot.lane.b32.xlu0 %v5985, 106
  %v5991 = vpop.permute.xlu0 %5990
  %v5994 = vmul.f32 %v17, %v5989
  %v5995 = vmul.f32 %v18, %v5991
  %v5996 = vmul.f32 %v19, %v5989
  %v5997 = vmul.f32 %v20, %v5991
  %5999 = vset.pattern.permute.xlu0 106
  %6000 = vperm.xlu0 %5999, %v5994
  %v6001 = vpop.permute.xlu0 %6000
  %6004 = vset.pattern.permute.xlu0 106
  %6005 = vperm.xlu0 %6004, %v5995
  %v6006 = vpop.permute.xlu0 %6005
  %6009 = vset.pattern.permute.xlu0 106
  %6010 = vperm.xlu0 %6009, %v5996
  %v6011 = vpop.permute.xlu0 %6010
  %6014 = vset.pattern.permute.xlu0 106
  %6015 = vperm.xlu0 %6014, %v5997
  %v6016 = vpop.permute.xlu0 %6015
  %v6018 = vmul.f32 %v5908, %v6001
  %v6019 = vmul.f32 %v5909, %v6001
  %v6020 = vmul.f32 %v5910, %v6001
  %v6021 = vmul.f32 %v5911, %v6001
  %v6022 = vmul.f32 %v5912, %v6006
  %v6023 = vmul.f32 %v5913, %v6006
  %v6024 = vmul.f32 %v5914, %v6006
  %v6025 = vmul.f32 %v5915, %v6006
  %v6026 = vmul.f32 %v5916, %v6011
  %v6027 = vmul.f32 %v5917, %v6011
  %v6028 = vmul.f32 %v5918, %v6011
  %v6029 = vmul.f32 %v5919, %v6011
  %v6030 = vmul.f32 %v5920, %v6016
  %v6031 = vmul.f32 %v5921, %v6016
  %v6032 = vmul.f32 %v5922, %v6016
  %v6033 = vmul.f32 %v5923, %v6016
  %6034 = vset.pattern.permute.xlu0 107
  %6035 = vperm.xlu0 %6034, %v17
  %v6036 = vpop.permute.xlu0 %6035
  %6038 = vset.pattern.permute.xlu0 107
  %6039 = vperm.xlu0 %6038, %v18
  %v6040 = vpop.permute.xlu0 %6039
  %6042 = vset.pattern.permute.xlu0 107
  %6043 = vperm.xlu0 %6042, %v19
  %v6044 = vpop.permute.xlu0 %6043
  %6046 = vset.pattern.permute.xlu0 107
  %6047 = vperm.xlu0 %6046, %v20
  %v6048 = vpop.permute.xlu0 %6047
  %v6050 = vadd.f32 %v6018, %v6036
  %v6051 = vadd.f32 %v6019, %v6036
  %v6052 = vadd.f32 %v6020, %v6036
  %v6053 = vadd.f32 %v6021, %v6036
  %v6054 = vadd.f32 %v6022, %v6040
  %v6055 = vadd.f32 %v6023, %v6040
  %v6056 = vadd.f32 %v6024, %v6040
  %v6057 = vadd.f32 %v6025, %v6040
  %v6058 = vadd.f32 %v6026, %v6044
  %v6059 = vadd.f32 %v6027, %v6044
  %v6060 = vadd.f32 %v6028, %v6044
  %v6061 = vadd.f32 %v6029, %v6044
  %v6062 = vadd.f32 %v6030, %v6048
  %v6063 = vadd.f32 %v6031, %v6048
  %v6064 = vadd.f32 %v6032, %v6048
  %v6065 = vadd.f32 %v6033, %v6048
  %v6066 = vmax.f32 %v6050, 0.0
  %v6067 = vmax.f32 %v6051, 0.0
  %v6068 = vmax.f32 %v6052, 0.0
  %v6069 = vmax.f32 %v6053, 0.0
  %v6070 = vmax.f32 %v6054, 0.0
  %v6071 = vmax.f32 %v6055, 0.0
  %v6072 = vmax.f32 %v6056, 0.0
  %v6073 = vmax.f32 %v6057, 0.0
  %v6074 = vmax.f32 %v6058, 0.0
  %v6075 = vmax.f32 %v6059, 0.0
  %v6076 = vmax.f32 %v6060, 0.0
  %v6077 = vmax.f32 %v6061, 0.0
  %v6078 = vmax.f32 %v6062, 0.0
  %v6079 = vmax.f32 %v6063, 0.0
  %v6080 = vmax.f32 %v6064, 0.0
  %v6081 = vmax.f32 %v6065, 0.0
  %6082 = vrot.lane.b32.xlu0 %v17, 96
  %v6083 = vpop.permute.xlu0 %6082
  %6084 = vrot.lane.b32.xlu0 %v18, 96
  %v6085 = vpop.permute.xlu0 %6084
  %6086 = vrot.lane.b32.xlu0 %v19, 96
  %v6087 = vpop.permute.xlu0 %6086
  %6088 = vrot.lane.b32.xlu0 %v20, 96
  %v6089 = vpop.permute.xlu0 %6088
  %v6090 = vsel %vm37, %v6083, 0
  %v6092 = vsel %vm37, %v6085, 0
  %v6094 = vsel %vm37, %v6087, 0
  %v6096 = vsel %vm37, %v6089, 0
  %6098 = vmatpush.msra.mxu0 0.0
  %6099 = vmatpush.msra.mxu0 0.0
  %6100 = vmatpush.msra.mxu0 0.0
  %6101 = vmatpush.msra.mxu0 0.0
  %6102 = vmatpush.msra.mxu0 0.0
  %6103 = vmatpush.msra.mxu0 0.0
  %6104 = vmatpush.msra.mxu0 0.0
  %6105 = vmatpush.msra.mxu0 0.0
  %6106 = vmatpush.msra.mxu0 0.0
  %6107 = vmatpush.msra.mxu0 0.0
  %6108 = vmatpush.msra.mxu0 0.0
  %6109 = vmatpush.msra.mxu0 0.0
  %6110 = vmatpush.msra.mxu0 %v6078
  %6111 = vmatpush.msra.mxu0 %v6074
  %6112 = vmatpush.msra.mxu0 %v6070
  %6113 = vmatpush.msra.mxu0 %v6066
  %6114 = vmatmul.f32.gmra.mxu0 %v6090
  %v6115 = vpop.f32.mrf.mxu0
  %v6116 = vadd.f32 0.0, %v6115
  %6117 = vmatmul.f32.gmra.mxu0 %v6092
  %v6118 = vpop.f32.mrf.mxu0
  %v6119 = vadd.f32 0.0, %v6118
  %6120 = vmatmul.f32.gmra.mxu0 %v6094
  %v6121 = vpop.f32.mrf.mxu0
  %v6122 = vadd.f32 0.0, %v6121
  %6123 = vmatmul.f32.gmra.mxu0 %v6096
  %v6124 = vpop.f32.mrf.mxu0
  %v6125 = vadd.f32 0.0, %v6124
  %6126 = vdwg.mxu0
  %6127 = vmatpush.msra.mxu0 0.0
  %6128 = vmatpush.msra.mxu0 0.0
  %6129 = vmatpush.msra.mxu0 0.0
  %6130 = vmatpush.msra.mxu0 0.0
  %6131 = vmatpush.msra.mxu0 0.0
  %6132 = vmatpush.msra.mxu0 0.0
  %6133 = vmatpush.msra.mxu0 0.0
  %6134 = vmatpush.msra.mxu0 0.0
  %6135 = vmatpush.msra.mxu0 0.0
  %6136 = vmatpush.msra.mxu0 0.0
  %6137 = vmatpush.msra.mxu0 0.0
  %6138 = vmatpush.msra.mxu0 0.0
  %6139 = vmatpush.msra.mxu0 %v6079
  %6140 = vmatpush.msra.mxu0 %v6075
  %6141 = vmatpush.msra.mxu0 %v6071
  %6142 = vmatpush.msra.mxu0 %v6067
  %6143 = vmatmul.f32.gmra.mxu0 %v6090
  %v6144 = vpop.f32.mrf.mxu0
  %v6145 = vadd.f32 0.0, %v6144
  %6146 = vmatmul.f32.gmra.mxu0 %v6092
  %v6147 = vpop.f32.mrf.mxu0
  %v6148 = vadd.f32 0.0, %v6147
  %6149 = vmatmul.f32.gmra.mxu0 %v6094
  %v6150 = vpop.f32.mrf.mxu0
  %v6151 = vadd.f32 0.0, %v6150
  %6152 = vmatmul.f32.gmra.mxu0 %v6096
  %v6153 = vpop.f32.mrf.mxu0
  %v6154 = vadd.f32 0.0, %v6153
  %6155 = vdwg.mxu0
  %6156 = vmatpush.msra.mxu0 0.0
  %6157 = vmatpush.msra.mxu0 0.0
  %6158 = vmatpush.msra.mxu0 0.0
  %6159 = vmatpush.msra.mxu0 0.0
  %6160 = vmatpush.msra.mxu0 0.0
  %6161 = vmatpush.msra.mxu0 0.0
  %6162 = vmatpush.msra.mxu0 0.0
  %6163 = vmatpush.msra.mxu0 0.0
  %6164 = vmatpush.msra.mxu0 0.0
  %6165 = vmatpush.msra.mxu0 0.0
  %6166 = vmatpush.msra.mxu0 0.0
  %6167 = vmatpush.msra.mxu0 0.0
  %6168 = vmatpush.msra.mxu0 %v6080
  %6169 = vmatpush.msra.mxu0 %v6076
  %6170 = vmatpush.msra.mxu0 %v6072
  %6171 = vmatpush.msra.mxu0 %v6068
  %6172 = vmatmul.f32.gmra.mxu0 %v6090
  %v6173 = vpop.f32.mrf.mxu0
  %v6174 = vadd.f32 0.0, %v6173
  %6175 = vmatmul.f32.gmra.mxu0 %v6092
  %v6176 = vpop.f32.mrf.mxu0
  %v6177 = vadd.f32 0.0, %v6176
  %6178 = vmatmul.f32.gmra.mxu0 %v6094
  %v6179 = vpop.f32.mrf.mxu0
  %v6180 = vadd.f32 0.0, %v6179
  %6181 = vmatmul.f32.gmra.mxu0 %v6096
  %v6182 = vpop.f32.mrf.mxu0
  %v6183 = vadd.f32 0.0, %v6182
  %6184 = vdwg.mxu0
  %6185 = vmatpush.msra.mxu0 0.0
  %6186 = vmatpush.msra.mxu0 0.0
  %6187 = vmatpush.msra.mxu0 0.0
  %6188 = vmatpush.msra.mxu0 0.0
  %6189 = vmatpush.msra.mxu0 0.0
  %6190 = vmatpush.msra.mxu0 0.0
  %6191 = vmatpush.msra.mxu0 0.0
  %6192 = vmatpush.msra.mxu0 0.0
  %6193 = vmatpush.msra.mxu0 0.0
  %6194 = vmatpush.msra.mxu0 0.0
  %6195 = vmatpush.msra.mxu0 0.0
  %6196 = vmatpush.msra.mxu0 0.0
  %6197 = vmatpush.msra.mxu0 %v6081
  %6198 = vmatpush.msra.mxu0 %v6077
  %6199 = vmatpush.msra.mxu0 %v6073
  %6200 = vmatpush.msra.mxu0 %v6069
  %6201 = vmatmul.f32.gmra.mxu0 %v6090
  %v6202 = vpop.f32.mrf.mxu0
  %v6203 = vadd.f32 0.0, %v6202
  %6204 = vmatmul.f32.gmra.mxu0 %v6092
  %v6205 = vpop.f32.mrf.mxu0
  %v6206 = vadd.f32 0.0, %v6205
  %6207 = vmatmul.f32.gmra.mxu0 %v6094
  %v6208 = vpop.f32.mrf.mxu0
  %v6209 = vadd.f32 0.0, %v6208
  %6210 = vmatmul.f32.gmra.mxu0 %v6096
  %v6211 = vpop.f32.mrf.mxu0
  %v6212 = vadd.f32 0.0, %v6211
  %6213 = vdwg.mxu0
  %v6214 = vadd.f32 %v6116, %v6145
  %v6215 = vadd.f32 %v6214, %v6174
  %v6216 = vadd.f32 %v6215, %v6203
  %6217 = vadd.xlane.f32.xlu0 %v6216
  %v6218 = vpop.xlane.xlu0 %6217
  %v6219 = vadd.f32 %v6119, %v6148
  %v6220 = vadd.f32 %v6219, %v6177
  %v6221 = vadd.f32 %v6220, %v6206
  %6222 = vadd.xlane.f32.xlu0 %v6221
  %v6223 = vpop.xlane.xlu0 %6222
  %v6224 = vadd.f32 %v6122, %v6151
  %v6225 = vadd.f32 %v6224, %v6180
  %v6226 = vadd.f32 %v6225, %v6209
  %6227 = vadd.xlane.f32.xlu0 %v6226
  %v6228 = vpop.xlane.xlu0 %6227
  %v6229 = vadd.f32 %v6125, %v6154
  %v6230 = vadd.f32 %v6229, %v6183
  %v6231 = vadd.f32 %v6230, %v6212
  %6232 = vadd.xlane.f32.xlu0 %v6231
  %v6233 = vpop.xlane.xlu0 %6232
  %v6234 = vadd.f32 %v6218, %v6228
  %v6235 = vadd.f32 %v6223, %v6233
  %v6236 = vmul.f32 %v6234, 0.0009765625
  %v6237 = vmul.f32 %v6235, 0.0009765625
  %6239 = vset.pattern.permute.xlu0 0
  %6240 = vperm.xlu0 %6239, %v6236
  %v6241 = vpop.permute.xlu0 %6240
  %6244 = vset.pattern.permute.xlu0 0
  %6245 = vperm.xlu0 %6244, %v6237
  %v6246 = vpop.permute.xlu0 %6245
  %v6248 = vsub.f32 %v6116, %v6241
  %v6249 = vsub.f32 %v6145, %v6241
  %v6250 = vsub.f32 %v6174, %v6241
  %v6251 = vsub.f32 %v6203, %v6241
  %v6252 = vsub.f32 %v6119, %v6246
  %v6253 = vsub.f32 %v6148, %v6246
  %v6254 = vsub.f32 %v6177, %v6246
  %v6255 = vsub.f32 %v6206, %v6246
  %v6256 = vsub.f32 %v6122, %v6241
  %v6257 = vsub.f32 %v6151, %v6241
  %v6258 = vsub.f32 %v6180, %v6241
  %v6259 = vsub.f32 %v6209, %v6241
  %v6260 = vsub.f32 %v6125, %v6246
  %v6261 = vsub.f32 %v6154, %v6246
  %v6262 = vsub.f32 %v6183, %v6246
  %v6263 = vsub.f32 %v6212, %v6246
  %v6264 = vmul.f32 %v6248, %v6248
  %v6265 = vmul.f32 %v6249, %v6249
  %v6266 = vmul.f32 %v6250, %v6250
  %v6267 = vmul.f32 %v6251, %v6251
  %v6268 = vmul.f32 %v6252, %v6252
  %v6269 = vmul.f32 %v6253, %v6253
  %v6270 = vmul.f32 %v6254, %v6254
  %v6271 = vmul.f32 %v6255, %v6255
  %v6272 = vmul.f32 %v6256, %v6256
  %v6273 = vmul.f32 %v6257, %v6257
  %v6274 = vmul.f32 %v6258, %v6258
  %v6275 = vmul.f32 %v6259, %v6259
  %v6276 = vmul.f32 %v6260, %v6260
  %v6277 = vmul.f32 %v6261, %v6261
  %v6278 = vmul.f32 %v6262, %v6262
  %v6279 = vmul.f32 %v6263, %v6263
  %v6280 = vadd.f32 %v6264, %v6265
  %v6281 = vadd.f32 %v6280, %v6266
  %v6282 = vadd.f32 %v6281, %v6267
  %6283 = vadd.xlane.f32.xlu0 %v6282
  %v6284 = vpop.xlane.xlu0 %6283
  %v6285 = vadd.f32 %v6268, %v6269
  %v6286 = vadd.f32 %v6285, %v6270
  %v6287 = vadd.f32 %v6286, %v6271
  %6288 = vadd.xlane.f32.xlu0 %v6287
  %v6289 = vpop.xlane.xlu0 %6288
  %v6290 = vadd.f32 %v6272, %v6273
  %v6291 = vadd.f32 %v6290, %v6274
  %v6292 = vadd.f32 %v6291, %v6275
  %6293 = vadd.xlane.f32.xlu0 %v6292
  %v6294 = vpop.xlane.xlu0 %6293
  %v6295 = vadd.f32 %v6276, %v6277
  %v6296 = vadd.f32 %v6295, %v6278
  %v6297 = vadd.f32 %v6296, %v6279
  %6298 = vadd.xlane.f32.xlu0 %v6297
  %v6299 = vpop.xlane.xlu0 %6298
  %v6300 = vadd.f32 %v6284, %v6294
  %v6301 = vadd.f32 %v6289, %v6299
  %v6302 = vmul.f32 %v6300, 0.0009765625
  %v6303 = vmul.f32 %v6301, 0.0009765625
  %v6304 = vadd.f32 %v6302, 1e-05
  %v6305 = vadd.f32 %v6303, 1e-05
  %v6306 = vrsqrt.pop %v6304
  %v6307 = vmul.f32 %v6306, %v6304
  %v6308 = vmul.f32 %v6307, %v6306
  %v6309 = vmul.f32 0.5, %v6308
  %v6310 = vsub.f32 1.5, %v6309
  %v6311 = vmul.f32 %v6306, %v6310
  %vm6312 = vweird.f32 %v6304
  %vm6313 = vweird.f32 %v6306
  %vm6314 = vmor %vm6312, %vm6313
  %v6315 = vsel %vm6314, %v6306, %v6311
  %v6316 = vrsqrt.pop %v6305
  %v6317 = vmul.f32 %v6316, %v6305
  %v6318 = vmul.f32 %v6317, %v6316
  %v6319 = vmul.f32 0.5, %v6318
  %v6320 = vsub.f32 1.5, %v6319
  %v6321 = vmul.f32 %v6316, %v6320
  %vm6322 = vweird.f32 %v6305
  %vm6323 = vweird.f32 %v6316
  %vm6324 = vmor %vm6322, %vm6323
  %v6325 = vsel %vm6324, %v6316, %v6321
  %6328 = vrot.lane.b32.xlu0 %v6315, 108
  %v6329 = vpop.permute.xlu0 %6328
  %6330 = vrot.lane.b32.xlu0 %v6325, 108
  %v6331 = vpop.permute.xlu0 %6330
  %v6334 = vmul.f32 %v17, %v6329
  %v6335 = vmul.f32 %v18, %v6331
  %v6336 = vmul.f32 %v19, %v6329
  %v6337 = vmul.f32 %v20, %v6331
  %6339 = vset.pattern.permute.xlu0 108
  %6340 = vperm.xlu0 %6339, %v6334
  %v6341 = vpop.permute.xlu0 %6340
  %6344 = vset.pattern.permute.xlu0 108
  %6345 = vperm.xlu0 %6344, %v6335
  %v6346 = vpop.permute.xlu0 %6345
  %6349 = vset.pattern.permute.xlu0 108
  %6350 = vperm.xlu0 %6349, %v6336
  %v6351 = vpop.permute.xlu0 %6350
  %6354 = vset.pattern.permute.xlu0 108
  %6355 = vperm.xlu0 %6354, %v6337
  %v6356 = vpop.permute.xlu0 %6355
  %v6358 = vmul.f32 %v6248, %v6341
  %v6359 = vmul.f32 %v6249, %v6341
  %v6360 = vmul.f32 %v6250, %v6341
  %v6361 = vmul.f32 %v6251, %v6341
  %v6362 = vmul.f32 %v6252, %v6346
  %v6363 = vmul.f32 %v6253, %v6346
  %v6364 = vmul.f32 %v6254, %v6346
  %v6365 = vmul.f32 %v6255, %v6346
  %v6366 = vmul.f32 %v6256, %v6351
  %v6367 = vmul.f32 %v6257, %v6351
  %v6368 = vmul.f32 %v6258, %v6351
  %v6369 = vmul.f32 %v6259, %v6351
  %v6370 = vmul.f32 %v6260, %v6356
  %v6371 = vmul.f32 %v6261, %v6356
  %v6372 = vmul.f32 %v6262, %v6356
  %v6373 = vmul.f32 %v6263, %v6356
  %6374 = vset.pattern.permute.xlu0 109
  %6375 = vperm.xlu0 %6374, %v17
  %v6376 = vpop.permute.xlu0 %6375
  %6378 = vset.pattern.permute.xlu0 109
  %6379 = vperm.xlu0 %6378, %v18
  %v6380 = vpop.permute.xlu0 %6379
  %6382 = vset.pattern.permute.xlu0 109
  %6383 = vperm.xlu0 %6382, %v19
  %v6384 = vpop.permute.xlu0 %6383
  %6386 = vset.pattern.permute.xlu0 109
  %6387 = vperm.xlu0 %6386, %v20
  %v6388 = vpop.permute.xlu0 %6387
  %v6390 = vadd.f32 %v6358, %v6376
  %v6391 = vadd.f32 %v6359, %v6376
  %v6392 = vadd.f32 %v6360, %v6376
  %v6393 = vadd.f32 %v6361, %v6376
  %v6394 = vadd.f32 %v6362, %v6380
  %v6395 = vadd.f32 %v6363, %v6380
  %v6396 = vadd.f32 %v6364, %v6380
  %v6397 = vadd.f32 %v6365, %v6380
  %v6398 = vadd.f32 %v6366, %v6384
  %v6399 = vadd.f32 %v6367, %v6384
  %v6400 = vadd.f32 %v6368, %v6384
  %v6401 = vadd.f32 %v6369, %v6384
  %v6402 = vadd.f32 %v6370, %v6388
  %v6403 = vadd.f32 %v6371, %v6388
  %v6404 = vadd.f32 %v6372, %v6388
  %v6405 = vadd.f32 %v6373, %v6388
  %v6406 = vadd.f32 %v6390, %v6391
  %v6407 = vadd.f32 %v6406, %v6392
  %v6408 = vadd.f32 %v6407, %v6393
  %6409 = vadd.xlane.f32.xlu0 %v6408
  %v6410 = vpop.xlane.xlu0 %6409
  %v6411 = vadd.f32 %v6394, %v6395
  %v6412 = vadd.f32 %v6411, %v6396
  %v6413 = vadd.f32 %v6412, %v6397
  %6414 = vadd.xlane.f32.xlu0 %v6413
  %v6415 = vpop.xlane.xlu0 %6414
  %v6416 = vadd.f32 %v6398, %v6399
  %v6417 = vadd.f32 %v6416, %v6400
  %v6418 = vadd.f32 %v6417, %v6401
  %6419 = vadd.xlane.f32.xlu0 %v6418
  %v6420 = vpop.xlane.xlu0 %6419
  %v6421 = vadd.f32 %v6402, %v6403
  %v6422 = vadd.f32 %v6421, %v6404
  %v6423 = vadd.f32 %v6422, %v6405
  %6424 = vadd.xlane.f32.xlu0 %v6423
  %v6425 = vpop.xlane.xlu0 %6424
  %v6426 = vmul.f32 %v6410, 0.001953125
  %v6427 = vmul.f32 %v6415, 0.001953125
  %v6428 = vmul.f32 %v6420, 0.001953125
  %v6429 = vmul.f32 %v6425, 0.001953125
  %v6430 = vld [vmem:[%s3] sm:$0xff]
  %6432 = vrot.lane.b32.xlu0 %v6430, 56
  %v6433 = vpop.permute.xlu0 %6432
  %6434 = vrot.lane.b32.xlu0 %v6430, 17
  %v6435 = vpop.permute.xlu0 %6434
  %v6437 = vsel %vm37, %v6433, 0
  %6439 = vmatpush.msra.mxu0 0.0
  %6440 = vmatpush.msra.mxu0 0.0
  %6441 = vmatpush.msra.mxu0 0.0
  %6442 = vmatpush.msra.mxu0 0.0
  %6443 = vmatpush.msra.mxu0 0.0
  %6444 = vmatpush.msra.mxu0 0.0
  %6445 = vmatpush.msra.mxu0 0.0
  %6446 = vmatpush.msra.mxu0 0.0
  %6447 = vmatpush.msra.mxu0 0.0
  %6448 = vmatpush.msra.mxu0 0.0
  %6449 = vmatpush.msra.mxu0 0.0
  %6450 = vmatpush.msra.mxu0 0.0
  %6451 = vmatpush.msra.mxu0 %v6429
  %6452 = vmatpush.msra.mxu0 %v6428
  %6453 = vmatpush.msra.mxu0 %v6427
  %6454 = vmatpush.msra.mxu0 %v6426
  %6455 = vmatmul.f32.gmra.mxu0 %v6437
  %v6456 = vpop.f32.mrf.mxu0
  %v6457 = vadd.f32 %v6435, %v6456
  %6458 = vdwg.mxu0
  %v6459 = vmax.f32 %v6457, 0.0
  %6460 = vrot.lane.b32.xlu0 %v17, 64
  %v6461 = vpop.permute.xlu0 %6460
  %6462 = vrot.lane.b32.xlu0 %v18, 64
  %v6463 = vpop.permute.xlu0 %6462
  %6464 = vrot.lane.b32.xlu0 %v19, 64
  %v6465 = vpop.permute.xlu0 %6464
  %6466 = vrot.lane.b32.xlu0 %v20, 64
  %v6467 = vpop.permute.xlu0 %6466
  %6468 = vrot.lane.b32.xlu0 %v17, 18
  %v6469 = vpop.permute.xlu0 %6468
  %6470 = vrot.lane.b32.xlu0 %v18, 18
  %v6471 = vpop.permute.xlu0 %6470
  %6472 = vrot.lane.b32.xlu0 %v19, 18
  %v6473 = vpop.permute.xlu0 %6472
  %6474 = vrot.lane.b32.xlu0 %v20, 18
  %v6475 = vpop.permute.xlu0 %6474
  %vm6480 = vcmask 64512
  %v6481 = vsel %vm6480, %v6461, 0
  %v6483 = vsel %vm6480, %v6463, 0
  %v6485 = vsel %vm6480, %v6465, 0
  %v6487 = vsel %vm6480, %v6467, 0
  %6489 = vmatpush.msra.mxu0 0.0
  %6490 = vmatpush.msra.mxu0 0.0
  %6491 = vmatpush.msra.mxu0 0.0
  %6492 = vmatpush.msra.mxu0 0.0
  %6493 = vmatpush.msra.mxu0 0.0
  %6494 = vmatpush.msra.mxu0 0.0
  %6495 = vmatpush.msra.mxu0 0.0
  %6496 = vmatpush.msra.mxu0 0.0
  %6497 = vmatpush.msra.mxu0 0.0
  %6498 = vmatpush.msra.mxu0 0.0
  %6499 = vmatpush.msra.mxu0 0.0
  %6500 = vmatpush.msra.mxu0 0.0
  %6501 = vmatpush.msra.mxu0 0.0
  %6502 = vmatpush.msra.mxu0 0.0
  %6503 = vmatpush.msra.mxu0 0.0
  %6504 = vmatpush.msra.mxu0 %v6459
  %6505 = vmatmul.f32.gmra.mxu0 %v6481
  %v6506 = vpop.f32.mrf.mxu0
  %v6507 = vadd.f32 %v6469, %v6506
  %6508 = vmatmul.f32.gmra.mxu0 %v6483
  %v6509 = vpop.f32.mrf.mxu0
  %v6510 = vadd.f32 %v6471, %v6509
  %6511 = vmatmul.f32.gmra.mxu0 %v6485
  %v6512 = vpop.f32.mrf.mxu0
  %v6513 = vadd.f32 %v6473, %v6512
  %6514 = vmatmul.f32.gmra.mxu0 %v6487
  %v6515 = vpop.f32.mrf.mxu0
  %v6516 = vadd.f32 %v6475, %v6515
  %6517 = vdwg.mxu0
  %v6518 = vxor.u32 %v6507, 2147483648
  %v6519 = vxor.u32 %v6510, 2147483648
  %v6520 = vxor.u32 %v6513, 2147483648
  %v6521 = vxor.u32 %v6516, 2147483648
  %v6522 = vmul.f32 %v6518, 1.442695
  %v6523 = vpow.pop %v6522
  %v6524 = vmul.f32 %v6519, 1.442695
  %v6525 = vpow.pop %v6524
  %v6526 = vmul.f32 %v6520, 1.442695
  %v6527 = vpow.pop %v6526
  %v6528 = vmul.f32 %v6521, 1.442695
  %v6529 = vpow.pop %v6528
  %v6530 = vadd.f32 %v6523, 1.0
  %v6531 = vadd.f32 %v6525, 1.0
  %v6532 = vadd.f32 %v6527, 1.0
  %v6533 = vadd.f32 %v6529, 1.0
  %v6534 = vrcp.pop %v6530
  %v6535 = vmul.f32 %v6530, %v6534
  %v6536 = vsub.f32 1.0, %v6535
  %v6537 = vmul.f32 %v6534, %v6536
  %v6538 = vadd.f32 %v6534, %v6537
  %vm6539 = vweird.f32 %v6530
  %vm6540 = vweird.f32 %v6534
  %vm6541 = vmor %vm6539, %vm6540
  %v6542 = vsel %vm6541, %v6534, %v6538
  %v6543 = vand.u32 2147483647, %v6530
  %vm6544 = vcmp.eq.f32.partialorder %v6543, 8.507059e+37
  %v6545 = vand.u32 %v6530, 2147483648
  %v6546 = vor.u32 1.1754944e-38, %v6545
  %v6547 = vsel %vm6544, %v6546, %v6542
  %v6548 = vmul.f32 1.0, %v6547
  %v6549 = vrcp.pop %v6531
  %v6550 = vmul.f32 %v6531, %v6549
  %v6551 = vsub.f32 1.0, %v6550
  %v6552 = vmul.f32 %v6549, %v6551
  %v6553 = vadd.f32 %v6549, %v6552
  %vm6554 = vweird.f32 %v6531
  %vm6555 = vweird.f32 %v6549
  %vm6556 = vmor %vm6554, %vm6555
  %v6557 = vsel %vm6556, %v6549, %v6553
  %v6558 = vand.u32 2147483647, %v6531
  %vm6559 = vcmp.eq.f32.partialorder %v6558, 8.507059e+37
  %v6560 = vand.u32 %v6531, 2147483648
  %v6561 = vor.u32 1.1754944e-38, %v6560
  %v6562 = vsel %vm6559, %v6561, %v6557
  %v6563 = vmul.f32 1.0, %v6562
  %v6564 = vrcp.pop %v6532
  %v6565 = vmul.f32 %v6532, %v6564
  %v6566 = vsub.f32 1.0, %v6565
  %v6567 = vmul.f32 %v6564, %v6566
  %v6568 = vadd.f32 %v6564, %v6567
  %vm6569 = vweird.f32 %v6532
  %vm6570 = vweird.f32 %v6564
  %vm6571 = vmor %vm6569, %vm6570
  %v6572 = vsel %vm6571, %v6564, %v6568
  %v6573 = vand.u32 2147483647, %v6532
  %vm6574 = vcmp.eq.f32.partialorder %v6573, 8.507059e+37
  %v6575 = vand.u32 %v6532, 2147483648
  %v6576 = vor.u32 1.1754944e-38, %v6575
  %v6577 = vsel %vm6574, %v6576, %v6572
  %v6578 = vmul.f32 1.0, %v6577
  %v6579 = vrcp.pop %v6533
  %v6580 = vmul.f32 %v6533, %v6579
  %v6581 = vsub.f32 1.0, %v6580
  %v6582 = vmul.f32 %v6579, %v6581
  %v6583 = vadd.f32 %v6579, %v6582
  %vm6584 = vweird.f32 %v6533
  %vm6585 = vweird.f32 %v6579
  %vm6586 = vmor %vm6584, %vm6585
  %v6587 = vsel %vm6586, %v6579, %v6583
  %v6588 = vand.u32 2147483647, %v6533
  %vm6589 = vcmp.eq.f32.partialorder %v6588, 8.507059e+37
  %v6590 = vand.u32 %v6533, 2147483648
  %v6591 = vor.u32 1.1754944e-38, %v6590
  %v6592 = vsel %vm6589, %v6591, %v6587
  %v6593 = vmul.f32 1.0, %v6592
  %6595 = vset.pattern.permute.xlu0 0
  %6596 = vperm.xlu0 %6595, %v6548
  %v6597 = vpop.permute.xlu0 %6596
  %6600 = vset.pattern.permute.xlu0 0
  %6601 = vperm.xlu0 %6600, %v6563
  %v6602 = vpop.permute.xlu0 %6601
  %6605 = vset.pattern.permute.xlu0 0
  %6606 = vperm.xlu0 %6605, %v6578
  %v6607 = vpop.permute.xlu0 %6606
  %6610 = vset.pattern.permute.xlu0 0
  %6611 = vperm.xlu0 %6610, %v6593
  %v6612 = vpop.permute.xlu0 %6611
  %v6614 = vmul.f32 %v6390, %v6597
  %v6615 = vmul.f32 %v6391, %v6597
  %v6616 = vmul.f32 %v6392, %v6597
  %v6617 = vmul.f32 %v6393, %v6597
  %v6618 = vmul.f32 %v6394, %v6602
  %v6619 = vmul.f32 %v6395, %v6602
  %v6620 = vmul.f32 %v6396, %v6602
  %v6621 = vmul.f32 %v6397, %v6602
  %v6622 = vmul.f32 %v6398, %v6607
  %v6623 = vmul.f32 %v6399, %v6607
  %v6624 = vmul.f32 %v6400, %v6607
  %v6625 = vmul.f32 %v6401, %v6607
  %v6626 = vmul.f32 %v6402, %v6612
  %v6627 = vmul.f32 %v6403, %v6612
  %v6628 = vmul.f32 %v6404, %v6612
  %v6629 = vmul.f32 %v6405, %v6612
  %v6630 = vadd.f32 %v6614, %v21
  %v6631 = vadd.f32 %v6615, %v22
  %v6632 = vadd.f32 %v6616, %v23
  %v6633 = vadd.f32 %v6617, %v24
  %v6634 = vadd.f32 %v6618, %v25
  %v6635 = vadd.f32 %v6619, %v26
  %v6636 = vadd.f32 %v6620, %v27
  %v6637 = vadd.f32 %v6621, %v28
  %v6638 = vadd.f32 %v6622, %v29
  %v6639 = vadd.f32 %v6623, %v30
  %v6640 = vadd.f32 %v6624, %v31
  %v6641 = vadd.f32 %v6625, %v32
  %v6642 = vadd.f32 %v6626, %v33
  %v6643 = vadd.f32 %v6627, %v34
  %v6644 = vadd.f32 %v6628, %v35
  %v6645 = vadd.f32 %v6629, %v36
  %v6646 = vmax.f32 %v6630, 0.0
  %v6647 = vmax.f32 %v6631, 0.0
  %v6648 = vmax.f32 %v6632, 0.0
  %v6649 = vmax.f32 %v6633, 0.0
  %v6650 = vmax.f32 %v6634, 0.0
  %v6651 = vmax.f32 %v6635, 0.0
  %v6652 = vmax.f32 %v6636, 0.0
  %v6653 = vmax.f32 %v6637, 0.0
  %v6654 = vmax.f32 %v6638, 0.0
  %v6655 = vmax.f32 %v6639, 0.0
  %v6656 = vmax.f32 %v6640, 0.0
  %v6657 = vmax.f32 %v6641, 0.0
  %v6658 = vmax.f32 %v6642, 0.0
  %v6659 = vmax.f32 %v6643, 0.0
  %v6660 = vmax.f32 %v6644, 0.0
  %v6661 = vmax.f32 %v6645, 0.0
  %6662 = vst [vmem:[%s4] sm:$0xff] %v6646
  %6663 = vst [vmem:[%s4 + $0x8] sm:$0xff] %v6647
  %6664 = vst [vmem:[%s4 + $0x10] sm:$0xff] %v6648
  %6665 = vst [vmem:[%s4 + $0x18] sm:$0xff] %v6649
  %6666 = vst [vmem:[%s4 + $0x20] sm:$0xff] %v6650
  %6667 = vst [vmem:[%s4 + $0x28] sm:$0xff] %v6651
  %6668 = vst [vmem:[%s4 + $0x30] sm:$0xff] %v6652
  %6669 = vst [vmem:[%s4 + $0x38] sm:$0xff] %v6653
  %6670 = vst [vmem:[%s4 + $0x40] sm:$0xff] %v6654
  %6671 = vst [vmem:[%s4 + $0x48] sm:$0xff] %v6655
  %6672 = vst [vmem:[%s4 + $0x50] sm:$0xff] %v6656
  %6673 = vst [vmem:[%s4 + $0x58] sm:$0xff] %v6657
  %6674 = vst [vmem:[%s4 + $0x60] sm:$0xff] %v6658
  %6675 = vst [vmem:[%s4 + $0x68] sm:$0xff] %v6659
  %6676 = vst [vmem:[%s4 + $0x70] sm:$0xff] %v6660
  %6677 = vst [vmem:[%s4 + $0x78] sm:$0xff] %v6661
  // Predicated region
  $region18: #{se_block_pallas.1} parent=0 // pred_check
    _
  $region19: #{se_block_pallas.1} parent=0 // pred_check_branch
    %6679 = sbr.rel (0) target = $region21
  $region20: #{se_block_pallas.1} parent=0 // pred_region
    _
  $region21: #{se_block_pallas.1} parent=0 // pred_fallthru
    _
  // Predicated region
  $region22: #{se_block_pallas.1} parent=0 // pred_check
    _
  $region23: #{se_block_pallas.1} parent=0 // pred_check_branch
    %6681 = sbr.rel (0) target = $region25
  $region24: #{se_block_pallas.1} parent=0 // pred_region
    _
  $region25: #{se_block_pallas.1} parent=0 // pred_fallthru
    _

</llo_original>
